<compile_context>
chip_gen: v7x
topology: tpu7x:2x2x1
jax: 0.10.0
libtpu: 0.0.40
codegen_flags: <defaults>
</compile_context>

<pallas_src>
import math

import jax
import jax.numpy as jnp
from jax import lax
from jax.experimental import pallas as pl
from jax.experimental.pallas import tpu as pltpu

BN_EPS = 1e-5


def _round_up(x, m):
    return ((x + m - 1) // m) * m


def _default_vmem_limit():
    """Pick a VMEM budget from the actual chip (v7x: 64 MiB, v5e/v6e: 128 MiB)."""
    cap = None
    try:
        cap = getattr(pltpu.get_tpu_info(), "vmem_capacity_bytes", None)
    except Exception:
        cap = None
    if not cap:
        return 64 * 1024 * 1024
    return min(int(0.85 * cap), 112 * 1024 * 1024)


def _pick_row_tile(H, Wp, Cinp, Cp, n_rates, rmax, vmem_limit_bytes):
    """Largest 8-aligned row tile whose working set fits the VMEM budget."""
    budget = int(0.80 * vmem_limit_bytes)            # headroom for compiler temps
    # resident weights: single-buffered bf16 (Buffered(1))
    w_bytes = 2 * (Cinp * Cp * (1 + 9 * n_rates) + (1 + n_rates) * Cp * Cp)
    h8 = max(8, _round_up(H, 8))
    for th in (256, 128, 64, 32, 16, 8):
        if th > h8:
            continue
        twp = th * Wp
        slab = 2 * (th + 2 * rmax + 2) * Wp * Cinp * 2   # double-buffered bf16 slab
        outb = 2 * twp * Cp * 2                          # double-buffered bf16 output
        live = 3 * twp * Cp * 4 + 2 * twp * Cinp * 2     # f32 acc/conv/b0 + tap windows
        if w_bytes + slab + outb + live <= budget:
            return th
    return 8


def _resident_spec(shape):
    """Constant-index weight block; single-buffered when pipeline_mode is available."""
    zeros = (0,) * len(shape)
    index_map = lambda n, t: zeros
    if hasattr(pl, "Buffered"):
        try:
            return pl.BlockSpec(shape, index_map, pipeline_mode=pl.Buffered(1))
        except TypeError:               # older Pallas without pipeline_mode kwarg
            pass
    return pl.BlockSpec(shape, index_map)


def _make_aspp_kernel(TH, Wp, Cinp, Cp, rates, rmax, LROW):
    TWP = TH * Wp                                   # rows of the per-tile output slab
    SLAB_FLAT = (TH + 2 * rmax + 2) * Wp            # halo rows + 2 guard rows, flat

    def kernel(x_hbm, pooled_ref, w_init_ref, w_rates_ref, w_final_ref,
               o_ref, slab_ref, sem_ref):
        n = pl.program_id(0)
        t = pl.program_id(1)
        nt = pl.num_programs(1)
        slot = lax.rem(t, 2)

        def slab_copy(tile, slot_):
            start = pl.multiple_of(n * LROW + tile * (TH * Wp), 8)
            return pltpu.make_async_copy(
                x_hbm.at[pl.ds(start, SLAB_FLAT)],
                slab_ref.at[slot_],
                sem_ref.at[slot_])

        # First tile of this image: nothing prefetched yet -> fetch now (exposed once
        # per image; all later tiles were prefetched by the previous grid step).
        @pl.when(t == 0)
        def _():
            slab_copy(t, slot).start()

        slab_copy(t, slot).wait()

        # Prefetch the next row tile of the SAME image (overlaps with the matmuls).
        # Scoped per-image so megacore sharding of the batch axis stays correct.
        @pl.when(t + 1 < nt)
        def _():
            slab_copy(t + 1, 1 - slot).start()

        cur = slab_ref.at[slot]                    # (SLAB_FLAT, Cinp) bf16 view

        def branch(conv_f32):                      # BN scale folded into the weights
            return jnp.maximum(conv_f32, 0.0).astype(jnp.bfloat16)

        # --- branch 0: init 1x1 conv -> ReLU, folded straight into the final 1x1 ---
        xc = cur[pl.ds((1 + rmax) * Wp, TWP), :]
        b0 = branch(jnp.dot(xc, w_init_ref[...],
                            preferred_element_type=jnp.float32))
        acc = jnp.dot(b0, w_final_ref[0:Cp, :],
                      preferred_element_type=jnp.float32)

        # --- atrous 3x3 branches: 9 contiguous flat-offset windows, 1 matmul each ---
        for ri, r in enumerate(rates):
            conv = None
            for ky in range(3):
                for kx in range(3):
                    off = (1 + rmax + (ky - 1) * r) * Wp + (kx - 1) * r
                    win = cur[pl.ds(off, TWP), :]
                    part = jnp.dot(win, w_rates_ref[ri, ky * 3 + kx],
                                   preferred_element_type=jnp.float32)
                    conv = part if conv is None else conv + part
            lo = (1 + ri) * Cp
            acc += jnp.dot(branch(conv), w_final_ref[lo:lo + Cp, :],
                           preferred_element_type=jnp.float32)

        # --- pooling-branch contribution (precomputed per image), broadcast add ---
        acc += pooled_ref[0]

        # final ReLU (final BN folded into w_final; Dropout(0.1) is identity in eval)
        o_ref[0, 0] = jnp.maximum(acc, 0.0).astype(o_ref.dtype)

    return kernel, SLAB_FLAT


def aspp_block_forward(x_nchw, params, rates, row_tile=None, vmem_limit_bytes=None):
    """ASPPBlock forward. x_nchw: (N, C_in, H, W) float32 -> (N, C_out, H, W) float32."""
    w_init, w_rates, w_pool, w_final = params
    rates = tuple(int(r) for r in rates)
    R = len(rates)
    N, C_in, H, W = x_nchw.shape
    C_out = w_init.shape[1]
    rmax = max(rates)
    inv_std = 1.0 / math.sqrt(1.0 + BN_EPS)

    # TODO(synk): when C_in << 128 (toy configs like the test below) padding channels
    # to 128 lanes dominates DMA/MXU work; a production small-C_in path should fold
    # taps or width into the lane dimension instead of zero-padding channels.
    Cinp = _round_up(C_in, 128)          # lane-align channels (K of every matmul)
    Cp = _round_up(C_out, 128)           # lane-dense outputs (unmasked stores)
    Wp = _round_up(W + 2 * rmax, 8)      # 8-aligned padded width (sublane friendly)

    if vmem_limit_bytes is None:
        vmem_limit_bytes = _default_vmem_limit()
    if row_tile is None:
        TH = _pick_row_tile(H, Wp, Cinp, Cp, R, rmax, vmem_limit_bytes)
    else:
        TH = max(8, _round_up(row_tile, 8))
    R_tiles = -(-H // TH)
    H_pad = R_tiles * TH
    rows_padded = H_pad + 2 * rmax + 2       # +2 guard rows for the flat tap windows
    LROW = rows_padded * Wp
    TWP = TH * Wp

    x = x_nchw.astype(jnp.float32)
    hi = lax.Precision.HIGHEST

    # ---- pooling branch (global over H,W) computed once per image in XLA ----
    xm = jnp.mean(x, axis=(2, 3))                                        # (N, C_in)
    p = jnp.maximum(jnp.dot(xm, w_pool, precision=hi) * inv_std, 0.0)    # (N, C_out)
    wf_pool = w_final[(1 + R) * C_out:(2 + R) * C_out, :] * inv_std
    pc = jnp.dot(p, wf_pool, precision=hi)                               # (N, C_out)
    pooled = jnp.zeros((N, 1, Cp), jnp.float32).at[:, 0, :C_out].set(pc)

    # ---- fold BN scales into weights, pad channels, cast to bf16 ----
    def pad2(a, rows, cols):
        return jnp.pad(a, ((0, rows - a.shape[0]), (0, cols - a.shape[1])))

    w_init_k = pad2(w_init * inv_std, Cinp, Cp).astype(jnp.bfloat16)
    w_rates_k = jnp.stack(
        [jnp.pad(w * inv_std, ((0, 0), (0, Cinp - C_in), (0, Cp - C_out)))
         for w in w_rates]).astype(jnp.bfloat16)                         # (R,9,Cinp,Cp)
    wf = w_final * inv_std
    w_final_k = jnp.concatenate(
        [pad2(wf[b * C_out:(b + 1) * C_out, :], Cp, Cp) for b in range(1 + R)],
        axis=0).astype(jnp.bfloat16)                                     # ((1+R)*Cp,Cp)

    # ---- single padded channels-last input, spatially flattened, bf16, in HBM ----
    # row layout per image: 1 guard + rmax halo + H image + (H_pad-H) + rmax + 1 guard
    x_nhwc = jnp.transpose(x, (0, 2, 3, 1))
    xp = jnp.pad(
        x_nhwc,
        ((0, 0),
         (1 + rmax, (H_pad - H) + rmax + 1),
         (rmax, Wp - W - rmax),
         (0, Cinp - C_in))).astype(jnp.bfloat16)        # (N, rows_padded, Wp, Cinp)
    x_flat = xp.reshape(N * LROW, Cinp)

    kernel, SLAB_FLAT = _make_aspp_kernel(TH, Wp, Cinp, Cp, rates, rmax, LROW)

    out = pl.pallas_call(
        kernel,
        out_shape=jax.ShapeDtypeStruct((N, R_tiles, TWP, Cp), jnp.bfloat16),
        grid=(N, R_tiles),
        in_specs=[
            pl.BlockSpec(memory_space=pl.ANY),                     # padded input (HBM)
            pl.BlockSpec((1, 1, Cp), lambda n, t: (n, 0, 0)),      # pooled contribution
            _resident_spec((Cinp, Cp)),                            # init 1x1 weights
            _resident_spec((R, 9, Cinp, Cp)),                      # atrous tap weights
            _resident_spec(((1 + R) * Cp, Cp)),                    # folded final 1x1
        ],
        out_specs=pl.BlockSpec((1, 1, TWP, Cp), lambda n, t: (n, t, 0, 0)),
        scratch_shapes=[
            pltpu.VMEM((2, SLAB_FLAT, Cinp), jnp.bfloat16),        # halo slab (2 bufs)
            pltpu.SemaphoreType.DMA((2,)),
        ],
        compiler_params=pltpu.CompilerParams(
            dimension_semantics=("parallel", "arbitrary"),
            vmem_limit_bytes=vmem_limit_bytes),
    )(x_flat, pooled, w_init_k, w_rates_k, w_final_k)

    # crop junk columns / padded rows / padded channels, upcast, back to NCHW
    out = out.reshape(N, R_tiles * TH, Wp, Cp)[:, :H, rmax:rmax + W, :C_out]
    return jnp.transpose(out, (0, 3, 1, 2)).astype(jnp.float32)


def init_params(key, in_channels, atrous_rates, aspp_out_channels):
    """Deterministic xavier_normal-style init matching the PyTorch module shapes."""
    C_in, C_out = in_channels, aspp_out_channels
    R = len(atrous_rates)
    keys = jax.random.split(key, 3 + R)

    def xavier(k, shape, fan_in, fan_out):
        std = math.sqrt(2.0 / (fan_in + fan_out))
        return std * jax.random.normal(k, shape, jnp.float32)

    w_init = xavier(keys[0], (C_in, C_out), C_in, C_out)
    w_rates = [xavier(keys[1 + i], (9, C_in, C_out), C_in * 9, C_out * 9)
               for i in range(R)]
    w_pool = xavier(keys[1 + R], (C_in, C_out), C_in, C_out)
    w_final = xavier(keys[2 + R], ((2 + R) * C_out, C_out), (2 + R) * C_out, C_out)
    return w_init, w_rates, w_pool, w_final


def aspp_reference(x_nchw, params, rates):
    """Pure-JAX reference (lax convs, f32 HIGHEST precision) for validation."""
    w_init, w_rates, w_pool, w_final = params
    N, C_in, H, W = x_nchw.shape
    C_out = w_init.shape[1]
    inv_std = 1.0 / math.sqrt(1.0 + BN_EPS)
    dn = ('NCHW', 'OIHW', 'NCHW')
    prec = lax.Precision.HIGHEST

    def bn_relu(v):
        return jnp.maximum(v * inv_std, 0.0)

    outs = []
    w0 = jnp.transpose(w_init, (1, 0))[:, :, None, None]
    outs.append(bn_relu(lax.conv_general_dilated(
        x_nchw, w0, (1, 1), 'SAME', dimension_numbers=dn, precision=prec)))
    for wr, r in zip(w_rates, rates):
        wk = jnp.transpose(wr.reshape(3, 3, C_in, C_out), (3, 2, 0, 1))
        outs.append(bn_relu(lax.conv_general_dilated(
            x_nchw, wk, (1, 1), [(r, r), (r, r)], rhs_dilation=(r, r),
            dimension_numbers=dn, precision=prec)))
    xm = jnp.mean(x_nchw, axis=(2, 3), keepdims=True)
    wp = jnp.transpose(w_pool, (1, 0))[:, :, None, None]
    pooled = bn_relu(lax.conv_general_dilated(
        xm, wp, (1, 1), 'SAME', dimension_numbers=dn, precision=prec))
    outs.append(jnp.broadcast_to(pooled, (N, C_out, H, W)))
    cat = jnp.concatenate(outs, axis=1)
    wf = jnp.transpose(w_final, (1, 0))[:, :, None, None]
    return bn_relu(lax.conv_general_dilated(
        cat, wf, (1, 1), 'SAME', dimension_numbers=dn, precision=prec))


if __name__ == "__main__":
    key = jax.random.PRNGKey(0)
    kx_, kp_ = jax.random.split(key)

    N, C_in, H, W = 2, 4, 16, 16
    atrous_rates = (1, 2)
    C_out = 32  # small stand-in for aspp_out_channels (default 256)

    x = jax.random.normal(kx_, (N, C_in, H, W), jnp.float32)
    params = init_params(kp_, C_in, atrous_rates, C_out)

    # row_tile=8 -> grid (2, 2): exercises multiple spatial tiles and the
    # prefetch / double-buffered DMA path.
    out = aspp_block_forward(x, params, atrous_rates, row_tile=8)
    out = jax.block_until_ready(out)

    assert out.shape == (N, C_out, H, W)
    ref = aspp_reference(x, params, atrous_rates)
    max_err = float(jnp.max(jnp.abs(out - ref)))
    # bf16 matmul inputs / bf16 kernel output with f32 accumulation vs f32 reference.
    assert jnp.allclose(out, ref, atol=5e-2, rtol=5e-2), max_err

    print("KERNEL_OK")
</pallas_src>

<mosaic_0001>
module attributes {stable_mosaic.version = 11 : i64} {
  func.func @kernel(%arg0: i32, %arg1: i32, %arg2: memref<1056x128xbf16, #tpu.memory_space<any>>, %arg3: memref<1x1x128xf32, #tpu.memory_space<vmem>>, %arg4: memref<128x128xbf16, #tpu.memory_space<vmem>>, %arg5: memref<2x9x128x128xbf16, #tpu.memory_space<vmem>>, %arg6: memref<384x128xbf16, #tpu.memory_space<vmem>>, %arg7: memref<1x1x192x128xbf16, #tpu.memory_space<vmem>>, %arg8: memref<2x336x128xbf16, #tpu.memory_space<vmem>>, %arg9: memref<2x!tpu.dma_semaphore, #tpu.memory_space<semaphore_mem>>) attributes {dimension_semantics = [#tpu.dimension_semantics<parallel>, #tpu.dimension_semantics<arbitrary>], iteration_bounds = array<i64: 2, 2>, scalar_prefetch = 0 : i64, scratch_operands = 2 : i64, tpu.core_type = #tpu.core_type<tc>, window_params = [{}, {transform_indices = @transform_1, window_bounds = array<i64: 1, 1, 128>}, {pipeline_mode = #tpu.pipeline_mode<synchronous>, transform_indices = @transform_2, window_bounds = array<i64: 128, 128>}, {pipeline_mode = #tpu.pipeline_mode<synchronous>, transform_indices = @transform_3, window_bounds = array<i64: 2, 9, 128, 128>}, {pipeline_mode = #tpu.pipeline_mode<synchronous>, transform_indices = @transform_4, window_bounds = array<i64: 384, 128>}, {transform_indices = @transform_5, window_bounds = array<i64: 1, 1, 192, 128>}]} {
    %c2_i32 = arith.constant 2 : i32
    %0 = arith.remsi %arg1, %c2_i32 : i32
    %c0_i32 = arith.constant 0 : i32
    %1 = arith.cmpi eq, %arg1, %c0_i32 : i32
    %2 = arith.extui %1 : i1 to i32
    %c0_i32_0 = arith.constant 0 : i32
    %3 = arith.cmpi ne, %2, %c0_i32_0 : i32
    scf.if %3 {
      %c528_i32_166 = arith.constant 528 : i32
      %173 = arith.muli %arg0, %c528_i32_166 : i32
      %c192_i32_167 = arith.constant 192 : i32
      %174 = arith.muli %arg1, %c192_i32_167 : i32
      %175 = arith.addi %173, %174 : i32
      %176 = tpu.assume_multiple %175, 8 : i32
      %c0_i32_168 = arith.constant 0 : i32
      %177 = tpu.memref_slice %arg2[%176, %c0_i32_168] : memref<1056x128xbf16, #tpu.memory_space<any>> -> memref<336x128xbf16, #tpu.memory_space<any>>
      %c0_i32_169 = arith.constant 0 : i32
      %c0_i32_170 = arith.constant 0 : i32
      %178 = tpu.memref_slice %arg8[%0, %c0_i32_169, %c0_i32_170] : memref<2x336x128xbf16, #tpu.memory_space<vmem>> -> memref<1x336x128xbf16, #tpu.memory_space<vmem>>
      %179 = tpu.memref_squeeze %178 : memref<1x336x128xbf16, #tpu.memory_space<vmem>> -> memref<336x128xbf16, #tpu.memory_space<vmem>>
      %180 = tpu.memref_slice %arg9[%0] : memref<2x!tpu.dma_semaphore, #tpu.memory_space<semaphore_mem>> -> memref<1x!tpu.dma_semaphore, #tpu.memory_space<semaphore_mem>>
      %181 = tpu.memref_squeeze %180 : memref<1x!tpu.dma_semaphore, #tpu.memory_space<semaphore_mem>> -> memref<!tpu.dma_semaphore, #tpu.memory_space<semaphore_mem>>
      tpu.enqueue_dma source(%177 : memref<336x128xbf16, #tpu.memory_space<any>>) target(%179 : memref<336x128xbf16, #tpu.memory_space<vmem>>) target_semaphore(%181 : memref<!tpu.dma_semaphore, #tpu.memory_space<semaphore_mem>>)
    } else {
    }
    %c528_i32 = arith.constant 528 : i32
    %4 = arith.muli %arg0, %c528_i32 : i32
    %c192_i32 = arith.constant 192 : i32
    %5 = arith.muli %arg1, %c192_i32 : i32
    %6 = arith.addi %4, %5 : i32
    %7 = tpu.assume_multiple %6, 8 : i32
    %c0_i32_1 = arith.constant 0 : i32
    %8 = tpu.memref_slice %arg2[%7, %c0_i32_1] : memref<1056x128xbf16, #tpu.memory_space<any>> -> memref<336x128xbf16, #tpu.memory_space<any>>
    %c0_i32_2 = arith.constant 0 : i32
    %c0_i32_3 = arith.constant 0 : i32
    %9 = tpu.memref_slice %arg8[%0, %c0_i32_2, %c0_i32_3] : memref<2x336x128xbf16, #tpu.memory_space<vmem>> -> memref<1x336x128xbf16, #tpu.memory_space<vmem>>
    %10 = tpu.memref_squeeze %9 : memref<1x336x128xbf16, #tpu.memory_space<vmem>> -> memref<336x128xbf16, #tpu.memory_space<vmem>>
    %11 = tpu.memref_slice %arg9[%0] : memref<2x!tpu.dma_semaphore, #tpu.memory_space<semaphore_mem>> -> memref<1x!tpu.dma_semaphore, #tpu.memory_space<semaphore_mem>>
    %12 = tpu.memref_squeeze %11 : memref<1x!tpu.dma_semaphore, #tpu.memory_space<semaphore_mem>> -> memref<!tpu.dma_semaphore, #tpu.memory_space<semaphore_mem>>
    tpu.wait_dma2 semaphore(%12 : memref<!tpu.dma_semaphore, #tpu.memory_space<semaphore_mem>>) src(%8 : memref<336x128xbf16, #tpu.memory_space<any>>) dst(%10 : memref<336x128xbf16, #tpu.memory_space<vmem>>)
    %c1_i32 = arith.constant 1 : i32
    %13 = arith.addi %arg1, %c1_i32 : i32
    %c2_i32_4 = arith.constant 2 : i32
    %14 = arith.cmpi slt, %13, %c2_i32_4 : i32
    %15 = arith.extui %14 : i1 to i32
    %c0_i32_5 = arith.constant 0 : i32
    %16 = arith.cmpi ne, %15, %c0_i32_5 : i32
    scf.if %16 {
      %c1_i32_166 = arith.constant 1 : i32
      %173 = arith.addi %arg1, %c1_i32_166 : i32
      %c1_i32_167 = arith.constant 1 : i32
      %174 = arith.subi %c1_i32_167, %0 : i32
      %c528_i32_168 = arith.constant 528 : i32
      %175 = arith.muli %arg0, %c528_i32_168 : i32
      %c192_i32_169 = arith.constant 192 : i32
      %176 = arith.muli %173, %c192_i32_169 : i32
      %177 = arith.addi %175, %176 : i32
      %178 = tpu.assume_multiple %177, 8 : i32
      %c0_i32_170 = arith.constant 0 : i32
      %179 = tpu.memref_slice %arg2[%178, %c0_i32_170] : memref<1056x128xbf16, #tpu.memory_space<any>> -> memref<336x128xbf16, #tpu.memory_space<any>>
      %c0_i32_171 = arith.constant 0 : i32
      %c0_i32_172 = arith.constant 0 : i32
      %180 = tpu.memref_slice %arg8[%174, %c0_i32_171, %c0_i32_172] : memref<2x336x128xbf16, #tpu.memory_space<vmem>> -> memref<1x336x128xbf16, #tpu.memory_space<vmem>>
      %181 = tpu.memref_squeeze %180 : memref<1x336x128xbf16, #tpu.memory_space<vmem>> -> memref<336x128xbf16, #tpu.memory_space<vmem>>
      %182 = tpu.memref_slice %arg9[%174] : memref<2x!tpu.dma_semaphore, #tpu.memory_space<semaphore_mem>> -> memref<1x!tpu.dma_semaphore, #tpu.memory_space<semaphore_mem>>
      %183 = tpu.memref_squeeze %182 : memref<1x!tpu.dma_semaphore, #tpu.memory_space<semaphore_mem>> -> memref<!tpu.dma_semaphore, #tpu.memory_space<semaphore_mem>>
      tpu.enqueue_dma source(%179 : memref<336x128xbf16, #tpu.memory_space<any>>) target(%181 : memref<336x128xbf16, #tpu.memory_space<vmem>>) target_semaphore(%183 : memref<!tpu.dma_semaphore, #tpu.memory_space<semaphore_mem>>)
    } else {
    }
    %c0_i32_6 = arith.constant 0 : i32
    %c0_i32_7 = arith.constant 0 : i32
    %17 = tpu.memref_slice %arg8[%0, %c0_i32_6, %c0_i32_7] : memref<2x336x128xbf16, #tpu.memory_space<vmem>> -> memref<1x336x128xbf16, #tpu.memory_space<vmem>>
    %18 = tpu.memref_squeeze %17 : memref<1x336x128xbf16, #tpu.memory_space<vmem>> -> memref<336x128xbf16, #tpu.memory_space<vmem>>
    %c72 = arith.constant 72 : index
    %c0 = arith.constant 0 : index
    %19 = vector.load %18[%c72, %c0] : memref<336x128xbf16, #tpu.memory_space<vmem>>, vector<192x128xbf16>
    %c0_8 = arith.constant 0 : index
    %c0_9 = arith.constant 0 : index
    %20 = vector.load %arg4[%c0_8, %c0_9] : memref<128x128xbf16, #tpu.memory_space<vmem>>, vector<128x128xbf16>
    %cst = arith.constant dense<0.000000e+00> : vector<192x128xf32>
    %21 = tpu.matmul %19, %20, %cst {dimension_numbers = #tpu.dot_dimension_numbers<[1], [0], [0], [1], [0, 0, 1, 1], [], []>} : vector<192x128xbf16>, vector<128x128xbf16>, vector<192x128xf32> -> vector<192x128xf32>
    %cst_10 = arith.constant 0.000000e+00 : f32
    %22 = vector.broadcast %cst_10 : f32 to vector<192x128xf32>
    %23 = arith.maximumf %21, %22 : vector<192x128xf32>
    %24 = arith.truncf %23 : vector<192x128xf32> to vector<192x128xbf16>
    %c0_11 = arith.constant 0 : index
    %c0_12 = arith.constant 0 : index
    %25 = vector.load %arg6[%c0_11, %c0_12] : memref<384x128xbf16, #tpu.memory_space<vmem>>, vector<128x128xbf16>
    %cst_13 = arith.constant dense<0.000000e+00> : vector<192x128xf32>
    %26 = tpu.matmul %24, %25, %cst_13 {dimension_numbers = #tpu.dot_dimension_numbers<[1], [0], [0], [1], [0, 0, 1, 1], [], []>} : vector<192x128xbf16>, vector<128x128xbf16>, vector<192x128xf32> -> vector<192x128xf32>
    %c0_i32_14 = arith.constant 0 : i32
    %c0_i32_15 = arith.constant 0 : i32
    %27 = tpu.memref_slice %arg8[%0, %c0_i32_14, %c0_i32_15] : memref<2x336x128xbf16, #tpu.memory_space<vmem>> -> memref<1x336x128xbf16, #tpu.memory_space<vmem>>
    %28 = tpu.memref_squeeze %27 : memref<1x336x128xbf16, #tpu.memory_space<vmem>> -> memref<336x128xbf16, #tpu.memory_space<vmem>>
    %c47 = arith.constant 47 : index
    %c0_16 = arith.constant 0 : index
    %29 = vector.load %28[%c47, %c0_16] : memref<336x128xbf16, #tpu.memory_space<vmem>>, vector<192x128xbf16>
    %c0_17 = arith.constant 0 : index
    %c0_18 = arith.constant 0 : index
    %c0_19 = arith.constant 0 : index
    %c0_20 = arith.constant 0 : index
    %30 = vector.load %arg5[%c0_17, %c0_18, %c0_19, %c0_20] : memref<2x9x128x128xbf16, #tpu.memory_space<vmem>>, vector<1x1x128x128xbf16>
    %31 = vector.shape_cast %30 : vector<1x1x128x128xbf16> to vector<128x128xbf16>
    %cst_21 = arith.constant dense<0.000000e+00> : vector<192x128xf32>
    %32 = tpu.matmul %29, %31, %cst_21 {dimension_numbers = #tpu.dot_dimension_numbers<[1], [0], [0], [1], [0, 0, 1, 1], [], []>} : vector<192x128xbf16>, vector<128x128xbf16>, vector<192x128xf32> -> vector<192x128xf32>
    %c0_i32_22 = arith.constant 0 : i32
    %c0_i32_23 = arith.constant 0 : i32
    %33 = tpu.memref_slice %arg8[%0, %c0_i32_22, %c0_i32_23] : memref<2x336x128xbf16, #tpu.memory_space<vmem>> -> memref<1x336x128xbf16, #tpu.memory_space<vmem>>
    %34 = tpu.memref_squeeze %33 : memref<1x336x128xbf16, #tpu.memory_space<vmem>> -> memref<336x128xbf16, #tpu.memory_space<vmem>>
    %c48 = arith.constant 48 : index
    %c0_24 = arith.constant 0 : index
    %35 = vector.load %34[%c48, %c0_24] : memref<336x128xbf16, #tpu.memory_space<vmem>>, vector<192x128xbf16>
    %c0_25 = arith.constant 0 : index
    %c1 = arith.constant 1 : index
    %c0_26 = arith.constant 0 : index
    %c0_27 = arith.constant 0 : index
    %36 = vector.load %arg5[%c0_25, %c1, %c0_26, %c0_27] : memref<2x9x128x128xbf16, #tpu.memory_space<vmem>>, vector<1x1x128x128xbf16>
    %37 = vector.shape_cast %36 : vector<1x1x128x128xbf16> to vector<128x128xbf16>
    %cst_28 = arith.constant dense<0.000000e+00> : vector<192x128xf32>
    %38 = tpu.matmul %35, %37, %cst_28 {dimension_numbers = #tpu.dot_dimension_numbers<[1], [0], [0], [1], [0, 0, 1, 1], [], []>} : vector<192x128xbf16>, vector<128x128xbf16>, vector<192x128xf32> -> vector<192x128xf32>
    %39 = arith.addf %32, %38 : vector<192x128xf32>
    %c0_i32_29 = arith.constant 0 : i32
    %c0_i32_30 = arith.constant 0 : i32
    %40 = tpu.memref_slice %arg8[%0, %c0_i32_29, %c0_i32_30] : memref<2x336x128xbf16, #tpu.memory_space<vmem>> -> memref<1x336x128xbf16, #tpu.memory_space<vmem>>
    %41 = tpu.memref_squeeze %40 : memref<1x336x128xbf16, #tpu.memory_space<vmem>> -> memref<336x128xbf16, #tpu.memory_space<vmem>>
    %c49 = arith.constant 49 : index
    %c0_31 = arith.constant 0 : index
    %42 = vector.load %41[%c49, %c0_31] : memref<336x128xbf16, #tpu.memory_space<vmem>>, vector<192x128xbf16>
    %c0_32 = arith.constant 0 : index
    %c2 = arith.constant 2 : index
    %c0_33 = arith.constant 0 : index
    %c0_34 = arith.constant 0 : index
    %43 = vector.load %arg5[%c0_32, %c2, %c0_33, %c0_34] : memref<2x9x128x128xbf16, #tpu.memory_space<vmem>>, vector<1x1x128x128xbf16>
    %44 = vector.shape_cast %43 : vector<1x1x128x128xbf16> to vector<128x128xbf16>
    %cst_35 = arith.constant dense<0.000000e+00> : vector<192x128xf32>
    %45 = tpu.matmul %42, %44, %cst_35 {dimension_numbers = #tpu.dot_dimension_numbers<[1], [0], [0], [1], [0, 0, 1, 1], [], []>} : vector<192x128xbf16>, vector<128x128xbf16>, vector<192x128xf32> -> vector<192x128xf32>
    %46 = arith.addf %39, %45 : vector<192x128xf32>
    %c0_i32_36 = arith.constant 0 : i32
    %c0_i32_37 = arith.constant 0 : i32
    %47 = tpu.memref_slice %arg8[%0, %c0_i32_36, %c0_i32_37] : memref<2x336x128xbf16, #tpu.memory_space<vmem>> -> memref<1x336x128xbf16, #tpu.memory_space<vmem>>
    %48 = tpu.memref_squeeze %47 : memref<1x336x128xbf16, #tpu.memory_space<vmem>> -> memref<336x128xbf16, #tpu.memory_space<vmem>>
    %c71 = arith.constant 71 : index
    %c0_38 = arith.constant 0 : index
    %49 = vector.load %48[%c71, %c0_38] : memref<336x128xbf16, #tpu.memory_space<vmem>>, vector<192x128xbf16>
    %c0_39 = arith.constant 0 : index
    %c3 = arith.constant 3 : index
    %c0_40 = arith.constant 0 : index
    %c0_41 = arith.constant 0 : index
    %50 = vector.load %arg5[%c0_39, %c3, %c0_40, %c0_41] : memref<2x9x128x128xbf16, #tpu.memory_space<vmem>>, vector<1x1x128x128xbf16>
    %51 = vector.shape_cast %50 : vector<1x1x128x128xbf16> to vector<128x128xbf16>
    %cst_42 = arith.constant dense<0.000000e+00> : vector<192x128xf32>
    %52 = tpu.matmul %49, %51, %cst_42 {dimension_numbers = #tpu.dot_dimension_numbers<[1], [0], [0], [1], [0, 0, 1, 1], [], []>} : vector<192x128xbf16>, vector<128x128xbf16>, vector<192x128xf32> -> vector<192x128xf32>
    %53 = arith.addf %46, %52 : vector<192x128xf32>
    %c0_i32_43 = arith.constant 0 : i32
    %c0_i32_44 = arith.constant 0 : i32
    %54 = tpu.memref_slice %arg8[%0, %c0_i32_43, %c0_i32_44] : memref<2x336x128xbf16, #tpu.memory_space<vmem>> -> memref<1x336x128xbf16, #tpu.memory_space<vmem>>
    %55 = tpu.memref_squeeze %54 : memref<1x336x128xbf16, #tpu.memory_space<vmem>> -> memref<336x128xbf16, #tpu.memory_space<vmem>>
    %c72_45 = arith.constant 72 : index
    %c0_46 = arith.constant 0 : index
    %56 = vector.load %55[%c72_45, %c0_46] : memref<336x128xbf16, #tpu.memory_space<vmem>>, vector<192x128xbf16>
    %c0_47 = arith.constant 0 : index
    %c4 = arith.constant 4 : index
    %c0_48 = arith.constant 0 : index
    %c0_49 = arith.constant 0 : index
    %57 = vector.load %arg5[%c0_47, %c4, %c0_48, %c0_49] : memref<2x9x128x128xbf16, #tpu.memory_space<vmem>>, vector<1x1x128x128xbf16>
    %58 = vector.shape_cast %57 : vector<1x1x128x128xbf16> to vector<128x128xbf16>
    %cst_50 = arith.constant dense<0.000000e+00> : vector<192x128xf32>
    %59 = tpu.matmul %56, %58, %cst_50 {dimension_numbers = #tpu.dot_dimension_numbers<[1], [0], [0], [1], [0, 0, 1, 1], [], []>} : vector<192x128xbf16>, vector<128x128xbf16>, vector<192x128xf32> -> vector<192x128xf32>
    %60 = arith.addf %53, %59 : vector<192x128xf32>
    %c0_i32_51 = arith.constant 0 : i32
    %c0_i32_52 = arith.constant 0 : i32
    %61 = tpu.memref_slice %arg8[%0, %c0_i32_51, %c0_i32_52] : memref<2x336x128xbf16, #tpu.memory_space<vmem>> -> memref<1x336x128xbf16, #tpu.memory_space<vmem>>
    %62 = tpu.memref_squeeze %61 : memref<1x336x128xbf16, #tpu.memory_space<vmem>> -> memref<336x128xbf16, #tpu.memory_space<vmem>>
    %c73 = arith.constant 73 : index
    %c0_53 = arith.constant 0 : index
    %63 = vector.load %62[%c73, %c0_53] : memref<336x128xbf16, #tpu.memory_space<vmem>>, vector<192x128xbf16>
    %c0_54 = arith.constant 0 : index
    %c5 = arith.constant 5 : index
    %c0_55 = arith.constant 0 : index
    %c0_56 = arith.constant 0 : index
    %64 = vector.load %arg5[%c0_54, %c5, %c0_55, %c0_56] : memref<2x9x128x128xbf16, #tpu.memory_space<vmem>>, vector<1x1x128x128xbf16>
    %65 = vector.shape_cast %64 : vector<1x1x128x128xbf16> to vector<128x128xbf16>
    %cst_57 = arith.constant dense<0.000000e+00> : vector<192x128xf32>
    %66 = tpu.matmul %63, %65, %cst_57 {dimension_numbers = #tpu.dot_dimension_numbers<[1], [0], [0], [1], [0, 0, 1, 1], [], []>} : vector<192x128xbf16>, vector<128x128xbf16>, vector<192x128xf32> -> vector<192x128xf32>
    %67 = arith.addf %60, %66 : vector<192x128xf32>
    %c0_i32_58 = arith.constant 0 : i32
    %c0_i32_59 = arith.constant 0 : i32
    %68 = tpu.memref_slice %arg8[%0, %c0_i32_58, %c0_i32_59] : memref<2x336x128xbf16, #tpu.memory_space<vmem>> -> memref<1x336x128xbf16, #tpu.memory_space<vmem>>
    %69 = tpu.memref_squeeze %68 : memref<1x336x128xbf16, #tpu.memory_space<vmem>> -> memref<336x128xbf16, #tpu.memory_space<vmem>>
    %c95 = arith.constant 95 : index
    %c0_60 = arith.constant 0 : index
    %70 = vector.load %69[%c95, %c0_60] : memref<336x128xbf16, #tpu.memory_space<vmem>>, vector<192x128xbf16>
    %c0_61 = arith.constant 0 : index
    %c6 = arith.constant 6 : index
    %c0_62 = arith.constant 0 : index
    %c0_63 = arith.constant 0 : index
    %71 = vector.load %arg5[%c0_61, %c6, %c0_62, %c0_63] : memref<2x9x128x128xbf16, #tpu.memory_space<vmem>>, vector<1x1x128x128xbf16>
    %72 = vector.shape_cast %71 : vector<1x1x128x128xbf16> to vector<128x128xbf16>
    %cst_64 = arith.constant dense<0.000000e+00> : vector<192x128xf32>
    %73 = tpu.matmul %70, %72, %cst_64 {dimension_numbers = #tpu.dot_dimension_numbers<[1], [0], [0], [1], [0, 0, 1, 1], [], []>} : vector<192x128xbf16>, vector<128x128xbf16>, vector<192x128xf32> -> vector<192x128xf32>
    %74 = arith.addf %67, %73 : vector<192x128xf32>
    %c0_i32_65 = arith.constant 0 : i32
    %c0_i32_66 = arith.constant 0 : i32
    %75 = tpu.memref_slice %arg8[%0, %c0_i32_65, %c0_i32_66] : memref<2x336x128xbf16, #tpu.memory_space<vmem>> -> memref<1x336x128xbf16, #tpu.memory_space<vmem>>
    %76 = tpu.memref_squeeze %75 : memref<1x336x128xbf16, #tpu.memory_space<vmem>> -> memref<336x128xbf16, #tpu.memory_space<vmem>>
    %c96 = arith.constant 96 : index
    %c0_67 = arith.constant 0 : index
    %77 = vector.load %76[%c96, %c0_67] : memref<336x128xbf16, #tpu.memory_space<vmem>>, vector<192x128xbf16>
    %c0_68 = arith.constant 0 : index
    %c7 = arith.constant 7 : index
    %c0_69 = arith.constant 0 : index
    %c0_70 = arith.constant 0 : index
    %78 = vector.load %arg5[%c0_68, %c7, %c0_69, %c0_70] : memref<2x9x128x128xbf16, #tpu.memory_space<vmem>>, vector<1x1x128x128xbf16>
    %79 = vector.shape_cast %78 : vector<1x1x128x128xbf16> to vector<128x128xbf16>
    %cst_71 = arith.constant dense<0.000000e+00> : vector<192x128xf32>
    %80 = tpu.matmul %77, %79, %cst_71 {dimension_numbers = #tpu.dot_dimension_numbers<[1], [0], [0], [1], [0, 0, 1, 1], [], []>} : vector<192x128xbf16>, vector<128x128xbf16>, vector<192x128xf32> -> vector<192x128xf32>
    %81 = arith.addf %74, %80 : vector<192x128xf32>
    %c0_i32_72 = arith.constant 0 : i32
    %c0_i32_73 = arith.constant 0 : i32
    %82 = tpu.memref_slice %arg8[%0, %c0_i32_72, %c0_i32_73] : memref<2x336x128xbf16, #tpu.memory_space<vmem>> -> memref<1x336x128xbf16, #tpu.memory_space<vmem>>
    %83 = tpu.memref_squeeze %82 : memref<1x336x128xbf16, #tpu.memory_space<vmem>> -> memref<336x128xbf16, #tpu.memory_space<vmem>>
    %c97 = arith.constant 97 : index
    %c0_74 = arith.constant 0 : index
    %84 = vector.load %83[%c97, %c0_74] : memref<336x128xbf16, #tpu.memory_space<vmem>>, vector<192x128xbf16>
    %c0_75 = arith.constant 0 : index
    %c8 = arith.constant 8 : index
    %c0_76 = arith.constant 0 : index
    %c0_77 = arith.constant 0 : index
    %85 = vector.load %arg5[%c0_75, %c8, %c0_76, %c0_77] : memref<2x9x128x128xbf16, #tpu.memory_space<vmem>>, vector<1x1x128x128xbf16>
    %86 = vector.shape_cast %85 : vector<1x1x128x128xbf16> to vector<128x128xbf16>
    %cst_78 = arith.constant dense<0.000000e+00> : vector<192x128xf32>
    %87 = tpu.matmul %84, %86, %cst_78 {dimension_numbers = #tpu.dot_dimension_numbers<[1], [0], [0], [1], [0, 0, 1, 1], [], []>} : vector<192x128xbf16>, vector<128x128xbf16>, vector<192x128xf32> -> vector<192x128xf32>
    %88 = arith.addf %81, %87 : vector<192x128xf32>
    %cst_79 = arith.constant 0.000000e+00 : f32
    %89 = vector.broadcast %cst_79 : f32 to vector<192x128xf32>
    %90 = arith.maximumf %88, %89 : vector<192x128xf32>
    %91 = arith.truncf %90 : vector<192x128xf32> to vector<192x128xbf16>
    %c128 = arith.constant 128 : index
    %c0_80 = arith.constant 0 : index
    %92 = vector.load %arg6[%c128, %c0_80] : memref<384x128xbf16, #tpu.memory_space<vmem>>, vector<128x128xbf16>
    %cst_81 = arith.constant dense<0.000000e+00> : vector<192x128xf32>
    %93 = tpu.matmul %91, %92, %cst_81 {dimension_numbers = #tpu.dot_dimension_numbers<[1], [0], [0], [1], [0, 0, 1, 1], [], []>} : vector<192x128xbf16>, vector<128x128xbf16>, vector<192x128xf32> -> vector<192x128xf32>
    %94 = arith.addf %26, %93 : vector<192x128xf32>
    %c0_i32_82 = arith.constant 0 : i32
    %c0_i32_83 = arith.constant 0 : i32
    %95 = tpu.memref_slice %arg8[%0, %c0_i32_82, %c0_i32_83] : memref<2x336x128xbf16, #tpu.memory_space<vmem>> -> memref<1x336x128xbf16, #tpu.memory_space<vmem>>
    %96 = tpu.memref_squeeze %95 : memref<1x336x128xbf16, #tpu.memory_space<vmem>> -> memref<336x128xbf16, #tpu.memory_space<vmem>>
    %c22 = arith.constant 22 : index
    %c0_84 = arith.constant 0 : index
    %97 = vector.load %96[%c22, %c0_84] : memref<336x128xbf16, #tpu.memory_space<vmem>>, vector<192x128xbf16>
    %c1_85 = arith.constant 1 : index
    %c0_86 = arith.constant 0 : index
    %c0_87 = arith.constant 0 : index
    %c0_88 = arith.constant 0 : index
    %98 = vector.load %arg5[%c1_85, %c0_86, %c0_87, %c0_88] : memref<2x9x128x128xbf16, #tpu.memory_space<vmem>>, vector<1x1x128x128xbf16>
    %99 = vector.shape_cast %98 : vector<1x1x128x128xbf16> to vector<128x128xbf16>
    %cst_89 = arith.constant dense<0.000000e+00> : vector<192x128xf32>
    %100 = tpu.matmul %97, %99, %cst_89 {dimension_numbers = #tpu.dot_dimension_numbers<[1], [0], [0], [1], [0, 0, 1, 1], [], []>} : vector<192x128xbf16>, vector<128x128xbf16>, vector<192x128xf32> -> vector<192x128xf32>
    %c0_i32_90 = arith.constant 0 : i32
    %c0_i32_91 = arith.constant 0 : i32
    %101 = tpu.memref_slice %arg8[%0, %c0_i32_90, %c0_i32_91] : memref<2x336x128xbf16, #tpu.memory_space<vmem>> -> memref<1x336x128xbf16, #tpu.memory_space<vmem>>
    %102 = tpu.memref_squeeze %101 : memref<1x336x128xbf16, #tpu.memory_space<vmem>> -> memref<336x128xbf16, #tpu.memory_space<vmem>>
    %c24 = arith.constant 24 : index
    %c0_92 = arith.constant 0 : index
    %103 = vector.load %102[%c24, %c0_92] : memref<336x128xbf16, #tpu.memory_space<vmem>>, vector<192x128xbf16>
    %c1_93 = arith.constant 1 : index
    %c1_94 = arith.constant 1 : index
    %c0_95 = arith.constant 0 : index
    %c0_96 = arith.constant 0 : index
    %104 = vector.load %arg5[%c1_93, %c1_94, %c0_95, %c0_96] : memref<2x9x128x128xbf16, #tpu.memory_space<vmem>>, vector<1x1x128x128xbf16>
    %105 = vector.shape_cast %104 : vector<1x1x128x128xbf16> to vector<128x128xbf16>
    %cst_97 = arith.constant dense<0.000000e+00> : vector<192x128xf32>
    %106 = tpu.matmul %103, %105, %cst_97 {dimension_numbers = #tpu.dot_dimension_numbers<[1], [0], [0], [1], [0, 0, 1, 1], [], []>} : vector<192x128xbf16>, vector<128x128xbf16>, vector<192x128xf32> -> vector<192x128xf32>
    %107 = arith.addf %100, %106 : vector<192x128xf32>
    %c0_i32_98 = arith.constant 0 : i32
    %c0_i32_99 = arith.constant 0 : i32
    %108 = tpu.memref_slice %arg8[%0, %c0_i32_98, %c0_i32_99] : memref<2x336x128xbf16, #tpu.memory_space<vmem>> -> memref<1x336x128xbf16, #tpu.memory_space<vmem>>
    %109 = tpu.memref_squeeze %108 : memref<1x336x128xbf16, #tpu.memory_space<vmem>> -> memref<336x128xbf16, #tpu.memory_space<vmem>>
    %c26 = arith.constant 26 : index
    %c0_100 = arith.constant 0 : index
    %110 = vector.load %109[%c26, %c0_100] : memref<336x128xbf16, #tpu.memory_space<vmem>>, vector<192x128xbf16>
    %c1_101 = arith.constant 1 : index
    %c2_102 = arith.constant 2 : index
    %c0_103 = arith.constant 0 : index
    %c0_104 = arith.constant 0 : index
    %111 = vector.load %arg5[%c1_101, %c2_102, %c0_103, %c0_104] : memref<2x9x128x128xbf16, #tpu.memory_space<vmem>>, vector<1x1x128x128xbf16>
    %112 = vector.shape_cast %111 : vector<1x1x128x128xbf16> to vector<128x128xbf16>
    %cst_105 = arith.constant dense<0.000000e+00> : vector<192x128xf32>
    %113 = tpu.matmul %110, %112, %cst_105 {dimension_numbers = #tpu.dot_dimension_numbers<[1], [0], [0], [1], [0, 0, 1, 1], [], []>} : vector<192x128xbf16>, vector<128x128xbf16>, vector<192x128xf32> -> vector<192x128xf32>
    %114 = arith.addf %107, %113 : vector<192x128xf32>
    %c0_i32_106 = arith.constant 0 : i32
    %c0_i32_107 = arith.constant 0 : i32
    %115 = tpu.memref_slice %arg8[%0, %c0_i32_106, %c0_i32_107] : memref<2x336x128xbf16, #tpu.memory_space<vmem>> -> memref<1x336x128xbf16, #tpu.memory_space<vmem>>
    %116 = tpu.memref_squeeze %115 : memref<1x336x128xbf16, #tpu.memory_space<vmem>> -> memref<336x128xbf16, #tpu.memory_space<vmem>>
    %c70 = arith.constant 70 : index
    %c0_108 = arith.constant 0 : index
    %117 = vector.load %116[%c70, %c0_108] : memref<336x128xbf16, #tpu.memory_space<vmem>>, vector<192x128xbf16>
    %c1_109 = arith.constant 1 : index
    %c3_110 = arith.constant 3 : index
    %c0_111 = arith.constant 0 : index
    %c0_112 = arith.constant 0 : index
    %118 = vector.load %arg5[%c1_109, %c3_110, %c0_111, %c0_112] : memref<2x9x128x128xbf16, #tpu.memory_space<vmem>>, vector<1x1x128x128xbf16>
    %119 = vector.shape_cast %118 : vector<1x1x128x128xbf16> to vector<128x128xbf16>
    %cst_113 = arith.constant dense<0.000000e+00> : vector<192x128xf32>
    %120 = tpu.matmul %117, %119, %cst_113 {dimension_numbers = #tpu.dot_dimension_numbers<[1], [0], [0], [1], [0, 0, 1, 1], [], []>} : vector<192x128xbf16>, vector<128x128xbf16>, vector<192x128xf32> -> vector<192x128xf32>
    %121 = arith.addf %114, %120 : vector<192x128xf32>
    %c0_i32_114 = arith.constant 0 : i32
    %c0_i32_115 = arith.constant 0 : i32
    %122 = tpu.memref_slice %arg8[%0, %c0_i32_114, %c0_i32_115] : memref<2x336x128xbf16, #tpu.memory_space<vmem>> -> memref<1x336x128xbf16, #tpu.memory_space<vmem>>
    %123 = tpu.memref_squeeze %122 : memref<1x336x128xbf16, #tpu.memory_space<vmem>> -> memref<336x128xbf16, #tpu.memory_space<vmem>>
    %c72_116 = arith.constant 72 : index
    %c0_117 = arith.constant 0 : index
    %124 = vector.load %123[%c72_116, %c0_117] : memref<336x128xbf16, #tpu.memory_space<vmem>>, vector<192x128xbf16>
    %c1_118 = arith.constant 1 : index
    %c4_119 = arith.constant 4 : index
    %c0_120 = arith.constant 0 : index
    %c0_121 = arith.constant 0 : index
    %125 = vector.load %arg5[%c1_118, %c4_119, %c0_120, %c0_121] : memref<2x9x128x128xbf16, #tpu.memory_space<vmem>>, vector<1x1x128x128xbf16>
    %126 = vector.shape_cast %125 : vector<1x1x128x128xbf16> to vector<128x128xbf16>
    %cst_122 = arith.constant dense<0.000000e+00> : vector<192x128xf32>
    %127 = tpu.matmul %124, %126, %cst_122 {dimension_numbers = #tpu.dot_dimension_numbers<[1], [0], [0], [1], [0, 0, 1, 1], [], []>} : vector<192x128xbf16>, vector<128x128xbf16>, vector<192x128xf32> -> vector<192x128xf32>
    %128 = arith.addf %121, %127 : vector<192x128xf32>
    %c0_i32_123 = arith.constant 0 : i32
    %c0_i32_124 = arith.constant 0 : i32
    %129 = tpu.memref_slice %arg8[%0, %c0_i32_123, %c0_i32_124] : memref<2x336x128xbf16, #tpu.memory_space<vmem>> -> memref<1x336x128xbf16, #tpu.memory_space<vmem>>
    %130 = tpu.memref_squeeze %129 : memref<1x336x128xbf16, #tpu.memory_space<vmem>> -> memref<336x128xbf16, #tpu.memory_space<vmem>>
    %c74 = arith.constant 74 : index
    %c0_125 = arith.constant 0 : index
    %131 = vector.load %130[%c74, %c0_125] : memref<336x128xbf16, #tpu.memory_space<vmem>>, vector<192x128xbf16>
    %c1_126 = arith.constant 1 : index
    %c5_127 = arith.constant 5 : index
    %c0_128 = arith.constant 0 : index
    %c0_129 = arith.constant 0 : index
    %132 = vector.load %arg5[%c1_126, %c5_127, %c0_128, %c0_129] : memref<2x9x128x128xbf16, #tpu.memory_space<vmem>>, vector<1x1x128x128xbf16>
    %133 = vector.shape_cast %132 : vector<1x1x128x128xbf16> to vector<128x128xbf16>
    %cst_130 = arith.constant dense<0.000000e+00> : vector<192x128xf32>
    %134 = tpu.matmul %131, %133, %cst_130 {dimension_numbers = #tpu.dot_dimension_numbers<[1], [0], [0], [1], [0, 0, 1, 1], [], []>} : vector<192x128xbf16>, vector<128x128xbf16>, vector<192x128xf32> -> vector<192x128xf32>
    %135 = arith.addf %128, %134 : vector<192x128xf32>
    %c0_i32_131 = arith.constant 0 : i32
    %c0_i32_132 = arith.constant 0 : i32
    %136 = tpu.memref_slice %arg8[%0, %c0_i32_131, %c0_i32_132] : memref<2x336x128xbf16, #tpu.memory_space<vmem>> -> memref<1x336x128xbf16, #tpu.memory_space<vmem>>
    %137 = tpu.memref_squeeze %136 : memref<1x336x128xbf16, #tpu.memory_space<vmem>> -> memref<336x128xbf16, #tpu.memory_space<vmem>>
    %c118 = arith.constant 118 : index
    %c0_133 = arith.constant 0 : index
    %138 = vector.load %137[%c118, %c0_133] : memref<336x128xbf16, #tpu.memory_space<vmem>>, vector<192x128xbf16>
    %c1_134 = arith.constant 1 : index
    %c6_135 = arith.constant 6 : index
    %c0_136 = arith.constant 0 : index
    %c0_137 = arith.constant 0 : index
    %139 = vector.load %arg5[%c1_134, %c6_135, %c0_136, %c0_137] : memref<2x9x128x128xbf16, #tpu.memory_space<vmem>>, vector<1x1x128x128xbf16>
    %140 = vector.shape_cast %139 : vector<1x1x128x128xbf16> to vector<128x128xbf16>
    %cst_138 = arith.constant dense<0.000000e+00> : vector<192x128xf32>
    %141 = tpu.matmul %138, %140, %cst_138 {dimension_numbers = #tpu.dot_dimension_numbers<[1], [0], [0], [1], [0, 0, 1, 1], [], []>} : vector<192x128xbf16>, vector<128x128xbf16>, vector<192x128xf32> -> vector<192x128xf32>
    %142 = arith.addf %135, %141 : vector<192x128xf32>
    %c0_i32_139 = arith.constant 0 : i32
    %c0_i32_140 = arith.constant 0 : i32
    %143 = tpu.memref_slice %arg8[%0, %c0_i32_139, %c0_i32_140] : memref<2x336x128xbf16, #tpu.memory_space<vmem>> -> memref<1x336x128xbf16, #tpu.memory_space<vmem>>
    %144 = tpu.memref_squeeze %143 : memref<1x336x128xbf16, #tpu.memory_space<vmem>> -> memref<336x128xbf16, #tpu.memory_space<vmem>>
    %c120 = arith.constant 120 : index
    %c0_141 = arith.constant 0 : index
    %145 = vector.load %144[%c120, %c0_141] : memref<336x128xbf16, #tpu.memory_space<vmem>>, vector<192x128xbf16>
    %c1_142 = arith.constant 1 : index
    %c7_143 = arith.constant 7 : index
    %c0_144 = arith.constant 0 : index
    %c0_145 = arith.constant 0 : index
    %146 = vector.load %arg5[%c1_142, %c7_143, %c0_144, %c0_145] : memref<2x9x128x128xbf16, #tpu.memory_space<vmem>>, vector<1x1x128x128xbf16>
    %147 = vector.shape_cast %146 : vector<1x1x128x128xbf16> to vector<128x128xbf16>
    %cst_146 = arith.constant dense<0.000000e+00> : vector<192x128xf32>
    %148 = tpu.matmul %145, %147, %cst_146 {dimension_numbers = #tpu.dot_dimension_numbers<[1], [0], [0], [1], [0, 0, 1, 1], [], []>} : vector<192x128xbf16>, vector<128x128xbf16>, vector<192x128xf32> -> vector<192x128xf32>
    %149 = arith.addf %142, %148 : vector<192x128xf32>
    %c0_i32_147 = arith.constant 0 : i32
    %c0_i32_148 = arith.constant 0 : i32
    %150 = tpu.memref_slice %arg8[%0, %c0_i32_147, %c0_i32_148] : memref<2x336x128xbf16, #tpu.memory_space<vmem>> -> memref<1x336x128xbf16, #tpu.memory_space<vmem>>
    %151 = tpu.memref_squeeze %150 : memref<1x336x128xbf16, #tpu.memory_space<vmem>> -> memref<336x128xbf16, #tpu.memory_space<vmem>>
    %c122 = arith.constant 122 : index
    %c0_149 = arith.constant 0 : index
    %152 = vector.load %151[%c122, %c0_149] : memref<336x128xbf16, #tpu.memory_space<vmem>>, vector<192x128xbf16>
    %c1_150 = arith.constant 1 : index
    %c8_151 = arith.constant 8 : index
    %c0_152 = arith.constant 0 : index
    %c0_153 = arith.constant 0 : index
    %153 = vector.load %arg5[%c1_150, %c8_151, %c0_152, %c0_153] : memref<2x9x128x128xbf16, #tpu.memory_space<vmem>>, vector<1x1x128x128xbf16>
    %154 = vector.shape_cast %153 : vector<1x1x128x128xbf16> to vector<128x128xbf16>
    %cst_154 = arith.constant dense<0.000000e+00> : vector<192x128xf32>
    %155 = tpu.matmul %152, %154, %cst_154 {dimension_numbers = #tpu.dot_dimension_numbers<[1], [0], [0], [1], [0, 0, 1, 1], [], []>} : vector<192x128xbf16>, vector<128x128xbf16>, vector<192x128xf32> -> vector<192x128xf32>
    %156 = arith.addf %149, %155 : vector<192x128xf32>
    %cst_155 = arith.constant 0.000000e+00 : f32
    %157 = vector.broadcast %cst_155 : f32 to vector<192x128xf32>
    %158 = arith.maximumf %156, %157 : vector<192x128xf32>
    %159 = arith.truncf %158 : vector<192x128xf32> to vector<192x128xbf16>
    %c256 = arith.constant 256 : index
    %c0_156 = arith.constant 0 : index
    %160 = vector.load %arg6[%c256, %c0_156] : memref<384x128xbf16, #tpu.memory_space<vmem>>, vector<128x128xbf16>
    %cst_157 = arith.constant dense<0.000000e+00> : vector<192x128xf32>
    %161 = tpu.matmul %159, %160, %cst_157 {dimension_numbers = #tpu.dot_dimension_numbers<[1], [0], [0], [1], [0, 0, 1, 1], [], []>} : vector<192x128xbf16>, vector<128x128xbf16>, vector<192x128xf32> -> vector<192x128xf32>
    %162 = arith.addf %94, %161 : vector<192x128xf32>
    %c0_158 = arith.constant 0 : index
    %c0_159 = arith.constant 0 : index
    %c0_160 = arith.constant 0 : index
    %163 = vector.load %arg3[%c0_158, %c0_159, %c0_160] : memref<1x1x128xf32, #tpu.memory_space<vmem>>, vector<1x1x128xf32>
    %164 = vector.shape_cast %163 : vector<1x1x128xf32> to vector<1x128xf32>
    %165 = vector.broadcast %164 : vector<1x128xf32> to vector<192x128xf32>
    %166 = arith.addf %162, %165 : vector<192x128xf32>
    %cst_161 = arith.constant 0.000000e+00 : f32
    %167 = vector.broadcast %cst_161 : f32 to vector<192x128xf32>
    %168 = arith.maximumf %166, %167 : vector<192x128xf32>
    %169 = arith.truncf %168 : vector<192x128xf32> to vector<192x128xbf16>
    %c0_162 = arith.constant 0 : index
    %c0_163 = arith.constant 0 : index
    %c0_164 = arith.constant 0 : index
    %c0_165 = arith.constant 0 : index
    %170 = vector.load %arg7[%c0_162, %c0_163, %c0_164, %c0_165] : memref<1x1x192x128xbf16, #tpu.memory_space<vmem>>, vector<1x1x192x128xbf16>
    %171 = vector.shape_cast %170 : vector<1x1x192x128xbf16> to vector<192x128xbf16>
    %172 = vector.shape_cast %169 : vector<192x128xbf16> to vector<1x1x192x128xbf16>
    tpu.vector_store %arg7[%c0_162, %c0_163, %c0_164, %c0_165], %172 {strides = array<i32>} : memref<1x1x192x128xbf16, #tpu.memory_space<vmem>>, vector<1x1x192x128xbf16>,
    return
  }
  func.func @transform_1(%arg0: i32, %arg1: i32) -> (i32, i32, i32) {
    %c0_i32 = arith.constant 0 : i32
    %c0_i32_0 = arith.constant 0 : i32
    %c0_i32_1 = arith.constant 0 : i32
    return %arg0, %c0_i32, %c0_i32_0 : i32, i32, i32
  }
  func.func @transform_2(%arg0: i32, %arg1: i32) -> (i32, i32) {
    %c0_i32 = arith.constant 0 : i32
    %c0_i32_0 = arith.constant 0 : i32
    %c0_i32_1 = arith.constant 0 : i32
    return %c0_i32, %c0_i32_0 : i32, i32
  }
  func.func @transform_3(%arg0: i32, %arg1: i32) -> (i32, i32, i32, i32) {
    %c0_i32 = arith.constant 0 : i32
    %c0_i32_0 = arith.constant 0 : i32
    %c0_i32_1 = arith.constant 0 : i32
    %c0_i32_2 = arith.constant 0 : i32
    %c0_i32_3 = arith.constant 0 : i32
    return %c0_i32, %c0_i32_0, %c0_i32_1, %c0_i32_2 : i32, i32, i32, i32
  }
  func.func @transform_4(%arg0: i32, %arg1: i32) -> (i32, i32) {
    %c0_i32 = arith.constant 0 : i32
    %c0_i32_0 = arith.constant 0 : i32
    %c0_i32_1 = arith.constant 0 : i32
    return %c0_i32, %c0_i32_0 : i32, i32
  }
  func.func @transform_5(%arg0: i32, %arg1: i32) -> (i32, i32, i32, i32) {
    %c0_i32 = arith.constant 0 : i32
    %c0_i32_0 = arith.constant 0 : i32
    %c0_i32_1 = arith.constant 0 : i32
    return %arg0, %arg1, %c0_i32, %c0_i32_0 : i32, i32, i32, i32
  }
}

</mosaic_0001>

<llo_original>
// kernel: tpu_custom_call.1
$region0: #{tpu_custom_call.1}
  #allocation0 [shape = 'u32[]', space=smem, size = 0x4, offset = 0x4, fixed_abs, tag = 'smem constant byte address 0x4 - core index']
  #allocation1 [shape = 'u32[144,128]{1,0:T(1,128)}', space=vmem, size = 0x12000, scoped, tag = 'internal scratch']
  #allocation2 [shape = 'bf16[2,336,128]{2,1,0:T(16,128)(2,1)}', space=vmem, size = 0x2a000, scoped, tag = 'scratch operand']
  #allocation3 [shape = 's32[2]{0}', space=sflag, size = 0x8, scoped, tag = 'scratch operand']
  #allocation13 [shape = 's32[]', space=sflag, size = 0x4, offset = 0, fixed_abs, tag = 'sflag constant byte address 0x0 - dummy sync flag']
  #allocation14 [shape = 's32[]', space=sflag, size = 0x4, offset = 0, fixed_abs, tag = 'sflag constant byte address 0x0 - dummy sync flag']
  #allocation15 [shape = 'u32[]', space=smem, size = 0x4, offset = 0x44, fixed_abs, tag = 'smem constant byte address 0x44 - assertion arg 0']
  #allocation16 [shape = 'u32[]', space=smem, size = 0x4, offset = 0x48, fixed_abs, tag = 'smem constant byte address 0x48 - assertion arg 1']
  #allocation17 [shape = 's32[]', space=sflag, size = 0x4, offset = 0, fixed_abs, tag = 'sflag constant byte address 0x0 - dummy sync flag']
  #allocation18 [shape = 's32[]', space=sflag, size = 0x4, offset = 0, fixed_abs, tag = 'sflag constant byte address 0x0 - dummy sync flag']
  %s0 = inlined_call_operand.hbm [shape: bf16[1056,128], index: 0, kind: input, shape index: {}]
  %s1 = inlined_call_operand.hbm [shape: f32[2,1,128], index: 1, kind: input, shape index: {}]
  %s2 = inlined_call_operand.hbm [shape: bf16[128,128], index: 2, kind: input, shape index: {}]
  %s3 = inlined_call_operand.hbm [shape: bf16[2,9,128,128], index: 3, kind: input, shape index: {}]
  %s4 = inlined_call_operand.hbm [shape: bf16[384,128], index: 4, kind: input, shape index: {}]
  %s5 = inlined_call_operand.hbm [shape: bf16[2,2,192,128], index: 5, kind: output, shape index: {}]
  %s6 = sld [smem:[#allocation0]]
  $region81: #{tpu_custom_call.1} parent=0
    _
  %s8 = ssub.s32 1, %s6
  %s9 = scalar_select 0, %s8, %s6
  $region1: #{tpu_custom_call.1} parent=0
    #allocation4 [shape = 'u8[1024]{0}', space=vmem, size = 0x400, scoped, tag = 'input window, operand 1']
    #allocation5 [shape = 's32[2]{0}', space=sflag, size = 0x8, scoped, tag = 'scoped memory for tpu_custom_call.1']
    #allocation6 [shape = 's32[2]{0}', space=sflag, size = 0x8, scoped, tag = 'scoped memory for tpu_custom_call.1']
    #allocation7 [shape = 'u8[32768]{0}', space=vmem, size = 0x8000, scoped, tag = 'input window, operand 2, single buffered']
    #allocation8 [shape = 's32[1]{0}', space=sflag, size = 0x4, scoped, tag = 'scoped memory for tpu_custom_call.1']
    #allocation9 [shape = 'u8[589824]{0}', space=vmem, size = 0x90000, scoped, tag = 'input window, operand 3, single buffered']
    #allocation10 [shape = 'u8[98304]{0}', space=vmem, size = 0x18000, scoped, tag = 'input window, operand 4, single buffered']
    #allocation11 [shape = 's32[1]{0}', space=sflag, size = 0x4, scoped, tag = 'scoped memory for tpu_custom_call.1']
    #allocation12 [shape = 'u8[98304]{0}', space=vmem, size = 0x18000, scoped, tag = 'output window, operand 0']
    %10 = vsyncpa [#allocation5], 0
    %s11 = scalar_lea.sflag [#allocation5], 1
    %12 = vsyncpa %s11, 0
    %13 = vsyncpa [#allocation8], 0
    %14 = vsyncpa [#allocation11], 0
    %15 = vsyncpa [#allocation6], 0
    %s16 = scalar_lea.sflag [#allocation6], 1
    %17 = vsyncpa %s16, 0
    loop: start=0, step=1, limit=6
    $region2: #{tpu_custom_call.1} parent=1 // loop_pre_header
      _
    $region3: #{tpu_custom_call.1} parent=1 // loop_header
      %s19 = sphi 0, %s23
      %p20 = scmp.ge.s32.totalorder %s19, 6
      %s26 = sphi 0, %s38
      %s27 = sphi 0, %s34
      %s28 = sphi 0, %s26
      %s29 = sphi 0, %s27
      %s30 = sphi 0, %s28
      %s31 = sphi 0, %s29
      %s41 = sphi 0, %s43
      %s44 = sphi 0, %s41
      %s45 = sphi 0, %s44
      %s61 = sphi 0, %s45
      %s65 = sphi 0, %s65
      %s67 = sphi 0, %s65
      %s68 = sphi 0, %s67
      %s82 = sphi 0, %s68
      %s86 = sphi 0, %s86
      %s88 = sphi 0, %s86
      %s89 = sphi 0, %s88
      %s103 = sphi 0, %s89
      %s107 = sphi 0, %s107
      %s109 = sphi 0, %s107
      %s110 = sphi 0, %s109
      %s124 = sphi 0, %s110
      %s132 = sphi 0, %s134
      %s135 = sphi 0, %s132
      %s136 = sphi 0, %s135
      %s152 = sphi 0, %s136
    $region4: #{tpu_custom_call.1} parent=1 // loop_header_branch
      %22 = sbr.rel (%p20) target = $region8
    $region5: #{tpu_custom_call.1} parent=1 // loop_body
      %s24 = ssub.s32 %s19, 1
      %s25 = ssub.s32 %s19, 2
      %s32 = sadd.s32 1, %s27
      %p33 = scmp.ge.s32.totalorder %s32, 2
      %s34 = scalar_select %p33, 0, %s32
      %s35 = sadd.s32 1, %s26
      %s36 = scalar_select %p33, %s35, %s26
      %p37 = scmp.ge.s32.totalorder %s36, 2
      %s38 = scalar_select %p37, 0, %s36
      %s39 = ssub.s32 %s26, %s38
      %p40 = scmp.eq.s32.totalorder %s39, 0
      %s42 = sadd.s32 %s41, 1
      %s43 = scalar_select %p40, %s41, %s42
      %p46 = pneg %p40
      %p47 = scmp.eq.s32.totalorder %s19, 3
      %p48 = por %p46, %p47
      %p49 = scmp.ne.s32.totalorder %s41, %s44
      %p50 = scmp.eq.s32.totalorder %s19, 0
      %p51 = por %p49, %p50
      %p52 = scmp.ne.s32.totalorder %s41, %s44
      %p53 = scmp.eq.s32.totalorder %s24, 3
      %p54 = por %p52, %p53
      %p55 = scmp.ne.s32.totalorder %s44, %s45
      %p56 = scmp.eq.s32.totalorder %s24, 0
      %p57 = por %p55, %p56
      %p58 = scmp.ne.s32.totalorder %s44, %s45
      %p59 = scmp.eq.s32.totalorder %s25, 3
      %p60 = por %p58, %p59
      %p62 = scmp.ne.s32.totalorder %s45, %s61
      %p63 = scmp.eq.s32.totalorder %s25, 0
      %p64 = por %p62, %p63
      %s66 = sadd.s32 %s65, 1
      %p69 = scmp.eq.s32.totalorder %s19, 3
      %p70 = scmp.ne.s32.totalorder %s65, %s67
      %p71 = scmp.eq.s32.totalorder %s19, 0
      %p72 = por %p70, %p71
      %p73 = scmp.ne.s32.totalorder %s65, %s67
      %p74 = scmp.eq.s32.totalorder %s24, 3
      %p75 = por %p73, %p74
      %p76 = scmp.ne.s32.totalorder %s67, %s68
      %p77 = scmp.eq.s32.totalorder %s24, 0
      %p78 = por %p76, %p77
      %p79 = scmp.ne.s32.totalorder %s67, %s68
      %p80 = scmp.eq.s32.totalorder %s25, 3
      %p81 = por %p79, %p80
      %p83 = scmp.ne.s32.totalorder %s68, %s82
      %p84 = scmp.eq.s32.totalorder %s25, 0
      %p85 = por %p83, %p84
      %s87 = sadd.s32 %s86, 1
      %p90 = scmp.eq.s32.totalorder %s19, 3
      %p91 = scmp.ne.s32.totalorder %s86, %s88
      %p92 = scmp.eq.s32.totalorder %s19, 0
      %p93 = por %p91, %p92
      %p94 = scmp.ne.s32.totalorder %s86, %s88
      %p95 = scmp.eq.s32.totalorder %s24, 3
      %p96 = por %p94, %p95
      %p97 = scmp.ne.s32.totalorder %s88, %s89
      %p98 = scmp.eq.s32.totalorder %s24, 0
      %p99 = por %p97, %p98
      %p100 = scmp.ne.s32.totalorder %s88, %s89
      %p101 = scmp.eq.s32.totalorder %s25, 3
      %p102 = por %p100, %p101
      %p104 = scmp.ne.s32.totalorder %s89, %s103
      %p105 = scmp.eq.s32.totalorder %s25, 0
      %p106 = por %p104, %p105
      %s108 = sadd.s32 %s107, 1
      %p111 = scmp.eq.s32.totalorder %s19, 3
      %p112 = scmp.ne.s32.totalorder %s107, %s109
      %p113 = scmp.eq.s32.totalorder %s19, 0
      %p114 = por %p112, %p113
      %p115 = scmp.ne.s32.totalorder %s107, %s109
      %p116 = scmp.eq.s32.totalorder %s24, 3
      %p117 = por %p115, %p116
      %p118 = scmp.ne.s32.totalorder %s109, %s110
      %p119 = scmp.eq.s32.totalorder %s24, 0
      %p120 = por %p118, %p119
      %p121 = scmp.ne.s32.totalorder %s109, %s110
      %p122 = scmp.eq.s32.totalorder %s25, 3
      %p123 = por %p121, %p122
      %p125 = scmp.ne.s32.totalorder %s110, %s124
      %p126 = scmp.eq.s32.totalorder %s25, 0
      %p127 = por %p125, %p126
      %s128 = ssub.s32 %s26, %s38
      %s129 = ssub.s32 %s27, %s34
      %s130 = sor.u32 %s128, %s129
      %p131 = scmp.eq.s32.totalorder %s130, 0
      %s133 = sadd.s32 %s132, 1
      %s134 = scalar_select %p131, %s132, %s133
      %p137 = pneg %p131
      %p138 = scmp.eq.s32.totalorder %s19, 3
      %p139 = por %p137, %p138
      %p140 = scmp.ne.s32.totalorder %s132, %s135
      %p141 = scmp.eq.s32.totalorder %s19, 0
      %p142 = por %p140, %p141
      %p143 = scmp.ne.s32.totalorder %s132, %s135
      %p144 = scmp.eq.s32.totalorder %s24, 3
      %p145 = por %p143, %p144
      %p146 = scmp.ne.s32.totalorder %s135, %s136
      %p147 = scmp.eq.s32.totalorder %s24, 0
      %p148 = por %p146, %p147
      %p149 = scmp.ne.s32.totalorder %s135, %s136
      %p150 = scmp.eq.s32.totalorder %s25, 3
      %p151 = por %p149, %p150
      %p153 = scmp.ne.s32.totalorder %s136, %s152
      %p154 = scmp.eq.s32.totalorder %s25, 0
      %p155 = por %p153, %p154
      %p156 = scmp.le.s32.totalorder 1, %s19
      %p157 = scmp.lt.s32.totalorder %s19, 5
      %p158 = pnand %p156, %p157
      %p159 = pneg %p158
      // Predicated region
      $region9: #{tpu_custom_call.1} parent=5 // pred_check
        _
      $region10: #{tpu_custom_call.1} parent=5 // pred_check_branch
        %161 = sbr.rel (%p158) target = $region12
      $region11: #{tpu_custom_call.1} parent=5 // pred_region
        %s162 = ssub.s32 %s19, 1
        // Predicated region
        $region13: #{tpu_custom_call.1} parent=11 // pred_check
          %p163 = pneg %p78
        $region14: #{tpu_custom_call.1} parent=11 // pred_check_branch
          %165 = sbr.rel (%p163) target = $region16
        $region15: #{tpu_custom_call.1} parent=11 // pred_region
          %s167 = ssub.s32 1024, 1024
          %168 = vsyncadd [#allocation8], %s167
          %s169 = sshll.u32 [#allocation7], 4
          %s170 = int_to_ptr.vmem [resolvable:$true] %s169
          %175 = dma.hbm_to_vmem [thread:$0]  %s2, 1024, %s170, [#allocation8], 64, 64, 4
        $region16: #{tpu_custom_call.1} parent=11 // pred_fallthru
          _
        // Predicated region
        $region17: #{tpu_custom_call.1} parent=11 // pred_check
          %p176 = pneg %p99
        $region18: #{tpu_custom_call.1} parent=11 // pred_check_branch
          %178 = sbr.rel (%p176) target = $region20
        $region19: #{tpu_custom_call.1} parent=11 // pred_region
          %s180 = ssub.s32 18432, 18432
          %181 = vsyncadd [#allocation8], %s180
          %s182 = sshll.u32 [#allocation9], 4
          %s183 = int_to_ptr.vmem [resolvable:$true] %s182
          %188 = dma.hbm_to_vmem [thread:$0]  %s3, 18432, %s183, [#allocation8], 64, 64, 4
        $region20: #{tpu_custom_call.1} parent=11 // pred_fallthru
          _
        // Predicated region
        $region21: #{tpu_custom_call.1} parent=11 // pred_check
          %p189 = pneg %p120
        $region22: #{tpu_custom_call.1} parent=11 // pred_check_branch
          %191 = sbr.rel (%p189) target = $region24
        $region23: #{tpu_custom_call.1} parent=11 // pred_region
          %s193 = ssub.s32 3072, 3072
          %194 = vsyncadd [#allocation11], %s193
          %s195 = sshll.u32 [#allocation10], 4
          %s196 = int_to_ptr.vmem [resolvable:$true] %s195
          %201 = dma.hbm_to_vmem [thread:$0]  %s4, 3072, %s196, [#allocation11], 64, 64, 4
        $region24: #{tpu_custom_call.1} parent=11 // pred_fallthru
          _
      $region12: #{tpu_custom_call.1} parent=5 // pred_fallthru
        _
      %p202 = scmp.lt.s32.totalorder %s19, 4
      // Predicated region
      $region25: #{tpu_custom_call.1} parent=5 // pred_check
        %p203 = pneg %p202
      $region26: #{tpu_custom_call.1} parent=5 // pred_check_branch
        %205 = sbr.rel (%p203) target = $region28
      $region27: #{tpu_custom_call.1} parent=5 // pred_region
        // Predicated region
        $region29: #{tpu_custom_call.1} parent=27 // pred_check
          %p206 = pneg %p51
        $region30: #{tpu_custom_call.1} parent=27 // pred_check_branch
          %208 = sbr.rel (%p206) target = $region32
        $region31: #{tpu_custom_call.1} parent=27 // pred_region
          %s209 = sand.u32 %s41, 1
          %s210 = scalar_lea.sflag [#allocation5], %s209
          %s211 = sand.u32 %s41, 1
          %s212 = scalar_lea.vmem [#allocation4], %s211
          %s214 = ssub.s32 16, 16
          %215 = vsyncadd %s210, %s214
          %s216 = smul.addr %s26, 16
          %s217 = scalar_lea.hbm %s1, %s216
          %s219 = sshll.u32 %s212, 4
          %s220 = int_to_ptr.vmem [resolvable:$true] %s219
          %222 = dma.hbm_to_vmem [thread:$0]  %s217, 16, %s220, %s210
        $region32: #{tpu_custom_call.1} parent=27 // pred_fallthru
          _
      $region28: #{tpu_custom_call.1} parent=5 // pred_fallthru
        _
      %p223 = scmp.le.s32.totalorder 1, %s19
      %p224 = scmp.lt.s32.totalorder %s19, 5
      %p225 = pnand %p223, %p224
      %p226 = pneg %p225
      // Predicated region
      $region33: #{tpu_custom_call.1} parent=5 // pred_check
        _
      $region34: #{tpu_custom_call.1} parent=5 // pred_check_branch
        %228 = sbr.rel (%p225) target = $region36
      $region35: #{tpu_custom_call.1} parent=5 // pred_region
        %s229 = ssub.s32 %s19, 1
        %s230 = sand.u32 %s44, 1
        %s231 = scalar_lea.sflag [#allocation5], %s230
        %s232 = sand.u32 %s44, 1
        %s233 = scalar_lea.vmem [#allocation4], %s232
        // Predicated region
        $region37: #{tpu_custom_call.1} parent=35 // pred_check
          %p234 = pneg %p57
        $region38: #{tpu_custom_call.1} parent=35 // pred_check_branch
          %236 = sbr.rel (%p234) target = $region40
        $region39: #{tpu_custom_call.1} parent=35 // pred_region
          %237 = dma.done %s231, 16
        $region40: #{tpu_custom_call.1} parent=35 // pred_fallthru
          _
        // Predicated region
        $region41: #{tpu_custom_call.1} parent=35 // pred_check
          %p238 = pneg %p78
        $region42: #{tpu_custom_call.1} parent=35 // pred_check_branch
          %240 = sbr.rel (%p238) target = $region44
        $region43: #{tpu_custom_call.1} parent=35 // pred_region
          %241 = dma.done [#allocation8], 1024
        $region44: #{tpu_custom_call.1} parent=35 // pred_fallthru
          _
        // Predicated region
        $region45: #{tpu_custom_call.1} parent=35 // pred_check
          %p242 = pneg %p99
        $region46: #{tpu_custom_call.1} parent=35 // pred_check_branch
          %244 = sbr.rel (%p242) target = $region48
        $region47: #{tpu_custom_call.1} parent=35 // pred_region
          %245 = dma.done [#allocation8], 18432
        $region48: #{tpu_custom_call.1} parent=35 // pred_fallthru
          _
        // Predicated region
        $region49: #{tpu_custom_call.1} parent=35 // pred_check
          %p246 = pneg %p120
        $region50: #{tpu_custom_call.1} parent=35 // pred_check_branch
          %248 = sbr.rel (%p246) target = $region52
        $region51: #{tpu_custom_call.1} parent=35 // pred_region
          %249 = dma.done [#allocation11], 3072
        $region52: #{tpu_custom_call.1} parent=35 // pred_fallthru
          _
        %s250 = sand.u32 %s44, 1
        %s251 = scalar_lea.sflag [#allocation5], %s250
        %s252 = sand.u32 %s44, 1
        %s253 = scalar_lea.vmem [#allocation4], %s252
        %p254 = pneg %p57
        %p255 = pneg %p54
        %p256 = pneg %p78
        %p257 = pneg %p75
        %p258 = pneg %p99
        %p259 = pneg %p96
        %p260 = pneg %p120
        %p261 = pneg %p117
        %p262 = pneg %p148
        %p263 = pneg %p145
        %s264 = sand.u32 %s135, 1
        %s265 = scalar_lea.sflag [#allocation6], %s264
        %s266 = sand.u32 %s135, 1
        %s267 = smul.addr %s266, 96
        %s268 = scalar_lea.vmem [#allocation12], %s267
        %p270 = scmp.lt.s32.totalorder %s29, 0
        %s271 = ssub.s32 0, %s29
        %s272 = scalar_select %p270, %s271, %s29
        %s273 = sand.u32 %s272, 1
        %s274 = ssub.s32 0, %s273
        %s275 = scalar_select %p270, %s274, %s273
        %p276 = scmp.eq.s32.totalorder %s29, 0
        // Predicated region
        $region53: #{tpu_custom_call.1} parent=35 // pred_check
          %p277 = pneg %p276
        $region54: #{tpu_custom_call.1} parent=35 // pred_check_branch
          %279 = sbr.rel (%p277) target = $region56
        $region55: #{tpu_custom_call.1} parent=35 // pred_region
          %s280 = smul.u32 %s28, 528
          %s281 = smul.u32 %s29, 192
          %s282 = sadd.s32 %s280, %s281
          %s283 = sshra.s32 %s282, 3
          %s284 = sand.u32 %s282, 7
          %s285 = smul.addr %s283, 64
          %s286 = scalar_lea.hbm %s0, %s285
          %s287 = smul.u32 %s275, 21
          %s288 = smul.addr %s287, 8
          %s289 = scalar_lea.vmem [#allocation2], %s288
          %s290 = scalar_lea.sflag [#allocation3], %s275
          // Predicated region
          $region57: #{tpu_custom_call.1} parent=55 // pred_check
            _
          $region58: #{tpu_custom_call.1} parent=55 // pred_check_branch
            %292 = sbr.rel target = $region60
          $region59: #{tpu_custom_call.1} parent=55 // pred_region
            %293 = sst [smem:[#allocation15]] [#allocation14]
            %294 = sst [smem:[#allocation16]] [#allocation13]
          $region60: #{tpu_custom_call.1} parent=55 // pred_fallthru
            _
          %296 = shalt.err (0)
          %s298 = sshll.u32 %s289, 4
          %s299 = int_to_ptr.vmem [resolvable:$true] %s298
          %301 = dma.hbm_to_vmem [thread:$0]  %s286, 2688, %s299, %s290
        $region56: #{tpu_custom_call.1} parent=35 // pred_fallthru
          _
        %s302 = smul.u32 %s28, 528
        %s303 = smul.u32 %s29, 192
        %s304 = sadd.s32 %s302, %s303
        %s305 = smul.u32 %s275, 21
        %s306 = smul.addr %s305, 8
        %s307 = scalar_lea.vmem [#allocation2], %s306
        %s308 = scalar_lea.sflag [#allocation3], %s275
        %s309 = smul.u32 4, 42
        %s310 = smul.u32 %s309, 1
        %s311 = sshll.u32 %s310, 4
        %312 = dma.done %s308, %s311
        %s313 = sadd.s32 %s29, 1
        %p314 = scmp.lt.s32.totalorder %s313, 2
        // Predicated region
        $region61: #{tpu_custom_call.1} parent=35 // pred_check
          %p315 = pneg %p314
        $region62: #{tpu_custom_call.1} parent=35 // pred_check_branch
          %317 = sbr.rel (%p315) target = $region64
        $region63: #{tpu_custom_call.1} parent=35 // pred_region
          %s318 = ssub.s32 1, %s275
          %s319 = smul.u32 %s313, 192
          %s320 = sadd.s32 %s302, %s319
          %s321 = sshra.s32 %s320, 3
          %s322 = sand.u32 %s320, 7
          %s323 = smul.addr %s321, 64
          %s324 = scalar_lea.hbm %s0, %s323
          %s325 = smul.u32 %s318, 21
          %s326 = smul.addr %s325, 8
          %s327 = scalar_lea.vmem [#allocation2], %s326
          %s328 = scalar_lea.sflag [#allocation3], %s318
          // Predicated region
          $region65: #{tpu_custom_call.1} parent=63 // pred_check
            _
          $region66: #{tpu_custom_call.1} parent=63 // pred_check_branch
            %330 = sbr.rel target = $region68
          $region67: #{tpu_custom_call.1} parent=63 // pred_region
            %331 = sst [smem:[#allocation15]] [#allocation18]
            %332 = sst [smem:[#allocation16]] [#allocation17]
          $region68: #{tpu_custom_call.1} parent=63 // pred_fallthru
            _
          %334 = shalt.err (0)
          %s336 = sshll.u32 %s327, 4
          %s337 = int_to_ptr.vmem [resolvable:$true] %s336
          %339 = dma.hbm_to_vmem [thread:$0]  %s324, 2688, %s337, %s328
        $region64: #{tpu_custom_call.1} parent=35 // pred_fallthru
          _
        %v340 = vld [vmem:[%s307 + $0x20] sm:$0xf0]
        %v341 = vld [vmem:[%s307 + $0x28] sm:$0xff]
        %v342 = vld [vmem:[%s307 + $0x30] sm:$0xff]
        %v343 = vld [vmem:[%s307 + $0x38] sm:$0xff]
        %v344 = vld [vmem:[%s307 + $0x40] sm:$0xff]
        %v345 = vld [vmem:[%s307 + $0x48] sm:$0xff]
        %v346 = vld [vmem:[%s307 + $0x50] sm:$0xff]
        %v347 = vld [vmem:[%s307 + $0x58] sm:$0xff]
        %v348 = vld [vmem:[%s307 + $0x60] sm:$0xff]
        %v349 = vld [vmem:[%s307 + $0x68] sm:$0xff]
        %v350 = vld [vmem:[%s307 + $0x70] sm:$0xff]
        %v351 = vld [vmem:[%s307 + $0x78] sm:$0xff]
        %v352 = vld [vmem:[%s307 + $0x80] sm:$0xf]
        %v353 = vld [vmem:[#allocation7] sm:$0xf]
        %v354 = vld [vmem:[#allocation7 + $0x4] sm:$0xf]
        %v355 = vld [vmem:[#allocation7 + $0x8] sm:$0xf]
        %v356 = vld [vmem:[#allocation7 + $0xc] sm:$0xf]
        %v357 = vld [vmem:[#allocation7 + $0x10] sm:$0xf]
        %v358 = vld [vmem:[#allocation7 + $0x14] sm:$0xf]
        %v359 = vld [vmem:[#allocation7 + $0x18] sm:$0xf]
        %v360 = vld [vmem:[#allocation7 + $0x1c] sm:$0xf]
        %v361 = vld [vmem:[#allocation7 + $0x20] sm:$0xf]
        %v362 = vld [vmem:[#allocation7 + $0x24] sm:$0xf]
        %v363 = vld [vmem:[#allocation7 + $0x28] sm:$0xf]
        %v364 = vld [vmem:[#allocation7 + $0x2c] sm:$0xf]
        %v365 = vld [vmem:[#allocation7 + $0x30] sm:$0xf]
        %v366 = vld [vmem:[#allocation7 + $0x34] sm:$0xf]
        %v367 = vld [vmem:[#allocation7 + $0x38] sm:$0xf]
        %v368 = vld [vmem:[#allocation7 + $0x3c] sm:$0xf]
        %vm382 = vcmask 1043456
        %v383 = vrot.slane %v340, 4
        %v384 = vrot.slane %v341, 4
        %v385 = vsel %vm382, %v383, %v384
        %v386 = vrot.slane %v342, 4
        %v387 = vsel %vm382, %v384, %v386
        %v388 = vrot.slane %v343, 4
        %v389 = vsel %vm382, %v386, %v388
        %v390 = vrot.slane %v344, 4
        %v391 = vsel %vm382, %v388, %v390
        %v392 = vrot.slane %v345, 4
        %v393 = vsel %vm382, %v390, %v392
        %v394 = vrot.slane %v346, 4
        %v395 = vsel %vm382, %v392, %v394
        %v396 = vrot.slane %v347, 4
        %v397 = vsel %vm382, %v394, %v396
        %v398 = vrot.slane %v348, 4
        %v399 = vsel %vm382, %v396, %v398
        %v400 = vrot.slane %v349, 4
        %v401 = vsel %vm382, %v398, %v400
        %v402 = vrot.slane %v350, 4
        %v403 = vsel %vm382, %v400, %v402
        %v404 = vrot.slane %v351, 4
        %v405 = vsel %vm382, %v402, %v404
        %v406 = vrot.slane %v352, 4
        %v407 = vsel %vm382, %v404, %v406
        %v436 = vunpack.c.l.b16 %v353
        %v437 = vunpack.c.l.b16 %v354
        %v438 = vunpack.c.l.b16 %v355
        %v439 = vunpack.c.l.b16 %v356
        %v440 = vunpack.c.l.b16 %v357
        %v441 = vunpack.c.l.b16 %v358
        %v442 = vunpack.c.l.b16 %v359
        %v443 = vunpack.c.l.b16 %v360
        %v444 = vunpack.c.l.b16 %v361
        %v445 = vunpack.c.l.b16 %v362
        %v446 = vunpack.c.l.b16 %v363
        %v447 = vunpack.c.l.b16 %v364
        %v448 = vunpack.c.l.b16 %v365
        %v449 = vunpack.c.l.b16 %v366
        %v450 = vunpack.c.l.b16 %v367
        %v451 = vunpack.c.l.b16 %v368
        %v452 = vpack.c.b16 %v437, %v436
        %v453 = vpack.c.b16 %v439, %v438
        %v454 = vpack.c.b16 %v441, %v440
        %v455 = vpack.c.b16 %v443, %v442
        %v456 = vpack.c.b16 %v445, %v444
        %v457 = vpack.c.b16 %v447, %v446
        %v458 = vpack.c.b16 %v449, %v448
        %v459 = vpack.c.b16 %v451, %v450
        %468 = vmatprep.subr.bf16.mxu0 0
        %469 = vmatpush1.bf16.msra.mxu0 %v452
        %470 = vmatprep.subr.bf16.mxu0 0
        %471 = vmatpush1.bf16.msra.mxu0 %v453
        %472 = vmatprep.subr.bf16.mxu0 0
        %473 = vmatpush1.bf16.msra.mxu0 %v454
        %474 = vmatprep.subr.bf16.mxu0 0
        %475 = vmatpush1.bf16.msra.mxu0 %v455
        %476 = vmatprep.subr.bf16.mxu0 0
        %477 = vmatpush1.bf16.msra.mxu0 %v456
        %478 = vmatprep.subr.bf16.mxu0 0
        %479 = vmatpush1.bf16.msra.mxu0 %v457
        %480 = vmatprep.subr.bf16.mxu0 0
        %481 = vmatpush1.bf16.msra.mxu0 %v458
        %482 = vmatprep.subr.bf16.mxu0 0
        %483 = vmatpush1.bf16.msra.mxu0 %v459
        %484 = vmatprep.subr.bf16.mxu0 0
        %485 = vmatpush1.bf16.msra.mxu0 0
        %486 = vmatprep.subr.bf16.mxu0 0
        %487 = vmatpush1.bf16.msra.mxu0 0
        %488 = vmatprep.subr.bf16.mxu0 0
        %489 = vmatpush1.bf16.msra.mxu0 0
        %490 = vmatprep.subr.bf16.mxu0 0
        %491 = vmatpush1.bf16.msra.mxu0 0
        %492 = vmatprep.subr.bf16.mxu0 0
        %493 = vmatpush1.bf16.msra.mxu0 0
        %494 = vmatprep.subr.bf16.mxu0 0
        %495 = vmatpush1.bf16.msra.mxu0 0
        %496 = vmatprep.subr.bf16.mxu0 0
        %497 = vmatpush1.bf16.msra.mxu0 0
        %498 = vmatprep.subr.bf16.mxu0 0
        %499 = vmatpush1.bf16.msra.mxu0 0
        %500 = vmatprep.mubr.bf16.mxu0 0
        %501 = vmatmul.mubr.bf16.gmra.mrb[0].mxu0 %v385
        %v502 = vpop.f32.mrb[0].mxu0
        %v503 = vadd.f32 0.0, %v502
        %v504 = vpop.f32.mrb[0].mxu0
        %v505 = vpop.f32.mrb[0].mxu0
        %v506 = vadd.f32 0.0, %v505
        %v507 = vpop.f32.mrb[0].mxu0
        %508 = vmatprep.mubr.bf16.mxu0 0
        %509 = vmatmul.mubr.bf16.gmra.mrb[0].mxu0 %v387
        %v510 = vpop.f32.mrb[0].mxu0
        %v511 = vadd.f32 0.0, %v510
        %v512 = vpop.f32.mrb[0].mxu0
        %v513 = vpop.f32.mrb[0].mxu0
        %v514 = vadd.f32 0.0, %v513
        %v515 = vpop.f32.mrb[0].mxu0
        %516 = vmatprep.mubr.bf16.mxu0 0
        %517 = vmatmul.mubr.bf16.gmra.mrb[0].mxu0 %v389
        %v518 = vpop.f32.mrb[0].mxu0
        %v519 = vadd.f32 0.0, %v518
        %v520 = vpop.f32.mrb[0].mxu0
        %v521 = vpop.f32.mrb[0].mxu0
        %v522 = vadd.f32 0.0, %v521
        %v523 = vpop.f32.mrb[0].mxu0
        %524 = vmatprep.mubr.bf16.mxu0 0
        %525 = vmatmul.mubr.bf16.gmra.mrb[0].mxu0 %v391
        %v526 = vpop.f32.mrb[0].mxu0
        %v527 = vadd.f32 0.0, %v526
        %v528 = vpop.f32.mrb[0].mxu0
        %v529 = vpop.f32.mrb[0].mxu0
        %v530 = vadd.f32 0.0, %v529
        %v531 = vpop.f32.mrb[0].mxu0
        %532 = vmatprep.mubr.bf16.mxu0 0
        %533 = vmatmul.mubr.bf16.gmra.mrb[0].mxu0 %v393
        %v534 = vpop.f32.mrb[0].mxu0
        %v535 = vadd.f32 0.0, %v534
        %v536 = vpop.f32.mrb[0].mxu0
        %v537 = vpop.f32.mrb[0].mxu0
        %v538 = vadd.f32 0.0, %v537
        %v539 = vpop.f32.mrb[0].mxu0
        %540 = vmatprep.mubr.bf16.mxu0 0
        %541 = vmatmul.mubr.bf16.gmra.mrb[0].mxu0 %v395
        %v542 = vpop.f32.mrb[0].mxu0
        %v543 = vadd.f32 0.0, %v542
        %v544 = vpop.f32.mrb[0].mxu0
        %v545 = vpop.f32.mrb[0].mxu0
        %v546 = vadd.f32 0.0, %v545
        %v547 = vpop.f32.mrb[0].mxu0
        %548 = vmatprep.mubr.bf16.mxu0 0
        %549 = vmatmul.mubr.bf16.gmra.mrb[0].mxu0 %v397
        %v550 = vpop.f32.mrb[0].mxu0
        %v551 = vadd.f32 0.0, %v550
        %v552 = vpop.f32.mrb[0].mxu0
        %v553 = vpop.f32.mrb[0].mxu0
        %v554 = vadd.f32 0.0, %v553
        %v555 = vpop.f32.mrb[0].mxu0
        %556 = vmatprep.mubr.bf16.mxu0 0
        %557 = vmatmul.mubr.bf16.gmra.mrb[0].mxu0 %v399
        %v558 = vpop.f32.mrb[0].mxu0
        %v559 = vadd.f32 0.0, %v558
        %v560 = vpop.f32.mrb[0].mxu0
        %v561 = vpop.f32.mrb[0].mxu0
        %v562 = vadd.f32 0.0, %v561
        %v563 = vpop.f32.mrb[0].mxu0
        %564 = vmatprep.mubr.bf16.mxu0 0
        %565 = vmatmul.mubr.bf16.gmra.mrb[0].mxu0 %v401
        %v566 = vpop.f32.mrb[0].mxu0
        %v567 = vadd.f32 0.0, %v566
        %v568 = vpop.f32.mrb[0].mxu0
        %v569 = vpop.f32.mrb[0].mxu0
        %v570 = vadd.f32 0.0, %v569
        %v571 = vpop.f32.mrb[0].mxu0
        %572 = vmatprep.mubr.bf16.mxu0 0
        %573 = vmatmul.mubr.bf16.gmra.mrb[0].mxu0 %v403
        %v574 = vpop.f32.mrb[0].mxu0
        %v575 = vadd.f32 0.0, %v574
        %v576 = vpop.f32.mrb[0].mxu0
        %v577 = vpop.f32.mrb[0].mxu0
        %v578 = vadd.f32 0.0, %v577
        %v579 = vpop.f32.mrb[0].mxu0
        %580 = vmatprep.mubr.bf16.mxu0 0
        %581 = vmatmul.mubr.bf16.gmra.mrb[0].mxu0 %v405
        %v582 = vpop.f32.mrb[0].mxu0
        %v583 = vadd.f32 0.0, %v582
        %v584 = vpop.f32.mrb[0].mxu0
        %v585 = vpop.f32.mrb[0].mxu0
        %v586 = vadd.f32 0.0, %v585
        %v587 = vpop.f32.mrb[0].mxu0
        %588 = vmatprep.mubr.bf16.mxu0 0
        %589 = vmatmul.mubr.bf16.gmra.mrb[0].mxu0 %v407
        %v590 = vpop.f32.mrb[0].mxu0
        %v591 = vadd.f32 0.0, %v590
        %v592 = vpop.f32.mrb[0].mxu0
        %v593 = vpop.f32.mrb[0].mxu0
        %v594 = vadd.f32 0.0, %v593
        %v595 = vpop.f32.mrb[0].mxu0
        %596 = vdwg.mxu0
        %v597 = vmax.f32 %v503, 0.0
        %v598 = vmax.f32 %v506, 0.0
        %v599 = vmax.f32 %v511, 0.0
        %v600 = vmax.f32 %v514, 0.0
        %v601 = vmax.f32 %v519, 0.0
        %v602 = vmax.f32 %v522, 0.0
        %v603 = vmax.f32 %v527, 0.0
        %v604 = vmax.f32 %v530, 0.0
        %v605 = vmax.f32 %v535, 0.0
        %v606 = vmax.f32 %v538, 0.0
        %v607 = vmax.f32 %v543, 0.0
        %v608 = vmax.f32 %v546, 0.0
        %v609 = vmax.f32 %v551, 0.0
        %v610 = vmax.f32 %v554, 0.0
        %v611 = vmax.f32 %v559, 0.0
        %v612 = vmax.f32 %v562, 0.0
        %v613 = vmax.f32 %v567, 0.0
        %v614 = vmax.f32 %v570, 0.0
        %v615 = vmax.f32 %v575, 0.0
        %v616 = vmax.f32 %v578, 0.0
        %v617 = vmax.f32 %v583, 0.0
        %v618 = vmax.f32 %v586, 0.0
        %v619 = vmax.f32 %v591, 0.0
        %v620 = vmax.f32 %v594, 0.0
        %v621 = vpack.c.bf16 %v598, %v597
        %v622 = vpack.c.bf16 %v600, %v599
        %v623 = vpack.c.bf16 %v602, %v601
        %v624 = vpack.c.bf16 %v604, %v603
        %v625 = vpack.c.bf16 %v606, %v605
        %v626 = vpack.c.bf16 %v608, %v607
        %v627 = vpack.c.bf16 %v610, %v609
        %v628 = vpack.c.bf16 %v612, %v611
        %v629 = vpack.c.bf16 %v614, %v613
        %v630 = vpack.c.bf16 %v616, %v615
        %v631 = vpack.c.bf16 %v618, %v617
        %v632 = vpack.c.bf16 %v620, %v619
        %v633 = vld [vmem:[#allocation10] sm:$0xf]
        %v634 = vld [vmem:[#allocation10 + $0x4] sm:$0xf]
        %v635 = vld [vmem:[#allocation10 + $0x8] sm:$0xf]
        %v636 = vld [vmem:[#allocation10 + $0xc] sm:$0xf]
        %v637 = vld [vmem:[#allocation10 + $0x10] sm:$0xf]
        %v638 = vld [vmem:[#allocation10 + $0x14] sm:$0xf]
        %v639 = vld [vmem:[#allocation10 + $0x18] sm:$0xf]
        %v640 = vld [vmem:[#allocation10 + $0x1c] sm:$0xf]
        %v641 = vld [vmem:[#allocation10 + $0x20] sm:$0xf]
        %v642 = vld [vmem:[#allocation10 + $0x24] sm:$0xf]
        %v643 = vld [vmem:[#allocation10 + $0x28] sm:$0xf]
        %v644 = vld [vmem:[#allocation10 + $0x2c] sm:$0xf]
        %v645 = vld [vmem:[#allocation10 + $0x30] sm:$0xf]
        %v646 = vld [vmem:[#allocation10 + $0x34] sm:$0xf]
        %v647 = vld [vmem:[#allocation10 + $0x38] sm:$0xf]
        %v648 = vld [vmem:[#allocation10 + $0x3c] sm:$0xf]
        %v649 = vld [vmem:[%s307 + $0x10] sm:$0x80]
        %v650 = vld [vmem:[%s307 + $0x18] sm:$0xff]
        %v651 = vld [vmem:[%s307 + $0x20] sm:$0xff]
        %v652 = vld [vmem:[%s307 + $0x28] sm:$0xff]
        %v653 = vld [vmem:[%s307 + $0x30] sm:$0xff]
        %v654 = vld [vmem:[%s307 + $0x38] sm:$0xff]
        %v655 = vld [vmem:[%s307 + $0x40] sm:$0xff]
        %v656 = vld [vmem:[%s307 + $0x48] sm:$0xff]
        %v657 = vld [vmem:[%s307 + $0x50] sm:$0xff]
        %v658 = vld [vmem:[%s307 + $0x58] sm:$0xff]
        %v659 = vld [vmem:[%s307 + $0x60] sm:$0xff]
        %v660 = vld [vmem:[%s307 + $0x68] sm:$0xff]
        %v661 = vld [vmem:[%s307 + $0x70] sm:$0xff]
        %v662 = vld [vmem:[#allocation9] sm:$0xf]
        %v663 = vld [vmem:[#allocation9 + $0x4] sm:$0xf]
        %v664 = vld [vmem:[#allocation9 + $0x8] sm:$0xf]
        %v665 = vld [vmem:[#allocation9 + $0xc] sm:$0xf]
        %v666 = vld [vmem:[#allocation9 + $0x10] sm:$0xf]
        %v667 = vld [vmem:[#allocation9 + $0x14] sm:$0xf]
        %v668 = vld [vmem:[#allocation9 + $0x18] sm:$0xf]
        %v669 = vld [vmem:[#allocation9 + $0x1c] sm:$0xf]
        %v670 = vld [vmem:[#allocation9 + $0x20] sm:$0xf]
        %v671 = vld [vmem:[#allocation9 + $0x24] sm:$0xf]
        %v672 = vld [vmem:[#allocation9 + $0x28] sm:$0xf]
        %v673 = vld [vmem:[#allocation9 + $0x2c] sm:$0xf]
        %v674 = vld [vmem:[#allocation9 + $0x30] sm:$0xf]
        %v675 = vld [vmem:[#allocation9 + $0x34] sm:$0xf]
        %v676 = vld [vmem:[#allocation9 + $0x38] sm:$0xf]
        %v677 = vld [vmem:[#allocation9 + $0x3c] sm:$0xf]
        %s678 = scalar_lea.vmem [#allocation9], 64
        %v679 = vld [vmem:[%s678] sm:$0xf]
        %v680 = vld [vmem:[%s678 + $0x4] sm:$0xf]
        %v681 = vld [vmem:[%s678 + $0x8] sm:$0xf]
        %v682 = vld [vmem:[%s678 + $0xc] sm:$0xf]
        %v683 = vld [vmem:[%s678 + $0x10] sm:$0xf]
        %v684 = vld [vmem:[%s678 + $0x14] sm:$0xf]
        %v685 = vld [vmem:[%s678 + $0x18] sm:$0xf]
        %v686 = vld [vmem:[%s678 + $0x1c] sm:$0xf]
        %v687 = vld [vmem:[%s678 + $0x20] sm:$0xf]
        %v688 = vld [vmem:[%s678 + $0x24] sm:$0xf]
        %v689 = vld [vmem:[%s678 + $0x28] sm:$0xf]
        %v690 = vld [vmem:[%s678 + $0x2c] sm:$0xf]
        %v691 = vld [vmem:[%s678 + $0x30] sm:$0xf]
        %v692 = vld [vmem:[%s678 + $0x34] sm:$0xf]
        %v693 = vld [vmem:[%s678 + $0x38] sm:$0xf]
        %v694 = vld [vmem:[%s678 + $0x3c] sm:$0xf]
        %v711 = vunpack.c.l.b16 %v679
        %v712 = vunpack.c.l.b16 %v680
        %v713 = vunpack.c.l.b16 %v681
        %v714 = vunpack.c.l.b16 %v682
        %v715 = vunpack.c.l.b16 %v683
        %v716 = vunpack.c.l.b16 %v684
        %v717 = vunpack.c.l.b16 %v685
        %v718 = vunpack.c.l.b16 %v686
        %v719 = vunpack.c.l.b16 %v687
        %v720 = vunpack.c.l.b16 %v688
        %v721 = vunpack.c.l.b16 %v689
        %v722 = vunpack.c.l.b16 %v690
        %v723 = vunpack.c.l.b16 %v691
        %v724 = vunpack.c.l.b16 %v692
        %v725 = vunpack.c.l.b16 %v693
        %v726 = vunpack.c.l.b16 %v694
        %v727 = vpack.c.b16 %v712, %v711
        %v728 = vpack.c.b16 %v714, %v713
        %v729 = vpack.c.b16 %v716, %v715
        %v730 = vpack.c.b16 %v718, %v717
        %v731 = vpack.c.b16 %v720, %v719
        %v732 = vpack.c.b16 %v722, %v721
        %v733 = vpack.c.b16 %v724, %v723
        %v734 = vpack.c.b16 %v726, %v725
        %743 = vmatprep.subr.bf16.mxu0 0
        %744 = vmatpush1.bf16.msra.mxu0 %v727
        %745 = vmatprep.subr.bf16.mxu0 0
        %746 = vmatpush1.bf16.msra.mxu0 %v728
        %747 = vmatprep.subr.bf16.mxu0 0
        %748 = vmatpush1.bf16.msra.mxu0 %v729
        %749 = vmatprep.subr.bf16.mxu0 0
        %750 = vmatpush1.bf16.msra.mxu0 %v730
        %751 = vmatprep.subr.bf16.mxu0 0
        %752 = vmatpush1.bf16.msra.mxu0 %v731
        %753 = vmatprep.subr.bf16.mxu0 0
        %754 = vmatpush1.bf16.msra.mxu0 %v732
        %755 = vmatprep.subr.bf16.mxu0 0
        %756 = vmatpush1.bf16.msra.mxu0 %v733
        %757 = vmatprep.subr.bf16.mxu0 0
        %758 = vmatpush1.bf16.msra.mxu0 %v734
        %759 = vmatprep.subr.bf16.mxu0 0
        %760 = vmatpush1.bf16.msra.mxu0 0
        %761 = vmatprep.subr.bf16.mxu0 0
        %762 = vmatpush1.bf16.msra.mxu0 0
        %763 = vmatprep.subr.bf16.mxu0 0
        %764 = vmatpush1.bf16.msra.mxu0 0
        %765 = vmatprep.subr.bf16.mxu0 0
        %766 = vmatpush1.bf16.msra.mxu0 0
        %767 = vmatprep.subr.bf16.mxu0 0
        %768 = vmatpush1.bf16.msra.mxu0 0
        %769 = vmatprep.subr.bf16.mxu0 0
        %770 = vmatpush1.bf16.msra.mxu0 0
        %771 = vmatprep.subr.bf16.mxu0 0
        %772 = vmatpush1.bf16.msra.mxu0 0
        %773 = vmatprep.subr.bf16.mxu0 0
        %774 = vmatpush1.bf16.msra.mxu0 0
        %775 = vmatprep.mubr.bf16.mxu0 0
        %776 = vmatmul.mubr.bf16.gmra.mrb[0].mxu0 %v650
        %v777 = vpop.f32.mrb[0].mxu0
        %v778 = vadd.f32 0.0, %v777
        %v779 = vpop.f32.mrb[0].mxu0
        %v780 = vpop.f32.mrb[0].mxu0
        %v781 = vadd.f32 0.0, %v780
        %v782 = vpop.f32.mrb[0].mxu0
        %783 = vmatprep.mubr.bf16.mxu0 0
        %784 = vmatmul.mubr.bf16.gmra.mrb[0].mxu0 %v651
        %v785 = vpop.f32.mrb[0].mxu0
        %v786 = vadd.f32 0.0, %v785
        %v787 = vpop.f32.mrb[0].mxu0
        %v788 = vpop.f32.mrb[0].mxu0
        %v789 = vadd.f32 0.0, %v788
        %v790 = vpop.f32.mrb[0].mxu0
        %791 = vmatprep.mubr.bf16.mxu0 0
        %792 = vmatmul.mubr.bf16.gmra.mrb[0].mxu0 %v652
        %v793 = vpop.f32.mrb[0].mxu0
        %v794 = vadd.f32 0.0, %v793
        %v795 = vpop.f32.mrb[0].mxu0
        %v796 = vpop.f32.mrb[0].mxu0
        %v797 = vadd.f32 0.0, %v796
        %v798 = vpop.f32.mrb[0].mxu0
        %799 = vmatprep.mubr.bf16.mxu0 0
        %800 = vmatmul.mubr.bf16.gmra.mrb[0].mxu0 %v653
        %v801 = vpop.f32.mrb[0].mxu0
        %v802 = vadd.f32 0.0, %v801
        %v803 = vpop.f32.mrb[0].mxu0
        %v804 = vpop.f32.mrb[0].mxu0
        %v805 = vadd.f32 0.0, %v804
        %v806 = vpop.f32.mrb[0].mxu0
        %807 = vmatprep.mubr.bf16.mxu0 0
        %808 = vmatmul.mubr.bf16.gmra.mrb[0].mxu0 %v654
        %v809 = vpop.f32.mrb[0].mxu0
        %v810 = vadd.f32 0.0, %v809
        %v811 = vpop.f32.mrb[0].mxu0
        %v812 = vpop.f32.mrb[0].mxu0
        %v813 = vadd.f32 0.0, %v812
        %v814 = vpop.f32.mrb[0].mxu0
        %815 = vmatprep.mubr.bf16.mxu0 0
        %816 = vmatmul.mubr.bf16.gmra.mrb[0].mxu0 %v655
        %v817 = vpop.f32.mrb[0].mxu0
        %v818 = vadd.f32 0.0, %v817
        %v819 = vpop.f32.mrb[0].mxu0
        %v820 = vpop.f32.mrb[0].mxu0
        %v821 = vadd.f32 0.0, %v820
        %v822 = vpop.f32.mrb[0].mxu0
        %823 = vmatprep.mubr.bf16.mxu0 0
        %824 = vmatmul.mubr.bf16.gmra.mrb[0].mxu0 %v656
        %v825 = vpop.f32.mrb[0].mxu0
        %v826 = vadd.f32 0.0, %v825
        %v827 = vpop.f32.mrb[0].mxu0
        %v828 = vpop.f32.mrb[0].mxu0
        %v829 = vadd.f32 0.0, %v828
        %v830 = vpop.f32.mrb[0].mxu0
        %831 = vmatprep.mubr.bf16.mxu0 0
        %832 = vmatmul.mubr.bf16.gmra.mrb[0].mxu0 %v657
        %v833 = vpop.f32.mrb[0].mxu0
        %v834 = vadd.f32 0.0, %v833
        %v835 = vpop.f32.mrb[0].mxu0
        %v836 = vpop.f32.mrb[0].mxu0
        %v837 = vadd.f32 0.0, %v836
        %v838 = vpop.f32.mrb[0].mxu0
        %839 = vmatprep.mubr.bf16.mxu0 0
        %840 = vmatmul.mubr.bf16.gmra.mrb[0].mxu0 %v658
        %v841 = vpop.f32.mrb[0].mxu0
        %v842 = vadd.f32 0.0, %v841
        %v843 = vpop.f32.mrb[0].mxu0
        %v844 = vpop.f32.mrb[0].mxu0
        %v845 = vadd.f32 0.0, %v844
        %v846 = vpop.f32.mrb[0].mxu0
        %847 = vmatprep.mubr.bf16.mxu0 0
        %848 = vmatmul.mubr.bf16.gmra.mrb[0].mxu0 %v659
        %v849 = vpop.f32.mrb[0].mxu0
        %v850 = vadd.f32 0.0, %v849
        %v851 = vpop.f32.mrb[0].mxu0
        %v852 = vpop.f32.mrb[0].mxu0
        %v853 = vadd.f32 0.0, %v852
        %v854 = vpop.f32.mrb[0].mxu0
        %855 = vmatprep.mubr.bf16.mxu0 0
        %856 = vmatmul.mubr.bf16.gmra.mrb[0].mxu0 %v660
        %v857 = vpop.f32.mrb[0].mxu0
        %v858 = vadd.f32 0.0, %v857
        %v859 = vpop.f32.mrb[0].mxu0
        %v860 = vpop.f32.mrb[0].mxu0
        %v861 = vadd.f32 0.0, %v860
        %v862 = vpop.f32.mrb[0].mxu0
        %863 = vmatprep.mubr.bf16.mxu0 0
        %864 = vmatmul.mubr.bf16.gmra.mrb[0].mxu0 %v661
        %v865 = vpop.f32.mrb[0].mxu0
        %v866 = vadd.f32 0.0, %v865
        %v867 = vpop.f32.mrb[0].mxu0
        %v868 = vpop.f32.mrb[0].mxu0
        %v869 = vadd.f32 0.0, %v868
        %v870 = vpop.f32.mrb[0].mxu0
        %871 = vdwg.mxu0
        %vm872 = vsmask.f32 256
        %v874 = vshrl.u32 %v649, 16
        %v876 = vrot.slane %v874, 7
        %v878 = vshrl.u32 %v650, 16
        %v880 = vrot.slane %v878, 7
        %v881 = vshll.u32 %v650, 16
        %v883 = vor.u32 %v880, %v881
        %v884 = vsel %vm872, %v876, %v883
        %v886 = vshrl.u32 %v651, 16
        %v888 = vrot.slane %v886, 7
        %v889 = vshll.u32 %v651, 16
        %v891 = vor.u32 %v888, %v889
        %v892 = vsel %vm872, %v880, %v891
        %v894 = vshrl.u32 %v652, 16
        %v896 = vrot.slane %v894, 7
        %v897 = vshll.u32 %v652, 16
        %v899 = vor.u32 %v896, %v897
        %v900 = vsel %vm872, %v888, %v899
        %v902 = vshrl.u32 %v653, 16
        %v904 = vrot.slane %v902, 7
        %v905 = vshll.u32 %v653, 16
        %v907 = vor.u32 %v904, %v905
        %v908 = vsel %vm872, %v896, %v907
        %v910 = vshrl.u32 %v654, 16
        %v912 = vrot.slane %v910, 7
        %v913 = vshll.u32 %v654, 16
        %v915 = vor.u32 %v912, %v913
        %v916 = vsel %vm872, %v904, %v915
        %v918 = vshrl.u32 %v655, 16
        %v920 = vrot.slane %v918, 7
        %v921 = vshll.u32 %v655, 16
        %v923 = vor.u32 %v920, %v921
        %v924 = vsel %vm872, %v912, %v923
        %v926 = vshrl.u32 %v656, 16
        %v928 = vrot.slane %v926, 7
        %v929 = vshll.u32 %v656, 16
        %v931 = vor.u32 %v928, %v929
        %v932 = vsel %vm872, %v920, %v931
        %v934 = vshrl.u32 %v657, 16
        %v936 = vrot.slane %v934, 7
        %v937 = vshll.u32 %v657, 16
        %v939 = vor.u32 %v936, %v937
        %v940 = vsel %vm872, %v928, %v939
        %v942 = vshrl.u32 %v658, 16
        %v944 = vrot.slane %v942, 7
        %v945 = vshll.u32 %v658, 16
        %v947 = vor.u32 %v944, %v945
        %v948 = vsel %vm872, %v936, %v947
        %v950 = vshrl.u32 %v659, 16
        %v952 = vrot.slane %v950, 7
        %v953 = vshll.u32 %v659, 16
        %v955 = vor.u32 %v952, %v953
        %v956 = vsel %vm872, %v944, %v955
        %v958 = vshrl.u32 %v660, 16
        %v960 = vrot.slane %v958, 7
        %v961 = vshll.u32 %v660, 16
        %v963 = vor.u32 %v960, %v961
        %v964 = vsel %vm872, %v952, %v963
        %v966 = vshrl.u32 %v661, 16
        %v968 = vrot.slane %v966, 7
        %v969 = vshll.u32 %v661, 16
        %v971 = vor.u32 %v968, %v969
        %v972 = vsel %vm872, %v960, %v971
        %v1001 = vunpack.c.l.b16 %v662
        %v1002 = vunpack.c.l.b16 %v663
        %v1003 = vunpack.c.l.b16 %v664
        %v1004 = vunpack.c.l.b16 %v665
        %v1005 = vunpack.c.l.b16 %v666
        %v1006 = vunpack.c.l.b16 %v667
        %v1007 = vunpack.c.l.b16 %v668
        %v1008 = vunpack.c.l.b16 %v669
        %v1009 = vunpack.c.l.b16 %v670
        %v1010 = vunpack.c.l.b16 %v671
        %v1011 = vunpack.c.l.b16 %v672
        %v1012 = vunpack.c.l.b16 %v673
        %v1013 = vunpack.c.l.b16 %v674
        %v1014 = vunpack.c.l.b16 %v675
        %v1015 = vunpack.c.l.b16 %v676
        %v1016 = vunpack.c.l.b16 %v677
        %v1017 = vpack.c.b16 %v1002, %v1001
        %v1018 = vpack.c.b16 %v1004, %v1003
        %v1019 = vpack.c.b16 %v1006, %v1005
        %v1020 = vpack.c.b16 %v1008, %v1007
        %v1021 = vpack.c.b16 %v1010, %v1009
        %v1022 = vpack.c.b16 %v1012, %v1011
        %v1023 = vpack.c.b16 %v1014, %v1013
        %v1024 = vpack.c.b16 %v1016, %v1015
        %1033 = vmatprep.subr.bf16.mxu0 0
        %1034 = vmatpush1.bf16.msra.mxu0 %v1017
        %1035 = vmatprep.subr.bf16.mxu0 0
        %1036 = vmatpush1.bf16.msra.mxu0 %v1018
        %1037 = vmatprep.subr.bf16.mxu0 0
        %1038 = vmatpush1.bf16.msra.mxu0 %v1019
        %1039 = vmatprep.subr.bf16.mxu0 0
        %1040 = vmatpush1.bf16.msra.mxu0 %v1020
        %1041 = vmatprep.subr.bf16.mxu0 0
        %1042 = vmatpush1.bf16.msra.mxu0 %v1021
        %1043 = vmatprep.subr.bf16.mxu0 0
        %1044 = vmatpush1.bf16.msra.mxu0 %v1022
        %1045 = vmatprep.subr.bf16.mxu0 0
        %1046 = vmatpush1.bf16.msra.mxu0 %v1023
        %1047 = vmatprep.subr.bf16.mxu0 0
        %1048 = vmatpush1.bf16.msra.mxu0 %v1024
        %1049 = vmatprep.subr.bf16.mxu0 0
        %1050 = vmatpush1.bf16.msra.mxu0 0
        %1051 = vmatprep.subr.bf16.mxu0 0
        %1052 = vmatpush1.bf16.msra.mxu0 0
        %1053 = vmatprep.subr.bf16.mxu0 0
        %1054 = vmatpush1.bf16.msra.mxu0 0
        %1055 = vmatprep.subr.bf16.mxu0 0
        %1056 = vmatpush1.bf16.msra.mxu0 0
        %1057 = vmatprep.subr.bf16.mxu0 0
        %1058 = vmatpush1.bf16.msra.mxu0 0
        %1059 = vmatprep.subr.bf16.mxu0 0
        %1060 = vmatpush1.bf16.msra.mxu0 0
        %1061 = vmatprep.subr.bf16.mxu0 0
        %1062 = vmatpush1.bf16.msra.mxu0 0
        %1063 = vmatprep.subr.bf16.mxu0 0
        %1064 = vmatpush1.bf16.msra.mxu0 0
        %1065 = vmatprep.mubr.bf16.mxu0 0
        %1066 = vmatmul.mubr.bf16.gmra.mrb[0].mxu0 %v884
        %v1067 = vpop.f32.mrb[0].mxu0
        %v1068 = vadd.f32 %v778, %v1067
        %v1069 = vpop.f32.mrb[0].mxu0
        %v1070 = vpop.f32.mrb[0].mxu0
        %v1071 = vadd.f32 %v781, %v1070
        %v1072 = vpop.f32.mrb[0].mxu0
        %1073 = vmatprep.mubr.bf16.mxu0 0
        %1074 = vmatmul.mubr.bf16.gmra.mrb[0].mxu0 %v892
        %v1075 = vpop.f32.mrb[0].mxu0
        %v1076 = vadd.f32 %v786, %v1075
        %v1077 = vpop.f32.mrb[0].mxu0
        %v1078 = vpop.f32.mrb[0].mxu0
        %v1079 = vadd.f32 %v789, %v1078
        %v1080 = vpop.f32.mrb[0].mxu0
        %1081 = vmatprep.mubr.bf16.mxu0 0
        %1082 = vmatmul.mubr.bf16.gmra.mrb[0].mxu0 %v900
        %v1083 = vpop.f32.mrb[0].mxu0
        %v1084 = vadd.f32 %v794, %v1083
        %v1085 = vpop.f32.mrb[0].mxu0
        %v1086 = vpop.f32.mrb[0].mxu0
        %v1087 = vadd.f32 %v797, %v1086
        %v1088 = vpop.f32.mrb[0].mxu0
        %1089 = vmatprep.mubr.bf16.mxu0 0
        %1090 = vmatmul.mubr.bf16.gmra.mrb[0].mxu0 %v908
        %v1091 = vpop.f32.mrb[0].mxu0
        %v1092 = vadd.f32 %v802, %v1091
        %v1093 = vpop.f32.mrb[0].mxu0
        %v1094 = vpop.f32.mrb[0].mxu0
        %v1095 = vadd.f32 %v805, %v1094
        %v1096 = vpop.f32.mrb[0].mxu0
        %1097 = vmatprep.mubr.bf16.mxu0 0
        %1098 = vmatmul.mubr.bf16.gmra.mrb[0].mxu0 %v916
        %v1099 = vpop.f32.mrb[0].mxu0
        %v1100 = vadd.f32 %v810, %v1099
        %v1101 = vpop.f32.mrb[0].mxu0
        %v1102 = vpop.f32.mrb[0].mxu0
        %v1103 = vadd.f32 %v813, %v1102
        %v1104 = vpop.f32.mrb[0].mxu0
        %1105 = vmatprep.mubr.bf16.mxu0 0
        %1106 = vmatmul.mubr.bf16.gmra.mrb[0].mxu0 %v924
        %v1107 = vpop.f32.mrb[0].mxu0
        %v1108 = vadd.f32 %v818, %v1107
        %v1109 = vpop.f32.mrb[0].mxu0
        %v1110 = vpop.f32.mrb[0].mxu0
        %v1111 = vadd.f32 %v821, %v1110
        %v1112 = vpop.f32.mrb[0].mxu0
        %1113 = vmatprep.mubr.bf16.mxu0 0
        %1114 = vmatmul.mubr.bf16.gmra.mrb[0].mxu0 %v932
        %v1115 = vpop.f32.mrb[0].mxu0
        %v1116 = vadd.f32 %v826, %v1115
        %v1117 = vpop.f32.mrb[0].mxu0
        %v1118 = vpop.f32.mrb[0].mxu0
        %v1119 = vadd.f32 %v829, %v1118
        %v1120 = vpop.f32.mrb[0].mxu0
        %1121 = vmatprep.mubr.bf16.mxu0 0
        %1122 = vmatmul.mubr.bf16.gmra.mrb[0].mxu0 %v940
        %v1123 = vpop.f32.mrb[0].mxu0
        %v1124 = vadd.f32 %v834, %v1123
        %v1125 = vpop.f32.mrb[0].mxu0
        %v1126 = vpop.f32.mrb[0].mxu0
        %v1127 = vadd.f32 %v837, %v1126
        %v1128 = vpop.f32.mrb[0].mxu0
        %1129 = vmatprep.mubr.bf16.mxu0 0
        %1130 = vmatmul.mubr.bf16.gmra.mrb[0].mxu0 %v948
        %v1131 = vpop.f32.mrb[0].mxu0
        %v1132 = vadd.f32 %v842, %v1131
        %v1133 = vpop.f32.mrb[0].mxu0
        %v1134 = vpop.f32.mrb[0].mxu0
        %v1135 = vadd.f32 %v845, %v1134
        %v1136 = vpop.f32.mrb[0].mxu0
        %1137 = vmatprep.mubr.bf16.mxu0 0
        %1138 = vmatmul.mubr.bf16.gmra.mrb[0].mxu0 %v956
        %v1139 = vpop.f32.mrb[0].mxu0
        %v1140 = vadd.f32 %v850, %v1139
        %v1141 = vpop.f32.mrb[0].mxu0
        %v1142 = vpop.f32.mrb[0].mxu0
        %v1143 = vadd.f32 %v853, %v1142
        %v1144 = vpop.f32.mrb[0].mxu0
        %1145 = vmatprep.mubr.bf16.mxu0 0
        %1146 = vmatmul.mubr.bf16.gmra.mrb[0].mxu0 %v964
        %v1147 = vpop.f32.mrb[0].mxu0
        %v1148 = vadd.f32 %v858, %v1147
        %v1149 = vpop.f32.mrb[0].mxu0
        %v1150 = vpop.f32.mrb[0].mxu0
        %v1151 = vadd.f32 %v861, %v1150
        %v1152 = vpop.f32.mrb[0].mxu0
        %1153 = vmatprep.mubr.bf16.mxu0 0
        %1154 = vmatmul.mubr.bf16.gmra.mrb[0].mxu0 %v972
        %v1155 = vpop.f32.mrb[0].mxu0
        %v1156 = vadd.f32 %v866, %v1155
        %v1157 = vpop.f32.mrb[0].mxu0
        %v1158 = vpop.f32.mrb[0].mxu0
        %v1159 = vadd.f32 %v869, %v1158
        %v1160 = vpop.f32.mrb[0].mxu0
        %1161 = vdwg.mxu0
        %v1162 = vld [vmem:[%s307 + $0x18] sm:$0xff]
        %v1163 = vld [vmem:[%s307 + $0x20] sm:$0xff]
        %v1164 = vld [vmem:[%s307 + $0x28] sm:$0xff]
        %v1165 = vld [vmem:[%s307 + $0x30] sm:$0xff]
        %v1166 = vld [vmem:[%s307 + $0x38] sm:$0xff]
        %v1167 = vld [vmem:[%s307 + $0x40] sm:$0xff]
        %v1168 = vld [vmem:[%s307 + $0x48] sm:$0xff]
        %v1169 = vld [vmem:[%s307 + $0x50] sm:$0xff]
        %v1170 = vld [vmem:[%s307 + $0x58] sm:$0xff]
        %v1171 = vld [vmem:[%s307 + $0x60] sm:$0xff]
        %v1172 = vld [vmem:[%s307 + $0x68] sm:$0xff]
        %v1173 = vld [vmem:[%s307 + $0x70] sm:$0xff]
        %v1174 = vld [vmem:[%s307 + $0x78] sm:$0x1]
        %s1175 = scalar_lea.vmem [#allocation9], 128
        %v1176 = vld [vmem:[%s1175] sm:$0xf]
        %v1177 = vld [vmem:[%s1175 + $0x4] sm:$0xf]
        %v1178 = vld [vmem:[%s1175 + $0x8] sm:$0xf]
        %v1179 = vld [vmem:[%s1175 + $0xc] sm:$0xf]
        %v1180 = vld [vmem:[%s1175 + $0x10] sm:$0xf]
        %v1181 = vld [vmem:[%s1175 + $0x14] sm:$0xf]
        %v1182 = vld [vmem:[%s1175 + $0x18] sm:$0xf]
        %v1183 = vld [vmem:[%s1175 + $0x1c] sm:$0xf]
        %v1184 = vld [vmem:[%s1175 + $0x20] sm:$0xf]
        %v1185 = vld [vmem:[%s1175 + $0x24] sm:$0xf]
        %v1186 = vld [vmem:[%s1175 + $0x28] sm:$0xf]
        %v1187 = vld [vmem:[%s1175 + $0x2c] sm:$0xf]
        %v1188 = vld [vmem:[%s1175 + $0x30] sm:$0xf]
        %v1189 = vld [vmem:[%s1175 + $0x34] sm:$0xf]
        %v1190 = vld [vmem:[%s1175 + $0x38] sm:$0xf]
        %v1191 = vld [vmem:[%s1175 + $0x3c] sm:$0xf]
        %vm1192 = vsmask.f32 7424
        %v1194 = vshrl.u32 %v1162, 16
        %v1196 = vshll.u32 %v1162, 16
        %v1198 = vrot.slane %v1196, 1
        %v1199 = vor.u32 %v1194, %v1198
        %v1201 = vshll.u32 %v1163, 16
        %v1203 = vrot.slane %v1201, 1
        %v1204 = vsel %vm1192, %v1199, %v1203
        %v1205 = vshrl.u32 %v1163, 16
        %v1207 = vor.u32 %v1205, %v1203
        %v1209 = vshll.u32 %v1164, 16
        %v1211 = vrot.slane %v1209, 1
        %v1212 = vsel %vm1192, %v1207, %v1211
        %v1213 = vshrl.u32 %v1164, 16
        %v1215 = vor.u32 %v1213, %v1211
        %v1217 = vshll.u32 %v1165, 16
        %v1219 = vrot.slane %v1217, 1
        %v1220 = vsel %vm1192, %v1215, %v1219
        %v1221 = vshrl.u32 %v1165, 16
        %v1223 = vor.u32 %v1221, %v1219
        %v1225 = vshll.u32 %v1166, 16
        %v1227 = vrot.slane %v1225, 1
        %v1228 = vsel %vm1192, %v1223, %v1227
        %v1229 = vshrl.u32 %v1166, 16
        %v1231 = vor.u32 %v1229, %v1227
        %v1233 = vshll.u32 %v1167, 16
        %v1235 = vrot.slane %v1233, 1
        %v1236 = vsel %vm1192, %v1231, %v1235
        %v1237 = vshrl.u32 %v1167, 16
        %v1239 = vor.u32 %v1237, %v1235
        %v1241 = vshll.u32 %v1168, 16
        %v1243 = vrot.slane %v1241, 1
        %v1244 = vsel %vm1192, %v1239, %v1243
        %v1245 = vshrl.u32 %v1168, 16
        %v1247 = vor.u32 %v1245, %v1243
        %v1249 = vshll.u32 %v1169, 16
        %v1251 = vrot.slane %v1249, 1
        %v1252 = vsel %vm1192, %v1247, %v1251
        %v1253 = vshrl.u32 %v1169, 16
        %v1255 = vor.u32 %v1253, %v1251
        %v1257 = vshll.u32 %v1170, 16
        %v1259 = vrot.slane %v1257, 1
        %v1260 = vsel %vm1192, %v1255, %v1259
        %v1261 = vshrl.u32 %v1170, 16
        %v1263 = vor.u32 %v1261, %v1259
        %v1265 = vshll.u32 %v1171, 16
        %v1267 = vrot.slane %v1265, 1
        %v1268 = vsel %vm1192, %v1263, %v1267
        %v1269 = vshrl.u32 %v1171, 16
        %v1271 = vor.u32 %v1269, %v1267
        %v1273 = vshll.u32 %v1172, 16
        %v1275 = vrot.slane %v1273, 1
        %v1276 = vsel %vm1192, %v1271, %v1275
        %v1277 = vshrl.u32 %v1172, 16
        %v1279 = vor.u32 %v1277, %v1275
        %v1281 = vshll.u32 %v1173, 16
        %v1283 = vrot.slane %v1281, 1
        %v1284 = vsel %vm1192, %v1279, %v1283
        %v1285 = vshrl.u32 %v1173, 16
        %v1287 = vor.u32 %v1285, %v1283
        %v1289 = vshll.u32 %v1174, 16
        %v1291 = vrot.slane %v1289, 1
        %v1292 = vsel %vm1192, %v1287, %v1291
        %v1321 = vunpack.c.l.b16 %v1176
        %v1322 = vunpack.c.l.b16 %v1177
        %v1323 = vunpack.c.l.b16 %v1178
        %v1324 = vunpack.c.l.b16 %v1179
        %v1325 = vunpack.c.l.b16 %v1180
        %v1326 = vunpack.c.l.b16 %v1181
        %v1327 = vunpack.c.l.b16 %v1182
        %v1328 = vunpack.c.l.b16 %v1183
        %v1329 = vunpack.c.l.b16 %v1184
        %v1330 = vunpack.c.l.b16 %v1185
        %v1331 = vunpack.c.l.b16 %v1186
        %v1332 = vunpack.c.l.b16 %v1187
        %v1333 = vunpack.c.l.b16 %v1188
        %v1334 = vunpack.c.l.b16 %v1189
        %v1335 = vunpack.c.l.b16 %v1190
        %v1336 = vunpack.c.l.b16 %v1191
        %v1337 = vpack.c.b16 %v1322, %v1321
        %v1338 = vpack.c.b16 %v1324, %v1323
        %v1339 = vpack.c.b16 %v1326, %v1325
        %v1340 = vpack.c.b16 %v1328, %v1327
        %v1341 = vpack.c.b16 %v1330, %v1329
        %v1342 = vpack.c.b16 %v1332, %v1331
        %v1343 = vpack.c.b16 %v1334, %v1333
        %v1344 = vpack.c.b16 %v1336, %v1335
        %1353 = vmatprep.subr.bf16.mxu0 0
        %1354 = vmatpush1.bf16.msra.mxu0 %v1337
        %1355 = vmatprep.subr.bf16.mxu0 0
        %1356 = vmatpush1.bf16.msra.mxu0 %v1338
        %1357 = vmatprep.subr.bf16.mxu0 0
        %1358 = vmatpush1.bf16.msra.mxu0 %v1339
        %1359 = vmatprep.subr.bf16.mxu0 0
        %1360 = vmatpush1.bf16.msra.mxu0 %v1340
        %1361 = vmatprep.subr.bf16.mxu0 0
        %1362 = vmatpush1.bf16.msra.mxu0 %v1341
        %1363 = vmatprep.subr.bf16.mxu0 0
        %1364 = vmatpush1.bf16.msra.mxu0 %v1342
        %1365 = vmatprep.subr.bf16.mxu0 0
        %1366 = vmatpush1.bf16.msra.mxu0 %v1343
        %1367 = vmatprep.subr.bf16.mxu0 0
        %1368 = vmatpush1.bf16.msra.mxu0 %v1344
        %1369 = vmatprep.subr.bf16.mxu0 0
        %1370 = vmatpush1.bf16.msra.mxu0 0
        %1371 = vmatprep.subr.bf16.mxu0 0
        %1372 = vmatpush1.bf16.msra.mxu0 0
        %1373 = vmatprep.subr.bf16.mxu0 0
        %1374 = vmatpush1.bf16.msra.mxu0 0
        %1375 = vmatprep.subr.bf16.mxu0 0
        %1376 = vmatpush1.bf16.msra.mxu0 0
        %1377 = vmatprep.subr.bf16.mxu0 0
        %1378 = vmatpush1.bf16.msra.mxu0 0
        %1379 = vmatprep.subr.bf16.mxu0 0
        %1380 = vmatpush1.bf16.msra.mxu0 0
        %1381 = vmatprep.subr.bf16.mxu0 0
        %1382 = vmatpush1.bf16.msra.mxu0 0
        %1383 = vmatprep.subr.bf16.mxu0 0
        %1384 = vmatpush1.bf16.msra.mxu0 0
        %1385 = vmatprep.mubr.bf16.mxu0 0
        %1386 = vmatmul.mubr.bf16.gmra.mrb[0].mxu0 %v1204
        %v1387 = vpop.f32.mrb[0].mxu0
        %v1388 = vadd.f32 0.0, %v1387
        %v1389 = vpop.f32.mrb[0].mxu0
        %v1390 = vpop.f32.mrb[0].mxu0
        %v1391 = vadd.f32 0.0, %v1390
        %v1392 = vpop.f32.mrb[0].mxu0
        %1393 = vmatprep.mubr.bf16.mxu0 0
        %1394 = vmatmul.mubr.bf16.gmra.mrb[0].mxu0 %v1212
        %v1395 = vpop.f32.mrb[0].mxu0
        %v1396 = vadd.f32 0.0, %v1395
        %v1397 = vpop.f32.mrb[0].mxu0
        %v1398 = vpop.f32.mrb[0].mxu0
        %v1399 = vadd.f32 0.0, %v1398
        %v1400 = vpop.f32.mrb[0].mxu0
        %1401 = vmatprep.mubr.bf16.mxu0 0
        %1402 = vmatmul.mubr.bf16.gmra.mrb[0].mxu0 %v1220
        %v1403 = vpop.f32.mrb[0].mxu0
        %v1404 = vadd.f32 0.0, %v1403
        %v1405 = vpop.f32.mrb[0].mxu0
        %v1406 = vpop.f32.mrb[0].mxu0
        %v1407 = vadd.f32 0.0, %v1406
        %v1408 = vpop.f32.mrb[0].mxu0
        %1409 = vmatprep.mubr.bf16.mxu0 0
        %1410 = vmatmul.mubr.bf16.gmra.mrb[0].mxu0 %v1228
        %v1411 = vpop.f32.mrb[0].mxu0
        %v1412 = vadd.f32 0.0, %v1411
        %v1413 = vpop.f32.mrb[0].mxu0
        %v1414 = vpop.f32.mrb[0].mxu0
        %v1415 = vadd.f32 0.0, %v1414
        %v1416 = vpop.f32.mrb[0].mxu0
        %1417 = vmatprep.mubr.bf16.mxu0 0
        %1418 = vmatmul.mubr.bf16.gmra.mrb[0].mxu0 %v1236
        %v1419 = vpop.f32.mrb[0].mxu0
        %v1420 = vadd.f32 0.0, %v1419
        %v1421 = vpop.f32.mrb[0].mxu0
        %v1422 = vpop.f32.mrb[0].mxu0
        %v1423 = vadd.f32 0.0, %v1422
        %v1424 = vpop.f32.mrb[0].mxu0
        %1425 = vmatprep.mubr.bf16.mxu0 0
        %1426 = vmatmul.mubr.bf16.gmra.mrb[0].mxu0 %v1244
        %v1427 = vpop.f32.mrb[0].mxu0
        %v1428 = vadd.f32 0.0, %v1427
        %v1429 = vpop.f32.mrb[0].mxu0
        %v1430 = vpop.f32.mrb[0].mxu0
        %v1431 = vadd.f32 0.0, %v1430
        %v1432 = vpop.f32.mrb[0].mxu0
        %1433 = vmatprep.mubr.bf16.mxu0 0
        %1434 = vmatmul.mubr.bf16.gmra.mrb[0].mxu0 %v1252
        %v1435 = vpop.f32.mrb[0].mxu0
        %v1436 = vadd.f32 0.0, %v1435
        %v1437 = vpop.f32.mrb[0].mxu0
        %v1438 = vpop.f32.mrb[0].mxu0
        %v1439 = vadd.f32 0.0, %v1438
        %v1440 = vpop.f32.mrb[0].mxu0
        %1441 = vmatprep.mubr.bf16.mxu0 0
        %1442 = vmatmul.mubr.bf16.gmra.mrb[0].mxu0 %v1260
        %v1443 = vpop.f32.mrb[0].mxu0
        %v1444 = vadd.f32 0.0, %v1443
        %v1445 = vpop.f32.mrb[0].mxu0
        %v1446 = vpop.f32.mrb[0].mxu0
        %v1447 = vadd.f32 0.0, %v1446
        %v1448 = vpop.f32.mrb[0].mxu0
        %1449 = vmatprep.mubr.bf16.mxu0 0
        %1450 = vmatmul.mubr.bf16.gmra.mrb[0].mxu0 %v1268
        %v1451 = vpop.f32.mrb[0].mxu0
        %v1452 = vadd.f32 0.0, %v1451
        %v1453 = vpop.f32.mrb[0].mxu0
        %v1454 = vpop.f32.mrb[0].mxu0
        %v1455 = vadd.f32 0.0, %v1454
        %v1456 = vpop.f32.mrb[0].mxu0
        %1457 = vmatprep.mubr.bf16.mxu0 0
        %1458 = vmatmul.mubr.bf16.gmra.mrb[0].mxu0 %v1276
        %v1459 = vpop.f32.mrb[0].mxu0
        %v1460 = vadd.f32 0.0, %v1459
        %v1461 = vpop.f32.mrb[0].mxu0
        %v1462 = vpop.f32.mrb[0].mxu0
        %v1463 = vadd.f32 0.0, %v1462
        %v1464 = vpop.f32.mrb[0].mxu0
        %1465 = vmatprep.mubr.bf16.mxu0 0
        %1466 = vmatmul.mubr.bf16.gmra.mrb[0].mxu0 %v1284
        %v1467 = vpop.f32.mrb[0].mxu0
        %v1468 = vadd.f32 0.0, %v1467
        %v1469 = vpop.f32.mrb[0].mxu0
        %v1470 = vpop.f32.mrb[0].mxu0
        %v1471 = vadd.f32 0.0, %v1470
        %v1472 = vpop.f32.mrb[0].mxu0
        %1473 = vmatprep.mubr.bf16.mxu0 0
        %1474 = vmatmul.mubr.bf16.gmra.mrb[0].mxu0 %v1292
        %v1475 = vpop.f32.mrb[0].mxu0
        %v1476 = vadd.f32 0.0, %v1475
        %v1477 = vpop.f32.mrb[0].mxu0
        %v1478 = vpop.f32.mrb[0].mxu0
        %v1479 = vadd.f32 0.0, %v1478
        %v1480 = vpop.f32.mrb[0].mxu0
        %1481 = vdwg.mxu0
        %v1482 = vadd.f32 %v1068, %v1388
        %v1483 = vadd.f32 %v1071, %v1391
        %v1484 = vadd.f32 %v1076, %v1396
        %v1485 = vadd.f32 %v1079, %v1399
        %v1486 = vadd.f32 %v1084, %v1404
        %v1487 = vadd.f32 %v1087, %v1407
        %v1488 = vadd.f32 %v1092, %v1412
        %v1489 = vadd.f32 %v1095, %v1415
        %v1490 = vadd.f32 %v1100, %v1420
        %v1491 = vadd.f32 %v1103, %v1423
        %v1492 = vadd.f32 %v1108, %v1428
        %v1493 = vadd.f32 %v1111, %v1431
        %v1494 = vadd.f32 %v1116, %v1436
        %v1495 = vadd.f32 %v1119, %v1439
        %v1496 = vadd.f32 %v1124, %v1444
        %v1497 = vadd.f32 %v1127, %v1447
        %v1498 = vadd.f32 %v1132, %v1452
        %v1499 = vadd.f32 %v1135, %v1455
        %v1500 = vadd.f32 %v1140, %v1460
        %v1501 = vadd.f32 %v1143, %v1463
        %v1502 = vadd.f32 %v1148, %v1468
        %v1503 = vadd.f32 %v1151, %v1471
        %v1504 = vadd.f32 %v1156, %v1476
        %v1505 = vadd.f32 %v1159, %v1479
        %v1506 = vld [vmem:[%s307 + $0x20] sm:$0xf8]
        %s1507 = scalar_lea.vmem [#allocation9], 192
        %v1508 = vld [vmem:[%s1507] sm:$0xf]
        %v1509 = vld [vmem:[%s1507 + $0x4] sm:$0xf]
        %v1510 = vld [vmem:[%s1507 + $0x8] sm:$0xf]
        %v1511 = vld [vmem:[%s1507 + $0xc] sm:$0xf]
        %v1512 = vld [vmem:[%s1507 + $0x10] sm:$0xf]
        %v1513 = vld [vmem:[%s1507 + $0x14] sm:$0xf]
        %v1514 = vld [vmem:[%s1507 + $0x18] sm:$0xf]
        %v1515 = vld [vmem:[%s1507 + $0x1c] sm:$0xf]
        %v1516 = vld [vmem:[%s1507 + $0x20] sm:$0xf]
        %v1517 = vld [vmem:[%s1507 + $0x24] sm:$0xf]
        %v1518 = vld [vmem:[%s1507 + $0x28] sm:$0xf]
        %v1519 = vld [vmem:[%s1507 + $0x2c] sm:$0xf]
        %v1520 = vld [vmem:[%s1507 + $0x30] sm:$0xf]
        %v1521 = vld [vmem:[%s1507 + $0x34] sm:$0xf]
        %v1522 = vld [vmem:[%s1507 + $0x38] sm:$0xf]
        %v1523 = vld [vmem:[%s1507 + $0x3c] sm:$0xf]
        %vm1524 = vsmask.f32 4352
        %v1526 = vshrl.u32 %v1506, 16
        %v1528 = vrot.slane %v1526, 3
        %v1529 = vshll.u32 %v1506, 16
        %v1531 = vrot.slane %v1529, 4
        %v1532 = vor.u32 %v1528, %v1531
        %v1534 = vshrl.u32 %v341, 16
        %v1536 = vrot.slane %v1534, 3
        %v1537 = vshll.u32 %v341, 16
        %v1539 = vrot.slane %v1537, 4
        %v1540 = vor.u32 %v1536, %v1539
        %v1541 = vsel %vm1524, %v1532, %v1540
        %v1543 = vshrl.u32 %v342, 16
        %v1545 = vrot.slane %v1543, 3
        %v1546 = vshll.u32 %v342, 16
        %v1548 = vrot.slane %v1546, 4
        %v1549 = vor.u32 %v1545, %v1548
        %v1550 = vsel %vm1524, %v1540, %v1549
        %v1552 = vshrl.u32 %v343, 16
        %v1554 = vrot.slane %v1552, 3
        %v1555 = vshll.u32 %v343, 16
        %v1557 = vrot.slane %v1555, 4
        %v1558 = vor.u32 %v1554, %v1557
        %v1559 = vsel %vm1524, %v1549, %v1558
        %v1561 = vshrl.u32 %v344, 16
        %v1563 = vrot.slane %v1561, 3
        %v1564 = vshll.u32 %v344, 16
        %v1566 = vrot.slane %v1564, 4
        %v1567 = vor.u32 %v1563, %v1566
        %v1568 = vsel %vm1524, %v1558, %v1567
        %v1570 = vshrl.u32 %v345, 16
        %v1572 = vrot.slane %v1570, 3
        %v1573 = vshll.u32 %v345, 16
        %v1575 = vrot.slane %v1573, 4
        %v1576 = vor.u32 %v1572, %v1575
        %v1577 = vsel %vm1524, %v1567, %v1576
        %v1579 = vshrl.u32 %v346, 16
        %v1581 = vrot.slane %v1579, 3
        %v1582 = vshll.u32 %v346, 16
        %v1584 = vrot.slane %v1582, 4
        %v1585 = vor.u32 %v1581, %v1584
        %v1586 = vsel %vm1524, %v1576, %v1585
        %v1588 = vshrl.u32 %v347, 16
        %v1590 = vrot.slane %v1588, 3
        %v1591 = vshll.u32 %v347, 16
        %v1593 = vrot.slane %v1591, 4
        %v1594 = vor.u32 %v1590, %v1593
        %v1595 = vsel %vm1524, %v1585, %v1594
        %v1597 = vshrl.u32 %v348, 16
        %v1599 = vrot.slane %v1597, 3
        %v1600 = vshll.u32 %v348, 16
        %v1602 = vrot.slane %v1600, 4
        %v1603 = vor.u32 %v1599, %v1602
        %v1604 = vsel %vm1524, %v1594, %v1603
        %v1606 = vshrl.u32 %v349, 16
        %v1608 = vrot.slane %v1606, 3
        %v1609 = vshll.u32 %v349, 16
        %v1611 = vrot.slane %v1609, 4
        %v1612 = vor.u32 %v1608, %v1611
        %v1613 = vsel %vm1524, %v1603, %v1612
        %v1615 = vshrl.u32 %v350, 16
        %v1617 = vrot.slane %v1615, 3
        %v1618 = vshll.u32 %v350, 16
        %v1620 = vrot.slane %v1618, 4
        %v1621 = vor.u32 %v1617, %v1620
        %v1622 = vsel %vm1524, %v1612, %v1621
        %v1624 = vshrl.u32 %v351, 16
        %v1626 = vrot.slane %v1624, 3
        %v1627 = vshll.u32 %v351, 16
        %v1629 = vrot.slane %v1627, 4
        %v1630 = vor.u32 %v1626, %v1629
        %v1631 = vsel %vm1524, %v1621, %v1630
        %v1633 = vshrl.u32 %v352, 16
        %v1635 = vrot.slane %v1633, 3
        %v1636 = vshll.u32 %v352, 16
        %v1638 = vrot.slane %v1636, 4
        %v1639 = vor.u32 %v1635, %v1638
        %v1640 = vsel %vm1524, %v1630, %v1639
        %v1669 = vunpack.c.l.b16 %v1508
        %v1670 = vunpack.c.l.b16 %v1509
        %v1671 = vunpack.c.l.b16 %v1510
        %v1672 = vunpack.c.l.b16 %v1511
        %v1673 = vunpack.c.l.b16 %v1512
        %v1674 = vunpack.c.l.b16 %v1513
        %v1675 = vunpack.c.l.b16 %v1514
        %v1676 = vunpack.c.l.b16 %v1515
        %v1677 = vunpack.c.l.b16 %v1516
        %v1678 = vunpack.c.l.b16 %v1517
        %v1679 = vunpack.c.l.b16 %v1518
        %v1680 = vunpack.c.l.b16 %v1519
        %v1681 = vunpack.c.l.b16 %v1520
        %v1682 = vunpack.c.l.b16 %v1521
        %v1683 = vunpack.c.l.b16 %v1522
        %v1684 = vunpack.c.l.b16 %v1523
        %v1685 = vpack.c.b16 %v1670, %v1669
        %v1686 = vpack.c.b16 %v1672, %v1671
        %v1687 = vpack.c.b16 %v1674, %v1673
        %v1688 = vpack.c.b16 %v1676, %v1675
        %v1689 = vpack.c.b16 %v1678, %v1677
        %v1690 = vpack.c.b16 %v1680, %v1679
        %v1691 = vpack.c.b16 %v1682, %v1681
        %v1692 = vpack.c.b16 %v1684, %v1683
        %1701 = vmatprep.subr.bf16.mxu0 0
        %1702 = vmatpush1.bf16.msra.mxu0 %v1685
        %1703 = vmatprep.subr.bf16.mxu0 0
        %1704 = vmatpush1.bf16.msra.mxu0 %v1686
        %1705 = vmatprep.subr.bf16.mxu0 0
        %1706 = vmatpush1.bf16.msra.mxu0 %v1687
        %1707 = vmatprep.subr.bf16.mxu0 0
        %1708 = vmatpush1.bf16.msra.mxu0 %v1688
        %1709 = vmatprep.subr.bf16.mxu0 0
        %1710 = vmatpush1.bf16.msra.mxu0 %v1689
        %1711 = vmatprep.subr.bf16.mxu0 0
        %1712 = vmatpush1.bf16.msra.mxu0 %v1690
        %1713 = vmatprep.subr.bf16.mxu0 0
        %1714 = vmatpush1.bf16.msra.mxu0 %v1691
        %1715 = vmatprep.subr.bf16.mxu0 0
        %1716 = vmatpush1.bf16.msra.mxu0 %v1692
        %1717 = vmatprep.subr.bf16.mxu0 0
        %1718 = vmatpush1.bf16.msra.mxu0 0
        %1719 = vmatprep.subr.bf16.mxu0 0
        %1720 = vmatpush1.bf16.msra.mxu0 0
        %1721 = vmatprep.subr.bf16.mxu0 0
        %1722 = vmatpush1.bf16.msra.mxu0 0
        %1723 = vmatprep.subr.bf16.mxu0 0
        %1724 = vmatpush1.bf16.msra.mxu0 0
        %1725 = vmatprep.subr.bf16.mxu0 0
        %1726 = vmatpush1.bf16.msra.mxu0 0
        %1727 = vmatprep.subr.bf16.mxu0 0
        %1728 = vmatpush1.bf16.msra.mxu0 0
        %1729 = vmatprep.subr.bf16.mxu0 0
        %1730 = vmatpush1.bf16.msra.mxu0 0
        %1731 = vmatprep.subr.bf16.mxu0 0
        %1732 = vmatpush1.bf16.msra.mxu0 0
        %1733 = vmatprep.mubr.bf16.mxu0 0
        %1734 = vmatmul.mubr.bf16.gmra.mrb[0].mxu0 %v1541
        %v1735 = vpop.f32.mrb[0].mxu0
        %v1736 = vadd.f32 0.0, %v1735
        %v1737 = vpop.f32.mrb[0].mxu0
        %v1738 = vpop.f32.mrb[0].mxu0
        %v1739 = vadd.f32 0.0, %v1738
        %v1740 = vpop.f32.mrb[0].mxu0
        %1741 = vmatprep.mubr.bf16.mxu0 0
        %1742 = vmatmul.mubr.bf16.gmra.mrb[0].mxu0 %v1550
        %v1743 = vpop.f32.mrb[0].mxu0
        %v1744 = vadd.f32 0.0, %v1743
        %v1745 = vpop.f32.mrb[0].mxu0
        %v1746 = vpop.f32.mrb[0].mxu0
        %v1747 = vadd.f32 0.0, %v1746
        %v1748 = vpop.f32.mrb[0].mxu0
        %1749 = vmatprep.mubr.bf16.mxu0 0
        %1750 = vmatmul.mubr.bf16.gmra.mrb[0].mxu0 %v1559
        %v1751 = vpop.f32.mrb[0].mxu0
        %v1752 = vadd.f32 0.0, %v1751
        %v1753 = vpop.f32.mrb[0].mxu0
        %v1754 = vpop.f32.mrb[0].mxu0
        %v1755 = vadd.f32 0.0, %v1754
        %v1756 = vpop.f32.mrb[0].mxu0
        %1757 = vmatprep.mubr.bf16.mxu0 0
        %1758 = vmatmul.mubr.bf16.gmra.mrb[0].mxu0 %v1568
        %v1759 = vpop.f32.mrb[0].mxu0
        %v1760 = vadd.f32 0.0, %v1759
        %v1761 = vpop.f32.mrb[0].mxu0
        %v1762 = vpop.f32.mrb[0].mxu0
        %v1763 = vadd.f32 0.0, %v1762
        %v1764 = vpop.f32.mrb[0].mxu0
        %1765 = vmatprep.mubr.bf16.mxu0 0
        %1766 = vmatmul.mubr.bf16.gmra.mrb[0].mxu0 %v1577
        %v1767 = vpop.f32.mrb[0].mxu0
        %v1768 = vadd.f32 0.0, %v1767
        %v1769 = vpop.f32.mrb[0].mxu0
        %v1770 = vpop.f32.mrb[0].mxu0
        %v1771 = vadd.f32 0.0, %v1770
        %v1772 = vpop.f32.mrb[0].mxu0
        %1773 = vmatprep.mubr.bf16.mxu0 0
        %1774 = vmatmul.mubr.bf16.gmra.mrb[0].mxu0 %v1586
        %v1775 = vpop.f32.mrb[0].mxu0
        %v1776 = vadd.f32 0.0, %v1775
        %v1777 = vpop.f32.mrb[0].mxu0
        %v1778 = vpop.f32.mrb[0].mxu0
        %v1779 = vadd.f32 0.0, %v1778
        %v1780 = vpop.f32.mrb[0].mxu0
        %1781 = vmatprep.mubr.bf16.mxu0 0
        %1782 = vmatmul.mubr.bf16.gmra.mrb[0].mxu0 %v1595
        %v1783 = vpop.f32.mrb[0].mxu0
        %v1784 = vadd.f32 0.0, %v1783
        %v1785 = vpop.f32.mrb[0].mxu0
        %v1786 = vpop.f32.mrb[0].mxu0
        %v1787 = vadd.f32 0.0, %v1786
        %v1788 = vpop.f32.mrb[0].mxu0
        %1789 = vmatprep.mubr.bf16.mxu0 0
        %1790 = vmatmul.mubr.bf16.gmra.mrb[0].mxu0 %v1604
        %v1791 = vpop.f32.mrb[0].mxu0
        %v1792 = vadd.f32 0.0, %v1791
        %v1793 = vpop.f32.mrb[0].mxu0
        %v1794 = vpop.f32.mrb[0].mxu0
        %v1795 = vadd.f32 0.0, %v1794
        %v1796 = vpop.f32.mrb[0].mxu0
        %1797 = vmatprep.mubr.bf16.mxu0 0
        %1798 = vmatmul.mubr.bf16.gmra.mrb[0].mxu0 %v1613
        %v1799 = vpop.f32.mrb[0].mxu0
        %v1800 = vadd.f32 0.0, %v1799
        %v1801 = vpop.f32.mrb[0].mxu0
        %v1802 = vpop.f32.mrb[0].mxu0
        %v1803 = vadd.f32 0.0, %v1802
        %v1804 = vpop.f32.mrb[0].mxu0
        %1805 = vmatprep.mubr.bf16.mxu0 0
        %1806 = vmatmul.mubr.bf16.gmra.mrb[0].mxu0 %v1622
        %v1807 = vpop.f32.mrb[0].mxu0
        %v1808 = vadd.f32 0.0, %v1807
        %v1809 = vpop.f32.mrb[0].mxu0
        %v1810 = vpop.f32.mrb[0].mxu0
        %v1811 = vadd.f32 0.0, %v1810
        %v1812 = vpop.f32.mrb[0].mxu0
        %1813 = vmatprep.mubr.bf16.mxu0 0
        %1814 = vmatmul.mubr.bf16.gmra.mrb[0].mxu0 %v1631
        %v1815 = vpop.f32.mrb[0].mxu0
        %v1816 = vadd.f32 0.0, %v1815
        %v1817 = vpop.f32.mrb[0].mxu0
        %v1818 = vpop.f32.mrb[0].mxu0
        %v1819 = vadd.f32 0.0, %v1818
        %v1820 = vpop.f32.mrb[0].mxu0
        %1821 = vmatprep.mubr.bf16.mxu0 0
        %1822 = vmatmul.mubr.bf16.gmra.mrb[0].mxu0 %v1640
        %v1823 = vpop.f32.mrb[0].mxu0
        %v1824 = vadd.f32 0.0, %v1823
        %v1825 = vpop.f32.mrb[0].mxu0
        %v1826 = vpop.f32.mrb[0].mxu0
        %v1827 = vadd.f32 0.0, %v1826
        %v1828 = vpop.f32.mrb[0].mxu0
        %1829 = vdwg.mxu0
        %v1830 = vadd.f32 %v1482, %v1736
        %v1831 = vadd.f32 %v1483, %v1739
        %v1832 = vadd.f32 %v1484, %v1744
        %v1833 = vadd.f32 %v1485, %v1747
        %v1834 = vadd.f32 %v1486, %v1752
        %v1835 = vadd.f32 %v1487, %v1755
        %v1836 = vadd.f32 %v1488, %v1760
        %v1837 = vadd.f32 %v1489, %v1763
        %v1838 = vadd.f32 %v1490, %v1768
        %v1839 = vadd.f32 %v1491, %v1771
        %v1840 = vadd.f32 %v1492, %v1776
        %v1841 = vadd.f32 %v1493, %v1779
        %v1842 = vadd.f32 %v1494, %v1784
        %v1843 = vadd.f32 %v1495, %v1787
        %v1844 = vadd.f32 %v1496, %v1792
        %v1845 = vadd.f32 %v1497, %v1795
        %v1846 = vadd.f32 %v1498, %v1800
        %v1847 = vadd.f32 %v1499, %v1803
        %v1848 = vadd.f32 %v1500, %v1808
        %v1849 = vadd.f32 %v1501, %v1811
        %v1850 = vadd.f32 %v1502, %v1816
        %v1851 = vadd.f32 %v1503, %v1819
        %v1852 = vadd.f32 %v1504, %v1824
        %v1853 = vadd.f32 %v1505, %v1827
        %s1854 = scalar_lea.vmem [#allocation9], 256
        %v1855 = vld [vmem:[%s1854] sm:$0xf]
        %v1856 = vld [vmem:[%s1854 + $0x4] sm:$0xf]
        %v1857 = vld [vmem:[%s1854 + $0x8] sm:$0xf]
        %v1858 = vld [vmem:[%s1854 + $0xc] sm:$0xf]
        %v1859 = vld [vmem:[%s1854 + $0x10] sm:$0xf]
        %v1860 = vld [vmem:[%s1854 + $0x14] sm:$0xf]
        %v1861 = vld [vmem:[%s1854 + $0x18] sm:$0xf]
        %v1862 = vld [vmem:[%s1854 + $0x1c] sm:$0xf]
        %v1863 = vld [vmem:[%s1854 + $0x20] sm:$0xf]
        %v1864 = vld [vmem:[%s1854 + $0x24] sm:$0xf]
        %v1865 = vld [vmem:[%s1854 + $0x28] sm:$0xf]
        %v1866 = vld [vmem:[%s1854 + $0x2c] sm:$0xf]
        %v1867 = vld [vmem:[%s1854 + $0x30] sm:$0xf]
        %v1868 = vld [vmem:[%s1854 + $0x34] sm:$0xf]
        %v1869 = vld [vmem:[%s1854 + $0x38] sm:$0xf]
        %v1870 = vld [vmem:[%s1854 + $0x3c] sm:$0xf]
        %v1887 = vunpack.c.l.b16 %v1855
        %v1888 = vunpack.c.l.b16 %v1856
        %v1889 = vunpack.c.l.b16 %v1857
        %v1890 = vunpack.c.l.b16 %v1858
        %v1891 = vunpack.c.l.b16 %v1859
        %v1892 = vunpack.c.l.b16 %v1860
        %v1893 = vunpack.c.l.b16 %v1861
        %v1894 = vunpack.c.l.b16 %v1862
        %v1895 = vunpack.c.l.b16 %v1863
        %v1896 = vunpack.c.l.b16 %v1864
        %v1897 = vunpack.c.l.b16 %v1865
        %v1898 = vunpack.c.l.b16 %v1866
        %v1899 = vunpack.c.l.b16 %v1867
        %v1900 = vunpack.c.l.b16 %v1868
        %v1901 = vunpack.c.l.b16 %v1869
        %v1902 = vunpack.c.l.b16 %v1870
        %v1903 = vpack.c.b16 %v1888, %v1887
        %v1904 = vpack.c.b16 %v1890, %v1889
        %v1905 = vpack.c.b16 %v1892, %v1891
        %v1906 = vpack.c.b16 %v1894, %v1893
        %v1907 = vpack.c.b16 %v1896, %v1895
        %v1908 = vpack.c.b16 %v1898, %v1897
        %v1909 = vpack.c.b16 %v1900, %v1899
        %v1910 = vpack.c.b16 %v1902, %v1901
        %1919 = vmatprep.subr.bf16.mxu0 0
        %1920 = vmatpush1.bf16.msra.mxu0 %v1903
        %1921 = vmatprep.subr.bf16.mxu0 0
        %1922 = vmatpush1.bf16.msra.mxu0 %v1904
        %1923 = vmatprep.subr.bf16.mxu0 0
        %1924 = vmatpush1.bf16.msra.mxu0 %v1905
        %1925 = vmatprep.subr.bf16.mxu0 0
        %1926 = vmatpush1.bf16.msra.mxu0 %v1906
        %1927 = vmatprep.subr.bf16.mxu0 0
        %1928 = vmatpush1.bf16.msra.mxu0 %v1907
        %1929 = vmatprep.subr.bf16.mxu0 0
        %1930 = vmatpush1.bf16.msra.mxu0 %v1908
        %1931 = vmatprep.subr.bf16.mxu0 0
        %1932 = vmatpush1.bf16.msra.mxu0 %v1909
        %1933 = vmatprep.subr.bf16.mxu0 0
        %1934 = vmatpush1.bf16.msra.mxu0 %v1910
        %1935 = vmatprep.subr.bf16.mxu0 0
        %1936 = vmatpush1.bf16.msra.mxu0 0
        %1937 = vmatprep.subr.bf16.mxu0 0
        %1938 = vmatpush1.bf16.msra.mxu0 0
        %1939 = vmatprep.subr.bf16.mxu0 0
        %1940 = vmatpush1.bf16.msra.mxu0 0
        %1941 = vmatprep.subr.bf16.mxu0 0
        %1942 = vmatpush1.bf16.msra.mxu0 0
        %1943 = vmatprep.subr.bf16.mxu0 0
        %1944 = vmatpush1.bf16.msra.mxu0 0
        %1945 = vmatprep.subr.bf16.mxu0 0
        %1946 = vmatpush1.bf16.msra.mxu0 0
        %1947 = vmatprep.subr.bf16.mxu0 0
        %1948 = vmatpush1.bf16.msra.mxu0 0
        %1949 = vmatprep.subr.bf16.mxu0 0
        %1950 = vmatpush1.bf16.msra.mxu0 0
        %1951 = vmatprep.mubr.bf16.mxu0 0
        %1952 = vmatmul.mubr.bf16.gmra.mrb[0].mxu0 %v385
        %v1953 = vpop.f32.mrb[0].mxu0
        %v1954 = vadd.f32 0.0, %v1953
        %v1955 = vpop.f32.mrb[0].mxu0
        %v1956 = vpop.f32.mrb[0].mxu0
        %v1957 = vadd.f32 0.0, %v1956
        %v1958 = vpop.f32.mrb[0].mxu0
        %1959 = vmatprep.mubr.bf16.mxu0 0
        %1960 = vmatmul.mubr.bf16.gmra.mrb[0].mxu0 %v387
        %v1961 = vpop.f32.mrb[0].mxu0
        %v1962 = vadd.f32 0.0, %v1961
        %v1963 = vpop.f32.mrb[0].mxu0
        %v1964 = vpop.f32.mrb[0].mxu0
        %v1965 = vadd.f32 0.0, %v1964
        %v1966 = vpop.f32.mrb[0].mxu0
        %1967 = vmatprep.mubr.bf16.mxu0 0
        %1968 = vmatmul.mubr.bf16.gmra.mrb[0].mxu0 %v389
        %v1969 = vpop.f32.mrb[0].mxu0
        %v1970 = vadd.f32 0.0, %v1969
        %v1971 = vpop.f32.mrb[0].mxu0
        %v1972 = vpop.f32.mrb[0].mxu0
        %v1973 = vadd.f32 0.0, %v1972
        %v1974 = vpop.f32.mrb[0].mxu0
        %1975 = vmatprep.mubr.bf16.mxu0 0
        %1976 = vmatmul.mubr.bf16.gmra.mrb[0].mxu0 %v391
        %v1977 = vpop.f32.mrb[0].mxu0
        %v1978 = vadd.f32 0.0, %v1977
        %v1979 = vpop.f32.mrb[0].mxu0
        %v1980 = vpop.f32.mrb[0].mxu0
        %v1981 = vadd.f32 0.0, %v1980
        %v1982 = vpop.f32.mrb[0].mxu0
        %1983 = vmatprep.mubr.bf16.mxu0 0
        %1984 = vmatmul.mubr.bf16.gmra.mrb[0].mxu0 %v393
        %v1985 = vpop.f32.mrb[0].mxu0
        %v1986 = vadd.f32 0.0, %v1985
        %v1987 = vpop.f32.mrb[0].mxu0
        %v1988 = vpop.f32.mrb[0].mxu0
        %v1989 = vadd.f32 0.0, %v1988
        %v1990 = vpop.f32.mrb[0].mxu0
        %1991 = vmatprep.mubr.bf16.mxu0 0
        %1992 = vmatmul.mubr.bf16.gmra.mrb[0].mxu0 %v395
        %v1993 = vpop.f32.mrb[0].mxu0
        %v1994 = vadd.f32 0.0, %v1993
        %v1995 = vpop.f32.mrb[0].mxu0
        %v1996 = vpop.f32.mrb[0].mxu0
        %v1997 = vadd.f32 0.0, %v1996
        %v1998 = vpop.f32.mrb[0].mxu0
        %1999 = vmatprep.mubr.bf16.mxu0 0
        %2000 = vmatmul.mubr.bf16.gmra.mrb[0].mxu0 %v397
        %v2001 = vpop.f32.mrb[0].mxu0
        %v2002 = vadd.f32 0.0, %v2001
        %v2003 = vpop.f32.mrb[0].mxu0
        %v2004 = vpop.f32.mrb[0].mxu0
        %v2005 = vadd.f32 0.0, %v2004
        %v2006 = vpop.f32.mrb[0].mxu0
        %2007 = vmatprep.mubr.bf16.mxu0 0
        %2008 = vmatmul.mubr.bf16.gmra.mrb[0].mxu0 %v399
        %v2009 = vpop.f32.mrb[0].mxu0
        %v2010 = vadd.f32 0.0, %v2009
        %v2011 = vpop.f32.mrb[0].mxu0
        %v2012 = vpop.f32.mrb[0].mxu0
        %v2013 = vadd.f32 0.0, %v2012
        %v2014 = vpop.f32.mrb[0].mxu0
        %2015 = vmatprep.mubr.bf16.mxu0 0
        %2016 = vmatmul.mubr.bf16.gmra.mrb[0].mxu0 %v401
        %v2017 = vpop.f32.mrb[0].mxu0
        %v2018 = vadd.f32 0.0, %v2017
        %v2019 = vpop.f32.mrb[0].mxu0
        %v2020 = vpop.f32.mrb[0].mxu0
        %v2021 = vadd.f32 0.0, %v2020
        %v2022 = vpop.f32.mrb[0].mxu0
        %2023 = vmatprep.mubr.bf16.mxu0 0
        %2024 = vmatmul.mubr.bf16.gmra.mrb[0].mxu0 %v403
        %v2025 = vpop.f32.mrb[0].mxu0
        %v2026 = vadd.f32 0.0, %v2025
        %v2027 = vpop.f32.mrb[0].mxu0
        %v2028 = vpop.f32.mrb[0].mxu0
        %v2029 = vadd.f32 0.0, %v2028
        %v2030 = vpop.f32.mrb[0].mxu0
        %2031 = vmatprep.mubr.bf16.mxu0 0
        %2032 = vmatmul.mubr.bf16.gmra.mrb[0].mxu0 %v405
        %v2033 = vpop.f32.mrb[0].mxu0
        %v2034 = vadd.f32 0.0, %v2033
        %v2035 = vpop.f32.mrb[0].mxu0
        %v2036 = vpop.f32.mrb[0].mxu0
        %v2037 = vadd.f32 0.0, %v2036
        %v2038 = vpop.f32.mrb[0].mxu0
        %2039 = vmatprep.mubr.bf16.mxu0 0
        %2040 = vmatmul.mubr.bf16.gmra.mrb[0].mxu0 %v407
        %v2041 = vpop.f32.mrb[0].mxu0
        %v2042 = vadd.f32 0.0, %v2041
        %v2043 = vpop.f32.mrb[0].mxu0
        %v2044 = vpop.f32.mrb[0].mxu0
        %v2045 = vadd.f32 0.0, %v2044
        %v2046 = vpop.f32.mrb[0].mxu0
        %2047 = vdwg.mxu0
        %v2048 = vadd.f32 %v1830, %v1954
        %v2049 = vadd.f32 %v1831, %v1957
        %v2050 = vadd.f32 %v1832, %v1962
        %v2051 = vadd.f32 %v1833, %v1965
        %v2052 = vadd.f32 %v1834, %v1970
        %v2053 = vadd.f32 %v1835, %v1973
        %v2054 = vadd.f32 %v1836, %v1978
        %v2055 = vadd.f32 %v1837, %v1981
        %v2056 = vadd.f32 %v1838, %v1986
        %v2057 = vadd.f32 %v1839, %v1989
        %v2058 = vadd.f32 %v1840, %v1994
        %v2059 = vadd.f32 %v1841, %v1997
        %v2060 = vadd.f32 %v1842, %v2002
        %v2061 = vadd.f32 %v1843, %v2005
        %v2062 = vadd.f32 %v1844, %v2010
        %v2063 = vadd.f32 %v1845, %v2013
        %v2064 = vadd.f32 %v1846, %v2018
        %v2065 = vadd.f32 %v1847, %v2021
        %v2066 = vadd.f32 %v1848, %v2026
        %v2067 = vadd.f32 %v1849, %v2029
        %v2068 = vadd.f32 %v1850, %v2034
        %v2069 = vadd.f32 %v1851, %v2037
        %v2070 = vadd.f32 %v1852, %v2042
        %v2071 = vadd.f32 %v1853, %v2045
        %v2072 = vld [vmem:[%s307 + $0x80] sm:$0x1f]
        %s2073 = scalar_lea.vmem [#allocation9], 320
        %v2074 = vld [vmem:[%s2073] sm:$0xf]
        %v2075 = vld [vmem:[%s2073 + $0x4] sm:$0xf]
        %v2076 = vld [vmem:[%s2073 + $0x8] sm:$0xf]
        %v2077 = vld [vmem:[%s2073 + $0xc] sm:$0xf]
        %v2078 = vld [vmem:[%s2073 + $0x10] sm:$0xf]
        %v2079 = vld [vmem:[%s2073 + $0x14] sm:$0xf]
        %v2080 = vld [vmem:[%s2073 + $0x18] sm:$0xf]
        %v2081 = vld [vmem:[%s2073 + $0x1c] sm:$0xf]
        %v2082 = vld [vmem:[%s2073 + $0x20] sm:$0xf]
        %v2083 = vld [vmem:[%s2073 + $0x24] sm:$0xf]
        %v2084 = vld [vmem:[%s2073 + $0x28] sm:$0xf]
        %v2085 = vld [vmem:[%s2073 + $0x2c] sm:$0xf]
        %v2086 = vld [vmem:[%s2073 + $0x30] sm:$0xf]
        %v2087 = vld [vmem:[%s2073 + $0x34] sm:$0xf]
        %v2088 = vld [vmem:[%s2073 + $0x38] sm:$0xf]
        %v2089 = vld [vmem:[%s2073 + $0x3c] sm:$0xf]
        %vm2090 = vsmask.f32 3328
        %v2092 = vshrl.u32 %v340, 16
        %v2094 = vrot.slane %v2092, 4
        %v2095 = vshll.u32 %v340, 16
        %v2097 = vrot.slane %v2095, 5
        %v2098 = vor.u32 %v2094, %v2097
        %v2099 = vrot.slane %v1534, 4
        %v2100 = vrot.slane %v1537, 5
        %v2101 = vor.u32 %v2099, %v2100
        %v2102 = vsel %vm2090, %v2098, %v2101
        %v2103 = vrot.slane %v1543, 4
        %v2104 = vrot.slane %v1546, 5
        %v2105 = vor.u32 %v2103, %v2104
        %v2106 = vsel %vm2090, %v2101, %v2105
        %v2107 = vrot.slane %v1552, 4
        %v2108 = vrot.slane %v1555, 5
        %v2109 = vor.u32 %v2107, %v2108
        %v2110 = vsel %vm2090, %v2105, %v2109
        %v2111 = vrot.slane %v1561, 4
        %v2112 = vrot.slane %v1564, 5
        %v2113 = vor.u32 %v2111, %v2112
        %v2114 = vsel %vm2090, %v2109, %v2113
        %v2115 = vrot.slane %v1570, 4
        %v2116 = vrot.slane %v1573, 5
        %v2117 = vor.u32 %v2115, %v2116
        %v2118 = vsel %vm2090, %v2113, %v2117
        %v2119 = vrot.slane %v1579, 4
        %v2120 = vrot.slane %v1582, 5
        %v2121 = vor.u32 %v2119, %v2120
        %v2122 = vsel %vm2090, %v2117, %v2121
        %v2123 = vrot.slane %v1588, 4
        %v2124 = vrot.slane %v1591, 5
        %v2125 = vor.u32 %v2123, %v2124
        %v2126 = vsel %vm2090, %v2121, %v2125
        %v2127 = vrot.slane %v1597, 4
        %v2128 = vrot.slane %v1600, 5
        %v2129 = vor.u32 %v2127, %v2128
        %v2130 = vsel %vm2090, %v2125, %v2129
        %v2131 = vrot.slane %v1606, 4
        %v2132 = vrot.slane %v1609, 5
        %v2133 = vor.u32 %v2131, %v2132
        %v2134 = vsel %vm2090, %v2129, %v2133
        %v2135 = vrot.slane %v1615, 4
        %v2136 = vrot.slane %v1618, 5
        %v2137 = vor.u32 %v2135, %v2136
        %v2138 = vsel %vm2090, %v2133, %v2137
        %v2139 = vrot.slane %v1624, 4
        %v2140 = vrot.slane %v1627, 5
        %v2141 = vor.u32 %v2139, %v2140
        %v2142 = vsel %vm2090, %v2137, %v2141
        %v2144 = vshrl.u32 %v2072, 16
        %v2146 = vrot.slane %v2144, 4
        %v2147 = vshll.u32 %v2072, 16
        %v2149 = vrot.slane %v2147, 5
        %v2150 = vor.u32 %v2146, %v2149
        %v2151 = vsel %vm2090, %v2141, %v2150
        %v2180 = vunpack.c.l.b16 %v2074
        %v2181 = vunpack.c.l.b16 %v2075
        %v2182 = vunpack.c.l.b16 %v2076
        %v2183 = vunpack.c.l.b16 %v2077
        %v2184 = vunpack.c.l.b16 %v2078
        %v2185 = vunpack.c.l.b16 %v2079
        %v2186 = vunpack.c.l.b16 %v2080
        %v2187 = vunpack.c.l.b16 %v2081
        %v2188 = vunpack.c.l.b16 %v2082
        %v2189 = vunpack.c.l.b16 %v2083
        %v2190 = vunpack.c.l.b16 %v2084
        %v2191 = vunpack.c.l.b16 %v2085
        %v2192 = vunpack.c.l.b16 %v2086
        %v2193 = vunpack.c.l.b16 %v2087
        %v2194 = vunpack.c.l.b16 %v2088
        %v2195 = vunpack.c.l.b16 %v2089
        %v2196 = vpack.c.b16 %v2181, %v2180
        %v2197 = vpack.c.b16 %v2183, %v2182
        %v2198 = vpack.c.b16 %v2185, %v2184
        %v2199 = vpack.c.b16 %v2187, %v2186
        %v2200 = vpack.c.b16 %v2189, %v2188
        %v2201 = vpack.c.b16 %v2191, %v2190
        %v2202 = vpack.c.b16 %v2193, %v2192
        %v2203 = vpack.c.b16 %v2195, %v2194
        %2212 = vmatprep.subr.bf16.mxu0 0
        %2213 = vmatpush1.bf16.msra.mxu0 %v2196
        %2214 = vmatprep.subr.bf16.mxu0 0
        %2215 = vmatpush1.bf16.msra.mxu0 %v2197
        %2216 = vmatprep.subr.bf16.mxu0 0
        %2217 = vmatpush1.bf16.msra.mxu0 %v2198
        %2218 = vmatprep.subr.bf16.mxu0 0
        %2219 = vmatpush1.bf16.msra.mxu0 %v2199
        %2220 = vmatprep.subr.bf16.mxu0 0
        %2221 = vmatpush1.bf16.msra.mxu0 %v2200
        %2222 = vmatprep.subr.bf16.mxu0 0
        %2223 = vmatpush1.bf16.msra.mxu0 %v2201
        %2224 = vmatprep.subr.bf16.mxu0 0
        %2225 = vmatpush1.bf16.msra.mxu0 %v2202
        %2226 = vmatprep.subr.bf16.mxu0 0
        %2227 = vmatpush1.bf16.msra.mxu0 %v2203
        %2228 = vmatprep.subr.bf16.mxu0 0
        %2229 = vmatpush1.bf16.msra.mxu0 0
        %2230 = vmatprep.subr.bf16.mxu0 0
        %2231 = vmatpush1.bf16.msra.mxu0 0
        %2232 = vmatprep.subr.bf16.mxu0 0
        %2233 = vmatpush1.bf16.msra.mxu0 0
        %2234 = vmatprep.subr.bf16.mxu0 0
        %2235 = vmatpush1.bf16.msra.mxu0 0
        %2236 = vmatprep.subr.bf16.mxu0 0
        %2237 = vmatpush1.bf16.msra.mxu0 0
        %2238 = vmatprep.subr.bf16.mxu0 0
        %2239 = vmatpush1.bf16.msra.mxu0 0
        %2240 = vmatprep.subr.bf16.mxu0 0
        %2241 = vmatpush1.bf16.msra.mxu0 0
        %2242 = vmatprep.subr.bf16.mxu0 0
        %2243 = vmatpush1.bf16.msra.mxu0 0
        %2244 = vmatprep.mubr.bf16.mxu0 0
        %2245 = vmatmul.mubr.bf16.gmra.mrb[0].mxu0 %v2102
        %v2246 = vpop.f32.mrb[0].mxu0
        %v2247 = vadd.f32 0.0, %v2246
        %v2248 = vpop.f32.mrb[0].mxu0
        %v2249 = vpop.f32.mrb[0].mxu0
        %v2250 = vadd.f32 0.0, %v2249
        %v2251 = vpop.f32.mrb[0].mxu0
        %2252 = vmatprep.mubr.bf16.mxu0 0
        %2253 = vmatmul.mubr.bf16.gmra.mrb[0].mxu0 %v2106
        %v2254 = vpop.f32.mrb[0].mxu0
        %v2255 = vadd.f32 0.0, %v2254
        %v2256 = vpop.f32.mrb[0].mxu0
        %v2257 = vpop.f32.mrb[0].mxu0
        %v2258 = vadd.f32 0.0, %v2257
        %v2259 = vpop.f32.mrb[0].mxu0
        %2260 = vmatprep.mubr.bf16.mxu0 0
        %2261 = vmatmul.mubr.bf16.gmra.mrb[0].mxu0 %v2110
        %v2262 = vpop.f32.mrb[0].mxu0
        %v2263 = vadd.f32 0.0, %v2262
        %v2264 = vpop.f32.mrb[0].mxu0
        %v2265 = vpop.f32.mrb[0].mxu0
        %v2266 = vadd.f32 0.0, %v2265
        %v2267 = vpop.f32.mrb[0].mxu0
        %2268 = vmatprep.mubr.bf16.mxu0 0
        %2269 = vmatmul.mubr.bf16.gmra.mrb[0].mxu0 %v2114
        %v2270 = vpop.f32.mrb[0].mxu0
        %v2271 = vadd.f32 0.0, %v2270
        %v2272 = vpop.f32.mrb[0].mxu0
        %v2273 = vpop.f32.mrb[0].mxu0
        %v2274 = vadd.f32 0.0, %v2273
        %v2275 = vpop.f32.mrb[0].mxu0
        %2276 = vmatprep.mubr.bf16.mxu0 0
        %2277 = vmatmul.mubr.bf16.gmra.mrb[0].mxu0 %v2118
        %v2278 = vpop.f32.mrb[0].mxu0
        %v2279 = vadd.f32 0.0, %v2278
        %v2280 = vpop.f32.mrb[0].mxu0
        %v2281 = vpop.f32.mrb[0].mxu0
        %v2282 = vadd.f32 0.0, %v2281
        %v2283 = vpop.f32.mrb[0].mxu0
        %2284 = vmatprep.mubr.bf16.mxu0 0
        %2285 = vmatmul.mubr.bf16.gmra.mrb[0].mxu0 %v2122
        %v2286 = vpop.f32.mrb[0].mxu0
        %v2287 = vadd.f32 0.0, %v2286
        %v2288 = vpop.f32.mrb[0].mxu0
        %v2289 = vpop.f32.mrb[0].mxu0
        %v2290 = vadd.f32 0.0, %v2289
        %v2291 = vpop.f32.mrb[0].mxu0
        %2292 = vmatprep.mubr.bf16.mxu0 0
        %2293 = vmatmul.mubr.bf16.gmra.mrb[0].mxu0 %v2126
        %v2294 = vpop.f32.mrb[0].mxu0
        %v2295 = vadd.f32 0.0, %v2294
        %v2296 = vpop.f32.mrb[0].mxu0
        %v2297 = vpop.f32.mrb[0].mxu0
        %v2298 = vadd.f32 0.0, %v2297
        %v2299 = vpop.f32.mrb[0].mxu0
        %2300 = vmatprep.mubr.bf16.mxu0 0
        %2301 = vmatmul.mubr.bf16.gmra.mrb[0].mxu0 %v2130
        %v2302 = vpop.f32.mrb[0].mxu0
        %v2303 = vadd.f32 0.0, %v2302
        %v2304 = vpop.f32.mrb[0].mxu0
        %v2305 = vpop.f32.mrb[0].mxu0
        %v2306 = vadd.f32 0.0, %v2305
        %v2307 = vpop.f32.mrb[0].mxu0
        %2308 = vmatprep.mubr.bf16.mxu0 0
        %2309 = vmatmul.mubr.bf16.gmra.mrb[0].mxu0 %v2134
        %v2310 = vpop.f32.mrb[0].mxu0
        %v2311 = vadd.f32 0.0, %v2310
        %v2312 = vpop.f32.mrb[0].mxu0
        %v2313 = vpop.f32.mrb[0].mxu0
        %v2314 = vadd.f32 0.0, %v2313
        %v2315 = vpop.f32.mrb[0].mxu0
        %2316 = vmatprep.mubr.bf16.mxu0 0
        %2317 = vmatmul.mubr.bf16.gmra.mrb[0].mxu0 %v2138
        %v2318 = vpop.f32.mrb[0].mxu0
        %v2319 = vadd.f32 0.0, %v2318
        %v2320 = vpop.f32.mrb[0].mxu0
        %v2321 = vpop.f32.mrb[0].mxu0
        %v2322 = vadd.f32 0.0, %v2321
        %v2323 = vpop.f32.mrb[0].mxu0
        %2324 = vmatprep.mubr.bf16.mxu0 0
        %2325 = vmatmul.mubr.bf16.gmra.mrb[0].mxu0 %v2142
        %v2326 = vpop.f32.mrb[0].mxu0
        %v2327 = vadd.f32 0.0, %v2326
        %v2328 = vpop.f32.mrb[0].mxu0
        %v2329 = vpop.f32.mrb[0].mxu0
        %v2330 = vadd.f32 0.0, %v2329
        %v2331 = vpop.f32.mrb[0].mxu0
        %2332 = vmatprep.mubr.bf16.mxu0 0
        %2333 = vmatmul.mubr.bf16.gmra.mrb[0].mxu0 %v2151
        %v2334 = vpop.f32.mrb[0].mxu0
        %v2335 = vadd.f32 0.0, %v2334
        %v2336 = vpop.f32.mrb[0].mxu0
        %v2337 = vpop.f32.mrb[0].mxu0
        %v2338 = vadd.f32 0.0, %v2337
        %v2339 = vpop.f32.mrb[0].mxu0
        %2340 = vdwg.mxu0
        %v2341 = vadd.f32 %v2048, %v2247
        %v2342 = vadd.f32 %v2049, %v2250
        %v2343 = vadd.f32 %v2050, %v2255
        %v2344 = vadd.f32 %v2051, %v2258
        %v2345 = vadd.f32 %v2052, %v2263
        %v2346 = vadd.f32 %v2053, %v2266
        %v2347 = vadd.f32 %v2054, %v2271
        %v2348 = vadd.f32 %v2055, %v2274
        %v2349 = vadd.f32 %v2056, %v2279
        %v2350 = vadd.f32 %v2057, %v2282
        %v2351 = vadd.f32 %v2058, %v2287
        %v2352 = vadd.f32 %v2059, %v2290
        %v2353 = vadd.f32 %v2060, %v2295
        %v2354 = vadd.f32 %v2061, %v2298
        %v2355 = vadd.f32 %v2062, %v2303
        %v2356 = vadd.f32 %v2063, %v2306
        %v2357 = vadd.f32 %v2064, %v2311
        %v2358 = vadd.f32 %v2065, %v2314
        %v2359 = vadd.f32 %v2066, %v2319
        %v2360 = vadd.f32 %v2067, %v2322
        %v2361 = vadd.f32 %v2068, %v2327
        %v2362 = vadd.f32 %v2069, %v2330
        %v2363 = vadd.f32 %v2070, %v2335
        %v2364 = vadd.f32 %v2071, %v2338
        %v2365 = vld [vmem:[%s307 + $0x28] sm:$0x80]
        %v2366 = vld [vmem:[%s307 + $0x30] sm:$0xff]
        %v2367 = vld [vmem:[%s307 + $0x38] sm:$0xff]
        %v2368 = vld [vmem:[%s307 + $0x40] sm:$0xff]
        %v2369 = vld [vmem:[%s307 + $0x48] sm:$0xff]
        %v2370 = vld [vmem:[%s307 + $0x50] sm:$0xff]
        %v2371 = vld [vmem:[%s307 + $0x58] sm:$0xff]
        %v2372 = vld [vmem:[%s307 + $0x60] sm:$0xff]
        %v2373 = vld [vmem:[%s307 + $0x68] sm:$0xff]
        %v2374 = vld [vmem:[%s307 + $0x70] sm:$0xff]
        %v2375 = vld [vmem:[%s307 + $0x78] sm:$0xff]
        %v2376 = vld [vmem:[%s307 + $0x80] sm:$0xff]
        %v2377 = vld [vmem:[%s307 + $0x88] sm:$0xff]
        %s2378 = scalar_lea.vmem [#allocation9], 384
        %v2379 = vld [vmem:[%s2378] sm:$0xf]
        %v2380 = vld [vmem:[%s2378 + $0x4] sm:$0xf]
        %v2381 = vld [vmem:[%s2378 + $0x8] sm:$0xf]
        %v2382 = vld [vmem:[%s2378 + $0xc] sm:$0xf]
        %v2383 = vld [vmem:[%s2378 + $0x10] sm:$0xf]
        %v2384 = vld [vmem:[%s2378 + $0x14] sm:$0xf]
        %v2385 = vld [vmem:[%s2378 + $0x18] sm:$0xf]
        %v2386 = vld [vmem:[%s2378 + $0x1c] sm:$0xf]
        %v2387 = vld [vmem:[%s2378 + $0x20] sm:$0xf]
        %v2388 = vld [vmem:[%s2378 + $0x24] sm:$0xf]
        %v2389 = vld [vmem:[%s2378 + $0x28] sm:$0xf]
        %v2390 = vld [vmem:[%s2378 + $0x2c] sm:$0xf]
        %v2391 = vld [vmem:[%s2378 + $0x30] sm:$0xf]
        %v2392 = vld [vmem:[%s2378 + $0x34] sm:$0xf]
        %v2393 = vld [vmem:[%s2378 + $0x38] sm:$0xf]
        %v2394 = vld [vmem:[%s2378 + $0x3c] sm:$0xf]
        %v2396 = vshrl.u32 %v2365, 16
        %v2398 = vrot.slane %v2396, 7
        %v2400 = vshrl.u32 %v2366, 16
        %v2402 = vrot.slane %v2400, 7
        %v2403 = vshll.u32 %v2366, 16
        %v2405 = vor.u32 %v2402, %v2403
        %v2406 = vsel %vm872, %v2398, %v2405
        %v2408 = vshrl.u32 %v2367, 16
        %v2410 = vrot.slane %v2408, 7
        %v2411 = vshll.u32 %v2367, 16
        %v2413 = vor.u32 %v2410, %v2411
        %v2414 = vsel %vm872, %v2402, %v2413
        %v2416 = vshrl.u32 %v2368, 16
        %v2418 = vrot.slane %v2416, 7
        %v2419 = vshll.u32 %v2368, 16
        %v2421 = vor.u32 %v2418, %v2419
        %v2422 = vsel %vm872, %v2410, %v2421
        %v2424 = vshrl.u32 %v2369, 16
        %v2426 = vrot.slane %v2424, 7
        %v2427 = vshll.u32 %v2369, 16
        %v2429 = vor.u32 %v2426, %v2427
        %v2430 = vsel %vm872, %v2418, %v2429
        %v2432 = vshrl.u32 %v2370, 16
        %v2434 = vrot.slane %v2432, 7
        %v2435 = vshll.u32 %v2370, 16
        %v2437 = vor.u32 %v2434, %v2435
        %v2438 = vsel %vm872, %v2426, %v2437
        %v2440 = vshrl.u32 %v2371, 16
        %v2442 = vrot.slane %v2440, 7
        %v2443 = vshll.u32 %v2371, 16
        %v2445 = vor.u32 %v2442, %v2443
        %v2446 = vsel %vm872, %v2434, %v2445
        %v2448 = vshrl.u32 %v2372, 16
        %v2450 = vrot.slane %v2448, 7
        %v2451 = vshll.u32 %v2372, 16
        %v2453 = vor.u32 %v2450, %v2451
        %v2454 = vsel %vm872, %v2442, %v2453
        %v2456 = vshrl.u32 %v2373, 16
        %v2458 = vrot.slane %v2456, 7
        %v2459 = vshll.u32 %v2373, 16
        %v2461 = vor.u32 %v2458, %v2459
        %v2462 = vsel %vm872, %v2450, %v2461
        %v2464 = vshrl.u32 %v2374, 16
        %v2466 = vrot.slane %v2464, 7
        %v2467 = vshll.u32 %v2374, 16
        %v2469 = vor.u32 %v2466, %v2467
        %v2470 = vsel %vm872, %v2458, %v2469
        %v2472 = vshrl.u32 %v2375, 16
        %v2474 = vrot.slane %v2472, 7
        %v2475 = vshll.u32 %v2375, 16
        %v2477 = vor.u32 %v2474, %v2475
        %v2478 = vsel %vm872, %v2466, %v2477
        %v2480 = vshrl.u32 %v2376, 16
        %v2482 = vrot.slane %v2480, 7
        %v2483 = vshll.u32 %v2376, 16
        %v2485 = vor.u32 %v2482, %v2483
        %v2486 = vsel %vm872, %v2474, %v2485
        %v2488 = vshrl.u32 %v2377, 16
        %v2490 = vrot.slane %v2488, 7
        %v2491 = vshll.u32 %v2377, 16
        %v2493 = vor.u32 %v2490, %v2491
        %v2494 = vsel %vm872, %v2482, %v2493
        %v2523 = vunpack.c.l.b16 %v2379
        %v2524 = vunpack.c.l.b16 %v2380
        %v2525 = vunpack.c.l.b16 %v2381
        %v2526 = vunpack.c.l.b16 %v2382
        %v2527 = vunpack.c.l.b16 %v2383
        %v2528 = vunpack.c.l.b16 %v2384
        %v2529 = vunpack.c.l.b16 %v2385
        %v2530 = vunpack.c.l.b16 %v2386
        %v2531 = vunpack.c.l.b16 %v2387
        %v2532 = vunpack.c.l.b16 %v2388
        %v2533 = vunpack.c.l.b16 %v2389
        %v2534 = vunpack.c.l.b16 %v2390
        %v2535 = vunpack.c.l.b16 %v2391
        %v2536 = vunpack.c.l.b16 %v2392
        %v2537 = vunpack.c.l.b16 %v2393
        %v2538 = vunpack.c.l.b16 %v2394
        %v2539 = vpack.c.b16 %v2524, %v2523
        %v2540 = vpack.c.b16 %v2526, %v2525
        %v2541 = vpack.c.b16 %v2528, %v2527
        %v2542 = vpack.c.b16 %v2530, %v2529
        %v2543 = vpack.c.b16 %v2532, %v2531
        %v2544 = vpack.c.b16 %v2534, %v2533
        %v2545 = vpack.c.b16 %v2536, %v2535
        %v2546 = vpack.c.b16 %v2538, %v2537
        %2555 = vmatprep.subr.bf16.mxu0 0
        %2556 = vmatpush1.bf16.msra.mxu0 %v2539
        %2557 = vmatprep.subr.bf16.mxu0 0
        %2558 = vmatpush1.bf16.msra.mxu0 %v2540
        %2559 = vmatprep.subr.bf16.mxu0 0
        %2560 = vmatpush1.bf16.msra.mxu0 %v2541
        %2561 = vmatprep.subr.bf16.mxu0 0
        %2562 = vmatpush1.bf16.msra.mxu0 %v2542
        %2563 = vmatprep.subr.bf16.mxu0 0
        %2564 = vmatpush1.bf16.msra.mxu0 %v2543
        %2565 = vmatprep.subr.bf16.mxu0 0
        %2566 = vmatpush1.bf16.msra.mxu0 %v2544
        %2567 = vmatprep.subr.bf16.mxu0 0
        %2568 = vmatpush1.bf16.msra.mxu0 %v2545
        %2569 = vmatprep.subr.bf16.mxu0 0
        %2570 = vmatpush1.bf16.msra.mxu0 %v2546
        %2571 = vmatprep.subr.bf16.mxu0 0
        %2572 = vmatpush1.bf16.msra.mxu0 0
        %2573 = vmatprep.subr.bf16.mxu0 0
        %2574 = vmatpush1.bf16.msra.mxu0 0
        %2575 = vmatprep.subr.bf16.mxu0 0
        %2576 = vmatpush1.bf16.msra.mxu0 0
        %2577 = vmatprep.subr.bf16.mxu0 0
        %2578 = vmatpush1.bf16.msra.mxu0 0
        %2579 = vmatprep.subr.bf16.mxu0 0
        %2580 = vmatpush1.bf16.msra.mxu0 0
        %2581 = vmatprep.subr.bf16.mxu0 0
        %2582 = vmatpush1.bf16.msra.mxu0 0
        %2583 = vmatprep.subr.bf16.mxu0 0
        %2584 = vmatpush1.bf16.msra.mxu0 0
        %2585 = vmatprep.subr.bf16.mxu0 0
        %2586 = vmatpush1.bf16.msra.mxu0 0
        %2587 = vmatprep.mubr.bf16.mxu0 0
        %2588 = vmatmul.mubr.bf16.gmra.mrb[0].mxu0 %v2406
        %v2589 = vpop.f32.mrb[0].mxu0
        %v2590 = vadd.f32 0.0, %v2589
        %v2591 = vpop.f32.mrb[0].mxu0
        %v2592 = vpop.f32.mrb[0].mxu0
        %v2593 = vadd.f32 0.0, %v2592
        %v2594 = vpop.f32.mrb[0].mxu0
        %2595 = vmatprep.mubr.bf16.mxu0 0
        %2596 = vmatmul.mubr.bf16.gmra.mrb[0].mxu0 %v2414
        %v2597 = vpop.f32.mrb[0].mxu0
        %v2598 = vadd.f32 0.0, %v2597
        %v2599 = vpop.f32.mrb[0].mxu0
        %v2600 = vpop.f32.mrb[0].mxu0
        %v2601 = vadd.f32 0.0, %v2600
        %v2602 = vpop.f32.mrb[0].mxu0
        %2603 = vmatprep.mubr.bf16.mxu0 0
        %2604 = vmatmul.mubr.bf16.gmra.mrb[0].mxu0 %v2422
        %v2605 = vpop.f32.mrb[0].mxu0
        %v2606 = vadd.f32 0.0, %v2605
        %v2607 = vpop.f32.mrb[0].mxu0
        %v2608 = vpop.f32.mrb[0].mxu0
        %v2609 = vadd.f32 0.0, %v2608
        %v2610 = vpop.f32.mrb[0].mxu0
        %2611 = vmatprep.mubr.bf16.mxu0 0
        %2612 = vmatmul.mubr.bf16.gmra.mrb[0].mxu0 %v2430
        %v2613 = vpop.f32.mrb[0].mxu0
        %v2614 = vadd.f32 0.0, %v2613
        %v2615 = vpop.f32.mrb[0].mxu0
        %v2616 = vpop.f32.mrb[0].mxu0
        %v2617 = vadd.f32 0.0, %v2616
        %v2618 = vpop.f32.mrb[0].mxu0
        %2619 = vmatprep.mubr.bf16.mxu0 0
        %2620 = vmatmul.mubr.bf16.gmra.mrb[0].mxu0 %v2438
        %v2621 = vpop.f32.mrb[0].mxu0
        %v2622 = vadd.f32 0.0, %v2621
        %v2623 = vpop.f32.mrb[0].mxu0
        %v2624 = vpop.f32.mrb[0].mxu0
        %v2625 = vadd.f32 0.0, %v2624
        %v2626 = vpop.f32.mrb[0].mxu0
        %2627 = vmatprep.mubr.bf16.mxu0 0
        %2628 = vmatmul.mubr.bf16.gmra.mrb[0].mxu0 %v2446
        %v2629 = vpop.f32.mrb[0].mxu0
        %v2630 = vadd.f32 0.0, %v2629
        %v2631 = vpop.f32.mrb[0].mxu0
        %v2632 = vpop.f32.mrb[0].mxu0
        %v2633 = vadd.f32 0.0, %v2632
        %v2634 = vpop.f32.mrb[0].mxu0
        %2635 = vmatprep.mubr.bf16.mxu0 0
        %2636 = vmatmul.mubr.bf16.gmra.mrb[0].mxu0 %v2454
        %v2637 = vpop.f32.mrb[0].mxu0
        %v2638 = vadd.f32 0.0, %v2637
        %v2639 = vpop.f32.mrb[0].mxu0
        %v2640 = vpop.f32.mrb[0].mxu0
        %v2641 = vadd.f32 0.0, %v2640
        %v2642 = vpop.f32.mrb[0].mxu0
        %2643 = vmatprep.mubr.bf16.mxu0 0
        %2644 = vmatmul.mubr.bf16.gmra.mrb[0].mxu0 %v2462
        %v2645 = vpop.f32.mrb[0].mxu0
        %v2646 = vadd.f32 0.0, %v2645
        %v2647 = vpop.f32.mrb[0].mxu0
        %v2648 = vpop.f32.mrb[0].mxu0
        %v2649 = vadd.f32 0.0, %v2648
        %v2650 = vpop.f32.mrb[0].mxu0
        %2651 = vmatprep.mubr.bf16.mxu0 0
        %2652 = vmatmul.mubr.bf16.gmra.mrb[0].mxu0 %v2470
        %v2653 = vpop.f32.mrb[0].mxu0
        %v2654 = vadd.f32 0.0, %v2653
        %v2655 = vpop.f32.mrb[0].mxu0
        %v2656 = vpop.f32.mrb[0].mxu0
        %v2657 = vadd.f32 0.0, %v2656
        %v2658 = vpop.f32.mrb[0].mxu0
        %2659 = vmatprep.mubr.bf16.mxu0 0
        %2660 = vmatmul.mubr.bf16.gmra.mrb[0].mxu0 %v2478
        %v2661 = vpop.f32.mrb[0].mxu0
        %v2662 = vadd.f32 0.0, %v2661
        %v2663 = vpop.f32.mrb[0].mxu0
        %v2664 = vpop.f32.mrb[0].mxu0
        %v2665 = vadd.f32 0.0, %v2664
        %v2666 = vpop.f32.mrb[0].mxu0
        %2667 = vmatprep.mubr.bf16.mxu0 0
        %2668 = vmatmul.mubr.bf16.gmra.mrb[0].mxu0 %v2486
        %v2669 = vpop.f32.mrb[0].mxu0
        %v2670 = vadd.f32 0.0, %v2669
        %v2671 = vpop.f32.mrb[0].mxu0
        %v2672 = vpop.f32.mrb[0].mxu0
        %v2673 = vadd.f32 0.0, %v2672
        %v2674 = vpop.f32.mrb[0].mxu0
        %2675 = vmatprep.mubr.bf16.mxu0 0
        %2676 = vmatmul.mubr.bf16.gmra.mrb[0].mxu0 %v2494
        %v2677 = vpop.f32.mrb[0].mxu0
        %v2678 = vadd.f32 0.0, %v2677
        %v2679 = vpop.f32.mrb[0].mxu0
        %v2680 = vpop.f32.mrb[0].mxu0
        %v2681 = vadd.f32 0.0, %v2680
        %v2682 = vpop.f32.mrb[0].mxu0
        %2683 = vdwg.mxu0
        %v2684 = vadd.f32 %v2341, %v2590
        %v2685 = vadd.f32 %v2342, %v2593
        %v2686 = vadd.f32 %v2343, %v2598
        %v2687 = vadd.f32 %v2344, %v2601
        %v2688 = vadd.f32 %v2345, %v2606
        %v2689 = vadd.f32 %v2346, %v2609
        %v2690 = vadd.f32 %v2347, %v2614
        %v2691 = vadd.f32 %v2348, %v2617
        %v2692 = vadd.f32 %v2349, %v2622
        %v2693 = vadd.f32 %v2350, %v2625
        %v2694 = vadd.f32 %v2351, %v2630
        %v2695 = vadd.f32 %v2352, %v2633
        %v2696 = vadd.f32 %v2353, %v2638
        %v2697 = vadd.f32 %v2354, %v2641
        %v2698 = vadd.f32 %v2355, %v2646
        %v2699 = vadd.f32 %v2356, %v2649
        %v2700 = vadd.f32 %v2357, %v2654
        %v2701 = vadd.f32 %v2358, %v2657
        %v2702 = vadd.f32 %v2359, %v2662
        %v2703 = vadd.f32 %v2360, %v2665
        %v2704 = vadd.f32 %v2361, %v2670
        %v2705 = vadd.f32 %v2362, %v2673
        %v2706 = vadd.f32 %v2363, %v2678
        %v2707 = vadd.f32 %v2364, %v2681
        %s2708 = scalar_lea.vmem [#allocation9], 448
        %v2709 = vld [vmem:[%s2708] sm:$0xf]
        %v2710 = vld [vmem:[%s2708 + $0x4] sm:$0xf]
        %v2711 = vld [vmem:[%s2708 + $0x8] sm:$0xf]
        %v2712 = vld [vmem:[%s2708 + $0xc] sm:$0xf]
        %v2713 = vld [vmem:[%s2708 + $0x10] sm:$0xf]
        %v2714 = vld [vmem:[%s2708 + $0x14] sm:$0xf]
        %v2715 = vld [vmem:[%s2708 + $0x18] sm:$0xf]
        %v2716 = vld [vmem:[%s2708 + $0x1c] sm:$0xf]
        %v2717 = vld [vmem:[%s2708 + $0x20] sm:$0xf]
        %v2718 = vld [vmem:[%s2708 + $0x24] sm:$0xf]
        %v2719 = vld [vmem:[%s2708 + $0x28] sm:$0xf]
        %v2720 = vld [vmem:[%s2708 + $0x2c] sm:$0xf]
        %v2721 = vld [vmem:[%s2708 + $0x30] sm:$0xf]
        %v2722 = vld [vmem:[%s2708 + $0x34] sm:$0xf]
        %v2723 = vld [vmem:[%s2708 + $0x38] sm:$0xf]
        %v2724 = vld [vmem:[%s2708 + $0x3c] sm:$0xf]
        %v2741 = vunpack.c.l.b16 %v2709
        %v2742 = vunpack.c.l.b16 %v2710
        %v2743 = vunpack.c.l.b16 %v2711
        %v2744 = vunpack.c.l.b16 %v2712
        %v2745 = vunpack.c.l.b16 %v2713
        %v2746 = vunpack.c.l.b16 %v2714
        %v2747 = vunpack.c.l.b16 %v2715
        %v2748 = vunpack.c.l.b16 %v2716
        %v2749 = vunpack.c.l.b16 %v2717
        %v2750 = vunpack.c.l.b16 %v2718
        %v2751 = vunpack.c.l.b16 %v2719
        %v2752 = vunpack.c.l.b16 %v2720
        %v2753 = vunpack.c.l.b16 %v2721
        %v2754 = vunpack.c.l.b16 %v2722
        %v2755 = vunpack.c.l.b16 %v2723
        %v2756 = vunpack.c.l.b16 %v2724
        %v2757 = vpack.c.b16 %v2742, %v2741
        %v2758 = vpack.c.b16 %v2744, %v2743
        %v2759 = vpack.c.b16 %v2746, %v2745
        %v2760 = vpack.c.b16 %v2748, %v2747
        %v2761 = vpack.c.b16 %v2750, %v2749
        %v2762 = vpack.c.b16 %v2752, %v2751
        %v2763 = vpack.c.b16 %v2754, %v2753
        %v2764 = vpack.c.b16 %v2756, %v2755
        %2773 = vmatprep.subr.bf16.mxu0 0
        %2774 = vmatpush1.bf16.msra.mxu0 %v2757
        %2775 = vmatprep.subr.bf16.mxu0 0
        %2776 = vmatpush1.bf16.msra.mxu0 %v2758
        %2777 = vmatprep.subr.bf16.mxu0 0
        %2778 = vmatpush1.bf16.msra.mxu0 %v2759
        %2779 = vmatprep.subr.bf16.mxu0 0
        %2780 = vmatpush1.bf16.msra.mxu0 %v2760
        %2781 = vmatprep.subr.bf16.mxu0 0
        %2782 = vmatpush1.bf16.msra.mxu0 %v2761
        %2783 = vmatprep.subr.bf16.mxu0 0
        %2784 = vmatpush1.bf16.msra.mxu0 %v2762
        %2785 = vmatprep.subr.bf16.mxu0 0
        %2786 = vmatpush1.bf16.msra.mxu0 %v2763
        %2787 = vmatprep.subr.bf16.mxu0 0
        %2788 = vmatpush1.bf16.msra.mxu0 %v2764
        %2789 = vmatprep.subr.bf16.mxu0 0
        %2790 = vmatpush1.bf16.msra.mxu0 0
        %2791 = vmatprep.subr.bf16.mxu0 0
        %2792 = vmatpush1.bf16.msra.mxu0 0
        %2793 = vmatprep.subr.bf16.mxu0 0
        %2794 = vmatpush1.bf16.msra.mxu0 0
        %2795 = vmatprep.subr.bf16.mxu0 0
        %2796 = vmatpush1.bf16.msra.mxu0 0
        %2797 = vmatprep.subr.bf16.mxu0 0
        %2798 = vmatpush1.bf16.msra.mxu0 0
        %2799 = vmatprep.subr.bf16.mxu0 0
        %2800 = vmatpush1.bf16.msra.mxu0 0
        %2801 = vmatprep.subr.bf16.mxu0 0
        %2802 = vmatpush1.bf16.msra.mxu0 0
        %2803 = vmatprep.subr.bf16.mxu0 0
        %2804 = vmatpush1.bf16.msra.mxu0 0
        %2805 = vmatprep.mubr.bf16.mxu0 0
        %2806 = vmatmul.mubr.bf16.gmra.mrb[0].mxu0 %v2366
        %v2807 = vpop.f32.mrb[0].mxu0
        %v2808 = vadd.f32 0.0, %v2807
        %v2809 = vpop.f32.mrb[0].mxu0
        %v2810 = vpop.f32.mrb[0].mxu0
        %v2811 = vadd.f32 0.0, %v2810
        %v2812 = vpop.f32.mrb[0].mxu0
        %2813 = vmatprep.mubr.bf16.mxu0 0
        %2814 = vmatmul.mubr.bf16.gmra.mrb[0].mxu0 %v2367
        %v2815 = vpop.f32.mrb[0].mxu0
        %v2816 = vadd.f32 0.0, %v2815
        %v2817 = vpop.f32.mrb[0].mxu0
        %v2818 = vpop.f32.mrb[0].mxu0
        %v2819 = vadd.f32 0.0, %v2818
        %v2820 = vpop.f32.mrb[0].mxu0
        %2821 = vmatprep.mubr.bf16.mxu0 0
        %2822 = vmatmul.mubr.bf16.gmra.mrb[0].mxu0 %v2368
        %v2823 = vpop.f32.mrb[0].mxu0
        %v2824 = vadd.f32 0.0, %v2823
        %v2825 = vpop.f32.mrb[0].mxu0
        %v2826 = vpop.f32.mrb[0].mxu0
        %v2827 = vadd.f32 0.0, %v2826
        %v2828 = vpop.f32.mrb[0].mxu0
        %2829 = vmatprep.mubr.bf16.mxu0 0
        %2830 = vmatmul.mubr.bf16.gmra.mrb[0].mxu0 %v2369
        %v2831 = vpop.f32.mrb[0].mxu0
        %v2832 = vadd.f32 0.0, %v2831
        %v2833 = vpop.f32.mrb[0].mxu0
        %v2834 = vpop.f32.mrb[0].mxu0
        %v2835 = vadd.f32 0.0, %v2834
        %v2836 = vpop.f32.mrb[0].mxu0
        %2837 = vmatprep.mubr.bf16.mxu0 0
        %2838 = vmatmul.mubr.bf16.gmra.mrb[0].mxu0 %v2370
        %v2839 = vpop.f32.mrb[0].mxu0
        %v2840 = vadd.f32 0.0, %v2839
        %v2841 = vpop.f32.mrb[0].mxu0
        %v2842 = vpop.f32.mrb[0].mxu0
        %v2843 = vadd.f32 0.0, %v2842
        %v2844 = vpop.f32.mrb[0].mxu0
        %2845 = vmatprep.mubr.bf16.mxu0 0
        %2846 = vmatmul.mubr.bf16.gmra.mrb[0].mxu0 %v2371
        %v2847 = vpop.f32.mrb[0].mxu0
        %v2848 = vadd.f32 0.0, %v2847
        %v2849 = vpop.f32.mrb[0].mxu0
        %v2850 = vpop.f32.mrb[0].mxu0
        %v2851 = vadd.f32 0.0, %v2850
        %v2852 = vpop.f32.mrb[0].mxu0
        %2853 = vmatprep.mubr.bf16.mxu0 0
        %2854 = vmatmul.mubr.bf16.gmra.mrb[0].mxu0 %v2372
        %v2855 = vpop.f32.mrb[0].mxu0
        %v2856 = vadd.f32 0.0, %v2855
        %v2857 = vpop.f32.mrb[0].mxu0
        %v2858 = vpop.f32.mrb[0].mxu0
        %v2859 = vadd.f32 0.0, %v2858
        %v2860 = vpop.f32.mrb[0].mxu0
        %2861 = vmatprep.mubr.bf16.mxu0 0
        %2862 = vmatmul.mubr.bf16.gmra.mrb[0].mxu0 %v2373
        %v2863 = vpop.f32.mrb[0].mxu0
        %v2864 = vadd.f32 0.0, %v2863
        %v2865 = vpop.f32.mrb[0].mxu0
        %v2866 = vpop.f32.mrb[0].mxu0
        %v2867 = vadd.f32 0.0, %v2866
        %v2868 = vpop.f32.mrb[0].mxu0
        %2869 = vmatprep.mubr.bf16.mxu0 0
        %2870 = vmatmul.mubr.bf16.gmra.mrb[0].mxu0 %v2374
        %v2871 = vpop.f32.mrb[0].mxu0
        %v2872 = vadd.f32 0.0, %v2871
        %v2873 = vpop.f32.mrb[0].mxu0
        %v2874 = vpop.f32.mrb[0].mxu0
        %v2875 = vadd.f32 0.0, %v2874
        %v2876 = vpop.f32.mrb[0].mxu0
        %2877 = vmatprep.mubr.bf16.mxu0 0
        %2878 = vmatmul.mubr.bf16.gmra.mrb[0].mxu0 %v2375
        %v2879 = vpop.f32.mrb[0].mxu0
        %v2880 = vadd.f32 0.0, %v2879
        %v2881 = vpop.f32.mrb[0].mxu0
        %v2882 = vpop.f32.mrb[0].mxu0
        %v2883 = vadd.f32 0.0, %v2882
        %v2884 = vpop.f32.mrb[0].mxu0
        %2885 = vmatprep.mubr.bf16.mxu0 0
        %2886 = vmatmul.mubr.bf16.gmra.mrb[0].mxu0 %v2376
        %v2887 = vpop.f32.mrb[0].mxu0
        %v2888 = vadd.f32 0.0, %v2887
        %v2889 = vpop.f32.mrb[0].mxu0
        %v2890 = vpop.f32.mrb[0].mxu0
        %v2891 = vadd.f32 0.0, %v2890
        %v2892 = vpop.f32.mrb[0].mxu0
        %2893 = vmatprep.mubr.bf16.mxu0 0
        %2894 = vmatmul.mubr.bf16.gmra.mrb[0].mxu0 %v2377
        %v2895 = vpop.f32.mrb[0].mxu0
        %v2896 = vadd.f32 0.0, %v2895
        %v2897 = vpop.f32.mrb[0].mxu0
        %v2898 = vpop.f32.mrb[0].mxu0
        %v2899 = vadd.f32 0.0, %v2898
        %v2900 = vpop.f32.mrb[0].mxu0
        %2901 = vdwg.mxu0
        %v2902 = vadd.f32 %v2684, %v2808
        %v2903 = vadd.f32 %v2685, %v2811
        %v2904 = vadd.f32 %v2686, %v2816
        %v2905 = vadd.f32 %v2687, %v2819
        %v2906 = vadd.f32 %v2688, %v2824
        %v2907 = vadd.f32 %v2689, %v2827
        %v2908 = vadd.f32 %v2690, %v2832
        %v2909 = vadd.f32 %v2691, %v2835
        %v2910 = vadd.f32 %v2692, %v2840
        %v2911 = vadd.f32 %v2693, %v2843
        %v2912 = vadd.f32 %v2694, %v2848
        %v2913 = vadd.f32 %v2695, %v2851
        %v2914 = vadd.f32 %v2696, %v2856
        %v2915 = vadd.f32 %v2697, %v2859
        %v2916 = vadd.f32 %v2698, %v2864
        %v2917 = vadd.f32 %v2699, %v2867
        %v2918 = vadd.f32 %v2700, %v2872
        %v2919 = vadd.f32 %v2701, %v2875
        %v2920 = vadd.f32 %v2702, %v2880
        %v2921 = vadd.f32 %v2703, %v2883
        %v2922 = vadd.f32 %v2704, %v2888
        %v2923 = vadd.f32 %v2705, %v2891
        %v2924 = vadd.f32 %v2706, %v2896
        %v2925 = vadd.f32 %v2707, %v2899
        %v2926 = vld [vmem:[%s307 + $0x30] sm:$0xff]
        %v2927 = vld [vmem:[%s307 + $0x38] sm:$0xff]
        %v2928 = vld [vmem:[%s307 + $0x40] sm:$0xff]
        %v2929 = vld [vmem:[%s307 + $0x48] sm:$0xff]
        %v2930 = vld [vmem:[%s307 + $0x50] sm:$0xff]
        %v2931 = vld [vmem:[%s307 + $0x58] sm:$0xff]
        %v2932 = vld [vmem:[%s307 + $0x60] sm:$0xff]
        %v2933 = vld [vmem:[%s307 + $0x68] sm:$0xff]
        %v2934 = vld [vmem:[%s307 + $0x70] sm:$0xff]
        %v2935 = vld [vmem:[%s307 + $0x78] sm:$0xff]
        %v2936 = vld [vmem:[%s307 + $0x80] sm:$0xff]
        %v2937 = vld [vmem:[%s307 + $0x88] sm:$0xff]
        %v2938 = vld [vmem:[%s307 + $0x90] sm:$0x1]
        %s2939 = scalar_lea.vmem [#allocation9], 512
        %v2940 = vld [vmem:[%s2939] sm:$0xf]
        %v2941 = vld [vmem:[%s2939 + $0x4] sm:$0xf]
        %v2942 = vld [vmem:[%s2939 + $0x8] sm:$0xf]
        %v2943 = vld [vmem:[%s2939 + $0xc] sm:$0xf]
        %v2944 = vld [vmem:[%s2939 + $0x10] sm:$0xf]
        %v2945 = vld [vmem:[%s2939 + $0x14] sm:$0xf]
        %v2946 = vld [vmem:[%s2939 + $0x18] sm:$0xf]
        %v2947 = vld [vmem:[%s2939 + $0x1c] sm:$0xf]
        %v2948 = vld [vmem:[%s2939 + $0x20] sm:$0xf]
        %v2949 = vld [vmem:[%s2939 + $0x24] sm:$0xf]
        %v2950 = vld [vmem:[%s2939 + $0x28] sm:$0xf]
        %v2951 = vld [vmem:[%s2939 + $0x2c] sm:$0xf]
        %v2952 = vld [vmem:[%s2939 + $0x30] sm:$0xf]
        %v2953 = vld [vmem:[%s2939 + $0x34] sm:$0xf]
        %v2954 = vld [vmem:[%s2939 + $0x38] sm:$0xf]
        %v2955 = vld [vmem:[%s2939 + $0x3c] sm:$0xf]
        %v2957 = vshrl.u32 %v2926, 16
        %v2959 = vshll.u32 %v2926, 16
        %v2961 = vrot.slane %v2959, 1
        %v2962 = vor.u32 %v2957, %v2961
        %v2964 = vshll.u32 %v2927, 16
        %v2966 = vrot.slane %v2964, 1
        %v2967 = vsel %vm1192, %v2962, %v2966
        %v2968 = vshrl.u32 %v2927, 16
        %v2970 = vor.u32 %v2968, %v2966
        %v2972 = vshll.u32 %v2928, 16
        %v2974 = vrot.slane %v2972, 1
        %v2975 = vsel %vm1192, %v2970, %v2974
        %v2976 = vshrl.u32 %v2928, 16
        %v2978 = vor.u32 %v2976, %v2974
        %v2980 = vshll.u32 %v2929, 16
        %v2982 = vrot.slane %v2980, 1
        %v2983 = vsel %vm1192, %v2978, %v2982
        %v2984 = vshrl.u32 %v2929, 16
        %v2986 = vor.u32 %v2984, %v2982
        %v2988 = vshll.u32 %v2930, 16
        %v2990 = vrot.slane %v2988, 1
        %v2991 = vsel %vm1192, %v2986, %v2990
        %v2992 = vshrl.u32 %v2930, 16
        %v2994 = vor.u32 %v2992, %v2990
        %v2996 = vshll.u32 %v2931, 16
        %v2998 = vrot.slane %v2996, 1
        %v2999 = vsel %vm1192, %v2994, %v2998
        %v3000 = vshrl.u32 %v2931, 16
        %v3002 = vor.u32 %v3000, %v2998
        %v3004 = vshll.u32 %v2932, 16
        %v3006 = vrot.slane %v3004, 1
        %v3007 = vsel %vm1192, %v3002, %v3006
        %v3008 = vshrl.u32 %v2932, 16
        %v3010 = vor.u32 %v3008, %v3006
        %v3012 = vshll.u32 %v2933, 16
        %v3014 = vrot.slane %v3012, 1
        %v3015 = vsel %vm1192, %v3010, %v3014
        %v3016 = vshrl.u32 %v2933, 16
        %v3018 = vor.u32 %v3016, %v3014
        %v3020 = vshll.u32 %v2934, 16
        %v3022 = vrot.slane %v3020, 1
        %v3023 = vsel %vm1192, %v3018, %v3022
        %v3024 = vshrl.u32 %v2934, 16
        %v3026 = vor.u32 %v3024, %v3022
        %v3028 = vshll.u32 %v2935, 16
        %v3030 = vrot.slane %v3028, 1
        %v3031 = vsel %vm1192, %v3026, %v3030
        %v3032 = vshrl.u32 %v2935, 16
        %v3034 = vor.u32 %v3032, %v3030
        %v3036 = vshll.u32 %v2936, 16
        %v3038 = vrot.slane %v3036, 1
        %v3039 = vsel %vm1192, %v3034, %v3038
        %v3040 = vshrl.u32 %v2936, 16
        %v3042 = vor.u32 %v3040, %v3038
        %v3044 = vshll.u32 %v2937, 16
        %v3046 = vrot.slane %v3044, 1
        %v3047 = vsel %vm1192, %v3042, %v3046
        %v3048 = vshrl.u32 %v2937, 16
        %v3050 = vor.u32 %v3048, %v3046
        %v3052 = vshll.u32 %v2938, 16
        %v3054 = vrot.slane %v3052, 1
        %v3055 = vsel %vm1192, %v3050, %v3054
        %v3084 = vunpack.c.l.b16 %v2940
        %v3085 = vunpack.c.l.b16 %v2941
        %v3086 = vunpack.c.l.b16 %v2942
        %v3087 = vunpack.c.l.b16 %v2943
        %v3088 = vunpack.c.l.b16 %v2944
        %v3089 = vunpack.c.l.b16 %v2945
        %v3090 = vunpack.c.l.b16 %v2946
        %v3091 = vunpack.c.l.b16 %v2947
        %v3092 = vunpack.c.l.b16 %v2948
        %v3093 = vunpack.c.l.b16 %v2949
        %v3094 = vunpack.c.l.b16 %v2950
        %v3095 = vunpack.c.l.b16 %v2951
        %v3096 = vunpack.c.l.b16 %v2952
        %v3097 = vunpack.c.l.b16 %v2953
        %v3098 = vunpack.c.l.b16 %v2954
        %v3099 = vunpack.c.l.b16 %v2955
        %v3100 = vpack.c.b16 %v3085, %v3084
        %v3101 = vpack.c.b16 %v3087, %v3086
        %v3102 = vpack.c.b16 %v3089, %v3088
        %v3103 = vpack.c.b16 %v3091, %v3090
        %v3104 = vpack.c.b16 %v3093, %v3092
        %v3105 = vpack.c.b16 %v3095, %v3094
        %v3106 = vpack.c.b16 %v3097, %v3096
        %v3107 = vpack.c.b16 %v3099, %v3098
        %3116 = vmatprep.subr.bf16.mxu0 0
        %3117 = vmatpush1.bf16.msra.mxu0 %v3100
        %3118 = vmatprep.subr.bf16.mxu0 0
        %3119 = vmatpush1.bf16.msra.mxu0 %v3101
        %3120 = vmatprep.subr.bf16.mxu0 0
        %3121 = vmatpush1.bf16.msra.mxu0 %v3102
        %3122 = vmatprep.subr.bf16.mxu0 0
        %3123 = vmatpush1.bf16.msra.mxu0 %v3103
        %3124 = vmatprep.subr.bf16.mxu0 0
        %3125 = vmatpush1.bf16.msra.mxu0 %v3104
        %3126 = vmatprep.subr.bf16.mxu0 0
        %3127 = vmatpush1.bf16.msra.mxu0 %v3105
        %3128 = vmatprep.subr.bf16.mxu0 0
        %3129 = vmatpush1.bf16.msra.mxu0 %v3106
        %3130 = vmatprep.subr.bf16.mxu0 0
        %3131 = vmatpush1.bf16.msra.mxu0 %v3107
        %3132 = vmatprep.subr.bf16.mxu0 0
        %3133 = vmatpush1.bf16.msra.mxu0 0
        %3134 = vmatprep.subr.bf16.mxu0 0
        %3135 = vmatpush1.bf16.msra.mxu0 0
        %3136 = vmatprep.subr.bf16.mxu0 0
        %3137 = vmatpush1.bf16.msra.mxu0 0
        %3138 = vmatprep.subr.bf16.mxu0 0
        %3139 = vmatpush1.bf16.msra.mxu0 0
        %3140 = vmatprep.subr.bf16.mxu0 0
        %3141 = vmatpush1.bf16.msra.mxu0 0
        %3142 = vmatprep.subr.bf16.mxu0 0
        %3143 = vmatpush1.bf16.msra.mxu0 0
        %3144 = vmatprep.subr.bf16.mxu0 0
        %3145 = vmatpush1.bf16.msra.mxu0 0
        %3146 = vmatprep.subr.bf16.mxu0 0
        %3147 = vmatpush1.bf16.msra.mxu0 0
        %3148 = vmatprep.mubr.bf16.mxu0 0
        %3149 = vmatmul.mubr.bf16.gmra.mrb[0].mxu0 %v2967
        %v3150 = vpop.f32.mrb[0].mxu0
        %v3151 = vadd.f32 0.0, %v3150
        %v3152 = vpop.f32.mrb[0].mxu0
        %v3153 = vpop.f32.mrb[0].mxu0
        %v3154 = vadd.f32 0.0, %v3153
        %v3155 = vpop.f32.mrb[0].mxu0
        %3156 = vmatprep.mubr.bf16.mxu0 0
        %3157 = vmatmul.mubr.bf16.gmra.mrb[0].mxu0 %v2975
        %v3158 = vpop.f32.mrb[0].mxu0
        %v3159 = vadd.f32 0.0, %v3158
        %v3160 = vpop.f32.mrb[0].mxu0
        %v3161 = vpop.f32.mrb[0].mxu0
        %v3162 = vadd.f32 0.0, %v3161
        %v3163 = vpop.f32.mrb[0].mxu0
        %3164 = vmatprep.mubr.bf16.mxu0 0
        %3165 = vmatmul.mubr.bf16.gmra.mrb[0].mxu0 %v2983
        %v3166 = vpop.f32.mrb[0].mxu0
        %v3167 = vadd.f32 0.0, %v3166
        %v3168 = vpop.f32.mrb[0].mxu0
        %v3169 = vpop.f32.mrb[0].mxu0
        %v3170 = vadd.f32 0.0, %v3169
        %v3171 = vpop.f32.mrb[0].mxu0
        %3172 = vmatprep.mubr.bf16.mxu0 0
        %3173 = vmatmul.mubr.bf16.gmra.mrb[0].mxu0 %v2991
        %v3174 = vpop.f32.mrb[0].mxu0
        %v3175 = vadd.f32 0.0, %v3174
        %v3176 = vpop.f32.mrb[0].mxu0
        %v3177 = vpop.f32.mrb[0].mxu0
        %v3178 = vadd.f32 0.0, %v3177
        %v3179 = vpop.f32.mrb[0].mxu0
        %3180 = vmatprep.mubr.bf16.mxu0 0
        %3181 = vmatmul.mubr.bf16.gmra.mrb[0].mxu0 %v2999
        %v3182 = vpop.f32.mrb[0].mxu0
        %v3183 = vadd.f32 0.0, %v3182
        %v3184 = vpop.f32.mrb[0].mxu0
        %v3185 = vpop.f32.mrb[0].mxu0
        %v3186 = vadd.f32 0.0, %v3185
        %v3187 = vpop.f32.mrb[0].mxu0
        %3188 = vmatprep.mubr.bf16.mxu0 0
        %3189 = vmatmul.mubr.bf16.gmra.mrb[0].mxu0 %v3007
        %v3190 = vpop.f32.mrb[0].mxu0
        %v3191 = vadd.f32 0.0, %v3190
        %v3192 = vpop.f32.mrb[0].mxu0
        %v3193 = vpop.f32.mrb[0].mxu0
        %v3194 = vadd.f32 0.0, %v3193
        %v3195 = vpop.f32.mrb[0].mxu0
        %3196 = vmatprep.mubr.bf16.mxu0 0
        %3197 = vmatmul.mubr.bf16.gmra.mrb[0].mxu0 %v3015
        %v3198 = vpop.f32.mrb[0].mxu0
        %v3199 = vadd.f32 0.0, %v3198
        %v3200 = vpop.f32.mrb[0].mxu0
        %v3201 = vpop.f32.mrb[0].mxu0
        %v3202 = vadd.f32 0.0, %v3201
        %v3203 = vpop.f32.mrb[0].mxu0
        %3204 = vmatprep.mubr.bf16.mxu0 0
        %3205 = vmatmul.mubr.bf16.gmra.mrb[0].mxu0 %v3023
        %v3206 = vpop.f32.mrb[0].mxu0
        %v3207 = vadd.f32 0.0, %v3206
        %v3208 = vpop.f32.mrb[0].mxu0
        %v3209 = vpop.f32.mrb[0].mxu0
        %v3210 = vadd.f32 0.0, %v3209
        %v3211 = vpop.f32.mrb[0].mxu0
        %3212 = vmatprep.mubr.bf16.mxu0 0
        %3213 = vmatmul.mubr.bf16.gmra.mrb[0].mxu0 %v3031
        %v3214 = vpop.f32.mrb[0].mxu0
        %v3215 = vadd.f32 0.0, %v3214
        %v3216 = vpop.f32.mrb[0].mxu0
        %v3217 = vpop.f32.mrb[0].mxu0
        %v3218 = vadd.f32 0.0, %v3217
        %v3219 = vpop.f32.mrb[0].mxu0
        %3220 = vmatprep.mubr.bf16.mxu0 0
        %3221 = vmatmul.mubr.bf16.gmra.mrb[0].mxu0 %v3039
        %v3222 = vpop.f32.mrb[0].mxu0
        %v3223 = vadd.f32 0.0, %v3222
        %v3224 = vpop.f32.mrb[0].mxu0
        %v3225 = vpop.f32.mrb[0].mxu0
        %v3226 = vadd.f32 0.0, %v3225
        %v3227 = vpop.f32.mrb[0].mxu0
        %3228 = vmatprep.mubr.bf16.mxu0 0
        %3229 = vmatmul.mubr.bf16.gmra.mrb[0].mxu0 %v3047
        %v3230 = vpop.f32.mrb[0].mxu0
        %v3231 = vadd.f32 0.0, %v3230
        %v3232 = vpop.f32.mrb[0].mxu0
        %v3233 = vpop.f32.mrb[0].mxu0
        %v3234 = vadd.f32 0.0, %v3233
        %v3235 = vpop.f32.mrb[0].mxu0
        %3236 = vmatprep.mubr.bf16.mxu0 0
        %3237 = vmatmul.mubr.bf16.gmra.mrb[0].mxu0 %v3055
        %v3238 = vpop.f32.mrb[0].mxu0
        %v3239 = vadd.f32 0.0, %v3238
        %v3240 = vpop.f32.mrb[0].mxu0
        %v3241 = vpop.f32.mrb[0].mxu0
        %v3242 = vadd.f32 0.0, %v3241
        %v3243 = vpop.f32.mrb[0].mxu0
        %3244 = vdwg.mxu0
        %v3245 = vadd.f32 %v2902, %v3151
        %v3246 = vadd.f32 %v2903, %v3154
        %v3247 = vadd.f32 %v2904, %v3159
        %v3248 = vadd.f32 %v2905, %v3162
        %v3249 = vadd.f32 %v2906, %v3167
        %v3250 = vadd.f32 %v2907, %v3170
        %v3251 = vadd.f32 %v2908, %v3175
        %v3252 = vadd.f32 %v2909, %v3178
        %v3253 = vadd.f32 %v2910, %v3183
        %v3254 = vadd.f32 %v2911, %v3186
        %v3255 = vadd.f32 %v2912, %v3191
        %v3256 = vadd.f32 %v2913, %v3194
        %v3257 = vadd.f32 %v2914, %v3199
        %v3258 = vadd.f32 %v2915, %v3202
        %v3259 = vadd.f32 %v2916, %v3207
        %v3260 = vadd.f32 %v2917, %v3210
        %v3261 = vadd.f32 %v2918, %v3215
        %v3262 = vadd.f32 %v2919, %v3218
        %v3263 = vadd.f32 %v2920, %v3223
        %v3264 = vadd.f32 %v2921, %v3226
        %v3265 = vadd.f32 %v2922, %v3231
        %v3266 = vadd.f32 %v2923, %v3234
        %v3267 = vadd.f32 %v2924, %v3239
        %v3268 = vadd.f32 %v2925, %v3242
        %v3269 = vmax.f32 %v3245, 0.0
        %v3270 = vmax.f32 %v3246, 0.0
        %v3271 = vmax.f32 %v3247, 0.0
        %v3272 = vmax.f32 %v3248, 0.0
        %v3273 = vmax.f32 %v3249, 0.0
        %v3274 = vmax.f32 %v3250, 0.0
        %v3275 = vmax.f32 %v3251, 0.0
        %v3276 = vmax.f32 %v3252, 0.0
        %v3277 = vmax.f32 %v3253, 0.0
        %v3278 = vmax.f32 %v3254, 0.0
        %v3279 = vmax.f32 %v3255, 0.0
        %v3280 = vmax.f32 %v3256, 0.0
        %v3281 = vmax.f32 %v3257, 0.0
        %v3282 = vmax.f32 %v3258, 0.0
        %v3283 = vmax.f32 %v3259, 0.0
        %v3284 = vmax.f32 %v3260, 0.0
        %v3285 = vmax.f32 %v3261, 0.0
        %v3286 = vmax.f32 %v3262, 0.0
        %v3287 = vmax.f32 %v3263, 0.0
        %v3288 = vmax.f32 %v3264, 0.0
        %v3289 = vmax.f32 %v3265, 0.0
        %v3290 = vmax.f32 %v3266, 0.0
        %v3291 = vmax.f32 %v3267, 0.0
        %v3292 = vmax.f32 %v3268, 0.0
        %v3293 = vpack.c.bf16 %v3270, %v3269
        %v3294 = vpack.c.bf16 %v3272, %v3271
        %v3295 = vpack.c.bf16 %v3274, %v3273
        %v3296 = vpack.c.bf16 %v3276, %v3275
        %v3297 = vpack.c.bf16 %v3278, %v3277
        %v3298 = vpack.c.bf16 %v3280, %v3279
        %v3299 = vpack.c.bf16 %v3282, %v3281
        %v3300 = vpack.c.bf16 %v3284, %v3283
        %v3301 = vpack.c.bf16 %v3286, %v3285
        %v3302 = vpack.c.bf16 %v3288, %v3287
        %v3303 = vpack.c.bf16 %v3290, %v3289
        %v3304 = vpack.c.bf16 %v3292, %v3291
        %v3305 = vld [vmem:[#allocation10 + $0x40] sm:$0xf]
        %v3306 = vld [vmem:[#allocation10 + $0x44] sm:$0xf]
        %v3307 = vld [vmem:[#allocation10 + $0x48] sm:$0xf]
        %v3308 = vld [vmem:[#allocation10 + $0x4c] sm:$0xf]
        %v3309 = vld [vmem:[#allocation10 + $0x50] sm:$0xf]
        %v3310 = vld [vmem:[#allocation10 + $0x54] sm:$0xf]
        %v3311 = vld [vmem:[#allocation10 + $0x58] sm:$0xf]
        %v3312 = vld [vmem:[#allocation10 + $0x5c] sm:$0xf]
        %v3313 = vld [vmem:[#allocation10 + $0x60] sm:$0xf]
        %v3314 = vld [vmem:[#allocation10 + $0x64] sm:$0xf]
        %v3315 = vld [vmem:[#allocation10 + $0x68] sm:$0xf]
        %v3316 = vld [vmem:[#allocation10 + $0x6c] sm:$0xf]
        %v3317 = vld [vmem:[#allocation10 + $0x70] sm:$0xf]
        %v3318 = vld [vmem:[#allocation10 + $0x74] sm:$0xf]
        %v3319 = vld [vmem:[#allocation10 + $0x78] sm:$0xf]
        %v3320 = vld [vmem:[#allocation10 + $0x7c] sm:$0xf]
        %v3337 = vunpack.c.l.b16 %v3305
        %v3338 = vunpack.c.l.b16 %v3306
        %v3339 = vunpack.c.l.b16 %v3307
        %v3340 = vunpack.c.l.b16 %v3308
        %v3341 = vunpack.c.l.b16 %v3309
        %v3342 = vunpack.c.l.b16 %v3310
        %v3343 = vunpack.c.l.b16 %v3311
        %v3344 = vunpack.c.l.b16 %v3312
        %v3345 = vunpack.c.l.b16 %v3313
        %v3346 = vunpack.c.l.b16 %v3314
        %v3347 = vunpack.c.l.b16 %v3315
        %v3348 = vunpack.c.l.b16 %v3316
        %v3349 = vunpack.c.l.b16 %v3317
        %v3350 = vunpack.c.l.b16 %v3318
        %v3351 = vunpack.c.l.b16 %v3319
        %v3352 = vunpack.c.l.b16 %v3320
        %v3353 = vpack.c.b16 %v3338, %v3337
        %v3354 = vpack.c.b16 %v3340, %v3339
        %v3355 = vpack.c.b16 %v3342, %v3341
        %v3356 = vpack.c.b16 %v3344, %v3343
        %v3357 = vpack.c.b16 %v3346, %v3345
        %v3358 = vpack.c.b16 %v3348, %v3347
        %v3359 = vpack.c.b16 %v3350, %v3349
        %v3360 = vpack.c.b16 %v3352, %v3351
        %3369 = vmatprep.subr.bf16.mxu0 0
        %3370 = vmatpush1.bf16.msra.mxu0 %v3353
        %3371 = vmatprep.subr.bf16.mxu0 0
        %3372 = vmatpush1.bf16.msra.mxu0 %v3354
        %3373 = vmatprep.subr.bf16.mxu0 0
        %3374 = vmatpush1.bf16.msra.mxu0 %v3355
        %3375 = vmatprep.subr.bf16.mxu0 0
        %3376 = vmatpush1.bf16.msra.mxu0 %v3356
        %3377 = vmatprep.subr.bf16.mxu0 0
        %3378 = vmatpush1.bf16.msra.mxu0 %v3357
        %3379 = vmatprep.subr.bf16.mxu0 0
        %3380 = vmatpush1.bf16.msra.mxu0 %v3358
        %3381 = vmatprep.subr.bf16.mxu0 0
        %3382 = vmatpush1.bf16.msra.mxu0 %v3359
        %3383 = vmatprep.subr.bf16.mxu0 0
        %3384 = vmatpush1.bf16.msra.mxu0 %v3360
        %3385 = vmatprep.subr.bf16.mxu0 0
        %3386 = vmatpush1.bf16.msra.mxu0 0
        %3387 = vmatprep.subr.bf16.mxu0 0
        %3388 = vmatpush1.bf16.msra.mxu0 0
        %3389 = vmatprep.subr.bf16.mxu0 0
        %3390 = vmatpush1.bf16.msra.mxu0 0
        %3391 = vmatprep.subr.bf16.mxu0 0
        %3392 = vmatpush1.bf16.msra.mxu0 0
        %3393 = vmatprep.subr.bf16.mxu0 0
        %3394 = vmatpush1.bf16.msra.mxu0 0
        %3395 = vmatprep.subr.bf16.mxu0 0
        %3396 = vmatpush1.bf16.msra.mxu0 0
        %3397 = vmatprep.subr.bf16.mxu0 0
        %3398 = vmatpush1.bf16.msra.mxu0 0
        %3399 = vmatprep.subr.bf16.mxu0 0
        %3400 = vmatpush1.bf16.msra.mxu0 0
        %3401 = vmatprep.mubr.bf16.mxu0 0
        %3402 = vmatmul.mubr.bf16.gmra.mrb[0].mxu0 %v3293
        %v3403 = vpop.f32.mrb[0].mxu0
        %v3404 = vadd.f32 0.0, %v3403
        %v3405 = vpop.f32.mrb[0].mxu0
        %v3406 = vpop.f32.mrb[0].mxu0
        %v3407 = vadd.f32 0.0, %v3406
        %v3408 = vpop.f32.mrb[0].mxu0
        %3409 = vmatprep.mubr.bf16.mxu0 0
        %3410 = vmatmul.mubr.bf16.gmra.mrb[0].mxu0 %v3294
        %v3411 = vpop.f32.mrb[0].mxu0
        %v3412 = vadd.f32 0.0, %v3411
        %v3413 = vpop.f32.mrb[0].mxu0
        %v3414 = vpop.f32.mrb[0].mxu0
        %v3415 = vadd.f32 0.0, %v3414
        %v3416 = vpop.f32.mrb[0].mxu0
        %3417 = vmatprep.mubr.bf16.mxu0 0
        %3418 = vmatmul.mubr.bf16.gmra.mrb[0].mxu0 %v3295
        %v3419 = vpop.f32.mrb[0].mxu0
        %v3420 = vadd.f32 0.0, %v3419
        %v3421 = vpop.f32.mrb[0].mxu0
        %v3422 = vpop.f32.mrb[0].mxu0
        %v3423 = vadd.f32 0.0, %v3422
        %v3424 = vpop.f32.mrb[0].mxu0
        %3425 = vmatprep.mubr.bf16.mxu0 0
        %3426 = vmatmul.mubr.bf16.gmra.mrb[0].mxu0 %v3296
        %v3427 = vpop.f32.mrb[0].mxu0
        %v3428 = vadd.f32 0.0, %v3427
        %v3429 = vpop.f32.mrb[0].mxu0
        %v3430 = vpop.f32.mrb[0].mxu0
        %v3431 = vadd.f32 0.0, %v3430
        %v3432 = vpop.f32.mrb[0].mxu0
        %3433 = vmatprep.mubr.bf16.mxu0 0
        %3434 = vmatmul.mubr.bf16.gmra.mrb[0].mxu0 %v3297
        %v3435 = vpop.f32.mrb[0].mxu0
        %v3436 = vadd.f32 0.0, %v3435
        %v3437 = vpop.f32.mrb[0].mxu0
        %v3438 = vpop.f32.mrb[0].mxu0
        %v3439 = vadd.f32 0.0, %v3438
        %v3440 = vpop.f32.mrb[0].mxu0
        %3441 = vmatprep.mubr.bf16.mxu0 0
        %3442 = vmatmul.mubr.bf16.gmra.mrb[0].mxu0 %v3298
        %v3443 = vpop.f32.mrb[0].mxu0
        %v3444 = vadd.f32 0.0, %v3443
        %v3445 = vpop.f32.mrb[0].mxu0
        %v3446 = vpop.f32.mrb[0].mxu0
        %v3447 = vadd.f32 0.0, %v3446
        %v3448 = vpop.f32.mrb[0].mxu0
        %3449 = vmatprep.mubr.bf16.mxu0 0
        %3450 = vmatmul.mubr.bf16.gmra.mrb[0].mxu0 %v3299
        %v3451 = vpop.f32.mrb[0].mxu0
        %v3452 = vadd.f32 0.0, %v3451
        %v3453 = vpop.f32.mrb[0].mxu0
        %v3454 = vpop.f32.mrb[0].mxu0
        %v3455 = vadd.f32 0.0, %v3454
        %v3456 = vpop.f32.mrb[0].mxu0
        %3457 = vmatprep.mubr.bf16.mxu0 0
        %3458 = vmatmul.mubr.bf16.gmra.mrb[0].mxu0 %v3300
        %v3459 = vpop.f32.mrb[0].mxu0
        %v3460 = vadd.f32 0.0, %v3459
        %v3461 = vpop.f32.mrb[0].mxu0
        %v3462 = vpop.f32.mrb[0].mxu0
        %v3463 = vadd.f32 0.0, %v3462
        %v3464 = vpop.f32.mrb[0].mxu0
        %3465 = vmatprep.mubr.bf16.mxu0 0
        %3466 = vmatmul.mubr.bf16.gmra.mrb[0].mxu0 %v3301
        %v3467 = vpop.f32.mrb[0].mxu0
        %v3468 = vadd.f32 0.0, %v3467
        %v3469 = vpop.f32.mrb[0].mxu0
        %v3470 = vpop.f32.mrb[0].mxu0
        %v3471 = vadd.f32 0.0, %v3470
        %v3472 = vpop.f32.mrb[0].mxu0
        %3473 = vmatprep.mubr.bf16.mxu0 0
        %3474 = vmatmul.mubr.bf16.gmra.mrb[0].mxu0 %v3302
        %v3475 = vpop.f32.mrb[0].mxu0
        %v3476 = vadd.f32 0.0, %v3475
        %v3477 = vpop.f32.mrb[0].mxu0
        %v3478 = vpop.f32.mrb[0].mxu0
        %v3479 = vadd.f32 0.0, %v3478
        %v3480 = vpop.f32.mrb[0].mxu0
        %3481 = vmatprep.mubr.bf16.mxu0 0
        %3482 = vmatmul.mubr.bf16.gmra.mrb[0].mxu0 %v3303
        %v3483 = vpop.f32.mrb[0].mxu0
        %v3484 = vadd.f32 0.0, %v3483
        %v3485 = vpop.f32.mrb[0].mxu0
        %v3486 = vpop.f32.mrb[0].mxu0
        %v3487 = vadd.f32 0.0, %v3486
        %v3488 = vpop.f32.mrb[0].mxu0
        %3489 = vmatprep.mubr.bf16.mxu0 0
        %3490 = vmatmul.mubr.bf16.gmra.mrb[0].mxu0 %v3304
        %v3491 = vpop.f32.mrb[0].mxu0
        %v3492 = vadd.f32 0.0, %v3491
        %v3493 = vpop.f32.mrb[0].mxu0
        %v3494 = vpop.f32.mrb[0].mxu0
        %v3495 = vadd.f32 0.0, %v3494
        %v3496 = vpop.f32.mrb[0].mxu0
        %3497 = vdwg.mxu0
        %v3514 = vunpack.c.l.b16 %v633
        %v3515 = vunpack.c.l.b16 %v634
        %v3516 = vunpack.c.l.b16 %v635
        %v3517 = vunpack.c.l.b16 %v636
        %v3518 = vunpack.c.l.b16 %v637
        %v3519 = vunpack.c.l.b16 %v638
        %v3520 = vunpack.c.l.b16 %v639
        %v3521 = vunpack.c.l.b16 %v640
        %v3522 = vunpack.c.l.b16 %v641
        %v3523 = vunpack.c.l.b16 %v642
        %v3524 = vunpack.c.l.b16 %v643
        %v3525 = vunpack.c.l.b16 %v644
        %v3526 = vunpack.c.l.b16 %v645
        %v3527 = vunpack.c.l.b16 %v646
        %v3528 = vunpack.c.l.b16 %v647
        %v3529 = vunpack.c.l.b16 %v648
        %v3530 = vpack.c.b16 %v3515, %v3514
        %v3531 = vpack.c.b16 %v3517, %v3516
        %v3532 = vpack.c.b16 %v3519, %v3518
        %v3533 = vpack.c.b16 %v3521, %v3520
        %v3534 = vpack.c.b16 %v3523, %v3522
        %v3535 = vpack.c.b16 %v3525, %v3524
        %v3536 = vpack.c.b16 %v3527, %v3526
        %v3537 = vpack.c.b16 %v3529, %v3528
        %3546 = vmatprep.subr.bf16.mxu0 0
        %3547 = vmatpush1.bf16.msra.mxu0 %v3530
        %3548 = vmatprep.subr.bf16.mxu0 0
        %3549 = vmatpush1.bf16.msra.mxu0 %v3531
        %3550 = vmatprep.subr.bf16.mxu0 0
        %3551 = vmatpush1.bf16.msra.mxu0 %v3532
        %3552 = vmatprep.subr.bf16.mxu0 0
        %3553 = vmatpush1.bf16.msra.mxu0 %v3533
        %3554 = vmatprep.subr.bf16.mxu0 0
        %3555 = vmatpush1.bf16.msra.mxu0 %v3534
        %3556 = vmatprep.subr.bf16.mxu0 0
        %3557 = vmatpush1.bf16.msra.mxu0 %v3535
        %3558 = vmatprep.subr.bf16.mxu0 0
        %3559 = vmatpush1.bf16.msra.mxu0 %v3536
        %3560 = vmatprep.subr.bf16.mxu0 0
        %3561 = vmatpush1.bf16.msra.mxu0 %v3537
        %3562 = vmatprep.subr.bf16.mxu0 0
        %3563 = vmatpush1.bf16.msra.mxu0 0
        %3564 = vmatprep.subr.bf16.mxu0 0
        %3565 = vmatpush1.bf16.msra.mxu0 0
        %3566 = vmatprep.subr.bf16.mxu0 0
        %3567 = vmatpush1.bf16.msra.mxu0 0
        %3568 = vmatprep.subr.bf16.mxu0 0
        %3569 = vmatpush1.bf16.msra.mxu0 0
        %3570 = vmatprep.subr.bf16.mxu0 0
        %3571 = vmatpush1.bf16.msra.mxu0 0
        %3572 = vmatprep.subr.bf16.mxu0 0
        %3573 = vmatpush1.bf16.msra.mxu0 0
        %3574 = vmatprep.subr.bf16.mxu0 0
        %3575 = vmatpush1.bf16.msra.mxu0 0
        %3576 = vmatprep.subr.bf16.mxu0 0
        %3577 = vmatpush1.bf16.msra.mxu0 0
        %3578 = vmatprep.mubr.bf16.mxu0 0
        %3579 = vmatmul.mubr.bf16.gmra.mrb[0].mxu0 %v621
        %v3580 = vpop.f32.mrb[0].mxu0
        %v3581 = vadd.f32 %v3404, %v3580
        %v3582 = vpop.f32.mrb[0].mxu0
        %v3583 = vpop.f32.mrb[0].mxu0
        %v3584 = vadd.f32 %v3407, %v3583
        %v3585 = vpop.f32.mrb[0].mxu0
        %3586 = vmatprep.mubr.bf16.mxu0 0
        %3587 = vmatmul.mubr.bf16.gmra.mrb[0].mxu0 %v622
        %v3588 = vpop.f32.mrb[0].mxu0
        %v3589 = vadd.f32 %v3412, %v3588
        %v3590 = vpop.f32.mrb[0].mxu0
        %v3591 = vpop.f32.mrb[0].mxu0
        %v3592 = vadd.f32 %v3415, %v3591
        %v3593 = vpop.f32.mrb[0].mxu0
        %3594 = vmatprep.mubr.bf16.mxu0 0
        %3595 = vmatmul.mubr.bf16.gmra.mrb[0].mxu0 %v623
        %v3596 = vpop.f32.mrb[0].mxu0
        %v3597 = vadd.f32 %v3420, %v3596
        %v3598 = vpop.f32.mrb[0].mxu0
        %v3599 = vpop.f32.mrb[0].mxu0
        %v3600 = vadd.f32 %v3423, %v3599
        %v3601 = vpop.f32.mrb[0].mxu0
        %3602 = vmatprep.mubr.bf16.mxu0 0
        %3603 = vmatmul.mubr.bf16.gmra.mrb[0].mxu0 %v624
        %v3604 = vpop.f32.mrb[0].mxu0
        %v3605 = vadd.f32 %v3428, %v3604
        %v3606 = vpop.f32.mrb[0].mxu0
        %v3607 = vpop.f32.mrb[0].mxu0
        %v3608 = vadd.f32 %v3431, %v3607
        %v3609 = vpop.f32.mrb[0].mxu0
        %3610 = vmatprep.mubr.bf16.mxu0 0
        %3611 = vmatmul.mubr.bf16.gmra.mrb[0].mxu0 %v625
        %v3612 = vpop.f32.mrb[0].mxu0
        %v3613 = vadd.f32 %v3436, %v3612
        %v3614 = vpop.f32.mrb[0].mxu0
        %v3615 = vpop.f32.mrb[0].mxu0
        %v3616 = vadd.f32 %v3439, %v3615
        %v3617 = vpop.f32.mrb[0].mxu0
        %3618 = vmatprep.mubr.bf16.mxu0 0
        %3619 = vmatmul.mubr.bf16.gmra.mrb[0].mxu0 %v626
        %v3620 = vpop.f32.mrb[0].mxu0
        %v3621 = vadd.f32 %v3444, %v3620
        %v3622 = vpop.f32.mrb[0].mxu0
        %v3623 = vpop.f32.mrb[0].mxu0
        %v3624 = vadd.f32 %v3447, %v3623
        %v3625 = vpop.f32.mrb[0].mxu0
        %3626 = vmatprep.mubr.bf16.mxu0 0
        %3627 = vmatmul.mubr.bf16.gmra.mrb[0].mxu0 %v627
        %v3628 = vpop.f32.mrb[0].mxu0
        %v3629 = vadd.f32 %v3452, %v3628
        %v3630 = vpop.f32.mrb[0].mxu0
        %v3631 = vpop.f32.mrb[0].mxu0
        %v3632 = vadd.f32 %v3455, %v3631
        %v3633 = vpop.f32.mrb[0].mxu0
        %3634 = vmatprep.mubr.bf16.mxu0 0
        %3635 = vmatmul.mubr.bf16.gmra.mrb[0].mxu0 %v628
        %v3636 = vpop.f32.mrb[0].mxu0
        %v3637 = vadd.f32 %v3460, %v3636
        %v3638 = vpop.f32.mrb[0].mxu0
        %v3639 = vpop.f32.mrb[0].mxu0
        %v3640 = vadd.f32 %v3463, %v3639
        %v3641 = vpop.f32.mrb[0].mxu0
        %3642 = vmatprep.mubr.bf16.mxu0 0
        %3643 = vmatmul.mubr.bf16.gmra.mrb[0].mxu0 %v629
        %v3644 = vpop.f32.mrb[0].mxu0
        %v3645 = vadd.f32 %v3468, %v3644
        %v3646 = vpop.f32.mrb[0].mxu0
        %v3647 = vpop.f32.mrb[0].mxu0
        %v3648 = vadd.f32 %v3471, %v3647
        %v3649 = vpop.f32.mrb[0].mxu0
        %3650 = vmatprep.mubr.bf16.mxu0 0
        %3651 = vmatmul.mubr.bf16.gmra.mrb[0].mxu0 %v630
        %v3652 = vpop.f32.mrb[0].mxu0
        %v3653 = vadd.f32 %v3476, %v3652
        %v3654 = vpop.f32.mrb[0].mxu0
        %v3655 = vpop.f32.mrb[0].mxu0
        %v3656 = vadd.f32 %v3479, %v3655
        %v3657 = vpop.f32.mrb[0].mxu0
        %3658 = vmatprep.mubr.bf16.mxu0 0
        %3659 = vmatmul.mubr.bf16.gmra.mrb[0].mxu0 %v631
        %v3660 = vpop.f32.mrb[0].mxu0
        %v3661 = vadd.f32 %v3484, %v3660
        %v3662 = vpop.f32.mrb[0].mxu0
        %v3663 = vpop.f32.mrb[0].mxu0
        %v3664 = vadd.f32 %v3487, %v3663
        %v3665 = vpop.f32.mrb[0].mxu0
        %3666 = vmatprep.mubr.bf16.mxu0 0
        %3667 = vmatmul.mubr.bf16.gmra.mrb[0].mxu0 %v632
        %v3668 = vpop.f32.mrb[0].mxu0
        %v3669 = vadd.f32 %v3492, %v3668
        %v3670 = vpop.f32.mrb[0].mxu0
        %v3671 = vpop.f32.mrb[0].mxu0
        %v3672 = vadd.f32 %v3495, %v3671
        %v3673 = vpop.f32.mrb[0].mxu0
        %3674 = vdwg.mxu0
        %v3675 = vld [vmem:[%s307 + $0x8] sm:$0xf8]
        %v3676 = vld [vmem:[%s307 + $0x10] sm:$0xff]
        %v3677 = vld [vmem:[%s307 + $0x18] sm:$0xff]
        %v3678 = vld [vmem:[%s307 + $0x20] sm:$0xff]
        %v3679 = vld [vmem:[%s307 + $0x28] sm:$0xff]
        %v3680 = vld [vmem:[%s307 + $0x30] sm:$0xff]
        %v3681 = vld [vmem:[%s307 + $0x38] sm:$0xff]
        %v3682 = vld [vmem:[%s307 + $0x40] sm:$0xff]
        %v3683 = vld [vmem:[%s307 + $0x48] sm:$0xff]
        %v3684 = vld [vmem:[%s307 + $0x50] sm:$0xff]
        %v3685 = vld [vmem:[%s307 + $0x58] sm:$0xff]
        %v3686 = vld [vmem:[%s307 + $0x60] sm:$0xff]
        %v3687 = vld [vmem:[%s307 + $0x68] sm:$0x7]
        %s3688 = scalar_lea.vmem [#allocation9], 576
        %v3689 = vld [vmem:[%s3688] sm:$0xf]
        %v3690 = vld [vmem:[%s3688 + $0x4] sm:$0xf]
        %v3691 = vld [vmem:[%s3688 + $0x8] sm:$0xf]
        %v3692 = vld [vmem:[%s3688 + $0xc] sm:$0xf]
        %v3693 = vld [vmem:[%s3688 + $0x10] sm:$0xf]
        %v3694 = vld [vmem:[%s3688 + $0x14] sm:$0xf]
        %v3695 = vld [vmem:[%s3688 + $0x18] sm:$0xf]
        %v3696 = vld [vmem:[%s3688 + $0x1c] sm:$0xf]
        %v3697 = vld [vmem:[%s3688 + $0x20] sm:$0xf]
        %v3698 = vld [vmem:[%s3688 + $0x24] sm:$0xf]
        %v3699 = vld [vmem:[%s3688 + $0x28] sm:$0xf]
        %v3700 = vld [vmem:[%s3688 + $0x2c] sm:$0xf]
        %v3701 = vld [vmem:[%s3688 + $0x30] sm:$0xf]
        %v3702 = vld [vmem:[%s3688 + $0x34] sm:$0xf]
        %v3703 = vld [vmem:[%s3688 + $0x38] sm:$0xf]
        %v3704 = vld [vmem:[%s3688 + $0x3c] sm:$0xf]
        %v3705 = vld [vmem:[%s307 + $0x8] sm:$0xf0]
        %v3706 = vld [vmem:[%s307 + $0x68] sm:$0xf]
        %s3707 = scalar_lea.vmem [#allocation9], 640
        %v3708 = vld [vmem:[%s3707] sm:$0xf]
        %v3709 = vld [vmem:[%s3707 + $0x4] sm:$0xf]
        %v3710 = vld [vmem:[%s3707 + $0x8] sm:$0xf]
        %v3711 = vld [vmem:[%s3707 + $0xc] sm:$0xf]
        %v3712 = vld [vmem:[%s3707 + $0x10] sm:$0xf]
        %v3713 = vld [vmem:[%s3707 + $0x14] sm:$0xf]
        %v3714 = vld [vmem:[%s3707 + $0x18] sm:$0xf]
        %v3715 = vld [vmem:[%s3707 + $0x1c] sm:$0xf]
        %v3716 = vld [vmem:[%s3707 + $0x20] sm:$0xf]
        %v3717 = vld [vmem:[%s3707 + $0x24] sm:$0xf]
        %v3718 = vld [vmem:[%s3707 + $0x28] sm:$0xf]
        %v3719 = vld [vmem:[%s3707 + $0x2c] sm:$0xf]
        %v3720 = vld [vmem:[%s3707 + $0x30] sm:$0xf]
        %v3721 = vld [vmem:[%s3707 + $0x34] sm:$0xf]
        %v3722 = vld [vmem:[%s3707 + $0x38] sm:$0xf]
        %v3723 = vld [vmem:[%s3707 + $0x3c] sm:$0xf]
        %v3737 = vrot.slane %v3705, 4
        %v3738 = vrot.slane %v3676, 4
        %v3739 = vsel %vm382, %v3737, %v3738
        %v3740 = vrot.slane %v3677, 4
        %v3741 = vsel %vm382, %v3738, %v3740
        %v3742 = vrot.slane %v3678, 4
        %v3743 = vsel %vm382, %v3740, %v3742
        %v3744 = vrot.slane %v3679, 4
        %v3745 = vsel %vm382, %v3742, %v3744
        %v3746 = vrot.slane %v3680, 4
        %v3747 = vsel %vm382, %v3744, %v3746
        %v3748 = vrot.slane %v3681, 4
        %v3749 = vsel %vm382, %v3746, %v3748
        %v3750 = vrot.slane %v3682, 4
        %v3751 = vsel %vm382, %v3748, %v3750
        %v3752 = vrot.slane %v3683, 4
        %v3753 = vsel %vm382, %v3750, %v3752
        %v3754 = vrot.slane %v3684, 4
        %v3755 = vsel %vm382, %v3752, %v3754
        %v3756 = vrot.slane %v3685, 4
        %v3757 = vsel %vm382, %v3754, %v3756
        %v3758 = vrot.slane %v3686, 4
        %v3759 = vsel %vm382, %v3756, %v3758
        %v3760 = vrot.slane %v3706, 4
        %v3761 = vsel %vm382, %v3758, %v3760
        %v3790 = vunpack.c.l.b16 %v3708
        %v3791 = vunpack.c.l.b16 %v3709
        %v3792 = vunpack.c.l.b16 %v3710
        %v3793 = vunpack.c.l.b16 %v3711
        %v3794 = vunpack.c.l.b16 %v3712
        %v3795 = vunpack.c.l.b16 %v3713
        %v3796 = vunpack.c.l.b16 %v3714
        %v3797 = vunpack.c.l.b16 %v3715
        %v3798 = vunpack.c.l.b16 %v3716
        %v3799 = vunpack.c.l.b16 %v3717
        %v3800 = vunpack.c.l.b16 %v3718
        %v3801 = vunpack.c.l.b16 %v3719
        %v3802 = vunpack.c.l.b16 %v3720
        %v3803 = vunpack.c.l.b16 %v3721
        %v3804 = vunpack.c.l.b16 %v3722
        %v3805 = vunpack.c.l.b16 %v3723
        %v3806 = vpack.c.b16 %v3791, %v3790
        %v3807 = vpack.c.b16 %v3793, %v3792
        %v3808 = vpack.c.b16 %v3795, %v3794
        %v3809 = vpack.c.b16 %v3797, %v3796
        %v3810 = vpack.c.b16 %v3799, %v3798
        %v3811 = vpack.c.b16 %v3801, %v3800
        %v3812 = vpack.c.b16 %v3803, %v3802
        %v3813 = vpack.c.b16 %v3805, %v3804
        %3822 = vmatprep.subr.bf16.mxu0 0
        %3823 = vmatpush1.bf16.msra.mxu0 %v3806
        %3824 = vmatprep.subr.bf16.mxu0 0
        %3825 = vmatpush1.bf16.msra.mxu0 %v3807
        %3826 = vmatprep.subr.bf16.mxu0 0
        %3827 = vmatpush1.bf16.msra.mxu0 %v3808
        %3828 = vmatprep.subr.bf16.mxu0 0
        %3829 = vmatpush1.bf16.msra.mxu0 %v3809
        %3830 = vmatprep.subr.bf16.mxu0 0
        %3831 = vmatpush1.bf16.msra.mxu0 %v3810
        %3832 = vmatprep.subr.bf16.mxu0 0
        %3833 = vmatpush1.bf16.msra.mxu0 %v3811
        %3834 = vmatprep.subr.bf16.mxu0 0
        %3835 = vmatpush1.bf16.msra.mxu0 %v3812
        %3836 = vmatprep.subr.bf16.mxu0 0
        %3837 = vmatpush1.bf16.msra.mxu0 %v3813
        %3838 = vmatprep.subr.bf16.mxu0 0
        %3839 = vmatpush1.bf16.msra.mxu0 0
        %3840 = vmatprep.subr.bf16.mxu0 0
        %3841 = vmatpush1.bf16.msra.mxu0 0
        %3842 = vmatprep.subr.bf16.mxu0 0
        %3843 = vmatpush1.bf16.msra.mxu0 0
        %3844 = vmatprep.subr.bf16.mxu0 0
        %3845 = vmatpush1.bf16.msra.mxu0 0
        %3846 = vmatprep.subr.bf16.mxu0 0
        %3847 = vmatpush1.bf16.msra.mxu0 0
        %3848 = vmatprep.subr.bf16.mxu0 0
        %3849 = vmatpush1.bf16.msra.mxu0 0
        %3850 = vmatprep.subr.bf16.mxu0 0
        %3851 = vmatpush1.bf16.msra.mxu0 0
        %3852 = vmatprep.subr.bf16.mxu0 0
        %3853 = vmatpush1.bf16.msra.mxu0 0
        %3854 = vmatprep.mubr.bf16.mxu0 0
        %3855 = vmatmul.mubr.bf16.gmra.mrb[0].mxu0 %v3739
        %v3856 = vpop.f32.mrb[0].mxu0
        %v3857 = vadd.f32 0.0, %v3856
        %v3858 = vpop.f32.mrb[0].mxu0
        %v3859 = vpop.f32.mrb[0].mxu0
        %v3860 = vadd.f32 0.0, %v3859
        %v3861 = vpop.f32.mrb[0].mxu0
        %3862 = vmatprep.mubr.bf16.mxu0 0
        %3863 = vmatmul.mubr.bf16.gmra.mrb[0].mxu0 %v3741
        %v3864 = vpop.f32.mrb[0].mxu0
        %v3865 = vadd.f32 0.0, %v3864
        %v3866 = vpop.f32.mrb[0].mxu0
        %v3867 = vpop.f32.mrb[0].mxu0
        %v3868 = vadd.f32 0.0, %v3867
        %v3869 = vpop.f32.mrb[0].mxu0
        %3870 = vmatprep.mubr.bf16.mxu0 0
        %3871 = vmatmul.mubr.bf16.gmra.mrb[0].mxu0 %v3743
        %v3872 = vpop.f32.mrb[0].mxu0
        %v3873 = vadd.f32 0.0, %v3872
        %v3874 = vpop.f32.mrb[0].mxu0
        %v3875 = vpop.f32.mrb[0].mxu0
        %v3876 = vadd.f32 0.0, %v3875
        %v3877 = vpop.f32.mrb[0].mxu0
        %3878 = vmatprep.mubr.bf16.mxu0 0
        %3879 = vmatmul.mubr.bf16.gmra.mrb[0].mxu0 %v3745
        %v3880 = vpop.f32.mrb[0].mxu0
        %v3881 = vadd.f32 0.0, %v3880
        %v3882 = vpop.f32.mrb[0].mxu0
        %v3883 = vpop.f32.mrb[0].mxu0
        %v3884 = vadd.f32 0.0, %v3883
        %v3885 = vpop.f32.mrb[0].mxu0
        %3886 = vmatprep.mubr.bf16.mxu0 0
        %3887 = vmatmul.mubr.bf16.gmra.mrb[0].mxu0 %v3747
        %v3888 = vpop.f32.mrb[0].mxu0
        %v3889 = vadd.f32 0.0, %v3888
        %v3890 = vpop.f32.mrb[0].mxu0
        %v3891 = vpop.f32.mrb[0].mxu0
        %v3892 = vadd.f32 0.0, %v3891
        %v3893 = vpop.f32.mrb[0].mxu0
        %3894 = vmatprep.mubr.bf16.mxu0 0
        %3895 = vmatmul.mubr.bf16.gmra.mrb[0].mxu0 %v3749
        %v3896 = vpop.f32.mrb[0].mxu0
        %v3897 = vadd.f32 0.0, %v3896
        %v3898 = vpop.f32.mrb[0].mxu0
        %v3899 = vpop.f32.mrb[0].mxu0
        %v3900 = vadd.f32 0.0, %v3899
        %v3901 = vpop.f32.mrb[0].mxu0
        %3902 = vmatprep.mubr.bf16.mxu0 0
        %3903 = vmatmul.mubr.bf16.gmra.mrb[0].mxu0 %v3751
        %v3904 = vpop.f32.mrb[0].mxu0
        %v3905 = vadd.f32 0.0, %v3904
        %v3906 = vpop.f32.mrb[0].mxu0
        %v3907 = vpop.f32.mrb[0].mxu0
        %v3908 = vadd.f32 0.0, %v3907
        %v3909 = vpop.f32.mrb[0].mxu0
        %3910 = vmatprep.mubr.bf16.mxu0 0
        %3911 = vmatmul.mubr.bf16.gmra.mrb[0].mxu0 %v3753
        %v3912 = vpop.f32.mrb[0].mxu0
        %v3913 = vadd.f32 0.0, %v3912
        %v3914 = vpop.f32.mrb[0].mxu0
        %v3915 = vpop.f32.mrb[0].mxu0
        %v3916 = vadd.f32 0.0, %v3915
        %v3917 = vpop.f32.mrb[0].mxu0
        %3918 = vmatprep.mubr.bf16.mxu0 0
        %3919 = vmatmul.mubr.bf16.gmra.mrb[0].mxu0 %v3755
        %v3920 = vpop.f32.mrb[0].mxu0
        %v3921 = vadd.f32 0.0, %v3920
        %v3922 = vpop.f32.mrb[0].mxu0
        %v3923 = vpop.f32.mrb[0].mxu0
        %v3924 = vadd.f32 0.0, %v3923
        %v3925 = vpop.f32.mrb[0].mxu0
        %3926 = vmatprep.mubr.bf16.mxu0 0
        %3927 = vmatmul.mubr.bf16.gmra.mrb[0].mxu0 %v3757
        %v3928 = vpop.f32.mrb[0].mxu0
        %v3929 = vadd.f32 0.0, %v3928
        %v3930 = vpop.f32.mrb[0].mxu0
        %v3931 = vpop.f32.mrb[0].mxu0
        %v3932 = vadd.f32 0.0, %v3931
        %v3933 = vpop.f32.mrb[0].mxu0
        %3934 = vmatprep.mubr.bf16.mxu0 0
        %3935 = vmatmul.mubr.bf16.gmra.mrb[0].mxu0 %v3759
        %v3936 = vpop.f32.mrb[0].mxu0
        %v3937 = vadd.f32 0.0, %v3936
        %v3938 = vpop.f32.mrb[0].mxu0
        %v3939 = vpop.f32.mrb[0].mxu0
        %v3940 = vadd.f32 0.0, %v3939
        %v3941 = vpop.f32.mrb[0].mxu0
        %3942 = vmatprep.mubr.bf16.mxu0 0
        %3943 = vmatmul.mubr.bf16.gmra.mrb[0].mxu0 %v3761
        %v3944 = vpop.f32.mrb[0].mxu0
        %v3945 = vadd.f32 0.0, %v3944
        %v3946 = vpop.f32.mrb[0].mxu0
        %v3947 = vpop.f32.mrb[0].mxu0
        %v3948 = vadd.f32 0.0, %v3947
        %v3949 = vpop.f32.mrb[0].mxu0
        %3950 = vdwg.mxu0
        %vm3953 = vcmask 1044480
        %v3954 = vrot.slane %v3675, 3
        %v3955 = vrot.slane %v3676, 3
        %v3956 = vsel %vm3953, %v3954, %v3955
        %v3957 = vrot.slane %v3677, 3
        %v3958 = vsel %vm3953, %v3955, %v3957
        %v3959 = vrot.slane %v3678, 3
        %v3960 = vsel %vm3953, %v3957, %v3959
        %v3961 = vrot.slane %v3679, 3
        %v3962 = vsel %vm3953, %v3959, %v3961
        %v3963 = vrot.slane %v3680, 3
        %v3964 = vsel %vm3953, %v3961, %v3963
        %v3965 = vrot.slane %v3681, 3
        %v3966 = vsel %vm3953, %v3963, %v3965
        %v3967 = vrot.slane %v3682, 3
        %v3968 = vsel %vm3953, %v3965, %v3967
        %v3969 = vrot.slane %v3683, 3
        %v3970 = vsel %vm3953, %v3967, %v3969
        %v3971 = vrot.slane %v3684, 3
        %v3972 = vsel %vm3953, %v3969, %v3971
        %v3973 = vrot.slane %v3685, 3
        %v3974 = vsel %vm3953, %v3971, %v3973
        %v3975 = vrot.slane %v3686, 3
        %v3976 = vsel %vm3953, %v3973, %v3975
        %v3977 = vrot.slane %v3687, 3
        %v3978 = vsel %vm3953, %v3975, %v3977
        %v4007 = vunpack.c.l.b16 %v3689
        %v4008 = vunpack.c.l.b16 %v3690
        %v4009 = vunpack.c.l.b16 %v3691
        %v4010 = vunpack.c.l.b16 %v3692
        %v4011 = vunpack.c.l.b16 %v3693
        %v4012 = vunpack.c.l.b16 %v3694
        %v4013 = vunpack.c.l.b16 %v3695
        %v4014 = vunpack.c.l.b16 %v3696
        %v4015 = vunpack.c.l.b16 %v3697
        %v4016 = vunpack.c.l.b16 %v3698
        %v4017 = vunpack.c.l.b16 %v3699
        %v4018 = vunpack.c.l.b16 %v3700
        %v4019 = vunpack.c.l.b16 %v3701
        %v4020 = vunpack.c.l.b16 %v3702
        %v4021 = vunpack.c.l.b16 %v3703
        %v4022 = vunpack.c.l.b16 %v3704
        %v4023 = vpack.c.b16 %v4008, %v4007
        %v4024 = vpack.c.b16 %v4010, %v4009
        %v4025 = vpack.c.b16 %v4012, %v4011
        %v4026 = vpack.c.b16 %v4014, %v4013
        %v4027 = vpack.c.b16 %v4016, %v4015
        %v4028 = vpack.c.b16 %v4018, %v4017
        %v4029 = vpack.c.b16 %v4020, %v4019
        %v4030 = vpack.c.b16 %v4022, %v4021
        %4039 = vmatprep.subr.bf16.mxu0 0
        %4040 = vmatpush1.bf16.msra.mxu0 %v4023
        %4041 = vmatprep.subr.bf16.mxu0 0
        %4042 = vmatpush1.bf16.msra.mxu0 %v4024
        %4043 = vmatprep.subr.bf16.mxu0 0
        %4044 = vmatpush1.bf16.msra.mxu0 %v4025
        %4045 = vmatprep.subr.bf16.mxu0 0
        %4046 = vmatpush1.bf16.msra.mxu0 %v4026
        %4047 = vmatprep.subr.bf16.mxu0 0
        %4048 = vmatpush1.bf16.msra.mxu0 %v4027
        %4049 = vmatprep.subr.bf16.mxu0 0
        %4050 = vmatpush1.bf16.msra.mxu0 %v4028
        %4051 = vmatprep.subr.bf16.mxu0 0
        %4052 = vmatpush1.bf16.msra.mxu0 %v4029
        %4053 = vmatprep.subr.bf16.mxu0 0
        %4054 = vmatpush1.bf16.msra.mxu0 %v4030
        %4055 = vmatprep.subr.bf16.mxu0 0
        %4056 = vmatpush1.bf16.msra.mxu0 0
        %4057 = vmatprep.subr.bf16.mxu0 0
        %4058 = vmatpush1.bf16.msra.mxu0 0
        %4059 = vmatprep.subr.bf16.mxu0 0
        %4060 = vmatpush1.bf16.msra.mxu0 0
        %4061 = vmatprep.subr.bf16.mxu0 0
        %4062 = vmatpush1.bf16.msra.mxu0 0
        %4063 = vmatprep.subr.bf16.mxu0 0
        %4064 = vmatpush1.bf16.msra.mxu0 0
        %4065 = vmatprep.subr.bf16.mxu0 0
        %4066 = vmatpush1.bf16.msra.mxu0 0
        %4067 = vmatprep.subr.bf16.mxu0 0
        %4068 = vmatpush1.bf16.msra.mxu0 0
        %4069 = vmatprep.subr.bf16.mxu0 0
        %4070 = vmatpush1.bf16.msra.mxu0 0
        %4071 = vmatprep.mubr.bf16.mxu0 0
        %4072 = vmatmul.mubr.bf16.gmra.mrb[0].mxu0 %v3956
        %v4073 = vpop.f32.mrb[0].mxu0
        %v4074 = vadd.f32 %v3857, %v4073
        %v4075 = vpop.f32.mrb[0].mxu0
        %v4076 = vpop.f32.mrb[0].mxu0
        %v4077 = vadd.f32 %v3860, %v4076
        %v4078 = vpop.f32.mrb[0].mxu0
        %4079 = vmatprep.mubr.bf16.mxu0 0
        %4080 = vmatmul.mubr.bf16.gmra.mrb[0].mxu0 %v3958
        %v4081 = vpop.f32.mrb[0].mxu0
        %v4082 = vadd.f32 %v3865, %v4081
        %v4083 = vpop.f32.mrb[0].mxu0
        %v4084 = vpop.f32.mrb[0].mxu0
        %v4085 = vadd.f32 %v3868, %v4084
        %v4086 = vpop.f32.mrb[0].mxu0
        %4087 = vmatprep.mubr.bf16.mxu0 0
        %4088 = vmatmul.mubr.bf16.gmra.mrb[0].mxu0 %v3960
        %v4089 = vpop.f32.mrb[0].mxu0
        %v4090 = vadd.f32 %v3873, %v4089
        %v4091 = vpop.f32.mrb[0].mxu0
        %v4092 = vpop.f32.mrb[0].mxu0
        %v4093 = vadd.f32 %v3876, %v4092
        %v4094 = vpop.f32.mrb[0].mxu0
        %4095 = vmatprep.mubr.bf16.mxu0 0
        %4096 = vmatmul.mubr.bf16.gmra.mrb[0].mxu0 %v3962
        %v4097 = vpop.f32.mrb[0].mxu0
        %v4098 = vadd.f32 %v3881, %v4097
        %v4099 = vpop.f32.mrb[0].mxu0
        %v4100 = vpop.f32.mrb[0].mxu0
        %v4101 = vadd.f32 %v3884, %v4100
        %v4102 = vpop.f32.mrb[0].mxu0
        %4103 = vmatprep.mubr.bf16.mxu0 0
        %4104 = vmatmul.mubr.bf16.gmra.mrb[0].mxu0 %v3964
        %v4105 = vpop.f32.mrb[0].mxu0
        %v4106 = vadd.f32 %v3889, %v4105
        %v4107 = vpop.f32.mrb[0].mxu0
        %v4108 = vpop.f32.mrb[0].mxu0
        %v4109 = vadd.f32 %v3892, %v4108
        %v4110 = vpop.f32.mrb[0].mxu0
        %4111 = vmatprep.mubr.bf16.mxu0 0
        %4112 = vmatmul.mubr.bf16.gmra.mrb[0].mxu0 %v3966
        %v4113 = vpop.f32.mrb[0].mxu0
        %v4114 = vadd.f32 %v3897, %v4113
        %v4115 = vpop.f32.mrb[0].mxu0
        %v4116 = vpop.f32.mrb[0].mxu0
        %v4117 = vadd.f32 %v3900, %v4116
        %v4118 = vpop.f32.mrb[0].mxu0
        %4119 = vmatprep.mubr.bf16.mxu0 0
        %4120 = vmatmul.mubr.bf16.gmra.mrb[0].mxu0 %v3968
        %v4121 = vpop.f32.mrb[0].mxu0
        %v4122 = vadd.f32 %v3905, %v4121
        %v4123 = vpop.f32.mrb[0].mxu0
        %v4124 = vpop.f32.mrb[0].mxu0
        %v4125 = vadd.f32 %v3908, %v4124
        %v4126 = vpop.f32.mrb[0].mxu0
        %4127 = vmatprep.mubr.bf16.mxu0 0
        %4128 = vmatmul.mubr.bf16.gmra.mrb[0].mxu0 %v3970
        %v4129 = vpop.f32.mrb[0].mxu0
        %v4130 = vadd.f32 %v3913, %v4129
        %v4131 = vpop.f32.mrb[0].mxu0
        %v4132 = vpop.f32.mrb[0].mxu0
        %v4133 = vadd.f32 %v3916, %v4132
        %v4134 = vpop.f32.mrb[0].mxu0
        %4135 = vmatprep.mubr.bf16.mxu0 0
        %4136 = vmatmul.mubr.bf16.gmra.mrb[0].mxu0 %v3972
        %v4137 = vpop.f32.mrb[0].mxu0
        %v4138 = vadd.f32 %v3921, %v4137
        %v4139 = vpop.f32.mrb[0].mxu0
        %v4140 = vpop.f32.mrb[0].mxu0
        %v4141 = vadd.f32 %v3924, %v4140
        %v4142 = vpop.f32.mrb[0].mxu0
        %4143 = vmatprep.mubr.bf16.mxu0 0
        %4144 = vmatmul.mubr.bf16.gmra.mrb[0].mxu0 %v3974
        %v4145 = vpop.f32.mrb[0].mxu0
        %v4146 = vadd.f32 %v3929, %v4145
        %v4147 = vpop.f32.mrb[0].mxu0
        %v4148 = vpop.f32.mrb[0].mxu0
        %v4149 = vadd.f32 %v3932, %v4148
        %v4150 = vpop.f32.mrb[0].mxu0
        %4151 = vmatprep.mubr.bf16.mxu0 0
        %4152 = vmatmul.mubr.bf16.gmra.mrb[0].mxu0 %v3976
        %v4153 = vpop.f32.mrb[0].mxu0
        %v4154 = vadd.f32 %v3937, %v4153
        %v4155 = vpop.f32.mrb[0].mxu0
        %v4156 = vpop.f32.mrb[0].mxu0
        %v4157 = vadd.f32 %v3940, %v4156
        %v4158 = vpop.f32.mrb[0].mxu0
        %4159 = vmatprep.mubr.bf16.mxu0 0
        %4160 = vmatmul.mubr.bf16.gmra.mrb[0].mxu0 %v3978
        %v4161 = vpop.f32.mrb[0].mxu0
        %v4162 = vadd.f32 %v3945, %v4161
        %v4163 = vpop.f32.mrb[0].mxu0
        %v4164 = vpop.f32.mrb[0].mxu0
        %v4165 = vadd.f32 %v3948, %v4164
        %v4166 = vpop.f32.mrb[0].mxu0
        %4167 = vdwg.mxu0
        %v4168 = vld [vmem:[%s307 + $0x8] sm:$0xe0]
        %v4169 = vld [vmem:[%s307 + $0x68] sm:$0x1f]
        %s4170 = scalar_lea.vmem [#allocation9], 704
        %v4171 = vld [vmem:[%s4170] sm:$0xf]
        %v4172 = vld [vmem:[%s4170 + $0x4] sm:$0xf]
        %v4173 = vld [vmem:[%s4170 + $0x8] sm:$0xf]
        %v4174 = vld [vmem:[%s4170 + $0xc] sm:$0xf]
        %v4175 = vld [vmem:[%s4170 + $0x10] sm:$0xf]
        %v4176 = vld [vmem:[%s4170 + $0x14] sm:$0xf]
        %v4177 = vld [vmem:[%s4170 + $0x18] sm:$0xf]
        %v4178 = vld [vmem:[%s4170 + $0x1c] sm:$0xf]
        %v4179 = vld [vmem:[%s4170 + $0x20] sm:$0xf]
        %v4180 = vld [vmem:[%s4170 + $0x24] sm:$0xf]
        %v4181 = vld [vmem:[%s4170 + $0x28] sm:$0xf]
        %v4182 = vld [vmem:[%s4170 + $0x2c] sm:$0xf]
        %v4183 = vld [vmem:[%s4170 + $0x30] sm:$0xf]
        %v4184 = vld [vmem:[%s4170 + $0x34] sm:$0xf]
        %v4185 = vld [vmem:[%s4170 + $0x38] sm:$0xf]
        %v4186 = vld [vmem:[%s4170 + $0x3c] sm:$0xf]
        %vm4189 = vcmask 1042432
        %v4190 = vrot.slane %v4168, 5
        %v4191 = vrot.slane %v3676, 5
        %v4192 = vsel %vm4189, %v4190, %v4191
        %v4193 = vrot.slane %v3677, 5
        %v4194 = vsel %vm4189, %v4191, %v4193
        %v4195 = vrot.slane %v3678, 5
        %v4196 = vsel %vm4189, %v4193, %v4195
        %v4197 = vrot.slane %v3679, 5
        %v4198 = vsel %vm4189, %v4195, %v4197
        %v4199 = vrot.slane %v3680, 5
        %v4200 = vsel %vm4189, %v4197, %v4199
        %v4201 = vrot.slane %v3681, 5
        %v4202 = vsel %vm4189, %v4199, %v4201
        %v4203 = vrot.slane %v3682, 5
        %v4204 = vsel %vm4189, %v4201, %v4203
        %v4205 = vrot.slane %v3683, 5
        %v4206 = vsel %vm4189, %v4203, %v4205
        %v4207 = vrot.slane %v3684, 5
        %v4208 = vsel %vm4189, %v4205, %v4207
        %v4209 = vrot.slane %v3685, 5
        %v4210 = vsel %vm4189, %v4207, %v4209
        %v4211 = vrot.slane %v3686, 5
        %v4212 = vsel %vm4189, %v4209, %v4211
        %v4213 = vrot.slane %v4169, 5
        %v4214 = vsel %vm4189, %v4211, %v4213
        %v4243 = vunpack.c.l.b16 %v4171
        %v4244 = vunpack.c.l.b16 %v4172
        %v4245 = vunpack.c.l.b16 %v4173
        %v4246 = vunpack.c.l.b16 %v4174
        %v4247 = vunpack.c.l.b16 %v4175
        %v4248 = vunpack.c.l.b16 %v4176
        %v4249 = vunpack.c.l.b16 %v4177
        %v4250 = vunpack.c.l.b16 %v4178
        %v4251 = vunpack.c.l.b16 %v4179
        %v4252 = vunpack.c.l.b16 %v4180
        %v4253 = vunpack.c.l.b16 %v4181
        %v4254 = vunpack.c.l.b16 %v4182
        %v4255 = vunpack.c.l.b16 %v4183
        %v4256 = vunpack.c.l.b16 %v4184
        %v4257 = vunpack.c.l.b16 %v4185
        %v4258 = vunpack.c.l.b16 %v4186
        %v4259 = vpack.c.b16 %v4244, %v4243
        %v4260 = vpack.c.b16 %v4246, %v4245
        %v4261 = vpack.c.b16 %v4248, %v4247
        %v4262 = vpack.c.b16 %v4250, %v4249
        %v4263 = vpack.c.b16 %v4252, %v4251
        %v4264 = vpack.c.b16 %v4254, %v4253
        %v4265 = vpack.c.b16 %v4256, %v4255
        %v4266 = vpack.c.b16 %v4258, %v4257
        %4275 = vmatprep.subr.bf16.mxu0 0
        %4276 = vmatpush1.bf16.msra.mxu0 %v4259
        %4277 = vmatprep.subr.bf16.mxu0 0
        %4278 = vmatpush1.bf16.msra.mxu0 %v4260
        %4279 = vmatprep.subr.bf16.mxu0 0
        %4280 = vmatpush1.bf16.msra.mxu0 %v4261
        %4281 = vmatprep.subr.bf16.mxu0 0
        %4282 = vmatpush1.bf16.msra.mxu0 %v4262
        %4283 = vmatprep.subr.bf16.mxu0 0
        %4284 = vmatpush1.bf16.msra.mxu0 %v4263
        %4285 = vmatprep.subr.bf16.mxu0 0
        %4286 = vmatpush1.bf16.msra.mxu0 %v4264
        %4287 = vmatprep.subr.bf16.mxu0 0
        %4288 = vmatpush1.bf16.msra.mxu0 %v4265
        %4289 = vmatprep.subr.bf16.mxu0 0
        %4290 = vmatpush1.bf16.msra.mxu0 %v4266
        %4291 = vmatprep.subr.bf16.mxu0 0
        %4292 = vmatpush1.bf16.msra.mxu0 0
        %4293 = vmatprep.subr.bf16.mxu0 0
        %4294 = vmatpush1.bf16.msra.mxu0 0
        %4295 = vmatprep.subr.bf16.mxu0 0
        %4296 = vmatpush1.bf16.msra.mxu0 0
        %4297 = vmatprep.subr.bf16.mxu0 0
        %4298 = vmatpush1.bf16.msra.mxu0 0
        %4299 = vmatprep.subr.bf16.mxu0 0
        %4300 = vmatpush1.bf16.msra.mxu0 0
        %4301 = vmatprep.subr.bf16.mxu0 0
        %4302 = vmatpush1.bf16.msra.mxu0 0
        %4303 = vmatprep.subr.bf16.mxu0 0
        %4304 = vmatpush1.bf16.msra.mxu0 0
        %4305 = vmatprep.subr.bf16.mxu0 0
        %4306 = vmatpush1.bf16.msra.mxu0 0
        %4307 = vmatprep.mubr.bf16.mxu0 0
        %4308 = vmatmul.mubr.bf16.gmra.mrb[0].mxu0 %v4192
        %v4309 = vpop.f32.mrb[0].mxu0
        %v4310 = vadd.f32 0.0, %v4309
        %v4311 = vpop.f32.mrb[0].mxu0
        %v4312 = vpop.f32.mrb[0].mxu0
        %v4313 = vadd.f32 0.0, %v4312
        %v4314 = vpop.f32.mrb[0].mxu0
        %4315 = vmatprep.mubr.bf16.mxu0 0
        %4316 = vmatmul.mubr.bf16.gmra.mrb[0].mxu0 %v4194
        %v4317 = vpop.f32.mrb[0].mxu0
        %v4318 = vadd.f32 0.0, %v4317
        %v4319 = vpop.f32.mrb[0].mxu0
        %v4320 = vpop.f32.mrb[0].mxu0
        %v4321 = vadd.f32 0.0, %v4320
        %v4322 = vpop.f32.mrb[0].mxu0
        %4323 = vmatprep.mubr.bf16.mxu0 0
        %4324 = vmatmul.mubr.bf16.gmra.mrb[0].mxu0 %v4196
        %v4325 = vpop.f32.mrb[0].mxu0
        %v4326 = vadd.f32 0.0, %v4325
        %v4327 = vpop.f32.mrb[0].mxu0
        %v4328 = vpop.f32.mrb[0].mxu0
        %v4329 = vadd.f32 0.0, %v4328
        %v4330 = vpop.f32.mrb[0].mxu0
        %4331 = vmatprep.mubr.bf16.mxu0 0
        %4332 = vmatmul.mubr.bf16.gmra.mrb[0].mxu0 %v4198
        %v4333 = vpop.f32.mrb[0].mxu0
        %v4334 = vadd.f32 0.0, %v4333
        %v4335 = vpop.f32.mrb[0].mxu0
        %v4336 = vpop.f32.mrb[0].mxu0
        %v4337 = vadd.f32 0.0, %v4336
        %v4338 = vpop.f32.mrb[0].mxu0
        %4339 = vmatprep.mubr.bf16.mxu0 0
        %4340 = vmatmul.mubr.bf16.gmra.mrb[0].mxu0 %v4200
        %v4341 = vpop.f32.mrb[0].mxu0
        %v4342 = vadd.f32 0.0, %v4341
        %v4343 = vpop.f32.mrb[0].mxu0
        %v4344 = vpop.f32.mrb[0].mxu0
        %v4345 = vadd.f32 0.0, %v4344
        %v4346 = vpop.f32.mrb[0].mxu0
        %4347 = vmatprep.mubr.bf16.mxu0 0
        %4348 = vmatmul.mubr.bf16.gmra.mrb[0].mxu0 %v4202
        %v4349 = vpop.f32.mrb[0].mxu0
        %v4350 = vadd.f32 0.0, %v4349
        %v4351 = vpop.f32.mrb[0].mxu0
        %v4352 = vpop.f32.mrb[0].mxu0
        %v4353 = vadd.f32 0.0, %v4352
        %v4354 = vpop.f32.mrb[0].mxu0
        %4355 = vmatprep.mubr.bf16.mxu0 0
        %4356 = vmatmul.mubr.bf16.gmra.mrb[0].mxu0 %v4204
        %v4357 = vpop.f32.mrb[0].mxu0
        %v4358 = vadd.f32 0.0, %v4357
        %v4359 = vpop.f32.mrb[0].mxu0
        %v4360 = vpop.f32.mrb[0].mxu0
        %v4361 = vadd.f32 0.0, %v4360
        %v4362 = vpop.f32.mrb[0].mxu0
        %4363 = vmatprep.mubr.bf16.mxu0 0
        %4364 = vmatmul.mubr.bf16.gmra.mrb[0].mxu0 %v4206
        %v4365 = vpop.f32.mrb[0].mxu0
        %v4366 = vadd.f32 0.0, %v4365
        %v4367 = vpop.f32.mrb[0].mxu0
        %v4368 = vpop.f32.mrb[0].mxu0
        %v4369 = vadd.f32 0.0, %v4368
        %v4370 = vpop.f32.mrb[0].mxu0
        %4371 = vmatprep.mubr.bf16.mxu0 0
        %4372 = vmatmul.mubr.bf16.gmra.mrb[0].mxu0 %v4208
        %v4373 = vpop.f32.mrb[0].mxu0
        %v4374 = vadd.f32 0.0, %v4373
        %v4375 = vpop.f32.mrb[0].mxu0
        %v4376 = vpop.f32.mrb[0].mxu0
        %v4377 = vadd.f32 0.0, %v4376
        %v4378 = vpop.f32.mrb[0].mxu0
        %4379 = vmatprep.mubr.bf16.mxu0 0
        %4380 = vmatmul.mubr.bf16.gmra.mrb[0].mxu0 %v4210
        %v4381 = vpop.f32.mrb[0].mxu0
        %v4382 = vadd.f32 0.0, %v4381
        %v4383 = vpop.f32.mrb[0].mxu0
        %v4384 = vpop.f32.mrb[0].mxu0
        %v4385 = vadd.f32 0.0, %v4384
        %v4386 = vpop.f32.mrb[0].mxu0
        %4387 = vmatprep.mubr.bf16.mxu0 0
        %4388 = vmatmul.mubr.bf16.gmra.mrb[0].mxu0 %v4212
        %v4389 = vpop.f32.mrb[0].mxu0
        %v4390 = vadd.f32 0.0, %v4389
        %v4391 = vpop.f32.mrb[0].mxu0
        %v4392 = vpop.f32.mrb[0].mxu0
        %v4393 = vadd.f32 0.0, %v4392
        %v4394 = vpop.f32.mrb[0].mxu0
        %4395 = vmatprep.mubr.bf16.mxu0 0
        %4396 = vmatmul.mubr.bf16.gmra.mrb[0].mxu0 %v4214
        %v4397 = vpop.f32.mrb[0].mxu0
        %v4398 = vadd.f32 0.0, %v4397
        %v4399 = vpop.f32.mrb[0].mxu0
        %v4400 = vpop.f32.mrb[0].mxu0
        %v4401 = vadd.f32 0.0, %v4400
        %v4402 = vpop.f32.mrb[0].mxu0
        %4403 = vdwg.mxu0
        %v4404 = vadd.f32 %v4074, %v4310
        %v4405 = vadd.f32 %v4077, %v4313
        %v4406 = vadd.f32 %v4082, %v4318
        %v4407 = vadd.f32 %v4085, %v4321
        %v4408 = vadd.f32 %v4090, %v4326
        %v4409 = vadd.f32 %v4093, %v4329
        %v4410 = vadd.f32 %v4098, %v4334
        %v4411 = vadd.f32 %v4101, %v4337
        %v4412 = vadd.f32 %v4106, %v4342
        %v4413 = vadd.f32 %v4109, %v4345
        %v4414 = vadd.f32 %v4114, %v4350
        %v4415 = vadd.f32 %v4117, %v4353
        %v4416 = vadd.f32 %v4122, %v4358
        %v4417 = vadd.f32 %v4125, %v4361
        %v4418 = vadd.f32 %v4130, %v4366
        %v4419 = vadd.f32 %v4133, %v4369
        %v4420 = vadd.f32 %v4138, %v4374
        %v4421 = vadd.f32 %v4141, %v4377
        %v4422 = vadd.f32 %v4146, %v4382
        %v4423 = vadd.f32 %v4149, %v4385
        %v4424 = vadd.f32 %v4154, %v4390
        %v4425 = vadd.f32 %v4157, %v4393
        %v4426 = vadd.f32 %v4162, %v4398
        %v4427 = vadd.f32 %v4165, %v4401
        %v4428 = vld [vmem:[%s307 + $0x80] sm:$0x7]
        %s4429 = scalar_lea.vmem [#allocation9], 768
        %v4430 = vld [vmem:[%s4429] sm:$0xf]
        %v4431 = vld [vmem:[%s4429 + $0x4] sm:$0xf]
        %v4432 = vld [vmem:[%s4429 + $0x8] sm:$0xf]
        %v4433 = vld [vmem:[%s4429 + $0xc] sm:$0xf]
        %v4434 = vld [vmem:[%s4429 + $0x10] sm:$0xf]
        %v4435 = vld [vmem:[%s4429 + $0x14] sm:$0xf]
        %v4436 = vld [vmem:[%s4429 + $0x18] sm:$0xf]
        %v4437 = vld [vmem:[%s4429 + $0x1c] sm:$0xf]
        %v4438 = vld [vmem:[%s4429 + $0x20] sm:$0xf]
        %v4439 = vld [vmem:[%s4429 + $0x24] sm:$0xf]
        %v4440 = vld [vmem:[%s4429 + $0x28] sm:$0xf]
        %v4441 = vld [vmem:[%s4429 + $0x2c] sm:$0xf]
        %v4442 = vld [vmem:[%s4429 + $0x30] sm:$0xf]
        %v4443 = vld [vmem:[%s4429 + $0x34] sm:$0xf]
        %v4444 = vld [vmem:[%s4429 + $0x38] sm:$0xf]
        %v4445 = vld [vmem:[%s4429 + $0x3c] sm:$0xf]
        %v4448 = vrot.slane %v1506, 3
        %v4449 = vrot.slane %v341, 3
        %v4450 = vsel %vm3953, %v4448, %v4449
        %v4451 = vrot.slane %v342, 3
        %v4452 = vsel %vm3953, %v4449, %v4451
        %v4453 = vrot.slane %v343, 3
        %v4454 = vsel %vm3953, %v4451, %v4453
        %v4455 = vrot.slane %v344, 3
        %v4456 = vsel %vm3953, %v4453, %v4455
        %v4457 = vrot.slane %v345, 3
        %v4458 = vsel %vm3953, %v4455, %v4457
        %v4459 = vrot.slane %v346, 3
        %v4460 = vsel %vm3953, %v4457, %v4459
        %v4461 = vrot.slane %v347, 3
        %v4462 = vsel %vm3953, %v4459, %v4461
        %v4463 = vrot.slane %v348, 3
        %v4464 = vsel %vm3953, %v4461, %v4463
        %v4465 = vrot.slane %v349, 3
        %v4466 = vsel %vm3953, %v4463, %v4465
        %v4467 = vrot.slane %v350, 3
        %v4468 = vsel %vm3953, %v4465, %v4467
        %v4469 = vrot.slane %v351, 3
        %v4470 = vsel %vm3953, %v4467, %v4469
        %v4471 = vrot.slane %v4428, 3
        %v4472 = vsel %vm3953, %v4469, %v4471
        %v4501 = vunpack.c.l.b16 %v4430
        %v4502 = vunpack.c.l.b16 %v4431
        %v4503 = vunpack.c.l.b16 %v4432
        %v4504 = vunpack.c.l.b16 %v4433
        %v4505 = vunpack.c.l.b16 %v4434
        %v4506 = vunpack.c.l.b16 %v4435
        %v4507 = vunpack.c.l.b16 %v4436
        %v4508 = vunpack.c.l.b16 %v4437
        %v4509 = vunpack.c.l.b16 %v4438
        %v4510 = vunpack.c.l.b16 %v4439
        %v4511 = vunpack.c.l.b16 %v4440
        %v4512 = vunpack.c.l.b16 %v4441
        %v4513 = vunpack.c.l.b16 %v4442
        %v4514 = vunpack.c.l.b16 %v4443
        %v4515 = vunpack.c.l.b16 %v4444
        %v4516 = vunpack.c.l.b16 %v4445
        %v4517 = vpack.c.b16 %v4502, %v4501
        %v4518 = vpack.c.b16 %v4504, %v4503
        %v4519 = vpack.c.b16 %v4506, %v4505
        %v4520 = vpack.c.b16 %v4508, %v4507
        %v4521 = vpack.c.b16 %v4510, %v4509
        %v4522 = vpack.c.b16 %v4512, %v4511
        %v4523 = vpack.c.b16 %v4514, %v4513
        %v4524 = vpack.c.b16 %v4516, %v4515
        %4533 = vmatprep.subr.bf16.mxu0 0
        %4534 = vmatpush1.bf16.msra.mxu0 %v4517
        %4535 = vmatprep.subr.bf16.mxu0 0
        %4536 = vmatpush1.bf16.msra.mxu0 %v4518
        %4537 = vmatprep.subr.bf16.mxu0 0
        %4538 = vmatpush1.bf16.msra.mxu0 %v4519
        %4539 = vmatprep.subr.bf16.mxu0 0
        %4540 = vmatpush1.bf16.msra.mxu0 %v4520
        %4541 = vmatprep.subr.bf16.mxu0 0
        %4542 = vmatpush1.bf16.msra.mxu0 %v4521
        %4543 = vmatprep.subr.bf16.mxu0 0
        %4544 = vmatpush1.bf16.msra.mxu0 %v4522
        %4545 = vmatprep.subr.bf16.mxu0 0
        %4546 = vmatpush1.bf16.msra.mxu0 %v4523
        %4547 = vmatprep.subr.bf16.mxu0 0
        %4548 = vmatpush1.bf16.msra.mxu0 %v4524
        %4549 = vmatprep.subr.bf16.mxu0 0
        %4550 = vmatpush1.bf16.msra.mxu0 0
        %4551 = vmatprep.subr.bf16.mxu0 0
        %4552 = vmatpush1.bf16.msra.mxu0 0
        %4553 = vmatprep.subr.bf16.mxu0 0
        %4554 = vmatpush1.bf16.msra.mxu0 0
        %4555 = vmatprep.subr.bf16.mxu0 0
        %4556 = vmatpush1.bf16.msra.mxu0 0
        %4557 = vmatprep.subr.bf16.mxu0 0
        %4558 = vmatpush1.bf16.msra.mxu0 0
        %4559 = vmatprep.subr.bf16.mxu0 0
        %4560 = vmatpush1.bf16.msra.mxu0 0
        %4561 = vmatprep.subr.bf16.mxu0 0
        %4562 = vmatpush1.bf16.msra.mxu0 0
        %4563 = vmatprep.subr.bf16.mxu0 0
        %4564 = vmatpush1.bf16.msra.mxu0 0
        %4565 = vmatprep.mubr.bf16.mxu0 0
        %4566 = vmatmul.mubr.bf16.gmra.mrb[0].mxu0 %v4450
        %v4567 = vpop.f32.mrb[0].mxu0
        %v4568 = vadd.f32 0.0, %v4567
        %v4569 = vpop.f32.mrb[0].mxu0
        %v4570 = vpop.f32.mrb[0].mxu0
        %v4571 = vadd.f32 0.0, %v4570
        %v4572 = vpop.f32.mrb[0].mxu0
        %4573 = vmatprep.mubr.bf16.mxu0 0
        %4574 = vmatmul.mubr.bf16.gmra.mrb[0].mxu0 %v4452
        %v4575 = vpop.f32.mrb[0].mxu0
        %v4576 = vadd.f32 0.0, %v4575
        %v4577 = vpop.f32.mrb[0].mxu0
        %v4578 = vpop.f32.mrb[0].mxu0
        %v4579 = vadd.f32 0.0, %v4578
        %v4580 = vpop.f32.mrb[0].mxu0
        %4581 = vmatprep.mubr.bf16.mxu0 0
        %4582 = vmatmul.mubr.bf16.gmra.mrb[0].mxu0 %v4454
        %v4583 = vpop.f32.mrb[0].mxu0
        %v4584 = vadd.f32 0.0, %v4583
        %v4585 = vpop.f32.mrb[0].mxu0
        %v4586 = vpop.f32.mrb[0].mxu0
        %v4587 = vadd.f32 0.0, %v4586
        %v4588 = vpop.f32.mrb[0].mxu0
        %4589 = vmatprep.mubr.bf16.mxu0 0
        %4590 = vmatmul.mubr.bf16.gmra.mrb[0].mxu0 %v4456
        %v4591 = vpop.f32.mrb[0].mxu0
        %v4592 = vadd.f32 0.0, %v4591
        %v4593 = vpop.f32.mrb[0].mxu0
        %v4594 = vpop.f32.mrb[0].mxu0
        %v4595 = vadd.f32 0.0, %v4594
        %v4596 = vpop.f32.mrb[0].mxu0
        %4597 = vmatprep.mubr.bf16.mxu0 0
        %4598 = vmatmul.mubr.bf16.gmra.mrb[0].mxu0 %v4458
        %v4599 = vpop.f32.mrb[0].mxu0
        %v4600 = vadd.f32 0.0, %v4599
        %v4601 = vpop.f32.mrb[0].mxu0
        %v4602 = vpop.f32.mrb[0].mxu0
        %v4603 = vadd.f32 0.0, %v4602
        %v4604 = vpop.f32.mrb[0].mxu0
        %4605 = vmatprep.mubr.bf16.mxu0 0
        %4606 = vmatmul.mubr.bf16.gmra.mrb[0].mxu0 %v4460
        %v4607 = vpop.f32.mrb[0].mxu0
        %v4608 = vadd.f32 0.0, %v4607
        %v4609 = vpop.f32.mrb[0].mxu0
        %v4610 = vpop.f32.mrb[0].mxu0
        %v4611 = vadd.f32 0.0, %v4610
        %v4612 = vpop.f32.mrb[0].mxu0
        %4613 = vmatprep.mubr.bf16.mxu0 0
        %4614 = vmatmul.mubr.bf16.gmra.mrb[0].mxu0 %v4462
        %v4615 = vpop.f32.mrb[0].mxu0
        %v4616 = vadd.f32 0.0, %v4615
        %v4617 = vpop.f32.mrb[0].mxu0
        %v4618 = vpop.f32.mrb[0].mxu0
        %v4619 = vadd.f32 0.0, %v4618
        %v4620 = vpop.f32.mrb[0].mxu0
        %4621 = vmatprep.mubr.bf16.mxu0 0
        %4622 = vmatmul.mubr.bf16.gmra.mrb[0].mxu0 %v4464
        %v4623 = vpop.f32.mrb[0].mxu0
        %v4624 = vadd.f32 0.0, %v4623
        %v4625 = vpop.f32.mrb[0].mxu0
        %v4626 = vpop.f32.mrb[0].mxu0
        %v4627 = vadd.f32 0.0, %v4626
        %v4628 = vpop.f32.mrb[0].mxu0
        %4629 = vmatprep.mubr.bf16.mxu0 0
        %4630 = vmatmul.mubr.bf16.gmra.mrb[0].mxu0 %v4466
        %v4631 = vpop.f32.mrb[0].mxu0
        %v4632 = vadd.f32 0.0, %v4631
        %v4633 = vpop.f32.mrb[0].mxu0
        %v4634 = vpop.f32.mrb[0].mxu0
        %v4635 = vadd.f32 0.0, %v4634
        %v4636 = vpop.f32.mrb[0].mxu0
        %4637 = vmatprep.mubr.bf16.mxu0 0
        %4638 = vmatmul.mubr.bf16.gmra.mrb[0].mxu0 %v4468
        %v4639 = vpop.f32.mrb[0].mxu0
        %v4640 = vadd.f32 0.0, %v4639
        %v4641 = vpop.f32.mrb[0].mxu0
        %v4642 = vpop.f32.mrb[0].mxu0
        %v4643 = vadd.f32 0.0, %v4642
        %v4644 = vpop.f32.mrb[0].mxu0
        %4645 = vmatprep.mubr.bf16.mxu0 0
        %4646 = vmatmul.mubr.bf16.gmra.mrb[0].mxu0 %v4470
        %v4647 = vpop.f32.mrb[0].mxu0
        %v4648 = vadd.f32 0.0, %v4647
        %v4649 = vpop.f32.mrb[0].mxu0
        %v4650 = vpop.f32.mrb[0].mxu0
        %v4651 = vadd.f32 0.0, %v4650
        %v4652 = vpop.f32.mrb[0].mxu0
        %4653 = vmatprep.mubr.bf16.mxu0 0
        %4654 = vmatmul.mubr.bf16.gmra.mrb[0].mxu0 %v4472
        %v4655 = vpop.f32.mrb[0].mxu0
        %v4656 = vadd.f32 0.0, %v4655
        %v4657 = vpop.f32.mrb[0].mxu0
        %v4658 = vpop.f32.mrb[0].mxu0
        %v4659 = vadd.f32 0.0, %v4658
        %v4660 = vpop.f32.mrb[0].mxu0
        %4661 = vdwg.mxu0
        %v4662 = vadd.f32 %v4404, %v4568
        %v4663 = vadd.f32 %v4405, %v4571
        %v4664 = vadd.f32 %v4406, %v4576
        %v4665 = vadd.f32 %v4407, %v4579
        %v4666 = vadd.f32 %v4408, %v4584
        %v4667 = vadd.f32 %v4409, %v4587
        %v4668 = vadd.f32 %v4410, %v4592
        %v4669 = vadd.f32 %v4411, %v4595
        %v4670 = vadd.f32 %v4412, %v4600
        %v4671 = vadd.f32 %v4413, %v4603
        %v4672 = vadd.f32 %v4414, %v4608
        %v4673 = vadd.f32 %v4415, %v4611
        %v4674 = vadd.f32 %v4416, %v4616
        %v4675 = vadd.f32 %v4417, %v4619
        %v4676 = vadd.f32 %v4418, %v4624
        %v4677 = vadd.f32 %v4419, %v4627
        %v4678 = vadd.f32 %v4420, %v4632
        %v4679 = vadd.f32 %v4421, %v4635
        %v4680 = vadd.f32 %v4422, %v4640
        %v4681 = vadd.f32 %v4423, %v4643
        %v4682 = vadd.f32 %v4424, %v4648
        %v4683 = vadd.f32 %v4425, %v4651
        %v4684 = vadd.f32 %v4426, %v4656
        %v4685 = vadd.f32 %v4427, %v4659
        %s4686 = scalar_lea.vmem [#allocation9], 832
        %v4687 = vld [vmem:[%s4686] sm:$0xf]
        %v4688 = vld [vmem:[%s4686 + $0x4] sm:$0xf]
        %v4689 = vld [vmem:[%s4686 + $0x8] sm:$0xf]
        %v4690 = vld [vmem:[%s4686 + $0xc] sm:$0xf]
        %v4691 = vld [vmem:[%s4686 + $0x10] sm:$0xf]
        %v4692 = vld [vmem:[%s4686 + $0x14] sm:$0xf]
        %v4693 = vld [vmem:[%s4686 + $0x18] sm:$0xf]
        %v4694 = vld [vmem:[%s4686 + $0x1c] sm:$0xf]
        %v4695 = vld [vmem:[%s4686 + $0x20] sm:$0xf]
        %v4696 = vld [vmem:[%s4686 + $0x24] sm:$0xf]
        %v4697 = vld [vmem:[%s4686 + $0x28] sm:$0xf]
        %v4698 = vld [vmem:[%s4686 + $0x2c] sm:$0xf]
        %v4699 = vld [vmem:[%s4686 + $0x30] sm:$0xf]
        %v4700 = vld [vmem:[%s4686 + $0x34] sm:$0xf]
        %v4701 = vld [vmem:[%s4686 + $0x38] sm:$0xf]
        %v4702 = vld [vmem:[%s4686 + $0x3c] sm:$0xf]
        %v4719 = vunpack.c.l.b16 %v4687
        %v4720 = vunpack.c.l.b16 %v4688
        %v4721 = vunpack.c.l.b16 %v4689
        %v4722 = vunpack.c.l.b16 %v4690
        %v4723 = vunpack.c.l.b16 %v4691
        %v4724 = vunpack.c.l.b16 %v4692
        %v4725 = vunpack.c.l.b16 %v4693
        %v4726 = vunpack.c.l.b16 %v4694
        %v4727 = vunpack.c.l.b16 %v4695
        %v4728 = vunpack.c.l.b16 %v4696
        %v4729 = vunpack.c.l.b16 %v4697
        %v4730 = vunpack.c.l.b16 %v4698
        %v4731 = vunpack.c.l.b16 %v4699
        %v4732 = vunpack.c.l.b16 %v4700
        %v4733 = vunpack.c.l.b16 %v4701
        %v4734 = vunpack.c.l.b16 %v4702
        %v4735 = vpack.c.b16 %v4720, %v4719
        %v4736 = vpack.c.b16 %v4722, %v4721
        %v4737 = vpack.c.b16 %v4724, %v4723
        %v4738 = vpack.c.b16 %v4726, %v4725
        %v4739 = vpack.c.b16 %v4728, %v4727
        %v4740 = vpack.c.b16 %v4730, %v4729
        %v4741 = vpack.c.b16 %v4732, %v4731
        %v4742 = vpack.c.b16 %v4734, %v4733
        %4751 = vmatprep.subr.bf16.mxu0 0
        %4752 = vmatpush1.bf16.msra.mxu0 %v4735
        %4753 = vmatprep.subr.bf16.mxu0 0
        %4754 = vmatpush1.bf16.msra.mxu0 %v4736
        %4755 = vmatprep.subr.bf16.mxu0 0
        %4756 = vmatpush1.bf16.msra.mxu0 %v4737
        %4757 = vmatprep.subr.bf16.mxu0 0
        %4758 = vmatpush1.bf16.msra.mxu0 %v4738
        %4759 = vmatprep.subr.bf16.mxu0 0
        %4760 = vmatpush1.bf16.msra.mxu0 %v4739
        %4761 = vmatprep.subr.bf16.mxu0 0
        %4762 = vmatpush1.bf16.msra.mxu0 %v4740
        %4763 = vmatprep.subr.bf16.mxu0 0
        %4764 = vmatpush1.bf16.msra.mxu0 %v4741
        %4765 = vmatprep.subr.bf16.mxu0 0
        %4766 = vmatpush1.bf16.msra.mxu0 %v4742
        %4767 = vmatprep.subr.bf16.mxu0 0
        %4768 = vmatpush1.bf16.msra.mxu0 0
        %4769 = vmatprep.subr.bf16.mxu0 0
        %4770 = vmatpush1.bf16.msra.mxu0 0
        %4771 = vmatprep.subr.bf16.mxu0 0
        %4772 = vmatpush1.bf16.msra.mxu0 0
        %4773 = vmatprep.subr.bf16.mxu0 0
        %4774 = vmatpush1.bf16.msra.mxu0 0
        %4775 = vmatprep.subr.bf16.mxu0 0
        %4776 = vmatpush1.bf16.msra.mxu0 0
        %4777 = vmatprep.subr.bf16.mxu0 0
        %4778 = vmatpush1.bf16.msra.mxu0 0
        %4779 = vmatprep.subr.bf16.mxu0 0
        %4780 = vmatpush1.bf16.msra.mxu0 0
        %4781 = vmatprep.subr.bf16.mxu0 0
        %4782 = vmatpush1.bf16.msra.mxu0 0
        %4783 = vmatprep.mubr.bf16.mxu0 0
        %4784 = vmatmul.mubr.bf16.gmra.mrb[0].mxu0 %v385
        %v4785 = vpop.f32.mrb[0].mxu0
        %v4786 = vadd.f32 0.0, %v4785
        %v4787 = vpop.f32.mrb[0].mxu0
        %v4788 = vpop.f32.mrb[0].mxu0
        %v4789 = vadd.f32 0.0, %v4788
        %v4790 = vpop.f32.mrb[0].mxu0
        %4791 = vmatprep.mubr.bf16.mxu0 0
        %4792 = vmatmul.mubr.bf16.gmra.mrb[0].mxu0 %v387
        %v4793 = vpop.f32.mrb[0].mxu0
        %v4794 = vadd.f32 0.0, %v4793
        %v4795 = vpop.f32.mrb[0].mxu0
        %v4796 = vpop.f32.mrb[0].mxu0
        %v4797 = vadd.f32 0.0, %v4796
        %v4798 = vpop.f32.mrb[0].mxu0
        %4799 = vmatprep.mubr.bf16.mxu0 0
        %4800 = vmatmul.mubr.bf16.gmra.mrb[0].mxu0 %v389
        %v4801 = vpop.f32.mrb[0].mxu0
        %v4802 = vadd.f32 0.0, %v4801
        %v4803 = vpop.f32.mrb[0].mxu0
        %v4804 = vpop.f32.mrb[0].mxu0
        %v4805 = vadd.f32 0.0, %v4804
        %v4806 = vpop.f32.mrb[0].mxu0
        %4807 = vmatprep.mubr.bf16.mxu0 0
        %4808 = vmatmul.mubr.bf16.gmra.mrb[0].mxu0 %v391
        %v4809 = vpop.f32.mrb[0].mxu0
        %v4810 = vadd.f32 0.0, %v4809
        %v4811 = vpop.f32.mrb[0].mxu0
        %v4812 = vpop.f32.mrb[0].mxu0
        %v4813 = vadd.f32 0.0, %v4812
        %v4814 = vpop.f32.mrb[0].mxu0
        %4815 = vmatprep.mubr.bf16.mxu0 0
        %4816 = vmatmul.mubr.bf16.gmra.mrb[0].mxu0 %v393
        %v4817 = vpop.f32.mrb[0].mxu0
        %v4818 = vadd.f32 0.0, %v4817
        %v4819 = vpop.f32.mrb[0].mxu0
        %v4820 = vpop.f32.mrb[0].mxu0
        %v4821 = vadd.f32 0.0, %v4820
        %v4822 = vpop.f32.mrb[0].mxu0
        %4823 = vmatprep.mubr.bf16.mxu0 0
        %4824 = vmatmul.mubr.bf16.gmra.mrb[0].mxu0 %v395
        %v4825 = vpop.f32.mrb[0].mxu0
        %v4826 = vadd.f32 0.0, %v4825
        %v4827 = vpop.f32.mrb[0].mxu0
        %v4828 = vpop.f32.mrb[0].mxu0
        %v4829 = vadd.f32 0.0, %v4828
        %v4830 = vpop.f32.mrb[0].mxu0
        %4831 = vmatprep.mubr.bf16.mxu0 0
        %4832 = vmatmul.mubr.bf16.gmra.mrb[0].mxu0 %v397
        %v4833 = vpop.f32.mrb[0].mxu0
        %v4834 = vadd.f32 0.0, %v4833
        %v4835 = vpop.f32.mrb[0].mxu0
        %v4836 = vpop.f32.mrb[0].mxu0
        %v4837 = vadd.f32 0.0, %v4836
        %v4838 = vpop.f32.mrb[0].mxu0
        %4839 = vmatprep.mubr.bf16.mxu0 0
        %4840 = vmatmul.mubr.bf16.gmra.mrb[0].mxu0 %v399
        %v4841 = vpop.f32.mrb[0].mxu0
        %v4842 = vadd.f32 0.0, %v4841
        %v4843 = vpop.f32.mrb[0].mxu0
        %v4844 = vpop.f32.mrb[0].mxu0
        %v4845 = vadd.f32 0.0, %v4844
        %v4846 = vpop.f32.mrb[0].mxu0
        %4847 = vmatprep.mubr.bf16.mxu0 0
        %4848 = vmatmul.mubr.bf16.gmra.mrb[0].mxu0 %v401
        %v4849 = vpop.f32.mrb[0].mxu0
        %v4850 = vadd.f32 0.0, %v4849
        %v4851 = vpop.f32.mrb[0].mxu0
        %v4852 = vpop.f32.mrb[0].mxu0
        %v4853 = vadd.f32 0.0, %v4852
        %v4854 = vpop.f32.mrb[0].mxu0
        %4855 = vmatprep.mubr.bf16.mxu0 0
        %4856 = vmatmul.mubr.bf16.gmra.mrb[0].mxu0 %v403
        %v4857 = vpop.f32.mrb[0].mxu0
        %v4858 = vadd.f32 0.0, %v4857
        %v4859 = vpop.f32.mrb[0].mxu0
        %v4860 = vpop.f32.mrb[0].mxu0
        %v4861 = vadd.f32 0.0, %v4860
        %v4862 = vpop.f32.mrb[0].mxu0
        %4863 = vmatprep.mubr.bf16.mxu0 0
        %4864 = vmatmul.mubr.bf16.gmra.mrb[0].mxu0 %v405
        %v4865 = vpop.f32.mrb[0].mxu0
        %v4866 = vadd.f32 0.0, %v4865
        %v4867 = vpop.f32.mrb[0].mxu0
        %v4868 = vpop.f32.mrb[0].mxu0
        %v4869 = vadd.f32 0.0, %v4868
        %v4870 = vpop.f32.mrb[0].mxu0
        %4871 = vmatprep.mubr.bf16.mxu0 0
        %4872 = vmatmul.mubr.bf16.gmra.mrb[0].mxu0 %v407
        %v4873 = vpop.f32.mrb[0].mxu0
        %v4874 = vadd.f32 0.0, %v4873
        %v4875 = vpop.f32.mrb[0].mxu0
        %v4876 = vpop.f32.mrb[0].mxu0
        %v4877 = vadd.f32 0.0, %v4876
        %v4878 = vpop.f32.mrb[0].mxu0
        %4879 = vdwg.mxu0
        %v4880 = vadd.f32 %v4662, %v4786
        %v4881 = vadd.f32 %v4663, %v4789
        %v4882 = vadd.f32 %v4664, %v4794
        %v4883 = vadd.f32 %v4665, %v4797
        %v4884 = vadd.f32 %v4666, %v4802
        %v4885 = vadd.f32 %v4667, %v4805
        %v4886 = vadd.f32 %v4668, %v4810
        %v4887 = vadd.f32 %v4669, %v4813
        %v4888 = vadd.f32 %v4670, %v4818
        %v4889 = vadd.f32 %v4671, %v4821
        %v4890 = vadd.f32 %v4672, %v4826
        %v4891 = vadd.f32 %v4673, %v4829
        %v4892 = vadd.f32 %v4674, %v4834
        %v4893 = vadd.f32 %v4675, %v4837
        %v4894 = vadd.f32 %v4676, %v4842
        %v4895 = vadd.f32 %v4677, %v4845
        %v4896 = vadd.f32 %v4678, %v4850
        %v4897 = vadd.f32 %v4679, %v4853
        %v4898 = vadd.f32 %v4680, %v4858
        %v4899 = vadd.f32 %v4681, %v4861
        %v4900 = vadd.f32 %v4682, %v4866
        %v4901 = vadd.f32 %v4683, %v4869
        %v4902 = vadd.f32 %v4684, %v4874
        %v4903 = vadd.f32 %v4685, %v4877
        %v4904 = vld [vmem:[%s307 + $0x20] sm:$0xe0]
        %s4905 = scalar_lea.vmem [#allocation9], 896
        %v4906 = vld [vmem:[%s4905] sm:$0xf]
        %v4907 = vld [vmem:[%s4905 + $0x4] sm:$0xf]
        %v4908 = vld [vmem:[%s4905 + $0x8] sm:$0xf]
        %v4909 = vld [vmem:[%s4905 + $0xc] sm:$0xf]
        %v4910 = vld [vmem:[%s4905 + $0x10] sm:$0xf]
        %v4911 = vld [vmem:[%s4905 + $0x14] sm:$0xf]
        %v4912 = vld [vmem:[%s4905 + $0x18] sm:$0xf]
        %v4913 = vld [vmem:[%s4905 + $0x1c] sm:$0xf]
        %v4914 = vld [vmem:[%s4905 + $0x20] sm:$0xf]
        %v4915 = vld [vmem:[%s4905 + $0x24] sm:$0xf]
        %v4916 = vld [vmem:[%s4905 + $0x28] sm:$0xf]
        %v4917 = vld [vmem:[%s4905 + $0x2c] sm:$0xf]
        %v4918 = vld [vmem:[%s4905 + $0x30] sm:$0xf]
        %v4919 = vld [vmem:[%s4905 + $0x34] sm:$0xf]
        %v4920 = vld [vmem:[%s4905 + $0x38] sm:$0xf]
        %v4921 = vld [vmem:[%s4905 + $0x3c] sm:$0xf]
        %v4924 = vrot.slane %v4904, 5
        %v4925 = vrot.slane %v341, 5
        %v4926 = vsel %vm4189, %v4924, %v4925
        %v4927 = vrot.slane %v342, 5
        %v4928 = vsel %vm4189, %v4925, %v4927
        %v4929 = vrot.slane %v343, 5
        %v4930 = vsel %vm4189, %v4927, %v4929
        %v4931 = vrot.slane %v344, 5
        %v4932 = vsel %vm4189, %v4929, %v4931
        %v4933 = vrot.slane %v345, 5
        %v4934 = vsel %vm4189, %v4931, %v4933
        %v4935 = vrot.slane %v346, 5
        %v4936 = vsel %vm4189, %v4933, %v4935
        %v4937 = vrot.slane %v347, 5
        %v4938 = vsel %vm4189, %v4935, %v4937
        %v4939 = vrot.slane %v348, 5
        %v4940 = vsel %vm4189, %v4937, %v4939
        %v4941 = vrot.slane %v349, 5
        %v4942 = vsel %vm4189, %v4939, %v4941
        %v4943 = vrot.slane %v350, 5
        %v4944 = vsel %vm4189, %v4941, %v4943
        %v4945 = vrot.slane %v351, 5
        %v4946 = vsel %vm4189, %v4943, %v4945
        %v4947 = vrot.slane %v2072, 5
        %v4948 = vsel %vm4189, %v4945, %v4947
        %v4977 = vunpack.c.l.b16 %v4906
        %v4978 = vunpack.c.l.b16 %v4907
        %v4979 = vunpack.c.l.b16 %v4908
        %v4980 = vunpack.c.l.b16 %v4909
        %v4981 = vunpack.c.l.b16 %v4910
        %v4982 = vunpack.c.l.b16 %v4911
        %v4983 = vunpack.c.l.b16 %v4912
        %v4984 = vunpack.c.l.b16 %v4913
        %v4985 = vunpack.c.l.b16 %v4914
        %v4986 = vunpack.c.l.b16 %v4915
        %v4987 = vunpack.c.l.b16 %v4916
        %v4988 = vunpack.c.l.b16 %v4917
        %v4989 = vunpack.c.l.b16 %v4918
        %v4990 = vunpack.c.l.b16 %v4919
        %v4991 = vunpack.c.l.b16 %v4920
        %v4992 = vunpack.c.l.b16 %v4921
        %v4993 = vpack.c.b16 %v4978, %v4977
        %v4994 = vpack.c.b16 %v4980, %v4979
        %v4995 = vpack.c.b16 %v4982, %v4981
        %v4996 = vpack.c.b16 %v4984, %v4983
        %v4997 = vpack.c.b16 %v4986, %v4985
        %v4998 = vpack.c.b16 %v4988, %v4987
        %v4999 = vpack.c.b16 %v4990, %v4989
        %v5000 = vpack.c.b16 %v4992, %v4991
        %5009 = vmatprep.subr.bf16.mxu0 0
        %5010 = vmatpush1.bf16.msra.mxu0 %v4993
        %5011 = vmatprep.subr.bf16.mxu0 0
        %5012 = vmatpush1.bf16.msra.mxu0 %v4994
        %5013 = vmatprep.subr.bf16.mxu0 0
        %5014 = vmatpush1.bf16.msra.mxu0 %v4995
        %5015 = vmatprep.subr.bf16.mxu0 0
        %5016 = vmatpush1.bf16.msra.mxu0 %v4996
        %5017 = vmatprep.subr.bf16.mxu0 0
        %5018 = vmatpush1.bf16.msra.mxu0 %v4997
        %5019 = vmatprep.subr.bf16.mxu0 0
        %5020 = vmatpush1.bf16.msra.mxu0 %v4998
        %5021 = vmatprep.subr.bf16.mxu0 0
        %5022 = vmatpush1.bf16.msra.mxu0 %v4999
        %5023 = vmatprep.subr.bf16.mxu0 0
        %5024 = vmatpush1.bf16.msra.mxu0 %v5000
        %5025 = vmatprep.subr.bf16.mxu0 0
        %5026 = vmatpush1.bf16.msra.mxu0 0
        %5027 = vmatprep.subr.bf16.mxu0 0
        %5028 = vmatpush1.bf16.msra.mxu0 0
        %5029 = vmatprep.subr.bf16.mxu0 0
        %5030 = vmatpush1.bf16.msra.mxu0 0
        %5031 = vmatprep.subr.bf16.mxu0 0
        %5032 = vmatpush1.bf16.msra.mxu0 0
        %5033 = vmatprep.subr.bf16.mxu0 0
        %5034 = vmatpush1.bf16.msra.mxu0 0
        %5035 = vmatprep.subr.bf16.mxu0 0
        %5036 = vmatpush1.bf16.msra.mxu0 0
        %5037 = vmatprep.subr.bf16.mxu0 0
        %5038 = vmatpush1.bf16.msra.mxu0 0
        %5039 = vmatprep.subr.bf16.mxu0 0
        %5040 = vmatpush1.bf16.msra.mxu0 0
        %5041 = vmatprep.mubr.bf16.mxu0 0
        %5042 = vmatmul.mubr.bf16.gmra.mrb[0].mxu0 %v4926
        %v5043 = vpop.f32.mrb[0].mxu0
        %v5044 = vadd.f32 0.0, %v5043
        %v5045 = vpop.f32.mrb[0].mxu0
        %v5046 = vpop.f32.mrb[0].mxu0
        %v5047 = vadd.f32 0.0, %v5046
        %v5048 = vpop.f32.mrb[0].mxu0
        %5049 = vmatprep.mubr.bf16.mxu0 0
        %5050 = vmatmul.mubr.bf16.gmra.mrb[0].mxu0 %v4928
        %v5051 = vpop.f32.mrb[0].mxu0
        %v5052 = vadd.f32 0.0, %v5051
        %v5053 = vpop.f32.mrb[0].mxu0
        %v5054 = vpop.f32.mrb[0].mxu0
        %v5055 = vadd.f32 0.0, %v5054
        %v5056 = vpop.f32.mrb[0].mxu0
        %5057 = vmatprep.mubr.bf16.mxu0 0
        %5058 = vmatmul.mubr.bf16.gmra.mrb[0].mxu0 %v4930
        %v5059 = vpop.f32.mrb[0].mxu0
        %v5060 = vadd.f32 0.0, %v5059
        %v5061 = vpop.f32.mrb[0].mxu0
        %v5062 = vpop.f32.mrb[0].mxu0
        %v5063 = vadd.f32 0.0, %v5062
        %v5064 = vpop.f32.mrb[0].mxu0
        %5065 = vmatprep.mubr.bf16.mxu0 0
        %5066 = vmatmul.mubr.bf16.gmra.mrb[0].mxu0 %v4932
        %v5067 = vpop.f32.mrb[0].mxu0
        %v5068 = vadd.f32 0.0, %v5067
        %v5069 = vpop.f32.mrb[0].mxu0
        %v5070 = vpop.f32.mrb[0].mxu0
        %v5071 = vadd.f32 0.0, %v5070
        %v5072 = vpop.f32.mrb[0].mxu0
        %5073 = vmatprep.mubr.bf16.mxu0 0
        %5074 = vmatmul.mubr.bf16.gmra.mrb[0].mxu0 %v4934
        %v5075 = vpop.f32.mrb[0].mxu0
        %v5076 = vadd.f32 0.0, %v5075
        %v5077 = vpop.f32.mrb[0].mxu0
        %v5078 = vpop.f32.mrb[0].mxu0
        %v5079 = vadd.f32 0.0, %v5078
        %v5080 = vpop.f32.mrb[0].mxu0
        %5081 = vmatprep.mubr.bf16.mxu0 0
        %5082 = vmatmul.mubr.bf16.gmra.mrb[0].mxu0 %v4936
        %v5083 = vpop.f32.mrb[0].mxu0
        %v5084 = vadd.f32 0.0, %v5083
        %v5085 = vpop.f32.mrb[0].mxu0
        %v5086 = vpop.f32.mrb[0].mxu0
        %v5087 = vadd.f32 0.0, %v5086
        %v5088 = vpop.f32.mrb[0].mxu0
        %5089 = vmatprep.mubr.bf16.mxu0 0
        %5090 = vmatmul.mubr.bf16.gmra.mrb[0].mxu0 %v4938
        %v5091 = vpop.f32.mrb[0].mxu0
        %v5092 = vadd.f32 0.0, %v5091
        %v5093 = vpop.f32.mrb[0].mxu0
        %v5094 = vpop.f32.mrb[0].mxu0
        %v5095 = vadd.f32 0.0, %v5094
        %v5096 = vpop.f32.mrb[0].mxu0
        %5097 = vmatprep.mubr.bf16.mxu0 0
        %5098 = vmatmul.mubr.bf16.gmra.mrb[0].mxu0 %v4940
        %v5099 = vpop.f32.mrb[0].mxu0
        %v5100 = vadd.f32 0.0, %v5099
        %v5101 = vpop.f32.mrb[0].mxu0
        %v5102 = vpop.f32.mrb[0].mxu0
        %v5103 = vadd.f32 0.0, %v5102
        %v5104 = vpop.f32.mrb[0].mxu0
        %5105 = vmatprep.mubr.bf16.mxu0 0
        %5106 = vmatmul.mubr.bf16.gmra.mrb[0].mxu0 %v4942
        %v5107 = vpop.f32.mrb[0].mxu0
        %v5108 = vadd.f32 0.0, %v5107
        %v5109 = vpop.f32.mrb[0].mxu0
        %v5110 = vpop.f32.mrb[0].mxu0
        %v5111 = vadd.f32 0.0, %v5110
        %v5112 = vpop.f32.mrb[0].mxu0
        %5113 = vmatprep.mubr.bf16.mxu0 0
        %5114 = vmatmul.mubr.bf16.gmra.mrb[0].mxu0 %v4944
        %v5115 = vpop.f32.mrb[0].mxu0
        %v5116 = vadd.f32 0.0, %v5115
        %v5117 = vpop.f32.mrb[0].mxu0
        %v5118 = vpop.f32.mrb[0].mxu0
        %v5119 = vadd.f32 0.0, %v5118
        %v5120 = vpop.f32.mrb[0].mxu0
        %5121 = vmatprep.mubr.bf16.mxu0 0
        %5122 = vmatmul.mubr.bf16.gmra.mrb[0].mxu0 %v4946
        %v5123 = vpop.f32.mrb[0].mxu0
        %v5124 = vadd.f32 0.0, %v5123
        %v5125 = vpop.f32.mrb[0].mxu0
        %v5126 = vpop.f32.mrb[0].mxu0
        %v5127 = vadd.f32 0.0, %v5126
        %v5128 = vpop.f32.mrb[0].mxu0
        %5129 = vmatprep.mubr.bf16.mxu0 0
        %5130 = vmatmul.mubr.bf16.gmra.mrb[0].mxu0 %v4948
        %v5131 = vpop.f32.mrb[0].mxu0
        %v5132 = vadd.f32 0.0, %v5131
        %v5133 = vpop.f32.mrb[0].mxu0
        %v5134 = vpop.f32.mrb[0].mxu0
        %v5135 = vadd.f32 0.0, %v5134
        %v5136 = vpop.f32.mrb[0].mxu0
        %5137 = vdwg.mxu0
        %v5138 = vadd.f32 %v4880, %v5044
        %v5139 = vadd.f32 %v4881, %v5047
        %v5140 = vadd.f32 %v4882, %v5052
        %v5141 = vadd.f32 %v4883, %v5055
        %v5142 = vadd.f32 %v4884, %v5060
        %v5143 = vadd.f32 %v4885, %v5063
        %v5144 = vadd.f32 %v4886, %v5068
        %v5145 = vadd.f32 %v4887, %v5071
        %v5146 = vadd.f32 %v4888, %v5076
        %v5147 = vadd.f32 %v4889, %v5079
        %v5148 = vadd.f32 %v4890, %v5084
        %v5149 = vadd.f32 %v4891, %v5087
        %v5150 = vadd.f32 %v4892, %v5092
        %v5151 = vadd.f32 %v4893, %v5095
        %v5152 = vadd.f32 %v4894, %v5100
        %v5153 = vadd.f32 %v4895, %v5103
        %v5154 = vadd.f32 %v4896, %v5108
        %v5155 = vadd.f32 %v4897, %v5111
        %v5156 = vadd.f32 %v4898, %v5116
        %v5157 = vadd.f32 %v4899, %v5119
        %v5158 = vadd.f32 %v4900, %v5124
        %v5159 = vadd.f32 %v4901, %v5127
        %v5160 = vadd.f32 %v4902, %v5132
        %v5161 = vadd.f32 %v4903, %v5135
        %v5162 = vld [vmem:[%s307 + $0x38] sm:$0xf8]
        %v5163 = vld [vmem:[%s307 + $0x40] sm:$0xff]
        %v5164 = vld [vmem:[%s307 + $0x48] sm:$0xff]
        %v5165 = vld [vmem:[%s307 + $0x50] sm:$0xff]
        %v5166 = vld [vmem:[%s307 + $0x58] sm:$0xff]
        %v5167 = vld [vmem:[%s307 + $0x60] sm:$0xff]
        %v5168 = vld [vmem:[%s307 + $0x68] sm:$0xff]
        %v5169 = vld [vmem:[%s307 + $0x70] sm:$0xff]
        %v5170 = vld [vmem:[%s307 + $0x78] sm:$0xff]
        %v5171 = vld [vmem:[%s307 + $0x80] sm:$0xff]
        %v5172 = vld [vmem:[%s307 + $0x88] sm:$0xff]
        %v5173 = vld [vmem:[%s307 + $0x90] sm:$0xff]
        %v5174 = vld [vmem:[%s307 + $0x98] sm:$0x7]
        %s5175 = scalar_lea.vmem [#allocation9], 960
        %v5176 = vld [vmem:[%s5175] sm:$0xf]
        %v5177 = vld [vmem:[%s5175 + $0x4] sm:$0xf]
        %v5178 = vld [vmem:[%s5175 + $0x8] sm:$0xf]
        %v5179 = vld [vmem:[%s5175 + $0xc] sm:$0xf]
        %v5180 = vld [vmem:[%s5175 + $0x10] sm:$0xf]
        %v5181 = vld [vmem:[%s5175 + $0x14] sm:$0xf]
        %v5182 = vld [vmem:[%s5175 + $0x18] sm:$0xf]
        %v5183 = vld [vmem:[%s5175 + $0x1c] sm:$0xf]
        %v5184 = vld [vmem:[%s5175 + $0x20] sm:$0xf]
        %v5185 = vld [vmem:[%s5175 + $0x24] sm:$0xf]
        %v5186 = vld [vmem:[%s5175 + $0x28] sm:$0xf]
        %v5187 = vld [vmem:[%s5175 + $0x2c] sm:$0xf]
        %v5188 = vld [vmem:[%s5175 + $0x30] sm:$0xf]
        %v5189 = vld [vmem:[%s5175 + $0x34] sm:$0xf]
        %v5190 = vld [vmem:[%s5175 + $0x38] sm:$0xf]
        %v5191 = vld [vmem:[%s5175 + $0x3c] sm:$0xf]
        %v5205 = vrot.slane %v5162, 3
        %v5206 = vrot.slane %v5163, 3
        %v5207 = vsel %vm3953, %v5205, %v5206
        %v5208 = vrot.slane %v5164, 3
        %v5209 = vsel %vm3953, %v5206, %v5208
        %v5210 = vrot.slane %v5165, 3
        %v5211 = vsel %vm3953, %v5208, %v5210
        %v5212 = vrot.slane %v5166, 3
        %v5213 = vsel %vm3953, %v5210, %v5212
        %v5214 = vrot.slane %v5167, 3
        %v5215 = vsel %vm3953, %v5212, %v5214
        %v5216 = vrot.slane %v5168, 3
        %v5217 = vsel %vm3953, %v5214, %v5216
        %v5218 = vrot.slane %v5169, 3
        %v5219 = vsel %vm3953, %v5216, %v5218
        %v5220 = vrot.slane %v5170, 3
        %v5221 = vsel %vm3953, %v5218, %v5220
        %v5222 = vrot.slane %v5171, 3
        %v5223 = vsel %vm3953, %v5220, %v5222
        %v5224 = vrot.slane %v5172, 3
        %v5225 = vsel %vm3953, %v5222, %v5224
        %v5226 = vrot.slane %v5173, 3
        %v5227 = vsel %vm3953, %v5224, %v5226
        %v5228 = vrot.slane %v5174, 3
        %v5229 = vsel %vm3953, %v5226, %v5228
        %v5258 = vunpack.c.l.b16 %v5176
        %v5259 = vunpack.c.l.b16 %v5177
        %v5260 = vunpack.c.l.b16 %v5178
        %v5261 = vunpack.c.l.b16 %v5179
        %v5262 = vunpack.c.l.b16 %v5180
        %v5263 = vunpack.c.l.b16 %v5181
        %v5264 = vunpack.c.l.b16 %v5182
        %v5265 = vunpack.c.l.b16 %v5183
        %v5266 = vunpack.c.l.b16 %v5184
        %v5267 = vunpack.c.l.b16 %v5185
        %v5268 = vunpack.c.l.b16 %v5186
        %v5269 = vunpack.c.l.b16 %v5187
        %v5270 = vunpack.c.l.b16 %v5188
        %v5271 = vunpack.c.l.b16 %v5189
        %v5272 = vunpack.c.l.b16 %v5190
        %v5273 = vunpack.c.l.b16 %v5191
        %v5274 = vpack.c.b16 %v5259, %v5258
        %v5275 = vpack.c.b16 %v5261, %v5260
        %v5276 = vpack.c.b16 %v5263, %v5262
        %v5277 = vpack.c.b16 %v5265, %v5264
        %v5278 = vpack.c.b16 %v5267, %v5266
        %v5279 = vpack.c.b16 %v5269, %v5268
        %v5280 = vpack.c.b16 %v5271, %v5270
        %v5281 = vpack.c.b16 %v5273, %v5272
        %5290 = vmatprep.subr.bf16.mxu0 0
        %5291 = vmatpush1.bf16.msra.mxu0 %v5274
        %5292 = vmatprep.subr.bf16.mxu0 0
        %5293 = vmatpush1.bf16.msra.mxu0 %v5275
        %5294 = vmatprep.subr.bf16.mxu0 0
        %5295 = vmatpush1.bf16.msra.mxu0 %v5276
        %5296 = vmatprep.subr.bf16.mxu0 0
        %5297 = vmatpush1.bf16.msra.mxu0 %v5277
        %5298 = vmatprep.subr.bf16.mxu0 0
        %5299 = vmatpush1.bf16.msra.mxu0 %v5278
        %5300 = vmatprep.subr.bf16.mxu0 0
        %5301 = vmatpush1.bf16.msra.mxu0 %v5279
        %5302 = vmatprep.subr.bf16.mxu0 0
        %5303 = vmatpush1.bf16.msra.mxu0 %v5280
        %5304 = vmatprep.subr.bf16.mxu0 0
        %5305 = vmatpush1.bf16.msra.mxu0 %v5281
        %5306 = vmatprep.subr.bf16.mxu0 0
        %5307 = vmatpush1.bf16.msra.mxu0 0
        %5308 = vmatprep.subr.bf16.mxu0 0
        %5309 = vmatpush1.bf16.msra.mxu0 0
        %5310 = vmatprep.subr.bf16.mxu0 0
        %5311 = vmatpush1.bf16.msra.mxu0 0
        %5312 = vmatprep.subr.bf16.mxu0 0
        %5313 = vmatpush1.bf16.msra.mxu0 0
        %5314 = vmatprep.subr.bf16.mxu0 0
        %5315 = vmatpush1.bf16.msra.mxu0 0
        %5316 = vmatprep.subr.bf16.mxu0 0
        %5317 = vmatpush1.bf16.msra.mxu0 0
        %5318 = vmatprep.subr.bf16.mxu0 0
        %5319 = vmatpush1.bf16.msra.mxu0 0
        %5320 = vmatprep.subr.bf16.mxu0 0
        %5321 = vmatpush1.bf16.msra.mxu0 0
        %5322 = vmatprep.mubr.bf16.mxu0 0
        %5323 = vmatmul.mubr.bf16.gmra.mrb[0].mxu0 %v5207
        %v5324 = vpop.f32.mrb[0].mxu0
        %v5325 = vadd.f32 0.0, %v5324
        %v5326 = vpop.f32.mrb[0].mxu0
        %v5327 = vpop.f32.mrb[0].mxu0
        %v5328 = vadd.f32 0.0, %v5327
        %v5329 = vpop.f32.mrb[0].mxu0
        %5330 = vmatprep.mubr.bf16.mxu0 0
        %5331 = vmatmul.mubr.bf16.gmra.mrb[0].mxu0 %v5209
        %v5332 = vpop.f32.mrb[0].mxu0
        %v5333 = vadd.f32 0.0, %v5332
        %v5334 = vpop.f32.mrb[0].mxu0
        %v5335 = vpop.f32.mrb[0].mxu0
        %v5336 = vadd.f32 0.0, %v5335
        %v5337 = vpop.f32.mrb[0].mxu0
        %5338 = vmatprep.mubr.bf16.mxu0 0
        %5339 = vmatmul.mubr.bf16.gmra.mrb[0].mxu0 %v5211
        %v5340 = vpop.f32.mrb[0].mxu0
        %v5341 = vadd.f32 0.0, %v5340
        %v5342 = vpop.f32.mrb[0].mxu0
        %v5343 = vpop.f32.mrb[0].mxu0
        %v5344 = vadd.f32 0.0, %v5343
        %v5345 = vpop.f32.mrb[0].mxu0
        %5346 = vmatprep.mubr.bf16.mxu0 0
        %5347 = vmatmul.mubr.bf16.gmra.mrb[0].mxu0 %v5213
        %v5348 = vpop.f32.mrb[0].mxu0
        %v5349 = vadd.f32 0.0, %v5348
        %v5350 = vpop.f32.mrb[0].mxu0
        %v5351 = vpop.f32.mrb[0].mxu0
        %v5352 = vadd.f32 0.0, %v5351
        %v5353 = vpop.f32.mrb[0].mxu0
        %5354 = vmatprep.mubr.bf16.mxu0 0
        %5355 = vmatmul.mubr.bf16.gmra.mrb[0].mxu0 %v5215
        %v5356 = vpop.f32.mrb[0].mxu0
        %v5357 = vadd.f32 0.0, %v5356
        %v5358 = vpop.f32.mrb[0].mxu0
        %v5359 = vpop.f32.mrb[0].mxu0
        %v5360 = vadd.f32 0.0, %v5359
        %v5361 = vpop.f32.mrb[0].mxu0
        %5362 = vmatprep.mubr.bf16.mxu0 0
        %5363 = vmatmul.mubr.bf16.gmra.mrb[0].mxu0 %v5217
        %v5364 = vpop.f32.mrb[0].mxu0
        %v5365 = vadd.f32 0.0, %v5364
        %v5366 = vpop.f32.mrb[0].mxu0
        %v5367 = vpop.f32.mrb[0].mxu0
        %v5368 = vadd.f32 0.0, %v5367
        %v5369 = vpop.f32.mrb[0].mxu0
        %5370 = vmatprep.mubr.bf16.mxu0 0
        %5371 = vmatmul.mubr.bf16.gmra.mrb[0].mxu0 %v5219
        %v5372 = vpop.f32.mrb[0].mxu0
        %v5373 = vadd.f32 0.0, %v5372
        %v5374 = vpop.f32.mrb[0].mxu0
        %v5375 = vpop.f32.mrb[0].mxu0
        %v5376 = vadd.f32 0.0, %v5375
        %v5377 = vpop.f32.mrb[0].mxu0
        %5378 = vmatprep.mubr.bf16.mxu0 0
        %5379 = vmatmul.mubr.bf16.gmra.mrb[0].mxu0 %v5221
        %v5380 = vpop.f32.mrb[0].mxu0
        %v5381 = vadd.f32 0.0, %v5380
        %v5382 = vpop.f32.mrb[0].mxu0
        %v5383 = vpop.f32.mrb[0].mxu0
        %v5384 = vadd.f32 0.0, %v5383
        %v5385 = vpop.f32.mrb[0].mxu0
        %5386 = vmatprep.mubr.bf16.mxu0 0
        %5387 = vmatmul.mubr.bf16.gmra.mrb[0].mxu0 %v5223
        %v5388 = vpop.f32.mrb[0].mxu0
        %v5389 = vadd.f32 0.0, %v5388
        %v5390 = vpop.f32.mrb[0].mxu0
        %v5391 = vpop.f32.mrb[0].mxu0
        %v5392 = vadd.f32 0.0, %v5391
        %v5393 = vpop.f32.mrb[0].mxu0
        %5394 = vmatprep.mubr.bf16.mxu0 0
        %5395 = vmatmul.mubr.bf16.gmra.mrb[0].mxu0 %v5225
        %v5396 = vpop.f32.mrb[0].mxu0
        %v5397 = vadd.f32 0.0, %v5396
        %v5398 = vpop.f32.mrb[0].mxu0
        %v5399 = vpop.f32.mrb[0].mxu0
        %v5400 = vadd.f32 0.0, %v5399
        %v5401 = vpop.f32.mrb[0].mxu0
        %5402 = vmatprep.mubr.bf16.mxu0 0
        %5403 = vmatmul.mubr.bf16.gmra.mrb[0].mxu0 %v5227
        %v5404 = vpop.f32.mrb[0].mxu0
        %v5405 = vadd.f32 0.0, %v5404
        %v5406 = vpop.f32.mrb[0].mxu0
        %v5407 = vpop.f32.mrb[0].mxu0
        %v5408 = vadd.f32 0.0, %v5407
        %v5409 = vpop.f32.mrb[0].mxu0
        %5410 = vmatprep.mubr.bf16.mxu0 0
        %5411 = vmatmul.mubr.bf16.gmra.mrb[0].mxu0 %v5229
        %v5412 = vpop.f32.mrb[0].mxu0
        %v5413 = vadd.f32 0.0, %v5412
        %v5414 = vpop.f32.mrb[0].mxu0
        %v5415 = vpop.f32.mrb[0].mxu0
        %v5416 = vadd.f32 0.0, %v5415
        %v5417 = vpop.f32.mrb[0].mxu0
        %5418 = vdwg.mxu0
        %v5419 = vadd.f32 %v5138, %v5325
        %v5420 = vadd.f32 %v5139, %v5328
        %v5421 = vadd.f32 %v5140, %v5333
        %v5422 = vadd.f32 %v5141, %v5336
        %v5423 = vadd.f32 %v5142, %v5341
        %v5424 = vadd.f32 %v5143, %v5344
        %v5425 = vadd.f32 %v5144, %v5349
        %v5426 = vadd.f32 %v5145, %v5352
        %v5427 = vadd.f32 %v5146, %v5357
        %v5428 = vadd.f32 %v5147, %v5360
        %v5429 = vadd.f32 %v5148, %v5365
        %v5430 = vadd.f32 %v5149, %v5368
        %v5431 = vadd.f32 %v5150, %v5373
        %v5432 = vadd.f32 %v5151, %v5376
        %v5433 = vadd.f32 %v5152, %v5381
        %v5434 = vadd.f32 %v5153, %v5384
        %v5435 = vadd.f32 %v5154, %v5389
        %v5436 = vadd.f32 %v5155, %v5392
        %v5437 = vadd.f32 %v5156, %v5397
        %v5438 = vadd.f32 %v5157, %v5400
        %v5439 = vadd.f32 %v5158, %v5405
        %v5440 = vadd.f32 %v5159, %v5408
        %v5441 = vadd.f32 %v5160, %v5413
        %v5442 = vadd.f32 %v5161, %v5416
        %v5443 = vld [vmem:[%s307 + $0x38] sm:$0xf0]
        %v5444 = vld [vmem:[%s307 + $0x98] sm:$0xf]
        %s5445 = scalar_lea.vmem [#allocation9], 1024
        %v5446 = vld [vmem:[%s5445] sm:$0xf]
        %v5447 = vld [vmem:[%s5445 + $0x4] sm:$0xf]
        %v5448 = vld [vmem:[%s5445 + $0x8] sm:$0xf]
        %v5449 = vld [vmem:[%s5445 + $0xc] sm:$0xf]
        %v5450 = vld [vmem:[%s5445 + $0x10] sm:$0xf]
        %v5451 = vld [vmem:[%s5445 + $0x14] sm:$0xf]
        %v5452 = vld [vmem:[%s5445 + $0x18] sm:$0xf]
        %v5453 = vld [vmem:[%s5445 + $0x1c] sm:$0xf]
        %v5454 = vld [vmem:[%s5445 + $0x20] sm:$0xf]
        %v5455 = vld [vmem:[%s5445 + $0x24] sm:$0xf]
        %v5456 = vld [vmem:[%s5445 + $0x28] sm:$0xf]
        %v5457 = vld [vmem:[%s5445 + $0x2c] sm:$0xf]
        %v5458 = vld [vmem:[%s5445 + $0x30] sm:$0xf]
        %v5459 = vld [vmem:[%s5445 + $0x34] sm:$0xf]
        %v5460 = vld [vmem:[%s5445 + $0x38] sm:$0xf]
        %v5461 = vld [vmem:[%s5445 + $0x3c] sm:$0xf]
        %v5464 = vrot.slane %v5443, 4
        %v5465 = vrot.slane %v5163, 4
        %v5466 = vsel %vm382, %v5464, %v5465
        %v5467 = vrot.slane %v5164, 4
        %v5468 = vsel %vm382, %v5465, %v5467
        %v5469 = vrot.slane %v5165, 4
        %v5470 = vsel %vm382, %v5467, %v5469
        %v5471 = vrot.slane %v5166, 4
        %v5472 = vsel %vm382, %v5469, %v5471
        %v5473 = vrot.slane %v5167, 4
        %v5474 = vsel %vm382, %v5471, %v5473
        %v5475 = vrot.slane %v5168, 4
        %v5476 = vsel %vm382, %v5473, %v5475
        %v5477 = vrot.slane %v5169, 4
        %v5478 = vsel %vm382, %v5475, %v5477
        %v5479 = vrot.slane %v5170, 4
        %v5480 = vsel %vm382, %v5477, %v5479
        %v5481 = vrot.slane %v5171, 4
        %v5482 = vsel %vm382, %v5479, %v5481
        %v5483 = vrot.slane %v5172, 4
        %v5484 = vsel %vm382, %v5481, %v5483
        %v5485 = vrot.slane %v5173, 4
        %v5486 = vsel %vm382, %v5483, %v5485
        %v5487 = vrot.slane %v5444, 4
        %v5488 = vsel %vm382, %v5485, %v5487
        %v5517 = vunpack.c.l.b16 %v5446
        %v5518 = vunpack.c.l.b16 %v5447
        %v5519 = vunpack.c.l.b16 %v5448
        %v5520 = vunpack.c.l.b16 %v5449
        %v5521 = vunpack.c.l.b16 %v5450
        %v5522 = vunpack.c.l.b16 %v5451
        %v5523 = vunpack.c.l.b16 %v5452
        %v5524 = vunpack.c.l.b16 %v5453
        %v5525 = vunpack.c.l.b16 %v5454
        %v5526 = vunpack.c.l.b16 %v5455
        %v5527 = vunpack.c.l.b16 %v5456
        %v5528 = vunpack.c.l.b16 %v5457
        %v5529 = vunpack.c.l.b16 %v5458
        %v5530 = vunpack.c.l.b16 %v5459
        %v5531 = vunpack.c.l.b16 %v5460
        %v5532 = vunpack.c.l.b16 %v5461
        %v5533 = vpack.c.b16 %v5518, %v5517
        %v5534 = vpack.c.b16 %v5520, %v5519
        %v5535 = vpack.c.b16 %v5522, %v5521
        %v5536 = vpack.c.b16 %v5524, %v5523
        %v5537 = vpack.c.b16 %v5526, %v5525
        %v5538 = vpack.c.b16 %v5528, %v5527
        %v5539 = vpack.c.b16 %v5530, %v5529
        %v5540 = vpack.c.b16 %v5532, %v5531
        %5549 = vmatprep.subr.bf16.mxu0 0
        %5550 = vmatpush1.bf16.msra.mxu0 %v5533
        %5551 = vmatprep.subr.bf16.mxu0 0
        %5552 = vmatpush1.bf16.msra.mxu0 %v5534
        %5553 = vmatprep.subr.bf16.mxu0 0
        %5554 = vmatpush1.bf16.msra.mxu0 %v5535
        %5555 = vmatprep.subr.bf16.mxu0 0
        %5556 = vmatpush1.bf16.msra.mxu0 %v5536
        %5557 = vmatprep.subr.bf16.mxu0 0
        %5558 = vmatpush1.bf16.msra.mxu0 %v5537
        %5559 = vmatprep.subr.bf16.mxu0 0
        %5560 = vmatpush1.bf16.msra.mxu0 %v5538
        %5561 = vmatprep.subr.bf16.mxu0 0
        %5562 = vmatpush1.bf16.msra.mxu0 %v5539
        %5563 = vmatprep.subr.bf16.mxu0 0
        %5564 = vmatpush1.bf16.msra.mxu0 %v5540
        %5565 = vmatprep.subr.bf16.mxu0 0
        %5566 = vmatpush1.bf16.msra.mxu0 0
        %5567 = vmatprep.subr.bf16.mxu0 0
        %5568 = vmatpush1.bf16.msra.mxu0 0
        %5569 = vmatprep.subr.bf16.mxu0 0
        %5570 = vmatpush1.bf16.msra.mxu0 0
        %5571 = vmatprep.subr.bf16.mxu0 0
        %5572 = vmatpush1.bf16.msra.mxu0 0
        %5573 = vmatprep.subr.bf16.mxu0 0
        %5574 = vmatpush1.bf16.msra.mxu0 0
        %5575 = vmatprep.subr.bf16.mxu0 0
        %5576 = vmatpush1.bf16.msra.mxu0 0
        %5577 = vmatprep.subr.bf16.mxu0 0
        %5578 = vmatpush1.bf16.msra.mxu0 0
        %5579 = vmatprep.subr.bf16.mxu0 0
        %5580 = vmatpush1.bf16.msra.mxu0 0
        %5581 = vmatprep.mubr.bf16.mxu0 0
        %5582 = vmatmul.mubr.bf16.gmra.mrb[0].mxu0 %v5466
        %v5583 = vpop.f32.mrb[0].mxu0
        %v5584 = vadd.f32 0.0, %v5583
        %v5585 = vpop.f32.mrb[0].mxu0
        %v5586 = vpop.f32.mrb[0].mxu0
        %v5587 = vadd.f32 0.0, %v5586
        %v5588 = vpop.f32.mrb[0].mxu0
        %5589 = vmatprep.mubr.bf16.mxu0 0
        %5590 = vmatmul.mubr.bf16.gmra.mrb[0].mxu0 %v5468
        %v5591 = vpop.f32.mrb[0].mxu0
        %v5592 = vadd.f32 0.0, %v5591
        %v5593 = vpop.f32.mrb[0].mxu0
        %v5594 = vpop.f32.mrb[0].mxu0
        %v5595 = vadd.f32 0.0, %v5594
        %v5596 = vpop.f32.mrb[0].mxu0
        %5597 = vmatprep.mubr.bf16.mxu0 0
        %5598 = vmatmul.mubr.bf16.gmra.mrb[0].mxu0 %v5470
        %v5599 = vpop.f32.mrb[0].mxu0
        %v5600 = vadd.f32 0.0, %v5599
        %v5601 = vpop.f32.mrb[0].mxu0
        %v5602 = vpop.f32.mrb[0].mxu0
        %v5603 = vadd.f32 0.0, %v5602
        %v5604 = vpop.f32.mrb[0].mxu0
        %5605 = vmatprep.mubr.bf16.mxu0 0
        %5606 = vmatmul.mubr.bf16.gmra.mrb[0].mxu0 %v5472
        %v5607 = vpop.f32.mrb[0].mxu0
        %v5608 = vadd.f32 0.0, %v5607
        %v5609 = vpop.f32.mrb[0].mxu0
        %v5610 = vpop.f32.mrb[0].mxu0
        %v5611 = vadd.f32 0.0, %v5610
        %v5612 = vpop.f32.mrb[0].mxu0
        %5613 = vmatprep.mubr.bf16.mxu0 0
        %5614 = vmatmul.mubr.bf16.gmra.mrb[0].mxu0 %v5474
        %v5615 = vpop.f32.mrb[0].mxu0
        %v5616 = vadd.f32 0.0, %v5615
        %v5617 = vpop.f32.mrb[0].mxu0
        %v5618 = vpop.f32.mrb[0].mxu0
        %v5619 = vadd.f32 0.0, %v5618
        %v5620 = vpop.f32.mrb[0].mxu0
        %5621 = vmatprep.mubr.bf16.mxu0 0
        %5622 = vmatmul.mubr.bf16.gmra.mrb[0].mxu0 %v5476
        %v5623 = vpop.f32.mrb[0].mxu0
        %v5624 = vadd.f32 0.0, %v5623
        %v5625 = vpop.f32.mrb[0].mxu0
        %v5626 = vpop.f32.mrb[0].mxu0
        %v5627 = vadd.f32 0.0, %v5626
        %v5628 = vpop.f32.mrb[0].mxu0
        %5629 = vmatprep.mubr.bf16.mxu0 0
        %5630 = vmatmul.mubr.bf16.gmra.mrb[0].mxu0 %v5478
        %v5631 = vpop.f32.mrb[0].mxu0
        %v5632 = vadd.f32 0.0, %v5631
        %v5633 = vpop.f32.mrb[0].mxu0
        %v5634 = vpop.f32.mrb[0].mxu0
        %v5635 = vadd.f32 0.0, %v5634
        %v5636 = vpop.f32.mrb[0].mxu0
        %5637 = vmatprep.mubr.bf16.mxu0 0
        %5638 = vmatmul.mubr.bf16.gmra.mrb[0].mxu0 %v5480
        %v5639 = vpop.f32.mrb[0].mxu0
        %v5640 = vadd.f32 0.0, %v5639
        %v5641 = vpop.f32.mrb[0].mxu0
        %v5642 = vpop.f32.mrb[0].mxu0
        %v5643 = vadd.f32 0.0, %v5642
        %v5644 = vpop.f32.mrb[0].mxu0
        %5645 = vmatprep.mubr.bf16.mxu0 0
        %5646 = vmatmul.mubr.bf16.gmra.mrb[0].mxu0 %v5482
        %v5647 = vpop.f32.mrb[0].mxu0
        %v5648 = vadd.f32 0.0, %v5647
        %v5649 = vpop.f32.mrb[0].mxu0
        %v5650 = vpop.f32.mrb[0].mxu0
        %v5651 = vadd.f32 0.0, %v5650
        %v5652 = vpop.f32.mrb[0].mxu0
        %5653 = vmatprep.mubr.bf16.mxu0 0
        %5654 = vmatmul.mubr.bf16.gmra.mrb[0].mxu0 %v5484
        %v5655 = vpop.f32.mrb[0].mxu0
        %v5656 = vadd.f32 0.0, %v5655
        %v5657 = vpop.f32.mrb[0].mxu0
        %v5658 = vpop.f32.mrb[0].mxu0
        %v5659 = vadd.f32 0.0, %v5658
        %v5660 = vpop.f32.mrb[0].mxu0
        %5661 = vmatprep.mubr.bf16.mxu0 0
        %5662 = vmatmul.mubr.bf16.gmra.mrb[0].mxu0 %v5486
        %v5663 = vpop.f32.mrb[0].mxu0
        %v5664 = vadd.f32 0.0, %v5663
        %v5665 = vpop.f32.mrb[0].mxu0
        %v5666 = vpop.f32.mrb[0].mxu0
        %v5667 = vadd.f32 0.0, %v5666
        %v5668 = vpop.f32.mrb[0].mxu0
        %5669 = vmatprep.mubr.bf16.mxu0 0
        %5670 = vmatmul.mubr.bf16.gmra.mrb[0].mxu0 %v5488
        %v5671 = vpop.f32.mrb[0].mxu0
        %v5672 = vadd.f32 0.0, %v5671
        %v5673 = vpop.f32.mrb[0].mxu0
        %v5674 = vpop.f32.mrb[0].mxu0
        %v5675 = vadd.f32 0.0, %v5674
        %v5676 = vpop.f32.mrb[0].mxu0
        %5677 = vdwg.mxu0
        %v5678 = vadd.f32 %v5419, %v5584
        %v5679 = vadd.f32 %v5420, %v5587
        %v5680 = vadd.f32 %v5421, %v5592
        %v5681 = vadd.f32 %v5422, %v5595
        %v5682 = vadd.f32 %v5423, %v5600
        %v5683 = vadd.f32 %v5424, %v5603
        %v5684 = vadd.f32 %v5425, %v5608
        %v5685 = vadd.f32 %v5426, %v5611
        %v5686 = vadd.f32 %v5427, %v5616
        %v5687 = vadd.f32 %v5428, %v5619
        %v5688 = vadd.f32 %v5429, %v5624
        %v5689 = vadd.f32 %v5430, %v5627
        %v5690 = vadd.f32 %v5431, %v5632
        %v5691 = vadd.f32 %v5432, %v5635
        %v5692 = vadd.f32 %v5433, %v5640
        %v5693 = vadd.f32 %v5434, %v5643
        %v5694 = vadd.f32 %v5435, %v5648
        %v5695 = vadd.f32 %v5436, %v5651
        %v5696 = vadd.f32 %v5437, %v5656
        %v5697 = vadd.f32 %v5438, %v5659
        %v5698 = vadd.f32 %v5439, %v5664
        %v5699 = vadd.f32 %v5440, %v5667
        %v5700 = vadd.f32 %v5441, %v5672
        %v5701 = vadd.f32 %v5442, %v5675
        %v5702 = vld [vmem:[%s307 + $0x38] sm:$0xe0]
        %v5703 = vld [vmem:[%s307 + $0x98] sm:$0x1f]
        %s5704 = scalar_lea.vmem [#allocation9], 1088
        %v5705 = vld [vmem:[%s5704] sm:$0xf]
        %v5706 = vld [vmem:[%s5704 + $0x4] sm:$0xf]
        %v5707 = vld [vmem:[%s5704 + $0x8] sm:$0xf]
        %v5708 = vld [vmem:[%s5704 + $0xc] sm:$0xf]
        %v5709 = vld [vmem:[%s5704 + $0x10] sm:$0xf]
        %v5710 = vld [vmem:[%s5704 + $0x14] sm:$0xf]
        %v5711 = vld [vmem:[%s5704 + $0x18] sm:$0xf]
        %v5712 = vld [vmem:[%s5704 + $0x1c] sm:$0xf]
        %v5713 = vld [vmem:[%s5704 + $0x20] sm:$0xf]
        %v5714 = vld [vmem:[%s5704 + $0x24] sm:$0xf]
        %v5715 = vld [vmem:[%s5704 + $0x28] sm:$0xf]
        %v5716 = vld [vmem:[%s5704 + $0x2c] sm:$0xf]
        %v5717 = vld [vmem:[%s5704 + $0x30] sm:$0xf]
        %v5718 = vld [vmem:[%s5704 + $0x34] sm:$0xf]
        %v5719 = vld [vmem:[%s5704 + $0x38] sm:$0xf]
        %v5720 = vld [vmem:[%s5704 + $0x3c] sm:$0xf]
        %v5723 = vrot.slane %v5702, 5
        %v5724 = vrot.slane %v5163, 5
        %v5725 = vsel %vm4189, %v5723, %v5724
        %v5726 = vrot.slane %v5164, 5
        %v5727 = vsel %vm4189, %v5724, %v5726
        %v5728 = vrot.slane %v5165, 5
        %v5729 = vsel %vm4189, %v5726, %v5728
        %v5730 = vrot.slane %v5166, 5
        %v5731 = vsel %vm4189, %v5728, %v5730
        %v5732 = vrot.slane %v5167, 5
        %v5733 = vsel %vm4189, %v5730, %v5732
        %v5734 = vrot.slane %v5168, 5
        %v5735 = vsel %vm4189, %v5732, %v5734
        %v5736 = vrot.slane %v5169, 5
        %v5737 = vsel %vm4189, %v5734, %v5736
        %v5738 = vrot.slane %v5170, 5
        %v5739 = vsel %vm4189, %v5736, %v5738
        %v5740 = vrot.slane %v5171, 5
        %v5741 = vsel %vm4189, %v5738, %v5740
        %v5742 = vrot.slane %v5172, 5
        %v5743 = vsel %vm4189, %v5740, %v5742
        %v5744 = vrot.slane %v5173, 5
        %v5745 = vsel %vm4189, %v5742, %v5744
        %v5746 = vrot.slane %v5703, 5
        %v5747 = vsel %vm4189, %v5744, %v5746
        %v5776 = vunpack.c.l.b16 %v5705
        %v5777 = vunpack.c.l.b16 %v5706
        %v5778 = vunpack.c.l.b16 %v5707
        %v5779 = vunpack.c.l.b16 %v5708
        %v5780 = vunpack.c.l.b16 %v5709
        %v5781 = vunpack.c.l.b16 %v5710
        %v5782 = vunpack.c.l.b16 %v5711
        %v5783 = vunpack.c.l.b16 %v5712
        %v5784 = vunpack.c.l.b16 %v5713
        %v5785 = vunpack.c.l.b16 %v5714
        %v5786 = vunpack.c.l.b16 %v5715
        %v5787 = vunpack.c.l.b16 %v5716
        %v5788 = vunpack.c.l.b16 %v5717
        %v5789 = vunpack.c.l.b16 %v5718
        %v5790 = vunpack.c.l.b16 %v5719
        %v5791 = vunpack.c.l.b16 %v5720
        %v5792 = vpack.c.b16 %v5777, %v5776
        %v5793 = vpack.c.b16 %v5779, %v5778
        %v5794 = vpack.c.b16 %v5781, %v5780
        %v5795 = vpack.c.b16 %v5783, %v5782
        %v5796 = vpack.c.b16 %v5785, %v5784
        %v5797 = vpack.c.b16 %v5787, %v5786
        %v5798 = vpack.c.b16 %v5789, %v5788
        %v5799 = vpack.c.b16 %v5791, %v5790
        %5808 = vmatprep.subr.bf16.mxu0 0
        %5809 = vmatpush1.bf16.msra.mxu0 %v5792
        %5810 = vmatprep.subr.bf16.mxu0 0
        %5811 = vmatpush1.bf16.msra.mxu0 %v5793
        %5812 = vmatprep.subr.bf16.mxu0 0
        %5813 = vmatpush1.bf16.msra.mxu0 %v5794
        %5814 = vmatprep.subr.bf16.mxu0 0
        %5815 = vmatpush1.bf16.msra.mxu0 %v5795
        %5816 = vmatprep.subr.bf16.mxu0 0
        %5817 = vmatpush1.bf16.msra.mxu0 %v5796
        %5818 = vmatprep.subr.bf16.mxu0 0
        %5819 = vmatpush1.bf16.msra.mxu0 %v5797
        %5820 = vmatprep.subr.bf16.mxu0 0
        %5821 = vmatpush1.bf16.msra.mxu0 %v5798
        %5822 = vmatprep.subr.bf16.mxu0 0
        %5823 = vmatpush1.bf16.msra.mxu0 %v5799
        %5824 = vmatprep.subr.bf16.mxu0 0
        %5825 = vmatpush1.bf16.msra.mxu0 0
        %5826 = vmatprep.subr.bf16.mxu0 0
        %5827 = vmatpush1.bf16.msra.mxu0 0
        %5828 = vmatprep.subr.bf16.mxu0 0
        %5829 = vmatpush1.bf16.msra.mxu0 0
        %5830 = vmatprep.subr.bf16.mxu0 0
        %5831 = vmatpush1.bf16.msra.mxu0 0
        %5832 = vmatprep.subr.bf16.mxu0 0
        %5833 = vmatpush1.bf16.msra.mxu0 0
        %5834 = vmatprep.subr.bf16.mxu0 0
        %5835 = vmatpush1.bf16.msra.mxu0 0
        %5836 = vmatprep.subr.bf16.mxu0 0
        %5837 = vmatpush1.bf16.msra.mxu0 0
        %5838 = vmatprep.subr.bf16.mxu0 0
        %5839 = vmatpush1.bf16.msra.mxu0 0
        %5840 = vmatprep.mubr.bf16.mxu0 0
        %5841 = vmatmul.mubr.bf16.gmra.mrb[0].mxu0 %v5725
        %v5842 = vpop.f32.mrb[0].mxu0
        %v5843 = vadd.f32 0.0, %v5842
        %v5844 = vpop.f32.mrb[0].mxu0
        %v5845 = vpop.f32.mrb[0].mxu0
        %v5846 = vadd.f32 0.0, %v5845
        %v5847 = vpop.f32.mrb[0].mxu0
        %5848 = vmatprep.mubr.bf16.mxu0 0
        %5849 = vmatmul.mubr.bf16.gmra.mrb[0].mxu0 %v5727
        %v5850 = vpop.f32.mrb[0].mxu0
        %v5851 = vadd.f32 0.0, %v5850
        %v5852 = vpop.f32.mrb[0].mxu0
        %v5853 = vpop.f32.mrb[0].mxu0
        %v5854 = vadd.f32 0.0, %v5853
        %v5855 = vpop.f32.mrb[0].mxu0
        %5856 = vmatprep.mubr.bf16.mxu0 0
        %5857 = vmatmul.mubr.bf16.gmra.mrb[0].mxu0 %v5729
        %v5858 = vpop.f32.mrb[0].mxu0
        %v5859 = vadd.f32 0.0, %v5858
        %v5860 = vpop.f32.mrb[0].mxu0
        %v5861 = vpop.f32.mrb[0].mxu0
        %v5862 = vadd.f32 0.0, %v5861
        %v5863 = vpop.f32.mrb[0].mxu0
        %5864 = vmatprep.mubr.bf16.mxu0 0
        %5865 = vmatmul.mubr.bf16.gmra.mrb[0].mxu0 %v5731
        %v5866 = vpop.f32.mrb[0].mxu0
        %v5867 = vadd.f32 0.0, %v5866
        %v5868 = vpop.f32.mrb[0].mxu0
        %v5869 = vpop.f32.mrb[0].mxu0
        %v5870 = vadd.f32 0.0, %v5869
        %v5871 = vpop.f32.mrb[0].mxu0
        %5872 = vmatprep.mubr.bf16.mxu0 0
        %5873 = vmatmul.mubr.bf16.gmra.mrb[0].mxu0 %v5733
        %v5874 = vpop.f32.mrb[0].mxu0
        %v5875 = vadd.f32 0.0, %v5874
        %v5876 = vpop.f32.mrb[0].mxu0
        %v5877 = vpop.f32.mrb[0].mxu0
        %v5878 = vadd.f32 0.0, %v5877
        %v5879 = vpop.f32.mrb[0].mxu0
        %5880 = vmatprep.mubr.bf16.mxu0 0
        %5881 = vmatmul.mubr.bf16.gmra.mrb[0].mxu0 %v5735
        %v5882 = vpop.f32.mrb[0].mxu0
        %v5883 = vadd.f32 0.0, %v5882
        %v5884 = vpop.f32.mrb[0].mxu0
        %v5885 = vpop.f32.mrb[0].mxu0
        %v5886 = vadd.f32 0.0, %v5885
        %v5887 = vpop.f32.mrb[0].mxu0
        %5888 = vmatprep.mubr.bf16.mxu0 0
        %5889 = vmatmul.mubr.bf16.gmra.mrb[0].mxu0 %v5737
        %v5890 = vpop.f32.mrb[0].mxu0
        %v5891 = vadd.f32 0.0, %v5890
        %v5892 = vpop.f32.mrb[0].mxu0
        %v5893 = vpop.f32.mrb[0].mxu0
        %v5894 = vadd.f32 0.0, %v5893
        %v5895 = vpop.f32.mrb[0].mxu0
        %5896 = vmatprep.mubr.bf16.mxu0 0
        %5897 = vmatmul.mubr.bf16.gmra.mrb[0].mxu0 %v5739
        %v5898 = vpop.f32.mrb[0].mxu0
        %v5899 = vadd.f32 0.0, %v5898
        %v5900 = vpop.f32.mrb[0].mxu0
        %v5901 = vpop.f32.mrb[0].mxu0
        %v5902 = vadd.f32 0.0, %v5901
        %v5903 = vpop.f32.mrb[0].mxu0
        %5904 = vmatprep.mubr.bf16.mxu0 0
        %5905 = vmatmul.mubr.bf16.gmra.mrb[0].mxu0 %v5741
        %v5906 = vpop.f32.mrb[0].mxu0
        %v5907 = vadd.f32 0.0, %v5906
        %v5908 = vpop.f32.mrb[0].mxu0
        %v5909 = vpop.f32.mrb[0].mxu0
        %v5910 = vadd.f32 0.0, %v5909
        %v5911 = vpop.f32.mrb[0].mxu0
        %5912 = vmatprep.mubr.bf16.mxu0 0
        %5913 = vmatmul.mubr.bf16.gmra.mrb[0].mxu0 %v5743
        %v5914 = vpop.f32.mrb[0].mxu0
        %v5915 = vadd.f32 0.0, %v5914
        %v5916 = vpop.f32.mrb[0].mxu0
        %v5917 = vpop.f32.mrb[0].mxu0
        %v5918 = vadd.f32 0.0, %v5917
        %v5919 = vpop.f32.mrb[0].mxu0
        %5920 = vmatprep.mubr.bf16.mxu0 0
        %5921 = vmatmul.mubr.bf16.gmra.mrb[0].mxu0 %v5745
        %v5922 = vpop.f32.mrb[0].mxu0
        %v5923 = vadd.f32 0.0, %v5922
        %v5924 = vpop.f32.mrb[0].mxu0
        %v5925 = vpop.f32.mrb[0].mxu0
        %v5926 = vadd.f32 0.0, %v5925
        %v5927 = vpop.f32.mrb[0].mxu0
        %5928 = vmatprep.mubr.bf16.mxu0 0
        %5929 = vmatmul.mubr.bf16.gmra.mrb[0].mxu0 %v5747
        %v5930 = vpop.f32.mrb[0].mxu0
        %v5931 = vadd.f32 0.0, %v5930
        %v5932 = vpop.f32.mrb[0].mxu0
        %v5933 = vpop.f32.mrb[0].mxu0
        %v5934 = vadd.f32 0.0, %v5933
        %v5935 = vpop.f32.mrb[0].mxu0
        %5936 = vdwg.mxu0
        %v5937 = vadd.f32 %v5678, %v5843
        %v5938 = vadd.f32 %v5679, %v5846
        %v5939 = vadd.f32 %v5680, %v5851
        %v5940 = vadd.f32 %v5681, %v5854
        %v5941 = vadd.f32 %v5682, %v5859
        %v5942 = vadd.f32 %v5683, %v5862
        %v5943 = vadd.f32 %v5684, %v5867
        %v5944 = vadd.f32 %v5685, %v5870
        %v5945 = vadd.f32 %v5686, %v5875
        %v5946 = vadd.f32 %v5687, %v5878
        %v5947 = vadd.f32 %v5688, %v5883
        %v5948 = vadd.f32 %v5689, %v5886
        %v5949 = vadd.f32 %v5690, %v5891
        %v5950 = vadd.f32 %v5691, %v5894
        %v5951 = vadd.f32 %v5692, %v5899
        %v5952 = vadd.f32 %v5693, %v5902
        %v5953 = vadd.f32 %v5694, %v5907
        %v5954 = vadd.f32 %v5695, %v5910
        %v5955 = vadd.f32 %v5696, %v5915
        %v5956 = vadd.f32 %v5697, %v5918
        %v5957 = vadd.f32 %v5698, %v5923
        %v5958 = vadd.f32 %v5699, %v5926
        %v5959 = vadd.f32 %v5700, %v5931
        %v5960 = vadd.f32 %v5701, %v5934
        %v5961 = vmax.f32 %v5937, 0.0
        %v5962 = vmax.f32 %v5938, 0.0
        %v5963 = vmax.f32 %v5939, 0.0
        %v5964 = vmax.f32 %v5940, 0.0
        %v5965 = vmax.f32 %v5941, 0.0
        %v5966 = vmax.f32 %v5942, 0.0
        %v5967 = vmax.f32 %v5943, 0.0
        %v5968 = vmax.f32 %v5944, 0.0
        %v5969 = vmax.f32 %v5945, 0.0
        %v5970 = vmax.f32 %v5946, 0.0
        %v5971 = vmax.f32 %v5947, 0.0
        %v5972 = vmax.f32 %v5948, 0.0
        %v5973 = vmax.f32 %v5949, 0.0
        %v5974 = vmax.f32 %v5950, 0.0
        %v5975 = vmax.f32 %v5951, 0.0
        %v5976 = vmax.f32 %v5952, 0.0
        %v5977 = vmax.f32 %v5953, 0.0
        %v5978 = vmax.f32 %v5954, 0.0
        %v5979 = vmax.f32 %v5955, 0.0
        %v5980 = vmax.f32 %v5956, 0.0
        %v5981 = vmax.f32 %v5957, 0.0
        %v5982 = vmax.f32 %v5958, 0.0
        %v5983 = vmax.f32 %v5959, 0.0
        %v5984 = vmax.f32 %v5960, 0.0
        %v5985 = vpack.c.bf16 %v5962, %v5961
        %v5986 = vpack.c.bf16 %v5964, %v5963
        %v5987 = vpack.c.bf16 %v5966, %v5965
        %v5988 = vpack.c.bf16 %v5968, %v5967
        %v5989 = vpack.c.bf16 %v5970, %v5969
        %v5990 = vpack.c.bf16 %v5972, %v5971
        %v5991 = vpack.c.bf16 %v5974, %v5973
        %v5992 = vpack.c.bf16 %v5976, %v5975
        %v5993 = vpack.c.bf16 %v5978, %v5977
        %v5994 = vpack.c.bf16 %v5980, %v5979
        %v5995 = vpack.c.bf16 %v5982, %v5981
        %v5996 = vpack.c.bf16 %v5984, %v5983
        %v5997 = vld [vmem:[#allocation10 + $0x80] sm:$0xf]
        %v5998 = vld [vmem:[#allocation10 + $0x84] sm:$0xf]
        %v5999 = vld [vmem:[#allocation10 + $0x88] sm:$0xf]
        %v6000 = vld [vmem:[#allocation10 + $0x8c] sm:$0xf]
        %v6001 = vld [vmem:[#allocation10 + $0x90] sm:$0xf]
        %v6002 = vld [vmem:[#allocation10 + $0x94] sm:$0xf]
        %v6003 = vld [vmem:[#allocation10 + $0x98] sm:$0xf]
        %v6004 = vld [vmem:[#allocation10 + $0x9c] sm:$0xf]
        %v6005 = vld [vmem:[#allocation10 + $0xa0] sm:$0xf]
        %v6006 = vld [vmem:[#allocation10 + $0xa4] sm:$0xf]
        %v6007 = vld [vmem:[#allocation10 + $0xa8] sm:$0xf]
        %v6008 = vld [vmem:[#allocation10 + $0xac] sm:$0xf]
        %v6009 = vld [vmem:[#allocation10 + $0xb0] sm:$0xf]
        %v6010 = vld [vmem:[#allocation10 + $0xb4] sm:$0xf]
        %v6011 = vld [vmem:[#allocation10 + $0xb8] sm:$0xf]
        %v6012 = vld [vmem:[#allocation10 + $0xbc] sm:$0xf]
        %v6029 = vunpack.c.l.b16 %v5997
        %v6030 = vunpack.c.l.b16 %v5998
        %v6031 = vunpack.c.l.b16 %v5999
        %v6032 = vunpack.c.l.b16 %v6000
        %v6033 = vunpack.c.l.b16 %v6001
        %v6034 = vunpack.c.l.b16 %v6002
        %v6035 = vunpack.c.l.b16 %v6003
        %v6036 = vunpack.c.l.b16 %v6004
        %v6037 = vunpack.c.l.b16 %v6005
        %v6038 = vunpack.c.l.b16 %v6006
        %v6039 = vunpack.c.l.b16 %v6007
        %v6040 = vunpack.c.l.b16 %v6008
        %v6041 = vunpack.c.l.b16 %v6009
        %v6042 = vunpack.c.l.b16 %v6010
        %v6043 = vunpack.c.l.b16 %v6011
        %v6044 = vunpack.c.l.b16 %v6012
        %v6045 = vpack.c.b16 %v6030, %v6029
        %v6046 = vpack.c.b16 %v6032, %v6031
        %v6047 = vpack.c.b16 %v6034, %v6033
        %v6048 = vpack.c.b16 %v6036, %v6035
        %v6049 = vpack.c.b16 %v6038, %v6037
        %v6050 = vpack.c.b16 %v6040, %v6039
        %v6051 = vpack.c.b16 %v6042, %v6041
        %v6052 = vpack.c.b16 %v6044, %v6043
        %6061 = vmatprep.subr.bf16.mxu0 0
        %6062 = vmatpush1.bf16.msra.mxu0 %v6045
        %6063 = vmatprep.subr.bf16.mxu0 0
        %6064 = vmatpush1.bf16.msra.mxu0 %v6046
        %6065 = vmatprep.subr.bf16.mxu0 0
        %6066 = vmatpush1.bf16.msra.mxu0 %v6047
        %6067 = vmatprep.subr.bf16.mxu0 0
        %6068 = vmatpush1.bf16.msra.mxu0 %v6048
        %6069 = vmatprep.subr.bf16.mxu0 0
        %6070 = vmatpush1.bf16.msra.mxu0 %v6049
        %6071 = vmatprep.subr.bf16.mxu0 0
        %6072 = vmatpush1.bf16.msra.mxu0 %v6050
        %6073 = vmatprep.subr.bf16.mxu0 0
        %6074 = vmatpush1.bf16.msra.mxu0 %v6051
        %6075 = vmatprep.subr.bf16.mxu0 0
        %6076 = vmatpush1.bf16.msra.mxu0 %v6052
        %6077 = vmatprep.subr.bf16.mxu0 0
        %6078 = vmatpush1.bf16.msra.mxu0 0
        %6079 = vmatprep.subr.bf16.mxu0 0
        %6080 = vmatpush1.bf16.msra.mxu0 0
        %6081 = vmatprep.subr.bf16.mxu0 0
        %6082 = vmatpush1.bf16.msra.mxu0 0
        %6083 = vmatprep.subr.bf16.mxu0 0
        %6084 = vmatpush1.bf16.msra.mxu0 0
        %6085 = vmatprep.subr.bf16.mxu0 0
        %6086 = vmatpush1.bf16.msra.mxu0 0
        %6087 = vmatprep.subr.bf16.mxu0 0
        %6088 = vmatpush1.bf16.msra.mxu0 0
        %6089 = vmatprep.subr.bf16.mxu0 0
        %6090 = vmatpush1.bf16.msra.mxu0 0
        %6091 = vmatprep.subr.bf16.mxu0 0
        %6092 = vmatpush1.bf16.msra.mxu0 0
        %6093 = vmatprep.mubr.bf16.mxu0 0
        %6094 = vmatmul.mubr.bf16.gmra.mrb[0].mxu0 %v5985
        %v6095 = vpop.f32.mrb[0].mxu0
        %v6096 = vadd.f32 0.0, %v6095
        %v6097 = vpop.f32.mrb[0].mxu0
        %v6098 = vpop.f32.mrb[0].mxu0
        %v6099 = vadd.f32 0.0, %v6098
        %v6100 = vpop.f32.mrb[0].mxu0
        %6101 = vmatprep.mubr.bf16.mxu0 0
        %6102 = vmatmul.mubr.bf16.gmra.mrb[0].mxu0 %v5986
        %v6103 = vpop.f32.mrb[0].mxu0
        %v6104 = vadd.f32 0.0, %v6103
        %v6105 = vpop.f32.mrb[0].mxu0
        %v6106 = vpop.f32.mrb[0].mxu0
        %v6107 = vadd.f32 0.0, %v6106
        %v6108 = vpop.f32.mrb[0].mxu0
        %6109 = vmatprep.mubr.bf16.mxu0 0
        %6110 = vmatmul.mubr.bf16.gmra.mrb[0].mxu0 %v5987
        %v6111 = vpop.f32.mrb[0].mxu0
        %v6112 = vadd.f32 0.0, %v6111
        %v6113 = vpop.f32.mrb[0].mxu0
        %v6114 = vpop.f32.mrb[0].mxu0
        %v6115 = vadd.f32 0.0, %v6114
        %v6116 = vpop.f32.mrb[0].mxu0
        %6117 = vmatprep.mubr.bf16.mxu0 0
        %6118 = vmatmul.mubr.bf16.gmra.mrb[0].mxu0 %v5988
        %v6119 = vpop.f32.mrb[0].mxu0
        %v6120 = vadd.f32 0.0, %v6119
        %v6121 = vpop.f32.mrb[0].mxu0
        %v6122 = vpop.f32.mrb[0].mxu0
        %v6123 = vadd.f32 0.0, %v6122
        %v6124 = vpop.f32.mrb[0].mxu0
        %6125 = vmatprep.mubr.bf16.mxu0 0
        %6126 = vmatmul.mubr.bf16.gmra.mrb[0].mxu0 %v5989
        %v6127 = vpop.f32.mrb[0].mxu0
        %v6128 = vadd.f32 0.0, %v6127
        %v6129 = vpop.f32.mrb[0].mxu0
        %v6130 = vpop.f32.mrb[0].mxu0
        %v6131 = vadd.f32 0.0, %v6130
        %v6132 = vpop.f32.mrb[0].mxu0
        %6133 = vmatprep.mubr.bf16.mxu0 0
        %6134 = vmatmul.mubr.bf16.gmra.mrb[0].mxu0 %v5990
        %v6135 = vpop.f32.mrb[0].mxu0
        %v6136 = vadd.f32 0.0, %v6135
        %v6137 = vpop.f32.mrb[0].mxu0
        %v6138 = vpop.f32.mrb[0].mxu0
        %v6139 = vadd.f32 0.0, %v6138
        %v6140 = vpop.f32.mrb[0].mxu0
        %6141 = vmatprep.mubr.bf16.mxu0 0
        %6142 = vmatmul.mubr.bf16.gmra.mrb[0].mxu0 %v5991
        %v6143 = vpop.f32.mrb[0].mxu0
        %v6144 = vadd.f32 0.0, %v6143
        %v6145 = vpop.f32.mrb[0].mxu0
        %v6146 = vpop.f32.mrb[0].mxu0
        %v6147 = vadd.f32 0.0, %v6146
        %v6148 = vpop.f32.mrb[0].mxu0
        %6149 = vmatprep.mubr.bf16.mxu0 0
        %6150 = vmatmul.mubr.bf16.gmra.mrb[0].mxu0 %v5992
        %v6151 = vpop.f32.mrb[0].mxu0
        %v6152 = vadd.f32 0.0, %v6151
        %v6153 = vpop.f32.mrb[0].mxu0
        %v6154 = vpop.f32.mrb[0].mxu0
        %v6155 = vadd.f32 0.0, %v6154
        %v6156 = vpop.f32.mrb[0].mxu0
        %6157 = vmatprep.mubr.bf16.mxu0 0
        %6158 = vmatmul.mubr.bf16.gmra.mrb[0].mxu0 %v5993
        %v6159 = vpop.f32.mrb[0].mxu0
        %v6160 = vadd.f32 0.0, %v6159
        %v6161 = vpop.f32.mrb[0].mxu0
        %v6162 = vpop.f32.mrb[0].mxu0
        %v6163 = vadd.f32 0.0, %v6162
        %v6164 = vpop.f32.mrb[0].mxu0
        %6165 = vmatprep.mubr.bf16.mxu0 0
        %6166 = vmatmul.mubr.bf16.gmra.mrb[0].mxu0 %v5994
        %v6167 = vpop.f32.mrb[0].mxu0
        %v6168 = vadd.f32 0.0, %v6167
        %v6169 = vpop.f32.mrb[0].mxu0
        %v6170 = vpop.f32.mrb[0].mxu0
        %v6171 = vadd.f32 0.0, %v6170
        %v6172 = vpop.f32.mrb[0].mxu0
        %6173 = vmatprep.mubr.bf16.mxu0 0
        %6174 = vmatmul.mubr.bf16.gmra.mrb[0].mxu0 %v5995
        %v6175 = vpop.f32.mrb[0].mxu0
        %v6176 = vadd.f32 0.0, %v6175
        %v6177 = vpop.f32.mrb[0].mxu0
        %v6178 = vpop.f32.mrb[0].mxu0
        %v6179 = vadd.f32 0.0, %v6178
        %v6180 = vpop.f32.mrb[0].mxu0
        %6181 = vmatprep.mubr.bf16.mxu0 0
        %6182 = vmatmul.mubr.bf16.gmra.mrb[0].mxu0 %v5996
        %v6183 = vpop.f32.mrb[0].mxu0
        %v6184 = vadd.f32 0.0, %v6183
        %v6185 = vpop.f32.mrb[0].mxu0
        %v6186 = vpop.f32.mrb[0].mxu0
        %v6187 = vadd.f32 0.0, %v6186
        %v6188 = vpop.f32.mrb[0].mxu0
        %6189 = vdwg.mxu0
        %v6190 = vadd.f32 %v3581, %v6096
        %v6191 = vadd.f32 %v3584, %v6099
        %v6192 = vadd.f32 %v3589, %v6104
        %v6193 = vadd.f32 %v3592, %v6107
        %v6194 = vadd.f32 %v3597, %v6112
        %v6195 = vadd.f32 %v3600, %v6115
        %v6196 = vadd.f32 %v3605, %v6120
        %v6197 = vadd.f32 %v3608, %v6123
        %v6198 = vadd.f32 %v3613, %v6128
        %v6199 = vadd.f32 %v3616, %v6131
        %v6200 = vadd.f32 %v3621, %v6136
        %v6201 = vadd.f32 %v3624, %v6139
        %v6202 = vadd.f32 %v3629, %v6144
        %v6203 = vadd.f32 %v3632, %v6147
        %v6204 = vadd.f32 %v3637, %v6152
        %v6205 = vadd.f32 %v3640, %v6155
        %v6206 = vadd.f32 %v3645, %v6160
        %v6207 = vadd.f32 %v3648, %v6163
        %v6208 = vadd.f32 %v3653, %v6168
        %v6209 = vadd.f32 %v3656, %v6171
        %v6210 = vadd.f32 %v3661, %v6176
        %v6211 = vadd.f32 %v3664, %v6179
        %v6212 = vadd.f32 %v3669, %v6184
        %v6213 = vadd.f32 %v3672, %v6187
        %v6214 = vld [vmem:[%s233] sm:$0x1]
        %v6216 = vlaneseq
        %v6217 = vshrl.u32 %v6216, 7
        %v6218 = vsub.s32 0, %v6217
        %v6219 = vrot.slane %v6214, %v6218
        %v6221 = vadd.f32 %v6190, %v6219
        %v6222 = vadd.f32 %v6191, %v6219
        %v6223 = vadd.f32 %v6192, %v6219
        %v6224 = vadd.f32 %v6193, %v6219
        %v6225 = vadd.f32 %v6194, %v6219
        %v6226 = vadd.f32 %v6195, %v6219
        %v6227 = vadd.f32 %v6196, %v6219
        %v6228 = vadd.f32 %v6197, %v6219
        %v6229 = vadd.f32 %v6198, %v6219
        %v6230 = vadd.f32 %v6199, %v6219
        %v6231 = vadd.f32 %v6200, %v6219
        %v6232 = vadd.f32 %v6201, %v6219
        %v6233 = vadd.f32 %v6202, %v6219
        %v6234 = vadd.f32 %v6203, %v6219
        %v6235 = vadd.f32 %v6204, %v6219
        %v6236 = vadd.f32 %v6205, %v6219
        %v6237 = vadd.f32 %v6206, %v6219
        %v6238 = vadd.f32 %v6207, %v6219
        %v6239 = vadd.f32 %v6208, %v6219
        %v6240 = vadd.f32 %v6209, %v6219
        %v6241 = vadd.f32 %v6210, %v6219
        %v6242 = vadd.f32 %v6211, %v6219
        %v6243 = vadd.f32 %v6212, %v6219
        %v6244 = vadd.f32 %v6213, %v6219
        %v6245 = vmax.f32 %v6221, 0.0
        %v6246 = vmax.f32 %v6222, 0.0
        %v6247 = vmax.f32 %v6223, 0.0
        %v6248 = vmax.f32 %v6224, 0.0
        %v6249 = vmax.f32 %v6225, 0.0
        %v6250 = vmax.f32 %v6226, 0.0
        %v6251 = vmax.f32 %v6227, 0.0
        %v6252 = vmax.f32 %v6228, 0.0
        %v6253 = vmax.f32 %v6229, 0.0
        %v6254 = vmax.f32 %v6230, 0.0
        %v6255 = vmax.f32 %v6231, 0.0
        %v6256 = vmax.f32 %v6232, 0.0
        %v6257 = vmax.f32 %v6233, 0.0
        %v6258 = vmax.f32 %v6234, 0.0
        %v6259 = vmax.f32 %v6235, 0.0
        %v6260 = vmax.f32 %v6236, 0.0
        %v6261 = vmax.f32 %v6237, 0.0
        %v6262 = vmax.f32 %v6238, 0.0
        %v6263 = vmax.f32 %v6239, 0.0
        %v6264 = vmax.f32 %v6240, 0.0
        %v6265 = vmax.f32 %v6241, 0.0
        %v6266 = vmax.f32 %v6242, 0.0
        %v6267 = vmax.f32 %v6243, 0.0
        %v6268 = vmax.f32 %v6244, 0.0
        %v6269 = vpack.c.bf16 %v6246, %v6245
        %v6270 = vpack.c.bf16 %v6248, %v6247
        %v6271 = vpack.c.bf16 %v6250, %v6249
        %v6272 = vpack.c.bf16 %v6252, %v6251
        %v6273 = vpack.c.bf16 %v6254, %v6253
        %v6274 = vpack.c.bf16 %v6256, %v6255
        %v6275 = vpack.c.bf16 %v6258, %v6257
        %v6276 = vpack.c.bf16 %v6260, %v6259
        %v6277 = vpack.c.bf16 %v6262, %v6261
        %v6278 = vpack.c.bf16 %v6264, %v6263
        %v6279 = vpack.c.bf16 %v6266, %v6265
        %v6280 = vpack.c.bf16 %v6268, %v6267
        %v6293 = vunpack.c.l.b16 %v6269
        %v6294 = vunpack.c.h.b16 %v6269
        %v6295 = vunpack.c.l.b16 %v6270
        %v6296 = vunpack.c.h.b16 %v6270
        %v6297 = vunpack.c.l.b16 %v6271
        %v6298 = vunpack.c.h.b16 %v6271
        %v6299 = vunpack.c.l.b16 %v6272
        %v6300 = vunpack.c.h.b16 %v6272
        %v6301 = vunpack.c.l.b16 %v6273
        %v6302 = vunpack.c.h.b16 %v6273
        %v6303 = vunpack.c.l.b16 %v6274
        %v6304 = vunpack.c.h.b16 %v6274
        %v6305 = vunpack.c.l.b16 %v6275
        %v6306 = vunpack.c.h.b16 %v6275
        %v6307 = vunpack.c.l.b16 %v6276
        %v6308 = vunpack.c.h.b16 %v6276
        %v6309 = vunpack.c.l.b16 %v6277
        %v6310 = vunpack.c.h.b16 %v6277
        %v6311 = vunpack.c.l.b16 %v6278
        %v6312 = vunpack.c.h.b16 %v6278
        %v6313 = vunpack.c.l.b16 %v6279
        %v6314 = vunpack.c.h.b16 %v6279
        %v6315 = vunpack.c.l.b16 %v6280
        %v6316 = vunpack.c.h.b16 %v6280
        %v6317 = vpack.c.b16 %v6293, %v6293
        %v6318 = vpack.c.b16 %v6294, %v6294
        %v6319 = vpack.c.b16 %v6295, %v6295
        %v6320 = vpack.c.b16 %v6296, %v6296
        %v6321 = vpack.c.b16 %v6297, %v6297
        %v6322 = vpack.c.b16 %v6298, %v6298
        %v6323 = vpack.c.b16 %v6299, %v6299
        %v6324 = vpack.c.b16 %v6300, %v6300
        %v6325 = vpack.c.b16 %v6301, %v6301
        %v6326 = vpack.c.b16 %v6302, %v6302
        %v6327 = vpack.c.b16 %v6303, %v6303
        %v6328 = vpack.c.b16 %v6304, %v6304
        %v6329 = vpack.c.b16 %v6305, %v6305
        %v6330 = vpack.c.b16 %v6306, %v6306
        %v6331 = vpack.c.b16 %v6307, %v6307
        %v6332 = vpack.c.b16 %v6308, %v6308
        %v6333 = vpack.c.b16 %v6309, %v6309
        %v6334 = vpack.c.b16 %v6310, %v6310
        %v6335 = vpack.c.b16 %v6311, %v6311
        %v6336 = vpack.c.b16 %v6312, %v6312
        %v6337 = vpack.c.b16 %v6313, %v6313
        %v6338 = vpack.c.b16 %v6314, %v6314
        %v6339 = vpack.c.b16 %v6315, %v6315
        %v6340 = vpack.c.b16 %v6316, %v6316
        %6365 = vst [vmem:[%s268] sm:$0xf] %v6317
        %6366 = vst [vmem:[%s268 + $0x4] sm:$0xf] %v6318
        %6367 = vst [vmem:[%s268 + $0x8] sm:$0xf] %v6319
        %6368 = vst [vmem:[%s268 + $0xc] sm:$0xf] %v6320
        %6369 = vst [vmem:[%s268 + $0x10] sm:$0xf] %v6321
        %6370 = vst [vmem:[%s268 + $0x14] sm:$0xf] %v6322
        %6371 = vst [vmem:[%s268 + $0x18] sm:$0xf] %v6323
        %6372 = vst [vmem:[%s268 + $0x1c] sm:$0xf] %v6324
        %6373 = vst [vmem:[%s268 + $0x20] sm:$0xf] %v6325
        %6374 = vst [vmem:[%s268 + $0x24] sm:$0xf] %v6326
        %6375 = vst [vmem:[%s268 + $0x28] sm:$0xf] %v6327
        %6376 = vst [vmem:[%s268 + $0x2c] sm:$0xf] %v6328
        %6377 = vst [vmem:[%s268 + $0x30] sm:$0xf] %v6329
        %6378 = vst [vmem:[%s268 + $0x34] sm:$0xf] %v6330
        %6379 = vst [vmem:[%s268 + $0x38] sm:$0xf] %v6331
        %6380 = vst [vmem:[%s268 + $0x3c] sm:$0xf] %v6332
        %6381 = vst [vmem:[%s268 + $0x40] sm:$0xf] %v6333
        %6382 = vst [vmem:[%s268 + $0x44] sm:$0xf] %v6334
        %6383 = vst [vmem:[%s268 + $0x48] sm:$0xf] %v6335
        %6384 = vst [vmem:[%s268 + $0x4c] sm:$0xf] %v6336
        %6385 = vst [vmem:[%s268 + $0x50] sm:$0xf] %v6337
        %6386 = vst [vmem:[%s268 + $0x54] sm:$0xf] %v6338
        %6387 = vst [vmem:[%s268 + $0x58] sm:$0xf] %v6339
        %6388 = vst [vmem:[%s268 + $0x5c] sm:$0xf] %v6340
        %s6389 = sand.u32 %s135, 1
        %s6390 = scalar_lea.sflag [#allocation6], %s6389
        %s6391 = sand.u32 %s135, 1
        %s6392 = smul.addr %s6391, 96
        %s6393 = scalar_lea.vmem [#allocation12], %s6392
        // Predicated region
        $region69: #{tpu_custom_call.1} parent=35 // pred_check
          %p6394 = pneg %p145
        $region70: #{tpu_custom_call.1} parent=35 // pred_check_branch
          %6396 = sbr.rel (%p6394) target = $region72
        $region71: #{tpu_custom_call.1} parent=35 // pred_region
          %s6398 = ssub.s32 1536, 1536
          %6399 = vsyncadd %s6390, %s6398
          %s6400 = smul.addr %s29, 24
          %s6401 = smul.addr %s28, 48
          %s6402 = sadd.s32 %s6400, %s6401
          %s6403 = smul.addr %s6402, 64
          %s6404 = scalar_lea.hbm %s5, %s6403
          %s6405 = sshll.u32 %s6393, 4
          %s6406 = int_to_ptr.vmem [resolvable:$true] %s6405
          %6411 = dma.vmem_to_hbm [thread:$0]  %s6406, 1536, %s6404, %s6390, 64, 64, 4
        $region72: #{tpu_custom_call.1} parent=35 // pred_fallthru
          _
      $region36: #{tpu_custom_call.1} parent=5 // pred_fallthru
        _
      %p6412 = scmp.le.s32.totalorder 2, %s19
      // Predicated region
      $region73: #{tpu_custom_call.1} parent=5 // pred_check
        %p6413 = pneg %p6412
      $region74: #{tpu_custom_call.1} parent=5 // pred_check_branch
        %6415 = sbr.rel (%p6413) target = $region76
      $region75: #{tpu_custom_call.1} parent=5 // pred_region
        %s6416 = ssub.s32 %s19, 2
        // Predicated region
        $region77: #{tpu_custom_call.1} parent=75 // pred_check
          %p6417 = pneg %p151
        $region78: #{tpu_custom_call.1} parent=75 // pred_check_branch
          %6419 = sbr.rel (%p6417) target = $region80
        $region79: #{tpu_custom_call.1} parent=75 // pred_region
          %s6420 = sand.u32 %s136, 1
          %s6421 = scalar_lea.sflag [#allocation6], %s6420
          %s6422 = sand.u32 %s136, 1
          %s6423 = smul.addr %s6422, 96
          %s6424 = scalar_lea.vmem [#allocation12], %s6423
          %6425 = dma.done %s6421, 1536
        $region80: #{tpu_custom_call.1} parent=75 // pred_fallthru
          _
      $region76: #{tpu_custom_call.1} parent=5 // pred_fallthru
        _
    $region6: #{tpu_custom_call.1} parent=1 // loop_footer
      %s23 = sadd.s32 1, %s19
    $region7: #{tpu_custom_call.1} parent=1 // loop_footer_branch
      %18 = sbr.rel target = $region3
    $region8: #{tpu_custom_call.1} parent=1 // loop_exit
      _
    %6426 = vsyncpa [#allocation5], 1
    %s6427 = scalar_lea.sflag [#allocation5], 1
    %6428 = vsyncpa %s6427, 1
    %6429 = vsyncpa [#allocation8], 1
    %6430 = vsyncpa [#allocation11], 1
    %6431 = vsyncpa [#allocation6], 1
    %s6432 = scalar_lea.sflag [#allocation6], 1
    %6433 = vsyncpa %s6432, 1
  %6434 = vsyncmov [#allocation3]
  %s6435 = vpop.sfrf %6434
  %p6436 = scmp.eq.s32.totalorder %s6435, 0
  %p6437 = pneg %p6436
  %6439 = shalt.err (%p6437)
  %s6440 = scalar_lea.sflag [#allocation3], 1
  %6441 = vsyncmov %s6440
  %s6442 = vpop.sfrf %6441
  %p6443 = scmp.eq.s32.totalorder %s6442, 0
  %p6444 = pneg %p6443
  %6446 = shalt.err (%p6444)

</llo_original>
